<compile_context>
chip_gen: v7x
topology: tpu7x:2x2x1
jax: 0.10.0
libtpu: 0.0.40
codegen_flags: <defaults>
</compile_context>

<pallas_src>
import functools

import jax
import jax.numpy as jnp
from jax.experimental import pallas as pl
from jax.experimental.pallas import tpu as pltpu


# ----------------------------------------------------------------------------- config helpers
def _vmem_limit_bytes():
    """Generation-aware VMEM budget: ~96 MiB on v5e/v6e (128 MiB VMEM), ~48 MiB on v7x (64 MiB)."""
    try:
        cap = pltpu.get_tpu_info().vmem_capacity_bytes
    except Exception:
        cap = 64 * 1024 * 1024
    return int(max(32 * 1024 * 1024, min(cap * 3 // 4, 96 * 1024 * 1024)))


_VMEM_LIMIT = _vmem_limit_bytes()
_SEQ_ALIGN = 128  # pad S (and hence M = B*S) to a multiple of this


def _cparams(dims):
    return pltpu.CompilerParams(dimension_semantics=dims, vmem_limit_bytes=_VMEM_LIMIT)


def _round_up(x, m):
    return ((x + m - 1) // m) * m


def _pick_tile(dim, pref, align):
    """Largest tile <= pref that is a multiple of `align` and evenly divides `dim`;
    falls back to the full dim (always legal).  After S-padding all hot dims are
    128-multiples, so the fallback no longer triggers on real Whisper shapes."""
    if dim <= pref:
        return dim
    t = (pref // align) * align
    while t >= align:
        if dim % t == 0:
            return t
        t -= align
    return dim


def _gelu(x):
    # TODO(synk): PyTorch/HF Whisper uses exact erf-GELU; tanh approximation is used because
    # lax.erf is not guaranteed to lower in Mosaic.  Elementwise math stays in f32.
    c = jnp.float32(0.7978845608028654)  # sqrt(2/pi)
    return 0.5 * x * (1.0 + jnp.tanh(c * (x + 0.044715 * x * x * x)))


# ----------------------------------------------------------------------------- kernels
def _make_matmul_kernel(act, has_pos, has_res):
    """Tiled o = act(x @ w + b) [+ pos] [+ residual]; K is the last (reduction) grid axis."""

    def kernel(*refs):
        x_ref, w_ref, b_ref = refs[0], refs[1], refs[2]
        idx = 3
        pos_ref = res_ref = None
        if has_pos:
            pos_ref = refs[idx]
            idx += 1
        if has_res:
            res_ref = refs[idx]
            idx += 1
        o_ref, acc_ref = refs[idx], refs[idx + 1]

        k = pl.program_id(2)

        @pl.when(k == 0)
        def _():
            acc_ref[...] = jnp.zeros_like(acc_ref)

        acc_ref[...] += jnp.dot(x_ref[...], w_ref[...], preferred_element_type=jnp.float32)

        @pl.when(k == pl.num_programs(2) - 1)
        def _():
            acc = acc_ref[...] + b_ref[...].astype(jnp.float32)
            if act == "gelu":
                acc = _gelu(acc)
            if pos_ref is not None:
                acc = acc + pos_ref[...].astype(jnp.float32)
            if res_ref is not None:
                acc = acc + res_ref[...].astype(jnp.float32)
            o_ref[...] = acc.astype(o_ref.dtype)

    return kernel


def _ln_matmul_kernel(x_ref, g_ref, bt_ref, w_ref, b_ref, o_ref, xn_ref, *, act, eps):
    """Fused pre-LayerNorm + projection: o = act(LN(x) @ w + b).
    LN is computed once per row block (j == 0) into a VMEM scratch and reused for all N tiles."""

    @pl.when(pl.program_id(1) == 0)
    def _():
        x = x_ref[...].astype(jnp.float32)
        mu = jnp.mean(x, axis=-1, keepdims=True)
        var = jnp.mean(jnp.square(x - mu), axis=-1, keepdims=True)
        xn = (x - mu) * jax.lax.rsqrt(var + eps)
        xn = xn * g_ref[...].astype(jnp.float32) + bt_ref[...].astype(jnp.float32)
        xn_ref[...] = xn.astype(xn_ref.dtype)

    acc = jnp.dot(xn_ref[...], w_ref[...], preferred_element_type=jnp.float32)
    acc = acc + b_ref[...].astype(jnp.float32)
    if act == "gelu":
        acc = _gelu(acc)
    o_ref[...] = acc.astype(o_ref.dtype)


def _layernorm_kernel(x_ref, g_ref, b_ref, o_ref, *, eps):
    x = x_ref[...].astype(jnp.float32)
    mu = jnp.mean(x, axis=-1, keepdims=True)
    var = jnp.mean(jnp.square(x - mu), axis=-1, keepdims=True)
    y = (x - mu) * jax.lax.rsqrt(var + eps)
    y = y * g_ref[...].astype(jnp.float32) + b_ref[...].astype(jnp.float32)
    o_ref[...] = y.astype(o_ref.dtype)


def _attention_kernel(q_ref, k_ref, v_ref, o_ref, *, dh, s_real):
    """Single-pass softmax attention on a head-group (128-lane) column block.

    Blocks: q (1, tq, 128), k/v (1, S_pad, 128), o (1, tq, 128).  Full-S KV per grid step, so no
    online-softmax rescaling.  The 1/sqrt(dh) scale is folded into the QKV weights.  Padded KV
    positions (>= s_real) are masked with a large negative value (finite: keeps padded rows
    NaN-free so later layers stay clean; padded rows are trimmed outside)."""
    q = q_ref[0]                      # (tq, 128) bf16
    k = k_ref[0]                      # (S_pad, 128)
    v = v_ref[0]
    tq, wb = q.shape
    skv = k.shape[0]
    n_sub = wb // dh

    if s_real < skv:
        kv_valid = jax.lax.broadcasted_iota(jnp.int32, (tq, skv), 1) < s_real
    else:
        kv_valid = None

    outs = []
    for h in range(n_sub):            # static unroll over the heads packed in this 128-lane block
        sl = slice(h * dh, (h + 1) * dh)
        s = jax.lax.dot_general(q[:, sl], k[:, sl], (((1,), (1,)), ((), ())),
                                preferred_element_type=jnp.float32)        # (tq, S_pad)
        if kv_valid is not None:
            s = jnp.where(kv_valid, s, jnp.float32(-1e30))
        m = jnp.max(s, axis=-1, keepdims=True)
        p = jnp.exp(s - m)                                                 # one exp per score
        l = jnp.sum(p, axis=-1, keepdims=True)
        oh = jnp.dot(p.astype(v.dtype), v[:, sl], preferred_element_type=jnp.float32)
        # approx reciprocal rides the EUP slot; set approx=False for bit-closeness if needed.
        outs.append(oh * pl.reciprocal(l, approx=True))
    o_ref[0] = jnp.concatenate(outs, axis=-1).astype(o_ref.dtype)


# --------------------------------------------------------------------------- wrappers
def matmul(x, w, b, residual=None, pos=None, act="none",
           tm_pref=512, tn_pref=1536, tk_pref=512):
    """act(x @ w + b) [+ pos] [+ residual], tiled over (M, N, K) with an f32 VMEM accumulator.

    `pos` is a (pos_rows, N) table added row-wise with rows wrapping modulo pos_rows (used to fuse
    the positional embedding into the conv2 epilogue without broadcasting it to (B, S, D) in HBM).
    """
    M, K = x.shape
    N = w.shape[1]
    if pos is not None:
        pos_rows = pos.shape[0]
        assert M % pos_rows == 0
        tm = _pick_tile(pos_rows, tm_pref, 16)   # tm | pos_rows | M
        n_pos_blocks = pos_rows // tm
    else:
        tm = _pick_tile(M, tm_pref, 16)          # 16-aligned for bf16 sublane packing
        n_pos_blocks = 1
    tn = _pick_tile(N, tn_pref, 256)             # 256-aligned for the v6e/v7x 2x256 MXU
    tk = _pick_tile(K, tk_pref, 256)
    grid = (M // tm, N // tn, K // tk)

    in_specs = [
        pl.BlockSpec((tm, tk), lambda i, j, k: (i, k)),
        pl.BlockSpec((tk, tn), lambda i, j, k: (k, j)),
        pl.BlockSpec((1, tn), lambda i, j, k: (0, j)),
    ]
    inputs = [x, w, b.reshape(1, N)]
    if pos is not None:
        in_specs.append(pl.BlockSpec((tm, tn), lambda i, j, k: (i % n_pos_blocks, j)))
        inputs.append(pos)
    if residual is not None:
        in_specs.append(pl.BlockSpec((tm, tn), lambda i, j, k: (i, j)))
        inputs.append(residual)

    return pl.pallas_call(
        _make_matmul_kernel(act, pos is not None, residual is not None),
        out_shape=jax.ShapeDtypeStruct((M, N), x.dtype),
        grid=grid,
        in_specs=in_specs,
        out_specs=pl.BlockSpec((tm, tn), lambda i, j, k: (i, j)),
        scratch_shapes=[pltpu.VMEM((tm, tn), jnp.float32)],
        compiler_params=_cparams(("parallel", "parallel", "arbitrary")),
    )(*inputs)


def ln_linear(x, g, beta, w, b, act="none", tm_pref=512, tn_pref=1536):
    """Fused LayerNorm + projection; K kept whole per block (LN needs the full feature row),
    LN result cached in a (tm, K) VMEM scratch and reused across the N tiles."""
    M, K = x.shape
    N = w.shape[1]
    tm = _pick_tile(M, tm_pref, 16)
    tn = _pick_tile(N, tn_pref, 256)
    return pl.pallas_call(
        functools.partial(_ln_matmul_kernel, act=act, eps=1e-5),
        out_shape=jax.ShapeDtypeStruct((M, N), x.dtype),
        grid=(M // tm, N // tn),
        in_specs=[
            pl.BlockSpec((tm, K), lambda i, j: (i, 0)),
            pl.BlockSpec((1, K), lambda i, j: (0, 0)),
            pl.BlockSpec((1, K), lambda i, j: (0, 0)),
            pl.BlockSpec((K, tn), lambda i, j: (0, j)),
            pl.BlockSpec((1, tn), lambda i, j: (0, j)),
        ],
        out_specs=pl.BlockSpec((tm, tn), lambda i, j: (i, j)),
        scratch_shapes=[pltpu.VMEM((tm, K), x.dtype)],
        # N axis must stay sequential per row block (scratch reuse); M axis carries megacore.
        compiler_params=_cparams(("parallel", "arbitrary")),
    )(x, g.reshape(1, K), beta.reshape(1, K), w, b.reshape(1, N))


def layer_norm(x, g, b):
    M, D = x.shape
    tm = _pick_tile(M, 512, 16)
    return pl.pallas_call(
        functools.partial(_layernorm_kernel, eps=1e-5),
        out_shape=jax.ShapeDtypeStruct((M, D), x.dtype),
        grid=(M // tm,),
        in_specs=[
            pl.BlockSpec((tm, D), lambda i: (i, 0)),
            pl.BlockSpec((1, D), lambda i: (0, 0)),
            pl.BlockSpec((1, D), lambda i: (0, 0)),
        ],
        out_specs=pl.BlockSpec((tm, D), lambda i: (i, 0)),
        compiler_params=_cparams(("parallel",)),
    )(x, g.reshape(1, D), b.reshape(1, D))


def attention(qkv, num_heads, s_real):
    """qkv: (B, S_pad, 3D) fused LN1+QKV output -> (B, S_pad, D) attention output.

    Head split/merge is done entirely through BlockSpec column offsets: each grid step processes
    one 128-lane head group (e.g. two dh=64 heads), pulling its q/k/v columns straight out of the
    fused qkv buffer and writing its output columns straight into (B, S_pad, D) layout.  No XLA
    transposes, no lane-sparse stores.  KV is taken full-S per step (single-pass softmax)."""
    B, S_pad, threeD = qkv.shape
    d_model = threeD // 3
    dh = d_model // num_heads
    assert d_model % 128 == 0 and dh <= 128 and 128 % dh == 0, \
        "head-group packing requires dh | 128 and 128 | d_model (Whisper: dh=64)"
    wb = 128
    n_g = d_model // wb                       # number of 128-lane head groups
    tq = _pick_tile(S_pad, 256, 128)

    return pl.pallas_call(
        functools.partial(_attention_kernel, dh=dh, s_real=s_real),
        out_shape=jax.ShapeDtypeStruct((B, S_pad, d_model), qkv.dtype),
        grid=(B, n_g, S_pad // tq),
        in_specs=[
            pl.BlockSpec((1, tq, wb), lambda b, g, qi: (b, qi, g)),              # q columns
            pl.BlockSpec((1, S_pad, wb), lambda b, g, qi: (b, 0, n_g + g)),      # k columns
            pl.BlockSpec((1, S_pad, wb), lambda b, g, qi: (b, 0, 2 * n_g + g)),  # v columns
        ],
        out_specs=pl.BlockSpec((1, tq, wb), lambda b, g, qi: (b, qi, g)),
        compiler_params=_cparams(("parallel", "parallel", "parallel")),
    )(qkv, qkv, qkv)


# ------------------------------------------------------------------------ model pieces
def conv1d_gelu_tm(x_btc, w, b, stride, pad, pos=None):
    """Conv1d + bias + GELU (+ fused positional embedding) via time-major im2col + tiled matmul.

    x_btc: (B, T, Cin) time-major; w: (Cout, Cin, K); b: (Cout,)  ->  (B, Tout, Cout)
    (time-major patches avoid a full-activation NCW<->NWC transpose between conv1 and conv2)."""
    B, T, Cin = x_btc.shape
    Cout, _, Ksz = w.shape
    xp = jnp.pad(x_btc, ((0, 0), (pad, pad), (0, 0)))
    Tout = (T + 2 * pad - Ksz) // stride + 1
    # TODO(synk): patches are still materialized by XLA (3x conv-input HBM traffic, one-time);
    # a tap-as-K-grid-axis BlockSpec formulation would stream the original activation instead.
    cols = [xp[:, k:k + stride * Tout:stride, :] for k in range(Ksz)]      # each (B, Tout, Cin)
    patches = jnp.stack(cols, axis=2).reshape(B * Tout, Ksz * Cin)         # row order (k, c)
    wmat = w.transpose(2, 1, 0).reshape(Ksz * Cin, Cout)                   # matching (k, c) rows
    y = matmul(patches, wmat, b, pos=pos, act="gelu")
    return y.reshape(B, Tout, Cout)


def sinusoids(length, channels, max_timescale=10000.0):
    """Whisper fixed sinusoidal positional embeddings, shape (length, channels)."""
    half = channels // 2
    log_timescale_increment = jnp.log(max_timescale) / (half - 1)
    inv_timescales = jnp.exp(-log_timescale_increment * jnp.arange(half, dtype=jnp.float32))
    scaled_time = jnp.arange(length, dtype=jnp.float32)[:, None] * inv_timescales[None, :]
    return jnp.concatenate([jnp.sin(scaled_time), jnp.cos(scaled_time)], axis=1)


def encoder_layer(x2, p, B, S_pad, S_real, num_heads):
    """HF WhisperEncoderLayer (pre-norm).  x2: (B*S_pad, D) -> (B*S_pad, D)."""
    D = p["o_w"].shape[0]

    # fused LN1 + QKV projection (k_proj's zero bias rides in the fused bias; 1/sqrt(dh) already
    # folded into the q columns of qkv_w/qkv_b)
    qkv = ln_linear(x2, p["ln1_g"], p["ln1_b"], p["qkv_w"], p["qkv_b"])    # (B*S_pad, 3D)

    # attention reads/writes head columns directly -> no XLA head transposes
    a = attention(qkv.reshape(B, S_pad, 3 * D), num_heads, S_real)         # (B, S_pad, D)

    # o_proj with the residual add fused into the matmul epilogue
    x2 = matmul(a.reshape(B * S_pad, D), p["o_w"], p["o_b"], residual=x2)

    # fused LN2 + fc1 + GELU, then fc2 with fused residual add
    h = ln_linear(x2, p["ln2_g"], p["ln2_b"], p["fc1_w"], p["fc1_b"], act="gelu")
    x2 = matmul(h, p["fc2_w"], p["fc2_b"], residual=x2)
    return x2


def whisper_encoder_hidden_states(samples, params, num_heads):
    """Returns the list of hidden states (HF output_hidden_states=True semantics), each trimmed
    back to the real (unpadded) sequence length."""
    compute_dtype = params["conv1_w"].dtype
    d_model = params["conv1_w"].shape[0]
    B, C_mel, T = samples.shape

    # pad frames so the post-conv2 sequence is a multiple of _SEQ_ALIGN (e.g. 1500 -> 1536);
    # zero-padded frames only influence the padded output rows, which are trimmed at the end.
    S_real = (T - 1) // 2 + 1
    S_pad = _round_up(max(S_real, _SEQ_ALIGN), _SEQ_ALIGN)
    T_pad = 2 * S_pad

    x = samples.astype(compute_dtype).transpose(0, 2, 1)                   # (B, T, C_mel)
    if T_pad > T:
        x = jnp.pad(x, ((0, 0), (0, T_pad - T), (0, 0)))

    h = conv1d_gelu_tm(x, params["conv1_w"], params["conv1_b"], stride=1, pad=1)  # (B, T_pad, D)

    # positional embedding (zero-padded) is added inside the conv2 matmul epilogue
    pos = jnp.pad(sinusoids(S_real, d_model),
                  ((0, S_pad - S_real), (0, 0))).astype(compute_dtype)
    h = conv1d_gelu_tm(h, params["conv2_w"], params["conv2_b"],
                       stride=2, pad=1, pos=pos)                           # (B, S_pad, D)

    states = [h[:, :S_real]]                                               # hidden_states[0]
    x2 = h.reshape(B * S_pad, d_model)
    n_layers = len(params["layers"])
    for i in range(n_layers):
        x2 = encoder_layer(x2, params["layers"][i], B, S_pad, S_real, num_heads)
        if i < n_layers - 1:
            states.append(x2.reshape(B, S_pad, d_model)[:, :S_real])
    # final encoder LayerNorm applied before appending the last hidden state (HF behavior)
    xf = layer_norm(x2, params["ln_f_g"], params["ln_f_b"]).reshape(B, S_pad, d_model)
    states.append(xf[:, :S_real])
    return states


def whisper_audio_tower_forward(samples, params, num_heads, select_layer):
    """Mirrors WhisperAudioTower.forward + feature_select."""
    if isinstance(samples, (list, tuple)):
        out = []
        for s in samples:
            hs = whisper_encoder_hidden_states(s[None], params, num_heads)
            out.append(hs[select_layer].astype(s.dtype))
        return out
    hs = whisper_encoder_hidden_states(samples, params, num_heads)
    return hs[select_layer].astype(samples.dtype)


# ------------------------------------------------------------------------------ params
def init_params(key, c_mel, d_model, ffn_dim, n_layers, n_heads, dtype=jnp.bfloat16):
    ks = iter(jax.random.split(key, 8 + 16 * n_layers))
    s = 0.02
    attn_scale = (d_model // n_heads) ** -0.5

    def nrm(shape):
        return (s * jax.random.normal(next(ks), shape, jnp.float32)).astype(dtype)

    params = {
        "conv1_w": nrm((d_model, c_mel, 3)),
        "conv1_b": nrm((d_model,)),
        "conv2_w": nrm((d_model, d_model, 3)),
        "conv2_b": nrm((d_model,)),
        "ln_f_g": jnp.ones((d_model,), dtype),
        "ln_f_b": jnp.zeros((d_model,), dtype),
        "layers": [],
    }
    for _ in range(n_layers):
        q_w, k_w, v_w = nrm((d_model, d_model)), nrm((d_model, d_model)), nrm((d_model, d_model))
        q_b = nrm((d_model,))
        k_b = jnp.zeros((d_model,), dtype)   # Whisper k_proj has no bias
        v_b = nrm((d_model,))
        # fold the 1/sqrt(dh) attention scale into the (frozen) q projection at prep time
        q_w = (q_w.astype(jnp.float32) * attn_scale).astype(dtype)
        q_b = (q_b.astype(jnp.float32) * attn_scale).astype(dtype)
        params["layers"].append(
            {
                "ln1_g": jnp.ones((d_model,), dtype),
                "ln1_b": jnp.zeros((d_model,), dtype),
                "qkv_w": jnp.concatenate([q_w, k_w, v_w], axis=1),   # fused (D, 3D)
                "qkv_b": jnp.concatenate([q_b, k_b, v_b], axis=0),   # fused (3D,)
                "o_w": nrm((d_model, d_model)),
                "o_b": nrm((d_model,)),
                "ln2_g": jnp.ones((d_model,), dtype),
                "ln2_b": jnp.zeros((d_model,), dtype),
                "fc1_w": nrm((d_model, ffn_dim)),
                "fc1_b": nrm((ffn_dim,)),
                "fc2_w": nrm((ffn_dim, d_model)),
                "fc2_b": nrm((d_model,)),
            }
        )
    # TODO(synk): optional v7x-only fp8 weight quantization of the frozen projections not done.
    return params


# -------------------------------------------------------------------------------- main
if __name__ == "__main__":
    # small synthetic Whisper-encoder config (dh=64 so head-group packing matches real Whisper)
    B, C_MEL, T = 2, 8, 32                 # batch, mel bins, input frames (mel layout: B, C_mel, T)
    D_MODEL, N_HEADS, FFN, N_LAYERS = 128, 2, 256, 2
    SELECT_LAYER = -2                      # args.mm_audio_select_layer

    key = jax.random.PRNGKey(0)
    k_params, k_data = jax.random.split(key)
    params = init_params(k_params, C_MEL, D_MODEL, FFN, N_LAYERS, N_HEADS)
    samples = jax.random.normal(k_data, (B, C_MEL, T), jnp.float32)

    fwd = jax.jit(functools.partial(whisper_audio_tower_forward,
                                    num_heads=N_HEADS, select_layer=SELECT_LAYER))
    feats = fwd(samples, params)
    feats = jax.block_until_ready(feats)
    assert feats.shape == (B, T // 2, D_MODEL), feats.shape
    assert feats.dtype == samples.dtype
    print("KERNEL_OK")
</pallas_src>

<mosaic_0001>
module attributes {stable_mosaic.version = 11 : i64} {
  func.func @kernel(%arg0: i32, %arg1: i32, %arg2: i32, %arg3: memref<512x24xbf16, #tpu.memory_space<vmem>>, %arg4: memref<24x128xbf16, #tpu.memory_space<vmem>>, %arg5: memref<1x128xbf16, #tpu.memory_space<vmem>>, %arg6: memref<512x128xbf16, #tpu.memory_space<vmem>>, %arg7: memref<512x128xf32, #tpu.memory_space<vmem>>) attributes {dimension_semantics = [#tpu.dimension_semantics<parallel>, #tpu.dimension_semantics<parallel>, #tpu.dimension_semantics<arbitrary>], iteration_bounds = array<i64: 1, 1, 1>, scalar_prefetch = 0 : i64, scratch_operands = 1 : i64, tpu.core_type = #tpu.core_type<tc>, window_params = [{transform_indices = @transform_0, window_bounds = array<i64: 512, 24>}, {transform_indices = @transform_1, window_bounds = array<i64: 24, 128>}, {transform_indices = @transform_2, window_bounds = array<i64: 1, 128>}, {transform_indices = @transform_3, window_bounds = array<i64: 512, 128>}]} {
    %c0_i32 = arith.constant 0 : i32
    %0 = arith.cmpi eq, %arg2, %c0_i32 : i32
    %1 = arith.extui %0 : i1 to i32
    %c0_i32_0 = arith.constant 0 : i32
    %2 = arith.cmpi ne, %1, %c0_i32_0 : i32
    scf.if %2 {
      %cst_10 = arith.constant 0.000000e+00 : f32
      %12 = vector.broadcast %cst_10 : f32 to vector<512x128xf32>
      %c0_11 = arith.constant 0 : index
      %c0_12 = arith.constant 0 : index
      %13 = vector.load %arg7[%c0_11, %c0_12] : memref<512x128xf32, #tpu.memory_space<vmem>>, vector<512x128xf32>
      tpu.vector_store %arg7[%c0_11, %c0_12], %12 {strides = array<i32>} : memref<512x128xf32, #tpu.memory_space<vmem>>, vector<512x128xf32>,
    } else {
    }
    %c0 = arith.constant 0 : index
    %c0_1 = arith.constant 0 : index
    %3 = vector.load %arg7[%c0, %c0_1] : memref<512x128xf32, #tpu.memory_space<vmem>>, vector<512x128xf32>
    %c0_2 = arith.constant 0 : index
    %c0_3 = arith.constant 0 : index
    %4 = vector.load %arg3[%c0_2, %c0_3] : memref<512x24xbf16, #tpu.memory_space<vmem>>, vector<512x24xbf16>
    %c0_4 = arith.constant 0 : index
    %c0_5 = arith.constant 0 : index
    %5 = vector.load %arg4[%c0_4, %c0_5] : memref<24x128xbf16, #tpu.memory_space<vmem>>, vector<24x128xbf16>
    %cst = arith.constant dense<0.000000e+00> : vector<512x128xf32>
    %6 = tpu.matmul %4, %5, %cst {dimension_numbers = #tpu.dot_dimension_numbers<[1], [0], [0], [1], [0, 0, 1, 1], [], []>} : vector<512x24xbf16>, vector<24x128xbf16>, vector<512x128xf32> -> vector<512x128xf32>
    %7 = arith.addf %3, %6 : vector<512x128xf32>
    %c0_6 = arith.constant 0 : index
    %c0_7 = arith.constant 0 : index
    %8 = vector.load %arg7[%c0_6, %c0_7] : memref<512x128xf32, #tpu.memory_space<vmem>>, vector<512x128xf32>
    tpu.vector_store %arg7[%c0_6, %c0_7], %7 {strides = array<i32>} : memref<512x128xf32, #tpu.memory_space<vmem>>, vector<512x128xf32>,
    %c0_i32_8 = arith.constant 0 : i32
    %9 = arith.cmpi eq, %arg2, %c0_i32_8 : i32
    %10 = arith.extui %9 : i1 to i32
    %c0_i32_9 = arith.constant 0 : i32
    %11 = arith.cmpi ne, %10, %c0_i32_9 : i32
    scf.if %11 {
      %c0_10 = arith.constant 0 : index
      %c0_11 = arith.constant 0 : index
      %12 = vector.load %arg7[%c0_10, %c0_11] : memref<512x128xf32, #tpu.memory_space<vmem>>, vector<512x128xf32>
      %c0_12 = arith.constant 0 : index
      %c0_13 = arith.constant 0 : index
      %13 = vector.load %arg5[%c0_12, %c0_13] : memref<1x128xbf16, #tpu.memory_space<vmem>>, vector<1x128xbf16>
      %14 = arith.extf %13 : vector<1x128xbf16> to vector<1x128xf32>
      %15 = vector.broadcast %14 : vector<1x128xf32> to vector<512x128xf32>
      %16 = arith.addf %12, %15 : vector<512x128xf32>
      %cst_14 = arith.constant 5.000000e-01 : f32
      %17 = vector.broadcast %cst_14 : f32 to vector<512x128xf32>
      %18 = arith.mulf %17, %16 : vector<512x128xf32>
      %cst_15 = arith.constant 4.471500e-02 : f32
      %19 = vector.broadcast %cst_15 : f32 to vector<512x128xf32>
      %20 = arith.mulf %19, %16 : vector<512x128xf32>
      %21 = arith.mulf %20, %16 : vector<512x128xf32>
      %22 = arith.mulf %21, %16 : vector<512x128xf32>
      %23 = arith.addf %16, %22 : vector<512x128xf32>
      %cst_16 = arith.constant 0.797884583 : f32
      %24 = vector.broadcast %cst_16 : f32 to vector<512x128xf32>
      %25 = arith.mulf %24, %23 : vector<512x128xf32>
      %26 = math.tanh %25 : vector<512x128xf32>
      %cst_17 = arith.constant 1.000000e+00 : f32
      %27 = vector.broadcast %cst_17 : f32 to vector<512x128xf32>
      %28 = arith.addf %27, %26 : vector<512x128xf32>
      %29 = arith.mulf %18, %28 : vector<512x128xf32>
      %30 = arith.truncf %29 : vector<512x128xf32> to vector<512x128xbf16>
      %c0_18 = arith.constant 0 : index
      %c0_19 = arith.constant 0 : index
      %31 = vector.load %arg6[%c0_18, %c0_19] : memref<512x128xbf16, #tpu.memory_space<vmem>>, vector<512x128xbf16>
      tpu.vector_store %arg6[%c0_18, %c0_19], %30 {strides = array<i32>} : memref<512x128xbf16, #tpu.memory_space<vmem>>, vector<512x128xbf16>,
    } else {
    }
    return
  }
  func.func @transform_0(%arg0: i32, %arg1: i32, %arg2: i32) -> (i32, i32) {
    %c0_i32 = arith.constant 0 : i32
    return %arg0, %arg2 : i32, i32
  }
  func.func @transform_1(%arg0: i32, %arg1: i32, %arg2: i32) -> (i32, i32) {
    %c0_i32 = arith.constant 0 : i32
    return %arg2, %arg1 : i32, i32
  }
  func.func @transform_2(%arg0: i32, %arg1: i32, %arg2: i32) -> (i32, i32) {
    %c0_i32 = arith.constant 0 : i32
    %c0_i32_0 = arith.constant 0 : i32
    return %c0_i32, %arg1 : i32, i32
  }
  func.func @transform_3(%arg0: i32, %arg1: i32, %arg2: i32) -> (i32, i32) {
    %c0_i32 = arith.constant 0 : i32
    return %arg0, %arg1 : i32, i32
  }
}

module attributes {stable_mosaic.version = 11 : i64} {
  func.func @kernel(%arg0: i32, %arg1: i32, %arg2: i32, %arg3: memref<128x384xbf16, #tpu.memory_space<vmem>>, %arg4: memref<384x128xbf16, #tpu.memory_space<vmem>>, %arg5: memref<1x128xbf16, #tpu.memory_space<vmem>>, %arg6: memref<128x128xbf16, #tpu.memory_space<vmem>>, %arg7: memref<128x128xbf16, #tpu.memory_space<vmem>>, %arg8: memref<128x128xf32, #tpu.memory_space<vmem>>) attributes {dimension_semantics = [#tpu.dimension_semantics<parallel>, #tpu.dimension_semantics<parallel>, #tpu.dimension_semantics<arbitrary>], iteration_bounds = array<i64: 2, 1, 1>, scalar_prefetch = 0 : i64, scratch_operands = 1 : i64, tpu.core_type = #tpu.core_type<tc>, window_params = [{transform_indices = @transform_0, window_bounds = array<i64: 128, 384>}, {transform_indices = @transform_1, window_bounds = array<i64: 384, 128>}, {transform_indices = @transform_2, window_bounds = array<i64: 1, 128>}, {transform_indices = @transform_3, window_bounds = array<i64: 128, 128>}, {transform_indices = @transform_4, window_bounds = array<i64: 128, 128>}]} {
    %c0_i32 = arith.constant 0 : i32
    %0 = arith.cmpi eq, %arg2, %c0_i32 : i32
    %1 = arith.extui %0 : i1 to i32
    %c0_i32_0 = arith.constant 0 : i32
    %2 = arith.cmpi ne, %1, %c0_i32_0 : i32
    scf.if %2 {
      %cst_10 = arith.constant 0.000000e+00 : f32
      %12 = vector.broadcast %cst_10 : f32 to vector<128x128xf32>
      %c0_11 = arith.constant 0 : index
      %c0_12 = arith.constant 0 : index
      %13 = vector.load %arg8[%c0_11, %c0_12] : memref<128x128xf32, #tpu.memory_space<vmem>>, vector<128x128xf32>
      tpu.vector_store %arg8[%c0_11, %c0_12], %12 {strides = array<i32>} : memref<128x128xf32, #tpu.memory_space<vmem>>, vector<128x128xf32>,
    } else {
    }
    %c0 = arith.constant 0 : index
    %c0_1 = arith.constant 0 : index
    %3 = vector.load %arg8[%c0, %c0_1] : memref<128x128xf32, #tpu.memory_space<vmem>>, vector<128x128xf32>
    %c0_2 = arith.constant 0 : index
    %c0_3 = arith.constant 0 : index
    %4 = vector.load %arg3[%c0_2, %c0_3] : memref<128x384xbf16, #tpu.memory_space<vmem>>, vector<128x384xbf16>
    %c0_4 = arith.constant 0 : index
    %c0_5 = arith.constant 0 : index
    %5 = vector.load %arg4[%c0_4, %c0_5] : memref<384x128xbf16, #tpu.memory_space<vmem>>, vector<384x128xbf16>
    %cst = arith.constant dense<0.000000e+00> : vector<128x128xf32>
    %6 = tpu.matmul %4, %5, %cst {dimension_numbers = #tpu.dot_dimension_numbers<[1], [0], [0], [1], [0, 0, 1, 1], [], []>} : vector<128x384xbf16>, vector<384x128xbf16>, vector<128x128xf32> -> vector<128x128xf32>
    %7 = arith.addf %3, %6 : vector<128x128xf32>
    %c0_6 = arith.constant 0 : index
    %c0_7 = arith.constant 0 : index
    %8 = vector.load %arg8[%c0_6, %c0_7] : memref<128x128xf32, #tpu.memory_space<vmem>>, vector<128x128xf32>
    tpu.vector_store %arg8[%c0_6, %c0_7], %7 {strides = array<i32>} : memref<128x128xf32, #tpu.memory_space<vmem>>, vector<128x128xf32>,
    %c0_i32_8 = arith.constant 0 : i32
    %9 = arith.cmpi eq, %arg2, %c0_i32_8 : i32
    %10 = arith.extui %9 : i1 to i32
    %c0_i32_9 = arith.constant 0 : i32
    %11 = arith.cmpi ne, %10, %c0_i32_9 : i32
    scf.if %11 {
      %c0_10 = arith.constant 0 : index
      %c0_11 = arith.constant 0 : index
      %12 = vector.load %arg8[%c0_10, %c0_11] : memref<128x128xf32, #tpu.memory_space<vmem>>, vector<128x128xf32>
      %c0_12 = arith.constant 0 : index
      %c0_13 = arith.constant 0 : index
      %13 = vector.load %arg5[%c0_12, %c0_13] : memref<1x128xbf16, #tpu.memory_space<vmem>>, vector<1x128xbf16>
      %14 = arith.extf %13 : vector<1x128xbf16> to vector<1x128xf32>
      %15 = vector.broadcast %14 : vector<1x128xf32> to vector<128x128xf32>
      %16 = arith.addf %12, %15 : vector<128x128xf32>
      %cst_14 = arith.constant 5.000000e-01 : f32
      %17 = vector.broadcast %cst_14 : f32 to vector<128x128xf32>
      %18 = arith.mulf %17, %16 : vector<128x128xf32>
      %cst_15 = arith.constant 4.471500e-02 : f32
      %19 = vector.broadcast %cst_15 : f32 to vector<128x128xf32>
      %20 = arith.mulf %19, %16 : vector<128x128xf32>
      %21 = arith.mulf %20, %16 : vector<128x128xf32>
      %22 = arith.mulf %21, %16 : vector<128x128xf32>
      %23 = arith.addf %16, %22 : vector<128x128xf32>
      %cst_16 = arith.constant 0.797884583 : f32
      %24 = vector.broadcast %cst_16 : f32 to vector<128x128xf32>
      %25 = arith.mulf %24, %23 : vector<128x128xf32>
      %26 = math.tanh %25 : vector<128x128xf32>
      %cst_17 = arith.constant 1.000000e+00 : f32
      %27 = vector.broadcast %cst_17 : f32 to vector<128x128xf32>
      %28 = arith.addf %27, %26 : vector<128x128xf32>
      %29 = arith.mulf %18, %28 : vector<128x128xf32>
      %c0_18 = arith.constant 0 : index
      %c0_19 = arith.constant 0 : index
      %30 = vector.load %arg6[%c0_18, %c0_19] : memref<128x128xbf16, #tpu.memory_space<vmem>>, vector<128x128xbf16>
      %31 = arith.extf %30 : vector<128x128xbf16> to vector<128x128xf32>
      %32 = arith.addf %29, %31 : vector<128x128xf32>
      %33 = arith.truncf %32 : vector<128x128xf32> to vector<128x128xbf16>
      %c0_20 = arith.constant 0 : index
      %c0_21 = arith.constant 0 : index
      %34 = vector.load %arg7[%c0_20, %c0_21] : memref<128x128xbf16, #tpu.memory_space<vmem>>, vector<128x128xbf16>
      tpu.vector_store %arg7[%c0_20, %c0_21], %33 {strides = array<i32>} : memref<128x128xbf16, #tpu.memory_space<vmem>>, vector<128x128xbf16>,
    } else {
    }
    return
  }
  func.func @transform_0(%arg0: i32, %arg1: i32, %arg2: i32) -> (i32, i32) {
    %c0_i32 = arith.constant 0 : i32
    return %arg0, %arg2 : i32, i32
  }
  func.func @transform_1(%arg0: i32, %arg1: i32, %arg2: i32) -> (i32, i32) {
    %c0_i32 = arith.constant 0 : i32
    return %arg2, %arg1 : i32, i32
  }
  func.func @transform_2(%arg0: i32, %arg1: i32, %arg2: i32) -> (i32, i32) {
    %c0_i32 = arith.constant 0 : i32
    %c0_i32_0 = arith.constant 0 : i32
    return %c0_i32, %arg1 : i32, i32
  }
  func.func @transform_3(%arg0: i32, %arg1: i32, %arg2: i32) -> (i32, i32) {
    %c1_i32 = arith.constant 1 : i32
    %c0_i32 = arith.constant 0 : i32
    %0 = arith.cmpi eq, %c1_i32, %c0_i32 : i32
    %c1_i32_0 = arith.constant 1 : i32
    %1 = arith.select %0, %c1_i32_0, %c1_i32 : i32
    %2 = arith.remsi %arg0, %1 : i32
    %c0_i32_1 = arith.constant 0 : i32
    %3 = arith.cmpi ne, %2, %c0_i32_1 : i32
    %c0_i32_2 = arith.constant 0 : i32
    %4 = arith.cmpi slt, %2, %c0_i32_2 : i32
    %c0_i32_3 = arith.constant 0 : i32
    %5 = arith.cmpi slt, %1, %c0_i32_3 : i32
    %6 = arith.xori %4, %5 : i1
    %7 = arith.andi %6, %3 : i1
    %8 = arith.addi %2, %1 : i32
    %9 = arith.select %7, %8, %2 : i32
    %c0_i32_4 = arith.constant 0 : i32
    return %9, %arg1 : i32, i32
  }
  func.func @transform_4(%arg0: i32, %arg1: i32, %arg2: i32) -> (i32, i32) {
    %c0_i32 = arith.constant 0 : i32
    return %arg0, %arg1 : i32, i32
  }
}

module attributes {stable_mosaic.version = 11 : i64} {
  func.func @_ln_matmul_kernel(%arg0: i32, %arg1: i32, %arg2: memref<256x128xbf16, #tpu.memory_space<vmem>>, %arg3: memref<1x128xbf16, #tpu.memory_space<vmem>>, %arg4: memref<1x128xbf16, #tpu.memory_space<vmem>>, %arg5: memref<128x384xbf16, #tpu.memory_space<vmem>>, %arg6: memref<1x384xbf16, #tpu.memory_space<vmem>>, %arg7: memref<256x384xbf16, #tpu.memory_space<vmem>>, %arg8: memref<256x128xbf16, #tpu.memory_space<vmem>>) attributes {dimension_semantics = [#tpu.dimension_semantics<parallel>, #tpu.dimension_semantics<arbitrary>], iteration_bounds = array<i64: 1, 1>, scalar_prefetch = 0 : i64, scratch_operands = 1 : i64, tpu.core_type = #tpu.core_type<tc>, window_params = [{transform_indices = @transform_0, window_bounds = array<i64: 256, 128>}, {pipeline_mode = #tpu.pipeline_mode<synchronous>, transform_indices = @transform_1, window_bounds = array<i64: 1, 128>}, {pipeline_mode = #tpu.pipeline_mode<synchronous>, transform_indices = @transform_2, window_bounds = array<i64: 1, 128>}, {transform_indices = @transform_3, window_bounds = array<i64: 128, 384>}, {transform_indices = @transform_4, window_bounds = array<i64: 1, 384>}, {transform_indices = @transform_5, window_bounds = array<i64: 256, 384>}]} {
    %c0_i32 = arith.constant 0 : i32
    %0 = arith.cmpi eq, %arg1, %c0_i32 : i32
    %1 = arith.extui %0 : i1 to i32
    %c0_i32_0 = arith.constant 0 : i32
    %2 = arith.cmpi ne, %1, %c0_i32_0 : i32
    scf.if %2 {
      %c0_8 = arith.constant 0 : index
      %c0_9 = arith.constant 0 : index
      %12 = vector.load %arg2[%c0_8, %c0_9] : memref<256x128xbf16, #tpu.memory_space<vmem>>, vector<256x128xbf16>
      %13 = arith.extf %12 : vector<256x128xbf16> to vector<256x128xf32>
      %cst_10 = arith.constant dense<0.000000e+00> : vector<256xf32>
      %14 = vector.multi_reduction <add>, %13, %cst_10 [1] : vector<256x128xf32> to vector<256xf32>
      %15 = vector.shape_cast %14 : vector<256xf32> to vector<256x1xf32>
      %cst_11 = arith.constant 1.280000e+02 : f32
      %16 = vector.broadcast %cst_11 : f32 to vector<256x1xf32>
      %17 = arith.divf %15, %16 : vector<256x1xf32>
      %18 = vector.broadcast %17 : vector<256x1xf32> to vector<256x128xf32>
      %19 = arith.subf %13, %18 : vector<256x128xf32>
      %20 = arith.mulf %19, %19 : vector<256x128xf32>
      %cst_12 = arith.constant dense<0.000000e+00> : vector<256xf32>
      %21 = vector.multi_reduction <add>, %20, %cst_12 [1] : vector<256x128xf32> to vector<256xf32>
      %22 = vector.shape_cast %21 : vector<256xf32> to vector<256x1xf32>
      %cst_13 = arith.constant 1.280000e+02 : f32
      %23 = vector.broadcast %cst_13 : f32 to vector<256x1xf32>
      %24 = arith.divf %22, %23 : vector<256x1xf32>
      %25 = vector.broadcast %17 : vector<256x1xf32> to vector<256x128xf32>
      %26 = arith.subf %13, %25 : vector<256x128xf32>
      %cst_14 = arith.constant 9.99999974E-6 : f32
      %27 = vector.broadcast %cst_14 : f32 to vector<256x1xf32>
      %28 = arith.addf %24, %27 : vector<256x1xf32>
      %29 = math.rsqrt %28 : vector<256x1xf32>
      %30 = vector.broadcast %29 : vector<256x1xf32> to vector<256x128xf32>
      %31 = arith.mulf %26, %30 : vector<256x128xf32>
      %c0_15 = arith.constant 0 : index
      %c0_16 = arith.constant 0 : index
      %32 = vector.load %arg3[%c0_15, %c0_16] : memref<1x128xbf16, #tpu.memory_space<vmem>>, vector<1x128xbf16>
      %33 = arith.extf %32 : vector<1x128xbf16> to vector<1x128xf32>
      %34 = vector.broadcast %33 : vector<1x128xf32> to vector<256x128xf32>
      %35 = arith.mulf %31, %34 : vector<256x128xf32>
      %c0_17 = arith.constant 0 : index
      %c0_18 = arith.constant 0 : index
      %36 = vector.load %arg4[%c0_17, %c0_18] : memref<1x128xbf16, #tpu.memory_space<vmem>>, vector<1x128xbf16>
      %37 = arith.extf %36 : vector<1x128xbf16> to vector<1x128xf32>
      %38 = vector.broadcast %37 : vector<1x128xf32> to vector<256x128xf32>
      %39 = arith.addf %35, %38 : vector<256x128xf32>
      %40 = arith.truncf %39 : vector<256x128xf32> to vector<256x128xbf16>
      %c0_19 = arith.constant 0 : index
      %c0_20 = arith.constant 0 : index
      %41 = vector.load %arg8[%c0_19, %c0_20] : memref<256x128xbf16, #tpu.memory_space<vmem>>, vector<256x128xbf16>
      tpu.vector_store %arg8[%c0_19, %c0_20], %40 {strides = array<i32>} : memref<256x128xbf16, #tpu.memory_space<vmem>>, vector<256x128xbf16>,
    } else {
    }
    %c0 = arith.constant 0 : index
    %c0_1 = arith.constant 0 : index
    %3 = vector.load %arg8[%c0, %c0_1] : memref<256x128xbf16, #tpu.memory_space<vmem>>, vector<256x128xbf16>
    %c0_2 = arith.constant 0 : index
    %c0_3 = arith.constant 0 : index
    %4 = vector.load %arg5[%c0_2, %c0_3] : memref<128x384xbf16, #tpu.memory_space<vmem>>, vector<128x384xbf16>
    %cst = arith.constant dense<0.000000e+00> : vector<256x384xf32>
    %5 = tpu.matmul %3, %4, %cst {dimension_numbers = #tpu.dot_dimension_numbers<[1], [0], [0], [1], [0, 0, 1, 1], [], []>} : vector<256x128xbf16>, vector<128x384xbf16>, vector<256x384xf32> -> vector<256x384xf32>
    %c0_4 = arith.constant 0 : index
    %c0_5 = arith.constant 0 : index
    %6 = vector.load %arg6[%c0_4, %c0_5] : memref<1x384xbf16, #tpu.memory_space<vmem>>, vector<1x384xbf16>
    %7 = arith.extf %6 : vector<1x384xbf16> to vector<1x384xf32>
    %8 = vector.broadcast %7 : vector<1x384xf32> to vector<256x384xf32>
    %9 = arith.addf %5, %8 : vector<256x384xf32>
    %10 = arith.truncf %9 : vector<256x384xf32> to vector<256x384xbf16>
    %c0_6 = arith.constant 0 : index
    %c0_7 = arith.constant 0 : index
    %11 = vector.load %arg7[%c0_6, %c0_7] : memref<256x384xbf16, #tpu.memory_space<vmem>>, vector<256x384xbf16>
    tpu.vector_store %arg7[%c0_6, %c0_7], %10 {strides = array<i32>} : memref<256x384xbf16, #tpu.memory_space<vmem>>, vector<256x384xbf16>,
    return
  }
  func.func @transform_0(%arg0: i32, %arg1: i32) -> (i32, i32) {
    %c0_i32 = arith.constant 0 : i32
    %c0_i32_0 = arith.constant 0 : i32
    return %arg0, %c0_i32 : i32, i32
  }
  func.func @transform_1(%arg0: i32, %arg1: i32) -> (i32, i32) {
    %c0_i32 = arith.constant 0 : i32
    %c0_i32_0 = arith.constant 0 : i32
    %c0_i32_1 = arith.constant 0 : i32
    return %c0_i32, %c0_i32_0 : i32, i32
  }
  func.func @transform_2(%arg0: i32, %arg1: i32) -> (i32, i32) {
    %c0_i32 = arith.constant 0 : i32
    %c0_i32_0 = arith.constant 0 : i32
    %c0_i32_1 = arith.constant 0 : i32
    return %c0_i32, %c0_i32_0 : i32, i32
  }
  func.func @transform_3(%arg0: i32, %arg1: i32) -> (i32, i32) {
    %c0_i32 = arith.constant 0 : i32
    %c0_i32_0 = arith.constant 0 : i32
    return %c0_i32, %arg1 : i32, i32
  }
  func.func @transform_4(%arg0: i32, %arg1: i32) -> (i32, i32) {
    %c0_i32 = arith.constant 0 : i32
    %c0_i32_0 = arith.constant 0 : i32
    return %c0_i32, %arg1 : i32, i32
  }
  func.func @transform_5(%arg0: i32, %arg1: i32) -> (i32, i32) {
    %c0_i32 = arith.constant 0 : i32
    return %arg0, %arg1 : i32, i32
  }
}

module attributes {stable_mosaic.version = 11 : i64} {
  func.func @_attention_kernel(%arg0: i32, %arg1: i32, %arg2: i32, %arg3: memref<1x128x128xbf16, #tpu.memory_space<vmem>>, %arg4: memref<1x128x128xbf16, #tpu.memory_space<vmem>>, %arg5: memref<1x128x128xbf16, #tpu.memory_space<vmem>>, %arg6: memref<1x128x128xbf16, #tpu.memory_space<vmem>>) attributes {dimension_semantics = [#tpu.dimension_semantics<parallel>, #tpu.dimension_semantics<parallel>, #tpu.dimension_semantics<parallel>], iteration_bounds = array<i64: 2, 1, 1>, scalar_prefetch = 0 : i64, scratch_operands = 0 : i64, tpu.core_type = #tpu.core_type<tc>, window_params = [{transform_indices = @transform_0, window_bounds = array<i64: 1, 128, 128>}, {transform_indices = @transform_1, window_bounds = array<i64: 1, 128, 128>}, {transform_indices = @transform_2, window_bounds = array<i64: 1, 128, 128>}, {transform_indices = @transform_3, window_bounds = array<i64: 1, 128, 128>}]} {
    %c0 = arith.constant 0 : index
    %c0_0 = arith.constant 0 : index
    %c0_1 = arith.constant 0 : index
    %0 = vector.load %arg3[%c0, %c0_0, %c0_1] : memref<1x128x128xbf16, #tpu.memory_space<vmem>>, vector<1x128x128xbf16>
    %1 = vector.shape_cast %0 : vector<1x128x128xbf16> to vector<128x128xbf16>
    %c0_2 = arith.constant 0 : index
    %c0_3 = arith.constant 0 : index
    %c0_4 = arith.constant 0 : index
    %2 = vector.load %arg4[%c0_2, %c0_3, %c0_4] : memref<1x128x128xbf16, #tpu.memory_space<vmem>>, vector<1x128x128xbf16>
    %3 = vector.shape_cast %2 : vector<1x128x128xbf16> to vector<128x128xbf16>
    %c0_5 = arith.constant 0 : index
    %c0_6 = arith.constant 0 : index
    %c0_7 = arith.constant 0 : index
    %4 = vector.load %arg5[%c0_5, %c0_6, %c0_7] : memref<1x128x128xbf16, #tpu.memory_space<vmem>>, vector<1x128x128xbf16>
    %5 = vector.shape_cast %4 : vector<1x128x128xbf16> to vector<128x128xbf16>
    %6 = tpu.iota {dimensions = array<i32: 1>} : vector<128x128xi32>
    %c16_i32 = arith.constant 16 : i32
    %7 = vector.broadcast %c16_i32 : i32 to vector<128x128xi32>
    %8 = arith.cmpi slt, %6, %7 : vector<128x128xi32>
    %9 = vector.extract_strided_slice %1 {offsets = [0, 0], sizes = [128, 64], strides = [1, 1]} : vector<128x128xbf16> to vector<128x64xbf16>
    %10 = vector.extract_strided_slice %3 {offsets = [0, 0], sizes = [128, 64], strides = [1, 1]} : vector<128x128xbf16> to vector<128x64xbf16>
    %cst = arith.constant dense<0.000000e+00> : vector<128x128xf32>
    %11 = tpu.matmul %9, %10, %cst {dimension_numbers = #tpu.dot_dimension_numbers<[1], [1], [0], [0], [0, 0, 1, 0], [], []>} : vector<128x64xbf16>, vector<128x64xbf16>, vector<128x128xf32> -> vector<128x128xf32>
    %cst_8 = arith.constant -1.000000e+30 : f32
    %12 = vector.broadcast %cst_8 : f32 to vector<128x128xf32>
    %13 = arith.select %8, %11, %12 : vector<128x128xi1>, vector<128x128xf32>
    %cst_9 = arith.constant dense<0xFF800000> : vector<128xf32>
    %14 = vector.multi_reduction <maximumf>, %13, %cst_9 [1] : vector<128x128xf32> to vector<128xf32>
    %15 = vector.shape_cast %14 : vector<128xf32> to vector<128x1xf32>
    %16 = vector.broadcast %15 : vector<128x1xf32> to vector<128x128xf32>
    %17 = arith.subf %13, %16 : vector<128x128xf32>
    %18 = math.exp %17 : vector<128x128xf32>
    %cst_10 = arith.constant dense<0.000000e+00> : vector<128xf32>
    %19 = vector.multi_reduction <add>, %18, %cst_10 [1] : vector<128x128xf32> to vector<128xf32>
    %20 = vector.shape_cast %19 : vector<128xf32> to vector<128x1xf32>
    %21 = arith.truncf %18 : vector<128x128xf32> to vector<128x128xbf16>
    %22 = vector.extract_strided_slice %5 {offsets = [0, 0], sizes = [128, 64], strides = [1, 1]} : vector<128x128xbf16> to vector<128x64xbf16>
    %cst_11 = arith.constant dense<0.000000e+00> : vector<128x64xf32>
    %23 = tpu.matmul %21, %22, %cst_11 {dimension_numbers = #tpu.dot_dimension_numbers<[1], [0], [0], [1], [0, 0, 1, 1], [], []>} : vector<128x128xbf16>, vector<128x64xbf16>, vector<128x64xf32> -> vector<128x64xf32>
    %24 = tpu.reciprocal %20 {approx = true} : vector<128x1xf32> -> vector<128x1xf32>
    %25 = vector.broadcast %24 : vector<128x1xf32> to vector<128x64xf32>
    %26 = arith.mulf %23, %25 : vector<128x64xf32>
    %27 = vector.extract_strided_slice %1 {offsets = [0, 64], sizes = [128, 64], strides = [1, 1]} : vector<128x128xbf16> to vector<128x64xbf16>
    %28 = vector.extract_strided_slice %3 {offsets = [0, 64], sizes = [128, 64], strides = [1, 1]} : vector<128x128xbf16> to vector<128x64xbf16>
    %cst_12 = arith.constant dense<0.000000e+00> : vector<128x128xf32>
    %29 = tpu.matmul %27, %28, %cst_12 {dimension_numbers = #tpu.dot_dimension_numbers<[1], [1], [0], [0], [0, 0, 1, 0], [], []>} : vector<128x64xbf16>, vector<128x64xbf16>, vector<128x128xf32> -> vector<128x128xf32>
    %cst_13 = arith.constant -1.000000e+30 : f32
    %30 = vector.broadcast %cst_13 : f32 to vector<128x128xf32>
    %31 = arith.select %8, %29, %30 : vector<128x128xi1>, vector<128x128xf32>
    %cst_14 = arith.constant dense<0xFF800000> : vector<128xf32>
    %32 = vector.multi_reduction <maximumf>, %31, %cst_14 [1] : vector<128x128xf32> to vector<128xf32>
    %33 = vector.shape_cast %32 : vector<128xf32> to vector<128x1xf32>
    %34 = vector.broadcast %33 : vector<128x1xf32> to vector<128x128xf32>
    %35 = arith.subf %31, %34 : vector<128x128xf32>
    %36 = math.exp %35 : vector<128x128xf32>
    %cst_15 = arith.constant dense<0.000000e+00> : vector<128xf32>
    %37 = vector.multi_reduction <add>, %36, %cst_15 [1] : vector<128x128xf32> to vector<128xf32>
    %38 = vector.shape_cast %37 : vector<128xf32> to vector<128x1xf32>
    %39 = arith.truncf %36 : vector<128x128xf32> to vector<128x128xbf16>
    %40 = vector.extract_strided_slice %5 {offsets = [0, 64], sizes = [128, 64], strides = [1, 1]} : vector<128x128xbf16> to vector<128x64xbf16>
    %cst_16 = arith.constant dense<0.000000e+00> : vector<128x64xf32>
    %41 = tpu.matmul %39, %40, %cst_16 {dimension_numbers = #tpu.dot_dimension_numbers<[1], [0], [0], [1], [0, 0, 1, 1], [], []>} : vector<128x128xbf16>, vector<128x64xbf16>, vector<128x64xf32> -> vector<128x64xf32>
    %42 = tpu.reciprocal %38 {approx = true} : vector<128x1xf32> -> vector<128x1xf32>
    %43 = vector.broadcast %42 : vector<128x1xf32> to vector<128x64xf32>
    %44 = arith.mulf %41, %43 : vector<128x64xf32>
    %45 = tpu.concatenate %26, %44 in 1 : vector<128x64xf32>, vector<128x64xf32> -> vector<128x128xf32>
    %46 = arith.truncf %45 : vector<128x128xf32> to vector<128x128xbf16>
    %c0_17 = arith.constant 0 : index
    %c0_18 = arith.constant 0 : index
    %c0_19 = arith.constant 0 : index
    %47 = vector.load %arg6[%c0_17, %c0_18, %c0_19] : memref<1x128x128xbf16, #tpu.memory_space<vmem>>, vector<1x128x128xbf16>
    %48 = vector.shape_cast %47 : vector<1x128x128xbf16> to vector<128x128xbf16>
    %49 = vector.shape_cast %46 : vector<128x128xbf16> to vector<1x128x128xbf16>
    tpu.vector_store %arg6[%c0_17, %c0_18, %c0_19], %49 {strides = array<i32>} : memref<1x128x128xbf16, #tpu.memory_space<vmem>>, vector<1x128x128xbf16>,
    return
  }
  func.func @transform_0(%arg0: i32, %arg1: i32, %arg2: i32) -> (i32, i32, i32) {
    %c0_i32 = arith.constant 0 : i32
    return %arg0, %arg2, %arg1 : i32, i32, i32
  }
  func.func @transform_1(%arg0: i32, %arg1: i32, %arg2: i32) -> (i32, i32, i32) {
    %c1_i32 = arith.constant 1 : i32
    %0 = arith.addi %c1_i32, %arg1 : i32
    %c0_i32 = arith.constant 0 : i32
    %c0_i32_0 = arith.constant 0 : i32
    return %arg0, %c0_i32, %0 : i32, i32, i32
  }
  func.func @transform_2(%arg0: i32, %arg1: i32, %arg2: i32) -> (i32, i32, i32) {
    %c2_i32 = arith.constant 2 : i32
    %0 = arith.addi %c2_i32, %arg1 : i32
    %c0_i32 = arith.constant 0 : i32
    %c0_i32_0 = arith.constant 0 : i32
    return %arg0, %c0_i32, %0 : i32, i32, i32
  }
  func.func @transform_3(%arg0: i32, %arg1: i32, %arg2: i32) -> (i32, i32, i32) {
    %c0_i32 = arith.constant 0 : i32
    return %arg0, %arg2, %arg1 : i32, i32, i32
  }
}

module attributes {stable_mosaic.version = 11 : i64} {
  func.func @kernel(%arg0: i32, %arg1: i32, %arg2: i32, %arg3: memref<256x128xbf16, #tpu.memory_space<vmem>>, %arg4: memref<128x128xbf16, #tpu.memory_space<vmem>>, %arg5: memref<1x128xbf16, #tpu.memory_space<vmem>>, %arg6: memref<256x128xbf16, #tpu.memory_space<vmem>>, %arg7: memref<256x128xbf16, #tpu.memory_space<vmem>>, %arg8: memref<256x128xf32, #tpu.memory_space<vmem>>) attributes {dimension_semantics = [#tpu.dimension_semantics<parallel>, #tpu.dimension_semantics<parallel>, #tpu.dimension_semantics<arbitrary>], iteration_bounds = array<i64: 1, 1, 1>, scalar_prefetch = 0 : i64, scratch_operands = 1 : i64, tpu.core_type = #tpu.core_type<tc>, window_params = [{transform_indices = @transform_0, window_bounds = array<i64: 256, 128>}, {transform_indices = @transform_1, window_bounds = array<i64: 128, 128>}, {transform_indices = @transform_2, window_bounds = array<i64: 1, 128>}, {transform_indices = @transform_3, window_bounds = array<i64: 256, 128>}, {transform_indices = @transform_4, window_bounds = array<i64: 256, 128>}]} {
    %c0_i32 = arith.constant 0 : i32
    %0 = arith.cmpi eq, %arg2, %c0_i32 : i32
    %1 = arith.extui %0 : i1 to i32
    %c0_i32_0 = arith.constant 0 : i32
    %2 = arith.cmpi ne, %1, %c0_i32_0 : i32
    scf.if %2 {
      %cst_10 = arith.constant 0.000000e+00 : f32
      %12 = vector.broadcast %cst_10 : f32 to vector<256x128xf32>
      %c0_11 = arith.constant 0 : index
      %c0_12 = arith.constant 0 : index
      %13 = vector.load %arg8[%c0_11, %c0_12] : memref<256x128xf32, #tpu.memory_space<vmem>>, vector<256x128xf32>
      tpu.vector_store %arg8[%c0_11, %c0_12], %12 {strides = array<i32>} : memref<256x128xf32, #tpu.memory_space<vmem>>, vector<256x128xf32>,
    } else {
    }
    %c0 = arith.constant 0 : index
    %c0_1 = arith.constant 0 : index
    %3 = vector.load %arg8[%c0, %c0_1] : memref<256x128xf32, #tpu.memory_space<vmem>>, vector<256x128xf32>
    %c0_2 = arith.constant 0 : index
    %c0_3 = arith.constant 0 : index
    %4 = vector.load %arg3[%c0_2, %c0_3] : memref<256x128xbf16, #tpu.memory_space<vmem>>, vector<256x128xbf16>
    %c0_4 = arith.constant 0 : index
    %c0_5 = arith.constant 0 : index
    %5 = vector.load %arg4[%c0_4, %c0_5] : memref<128x128xbf16, #tpu.memory_space<vmem>>, vector<128x128xbf16>
    %cst = arith.constant dense<0.000000e+00> : vector<256x128xf32>
    %6 = tpu.matmul %4, %5, %cst {dimension_numbers = #tpu.dot_dimension_numbers<[1], [0], [0], [1], [0, 0, 1, 1], [], []>} : vector<256x128xbf16>, vector<128x128xbf16>, vector<256x128xf32> -> vector<256x128xf32>
    %7 = arith.addf %3, %6 : vector<256x128xf32>
    %c0_6 = arith.constant 0 : index
    %c0_7 = arith.constant 0 : index
    %8 = vector.load %arg8[%c0_6, %c0_7] : memref<256x128xf32, #tpu.memory_space<vmem>>, vector<256x128xf32>
    tpu.vector_store %arg8[%c0_6, %c0_7], %7 {strides = array<i32>} : memref<256x128xf32, #tpu.memory_space<vmem>>, vector<256x128xf32>,
    %c0_i32_8 = arith.constant 0 : i32
    %9 = arith.cmpi eq, %arg2, %c0_i32_8 : i32
    %10 = arith.extui %9 : i1 to i32
    %c0_i32_9 = arith.constant 0 : i32
    %11 = arith.cmpi ne, %10, %c0_i32_9 : i32
    scf.if %11 {
      %c0_10 = arith.constant 0 : index
      %c0_11 = arith.constant 0 : index
      %12 = vector.load %arg8[%c0_10, %c0_11] : memref<256x128xf32, #tpu.memory_space<vmem>>, vector<256x128xf32>
      %c0_12 = arith.constant 0 : index
      %c0_13 = arith.constant 0 : index
      %13 = vector.load %arg5[%c0_12, %c0_13] : memref<1x128xbf16, #tpu.memory_space<vmem>>, vector<1x128xbf16>
      %14 = arith.extf %13 : vector<1x128xbf16> to vector<1x128xf32>
      %15 = vector.broadcast %14 : vector<1x128xf32> to vector<256x128xf32>
      %16 = arith.addf %12, %15 : vector<256x128xf32>
      %c0_14 = arith.constant 0 : index
      %c0_15 = arith.constant 0 : index
      %17 = vector.load %arg6[%c0_14, %c0_15] : memref<256x128xbf16, #tpu.memory_space<vmem>>, vector<256x128xbf16>
      %18 = arith.extf %17 : vector<256x128xbf16> to vector<256x128xf32>
      %19 = arith.addf %16, %18 : vector<256x128xf32>
      %20 = arith.truncf %19 : vector<256x128xf32> to vector<256x128xbf16>
      %c0_16 = arith.constant 0 : index
      %c0_17 = arith.constant 0 : index
      %21 = vector.load %arg7[%c0_16, %c0_17] : memref<256x128xbf16, #tpu.memory_space<vmem>>, vector<256x128xbf16>
      tpu.vector_store %arg7[%c0_16, %c0_17], %20 {strides = array<i32>} : memref<256x128xbf16, #tpu.memory_space<vmem>>, vector<256x128xbf16>,
    } else {
    }
    return
  }
  func.func @transform_0(%arg0: i32, %arg1: i32, %arg2: i32) -> (i32, i32) {
    %c0_i32 = arith.constant 0 : i32
    return %arg0, %arg2 : i32, i32
  }
  func.func @transform_1(%arg0: i32, %arg1: i32, %arg2: i32) -> (i32, i32) {
    %c0_i32 = arith.constant 0 : i32
    return %arg2, %arg1 : i32, i32
  }
  func.func @transform_2(%arg0: i32, %arg1: i32, %arg2: i32) -> (i32, i32) {
    %c0_i32 = arith.constant 0 : i32
    %c0_i32_0 = arith.constant 0 : i32
    return %c0_i32, %arg1 : i32, i32
  }
  func.func @transform_3(%arg0: i32, %arg1: i32, %arg2: i32) -> (i32, i32) {
    %c0_i32 = arith.constant 0 : i32
    return %arg0, %arg1 : i32, i32
  }
  func.func @transform_4(%arg0: i32, %arg1: i32, %arg2: i32) -> (i32, i32) {
    %c0_i32 = arith.constant 0 : i32
    return %arg0, %arg1 : i32, i32
  }
}

module attributes {stable_mosaic.version = 11 : i64} {
  func.func @kernel(%arg0: i32, %arg1: i32, %arg2: i32, %arg3: memref<256x256xbf16, #tpu.memory_space<vmem>>, %arg4: memref<256x128xbf16, #tpu.memory_space<vmem>>, %arg5: memref<1x128xbf16, #tpu.memory_space<vmem>>, %arg6: memref<256x128xbf16, #tpu.memory_space<vmem>>, %arg7: memref<256x128xbf16, #tpu.memory_space<vmem>>, %arg8: memref<256x128xf32, #tpu.memory_space<vmem>>) attributes {dimension_semantics = [#tpu.dimension_semantics<parallel>, #tpu.dimension_semantics<parallel>, #tpu.dimension_semantics<arbitrary>], iteration_bounds = array<i64: 1, 1, 1>, scalar_prefetch = 0 : i64, scratch_operands = 1 : i64, tpu.core_type = #tpu.core_type<tc>, window_params = [{transform_indices = @transform_0, window_bounds = array<i64: 256, 256>}, {transform_indices = @transform_1, window_bounds = array<i64: 256, 128>}, {transform_indices = @transform_2, window_bounds = array<i64: 1, 128>}, {transform_indices = @transform_3, window_bounds = array<i64: 256, 128>}, {transform_indices = @transform_4, window_bounds = array<i64: 256, 128>}]} {
    %c0_i32 = arith.constant 0 : i32
    %0 = arith.cmpi eq, %arg2, %c0_i32 : i32
    %1 = arith.extui %0 : i1 to i32
    %c0_i32_0 = arith.constant 0 : i32
    %2 = arith.cmpi ne, %1, %c0_i32_0 : i32
    scf.if %2 {
      %cst_10 = arith.constant 0.000000e+00 : f32
      %12 = vector.broadcast %cst_10 : f32 to vector<256x128xf32>
      %c0_11 = arith.constant 0 : index
      %c0_12 = arith.constant 0 : index
      %13 = vector.load %arg8[%c0_11, %c0_12] : memref<256x128xf32, #tpu.memory_space<vmem>>, vector<256x128xf32>
      tpu.vector_store %arg8[%c0_11, %c0_12], %12 {strides = array<i32>} : memref<256x128xf32, #tpu.memory_space<vmem>>, vector<256x128xf32>,
    } else {
    }
    %c0 = arith.constant 0 : index
    %c0_1 = arith.constant 0 : index
    %3 = vector.load %arg8[%c0, %c0_1] : memref<256x128xf32, #tpu.memory_space<vmem>>, vector<256x128xf32>
    %c0_2 = arith.constant 0 : index
    %c0_3 = arith.constant 0 : index
    %4 = vector.load %arg3[%c0_2, %c0_3] : memref<256x256xbf16, #tpu.memory_space<vmem>>, vector<256x256xbf16>
    %c0_4 = arith.constant 0 : index
    %c0_5 = arith.constant 0 : index
    %5 = vector.load %arg4[%c0_4, %c0_5] : memref<256x128xbf16, #tpu.memory_space<vmem>>, vector<256x128xbf16>
    %cst = arith.constant dense<0.000000e+00> : vector<256x128xf32>
    %6 = tpu.matmul %4, %5, %cst {dimension_numbers = #tpu.dot_dimension_numbers<[1], [0], [0], [1], [0, 0, 1, 1], [], []>} : vector<256x256xbf16>, vector<256x128xbf16>, vector<256x128xf32> -> vector<256x128xf32>
    %7 = arith.addf %3, %6 : vector<256x128xf32>
    %c0_6 = arith.constant 0 : index
    %c0_7 = arith.constant 0 : index
    %8 = vector.load %arg8[%c0_6, %c0_7] : memref<256x128xf32, #tpu.memory_space<vmem>>, vector<256x128xf32>
    tpu.vector_store %arg8[%c0_6, %c0_7], %7 {strides = array<i32>} : memref<256x128xf32, #tpu.memory_space<vmem>>, vector<256x128xf32>,
    %c0_i32_8 = arith.constant 0 : i32
    %9 = arith.cmpi eq, %arg2, %c0_i32_8 : i32
    %10 = arith.extui %9 : i1 to i32
    %c0_i32_9 = arith.constant 0 : i32
    %11 = arith.cmpi ne, %10, %c0_i32_9 : i32
    scf.if %11 {
      %c0_10 = arith.constant 0 : index
      %c0_11 = arith.constant 0 : index
      %12 = vector.load %arg8[%c0_10, %c0_11] : memref<256x128xf32, #tpu.memory_space<vmem>>, vector<256x128xf32>
      %c0_12 = arith.constant 0 : index
      %c0_13 = arith.constant 0 : index
      %13 = vector.load %arg5[%c0_12, %c0_13] : memref<1x128xbf16, #tpu.memory_space<vmem>>, vector<1x128xbf16>
      %14 = arith.extf %13 : vector<1x128xbf16> to vector<1x128xf32>
      %15 = vector.broadcast %14 : vector<1x128xf32> to vector<256x128xf32>
      %16 = arith.addf %12, %15 : vector<256x128xf32>
      %c0_14 = arith.constant 0 : index
      %c0_15 = arith.constant 0 : index
      %17 = vector.load %arg6[%c0_14, %c0_15] : memref<256x128xbf16, #tpu.memory_space<vmem>>, vector<256x128xbf16>
      %18 = arith.extf %17 : vector<256x128xbf16> to vector<256x128xf32>
      %19 = arith.addf %16, %18 : vector<256x128xf32>
      %20 = arith.truncf %19 : vector<256x128xf32> to vector<256x128xbf16>
      %c0_16 = arith.constant 0 : index
      %c0_17 = arith.constant 0 : index
      %21 = vector.load %arg7[%c0_16, %c0_17] : memref<256x128xbf16, #tpu.memory_space<vmem>>, vector<256x128xbf16>
      tpu.vector_store %arg7[%c0_16, %c0_17], %20 {strides = array<i32>} : memref<256x128xbf16, #tpu.memory_space<vmem>>, vector<256x128xbf16>,
    } else {
    }
    return
  }
  func.func @transform_0(%arg0: i32, %arg1: i32, %arg2: i32) -> (i32, i32) {
    %c0_i32 = arith.constant 0 : i32
    return %arg0, %arg2 : i32, i32
  }
  func.func @transform_1(%arg0: i32, %arg1: i32, %arg2: i32) -> (i32, i32) {
    %c0_i32 = arith.constant 0 : i32
    return %arg2, %arg1 : i32, i32
  }
  func.func @transform_2(%arg0: i32, %arg1: i32, %arg2: i32) -> (i32, i32) {
    %c0_i32 = arith.constant 0 : i32
    %c0_i32_0 = arith.constant 0 : i32
    return %c0_i32, %arg1 : i32, i32
  }
  func.func @transform_3(%arg0: i32, %arg1: i32, %arg2: i32) -> (i32, i32) {
    %c0_i32 = arith.constant 0 : i32
    return %arg0, %arg1 : i32, i32
  }
  func.func @transform_4(%arg0: i32, %arg1: i32, %arg2: i32) -> (i32, i32) {
    %c0_i32 = arith.constant 0 : i32
    return %arg0, %arg1 : i32, i32
  }
}

module attributes {stable_mosaic.version = 11 : i64} {
  func.func @_ln_matmul_kernel(%arg0: i32, %arg1: i32, %arg2: memref<256x128xbf16, #tpu.memory_space<vmem>>, %arg3: memref<1x128xbf16, #tpu.memory_space<vmem>>, %arg4: memref<1x128xbf16, #tpu.memory_space<vmem>>, %arg5: memref<128x256xbf16, #tpu.memory_space<vmem>>, %arg6: memref<1x256xbf16, #tpu.memory_space<vmem>>, %arg7: memref<256x256xbf16, #tpu.memory_space<vmem>>, %arg8: memref<256x128xbf16, #tpu.memory_space<vmem>>) attributes {dimension_semantics = [#tpu.dimension_semantics<parallel>, #tpu.dimension_semantics<arbitrary>], iteration_bounds = array<i64: 1, 1>, scalar_prefetch = 0 : i64, scratch_operands = 1 : i64, tpu.core_type = #tpu.core_type<tc>, window_params = [{transform_indices = @transform_0, window_bounds = array<i64: 256, 128>}, {pipeline_mode = #tpu.pipeline_mode<synchronous>, transform_indices = @transform_1, window_bounds = array<i64: 1, 128>}, {pipeline_mode = #tpu.pipeline_mode<synchronous>, transform_indices = @transform_2, window_bounds = array<i64: 1, 128>}, {transform_indices = @transform_3, window_bounds = array<i64: 128, 256>}, {transform_indices = @transform_4, window_bounds = array<i64: 1, 256>}, {transform_indices = @transform_5, window_bounds = array<i64: 256, 256>}]} {
    %c0_i32 = arith.constant 0 : i32
    %0 = arith.cmpi eq, %arg1, %c0_i32 : i32
    %1 = arith.extui %0 : i1 to i32
    %c0_i32_0 = arith.constant 0 : i32
    %2 = arith.cmpi ne, %1, %c0_i32_0 : i32
    scf.if %2 {
      %c0_12 = arith.constant 0 : index
      %c0_13 = arith.constant 0 : index
      %25 = vector.load %arg2[%c0_12, %c0_13] : memref<256x128xbf16, #tpu.memory_space<vmem>>, vector<256x128xbf16>
      %26 = arith.extf %25 : vector<256x128xbf16> to vector<256x128xf32>
      %cst_14 = arith.constant dense<0.000000e+00> : vector<256xf32>
      %27 = vector.multi_reduction <add>, %26, %cst_14 [1] : vector<256x128xf32> to vector<256xf32>
      %28 = vector.shape_cast %27 : vector<256xf32> to vector<256x1xf32>
      %cst_15 = arith.constant 1.280000e+02 : f32
      %29 = vector.broadcast %cst_15 : f32 to vector<256x1xf32>
      %30 = arith.divf %28, %29 : vector<256x1xf32>
      %31 = vector.broadcast %30 : vector<256x1xf32> to vector<256x128xf32>
      %32 = arith.subf %26, %31 : vector<256x128xf32>
      %33 = arith.mulf %32, %32 : vector<256x128xf32>
      %cst_16 = arith.constant dense<0.000000e+00> : vector<256xf32>
      %34 = vector.multi_reduction <add>, %33, %cst_16 [1] : vector<256x128xf32> to vector<256xf32>
      %35 = vector.shape_cast %34 : vector<256xf32> to vector<256x1xf32>
      %cst_17 = arith.constant 1.280000e+02 : f32
      %36 = vector.broadcast %cst_17 : f32 to vector<256x1xf32>
      %37 = arith.divf %35, %36 : vector<256x1xf32>
      %38 = vector.broadcast %30 : vector<256x1xf32> to vector<256x128xf32>
      %39 = arith.subf %26, %38 : vector<256x128xf32>
      %cst_18 = arith.constant 9.99999974E-6 : f32
      %40 = vector.broadcast %cst_18 : f32 to vector<256x1xf32>
      %41 = arith.addf %37, %40 : vector<256x1xf32>
      %42 = math.rsqrt %41 : vector<256x1xf32>
      %43 = vector.broadcast %42 : vector<256x1xf32> to vector<256x128xf32>
      %44 = arith.mulf %39, %43 : vector<256x128xf32>
      %c0_19 = arith.constant 0 : index
      %c0_20 = arith.constant 0 : index
      %45 = vector.load %arg3[%c0_19, %c0_20] : memref<1x128xbf16, #tpu.memory_space<vmem>>, vector<1x128xbf16>
      %46 = arith.extf %45 : vector<1x128xbf16> to vector<1x128xf32>
      %47 = vector.broadcast %46 : vector<1x128xf32> to vector<256x128xf32>
      %48 = arith.mulf %44, %47 : vector<256x128xf32>
      %c0_21 = arith.constant 0 : index
      %c0_22 = arith.constant 0 : index
      %49 = vector.load %arg4[%c0_21, %c0_22] : memref<1x128xbf16, #tpu.memory_space<vmem>>, vector<1x128xbf16>
      %50 = arith.extf %49 : vector<1x128xbf16> to vector<1x128xf32>
      %51 = vector.broadcast %50 : vector<1x128xf32> to vector<256x128xf32>
      %52 = arith.addf %48, %51 : vector<256x128xf32>
      %53 = arith.truncf %52 : vector<256x128xf32> to vector<256x128xbf16>
      %c0_23 = arith.constant 0 : index
      %c0_24 = arith.constant 0 : index
      %54 = vector.load %arg8[%c0_23, %c0_24] : memref<256x128xbf16, #tpu.memory_space<vmem>>, vector<256x128xbf16>
      tpu.vector_store %arg8[%c0_23, %c0_24], %53 {strides = array<i32>} : memref<256x128xbf16, #tpu.memory_space<vmem>>, vector<256x128xbf16>,
    } else {
    }
    %c0 = arith.constant 0 : index
    %c0_1 = arith.constant 0 : index
    %3 = vector.load %arg8[%c0, %c0_1] : memref<256x128xbf16, #tpu.memory_space<vmem>>, vector<256x128xbf16>
    %c0_2 = arith.constant 0 : index
    %c0_3 = arith.constant 0 : index
    %4 = vector.load %arg5[%c0_2, %c0_3] : memref<128x256xbf16, #tpu.memory_space<vmem>>, vector<128x256xbf16>
    %cst = arith.constant dense<0.000000e+00> : vector<256x256xf32>
    %5 = tpu.matmul %3, %4, %cst {dimension_numbers = #tpu.dot_dimension_numbers<[1], [0], [0], [1], [0, 0, 1, 1], [], []>} : vector<256x128xbf16>, vector<128x256xbf16>, vector<256x256xf32> -> vector<256x256xf32>
    %c0_4 = arith.constant 0 : index
    %c0_5 = arith.constant 0 : index
    %6 = vector.load %arg6[%c0_4, %c0_5] : memref<1x256xbf16, #tpu.memory_space<vmem>>, vector<1x256xbf16>
    %7 = arith.extf %6 : vector<1x256xbf16> to vector<1x256xf32>
    %8 = vector.broadcast %7 : vector<1x256xf32> to vector<256x256xf32>
    %9 = arith.addf %5, %8 : vector<256x256xf32>
    %cst_6 = arith.constant 5.000000e-01 : f32
    %10 = vector.broadcast %cst_6 : f32 to vector<256x256xf32>
    %11 = arith.mulf %10, %9 : vector<256x256xf32>
    %cst_7 = arith.constant 4.471500e-02 : f32
    %12 = vector.broadcast %cst_7 : f32 to vector<256x256xf32>
    %13 = arith.mulf %12, %9 : vector<256x256xf32>
    %14 = arith.mulf %13, %9 : vector<256x256xf32>
    %15 = arith.mulf %14, %9 : vector<256x256xf32>
    %16 = arith.addf %9, %15 : vector<256x256xf32>
    %cst_8 = arith.constant 0.797884583 : f32
    %17 = vector.broadcast %cst_8 : f32 to vector<256x256xf32>
    %18 = arith.mulf %17, %16 : vector<256x256xf32>
    %19 = math.tanh %18 : vector<256x256xf32>
    %cst_9 = arith.constant 1.000000e+00 : f32
    %20 = vector.broadcast %cst_9 : f32 to vector<256x256xf32>
    %21 = arith.addf %20, %19 : vector<256x256xf32>
    %22 = arith.mulf %11, %21 : vector<256x256xf32>
    %23 = arith.truncf %22 : vector<256x256xf32> to vector<256x256xbf16>
    %c0_10 = arith.constant 0 : index
    %c0_11 = arith.constant 0 : index
    %24 = vector.load %arg7[%c0_10, %c0_11] : memref<256x256xbf16, #tpu.memory_space<vmem>>, vector<256x256xbf16>
    tpu.vector_store %arg7[%c0_10, %c0_11], %23 {strides = array<i32>} : memref<256x256xbf16, #tpu.memory_space<vmem>>, vector<256x256xbf16>,
    return
  }
  func.func @transform_0(%arg0: i32, %arg1: i32) -> (i32, i32) {
    %c0_i32 = arith.constant 0 : i32
    %c0_i32_0 = arith.constant 0 : i32
    return %arg0, %c0_i32 : i32, i32
  }
  func.func @transform_1(%arg0: i32, %arg1: i32) -> (i32, i32) {
    %c0_i32 = arith.constant 0 : i32
    %c0_i32_0 = arith.constant 0 : i32
    %c0_i32_1 = arith.constant 0 : i32
    return %c0_i32, %c0_i32_0 : i32, i32
  }
  func.func @transform_2(%arg0: i32, %arg1: i32) -> (i32, i32) {
    %c0_i32 = arith.constant 0 : i32
    %c0_i32_0 = arith.constant 0 : i32
    %c0_i32_1 = arith.constant 0 : i32
    return %c0_i32, %c0_i32_0 : i32, i32
  }
  func.func @transform_3(%arg0: i32, %arg1: i32) -> (i32, i32) {
    %c0_i32 = arith.constant 0 : i32
    %c0_i32_0 = arith.constant 0 : i32
    return %c0_i32, %arg1 : i32, i32
  }
  func.func @transform_4(%arg0: i32, %arg1: i32) -> (i32, i32) {
    %c0_i32 = arith.constant 0 : i32
    %c0_i32_0 = arith.constant 0 : i32
    return %c0_i32, %arg1 : i32, i32
  }
  func.func @transform_5(%arg0: i32, %arg1: i32) -> (i32, i32) {
    %c0_i32 = arith.constant 0 : i32
    return %arg0, %arg1 : i32, i32
  }
}

</mosaic_0001>

<llo_original>
// kernel: whisper_audio_tower_forward.7
$region0: #{whisper_audio_tower_forward.7}
  #allocation0 [shape = 'u32[]', space=smem, size = 0x4, offset = 0x4, fixed_abs, tag = 'smem constant byte address 0x4 - core index']
  #allocation1 [shape = 'u32[144,128]{1,0:T(1,128)}', space=vmem, size = 0x12000, scoped, tag = 'internal scratch']
  #allocation2 [shape = 'f32[512,128]{1,0:T(8,128)}', space=vmem, size = 0x40000, scoped, tag = 'scratch operand']
  %s0 = inlined_call_operand.vmem [shape: bf16[512,24], index: 0, kind: input, shape index: {}]
  %s1 = inlined_call_operand.vmem [shape: bf16[24,128], index: 1, kind: input, shape index: {}]
  %s2 = inlined_call_operand.vmem [shape: bf16[1,128], index: 2, kind: input, shape index: {}]
  %s3 = inlined_call_operand.vmem [shape: bf16[512,128], index: 3, kind: output, shape index: {}]
  %s4 = sld [smem:[#allocation0]]
  $region30: #{whisper_audio_tower_forward.7} parent=0
    _
  %s6 = ssub.s32 1, %s4
  %s7 = scalar_select 0, %s6, %s4
  // Predicated region
  $region2: #{whisper_audio_tower_forward.7} parent=0 // pred_check
    _
  $region3: #{whisper_audio_tower_forward.7} parent=0 // pred_check_branch
    %9 = sbr.rel (0) target = $region5
  $region4: #{whisper_audio_tower_forward.7} parent=0 // pred_region
    _
  $region5: #{whisper_audio_tower_forward.7} parent=0 // pred_fallthru
    _
  // Predicated region
  $region6: #{whisper_audio_tower_forward.7} parent=0 // pred_check
    _
  $region7: #{whisper_audio_tower_forward.7} parent=0 // pred_check_branch
    %11 = sbr.rel (0) target = $region9
  $region8: #{whisper_audio_tower_forward.7} parent=0 // pred_region
    _
  $region9: #{whisper_audio_tower_forward.7} parent=0 // pred_fallthru
    _
  // Predicated region
  $region10: #{whisper_audio_tower_forward.7} parent=0 // pred_check
    _
  $region11: #{whisper_audio_tower_forward.7} parent=0 // pred_check_branch
    %13 = sbr.rel (0) target = $region13
  $region12: #{whisper_audio_tower_forward.7} parent=0 // pred_region
    _
  $region13: #{whisper_audio_tower_forward.7} parent=0 // pred_fallthru
    _
  %p15 = scmp.eq.s32.totalorder 0, 0
  // Predicated region
  $region14: #{whisper_audio_tower_forward.7} parent=0 // pred_check
    %p16 = pneg %p15
  $region15: #{whisper_audio_tower_forward.7} parent=0 // pred_check_branch
    %18 = sbr.rel (%p16) target = $region17
  $region16: #{whisper_audio_tower_forward.7} parent=0 // pred_region
    %19 = vst [vmem:[#allocation2] sm:$0xff] 0.0
    %20 = vst [vmem:[#allocation2 + $0x8] sm:$0xff] 0.0
    %21 = vst [vmem:[#allocation2 + $0x10] sm:$0xff] 0.0
    %22 = vst [vmem:[#allocation2 + $0x18] sm:$0xff] 0.0
    %23 = vst [vmem:[#allocation2 + $0x20] sm:$0xff] 0.0
    %24 = vst [vmem:[#allocation2 + $0x28] sm:$0xff] 0.0
    %25 = vst [vmem:[#allocation2 + $0x30] sm:$0xff] 0.0
    %26 = vst [vmem:[#allocation2 + $0x38] sm:$0xff] 0.0
    %27 = vst [vmem:[#allocation2 + $0x40] sm:$0xff] 0.0
    %28 = vst [vmem:[#allocation2 + $0x48] sm:$0xff] 0.0
    %29 = vst [vmem:[#allocation2 + $0x50] sm:$0xff] 0.0
    %30 = vst [vmem:[#allocation2 + $0x58] sm:$0xff] 0.0
    %31 = vst [vmem:[#allocation2 + $0x60] sm:$0xff] 0.0
    %32 = vst [vmem:[#allocation2 + $0x68] sm:$0xff] 0.0
    %33 = vst [vmem:[#allocation2 + $0x70] sm:$0xff] 0.0
    %34 = vst [vmem:[#allocation2 + $0x78] sm:$0xff] 0.0
    %35 = vst [vmem:[#allocation2 + $0x80] sm:$0xff] 0.0
    %36 = vst [vmem:[#allocation2 + $0x88] sm:$0xff] 0.0
    %37 = vst [vmem:[#allocation2 + $0x90] sm:$0xff] 0.0
    %38 = vst [vmem:[#allocation2 + $0x98] sm:$0xff] 0.0
    %39 = vst [vmem:[#allocation2 + $0xa0] sm:$0xff] 0.0
    %40 = vst [vmem:[#allocation2 + $0xa8] sm:$0xff] 0.0
    %41 = vst [vmem:[#allocation2 + $0xb0] sm:$0xff] 0.0
    %42 = vst [vmem:[#allocation2 + $0xb8] sm:$0xff] 0.0
    %43 = vst [vmem:[#allocation2 + $0xc0] sm:$0xff] 0.0
    %44 = vst [vmem:[#allocation2 + $0xc8] sm:$0xff] 0.0
    %45 = vst [vmem:[#allocation2 + $0xd0] sm:$0xff] 0.0
    %46 = vst [vmem:[#allocation2 + $0xd8] sm:$0xff] 0.0
    %47 = vst [vmem:[#allocation2 + $0xe0] sm:$0xff] 0.0
    %48 = vst [vmem:[#allocation2 + $0xe8] sm:$0xff] 0.0
    %49 = vst [vmem:[#allocation2 + $0xf0] sm:$0xff] 0.0
    %50 = vst [vmem:[#allocation2 + $0xf8] sm:$0xff] 0.0
    %51 = vst [vmem:[#allocation2 + $0x100] sm:$0xff] 0.0
    %52 = vst [vmem:[#allocation2 + $0x108] sm:$0xff] 0.0
    %53 = vst [vmem:[#allocation2 + $0x110] sm:$0xff] 0.0
    %54 = vst [vmem:[#allocation2 + $0x118] sm:$0xff] 0.0
    %55 = vst [vmem:[#allocation2 + $0x120] sm:$0xff] 0.0
    %56 = vst [vmem:[#allocation2 + $0x128] sm:$0xff] 0.0
    %57 = vst [vmem:[#allocation2 + $0x130] sm:$0xff] 0.0
    %58 = vst [vmem:[#allocation2 + $0x138] sm:$0xff] 0.0
    %59 = vst [vmem:[#allocation2 + $0x140] sm:$0xff] 0.0
    %60 = vst [vmem:[#allocation2 + $0x148] sm:$0xff] 0.0
    %61 = vst [vmem:[#allocation2 + $0x150] sm:$0xff] 0.0
    %62 = vst [vmem:[#allocation2 + $0x158] sm:$0xff] 0.0
    %63 = vst [vmem:[#allocation2 + $0x160] sm:$0xff] 0.0
    %64 = vst [vmem:[#allocation2 + $0x168] sm:$0xff] 0.0
    %65 = vst [vmem:[#allocation2 + $0x170] sm:$0xff] 0.0
    %66 = vst [vmem:[#allocation2 + $0x178] sm:$0xff] 0.0
    %67 = vst [vmem:[#allocation2 + $0x180] sm:$0xff] 0.0
    %68 = vst [vmem:[#allocation2 + $0x188] sm:$0xff] 0.0
    %69 = vst [vmem:[#allocation2 + $0x190] sm:$0xff] 0.0
    %70 = vst [vmem:[#allocation2 + $0x198] sm:$0xff] 0.0
    %71 = vst [vmem:[#allocation2 + $0x1a0] sm:$0xff] 0.0
    %72 = vst [vmem:[#allocation2 + $0x1a8] sm:$0xff] 0.0
    %73 = vst [vmem:[#allocation2 + $0x1b0] sm:$0xff] 0.0
    %74 = vst [vmem:[#allocation2 + $0x1b8] sm:$0xff] 0.0
    %75 = vst [vmem:[#allocation2 + $0x1c0] sm:$0xff] 0.0
    %76 = vst [vmem:[#allocation2 + $0x1c8] sm:$0xff] 0.0
    %77 = vst [vmem:[#allocation2 + $0x1d0] sm:$0xff] 0.0
    %78 = vst [vmem:[#allocation2 + $0x1d8] sm:$0xff] 0.0
    %79 = vst [vmem:[#allocation2 + $0x1e0] sm:$0xff] 0.0
    %80 = vst [vmem:[#allocation2 + $0x1e8] sm:$0xff] 0.0
    %81 = vst [vmem:[#allocation2 + $0x1f0] sm:$0xff] 0.0
    %82 = vst [vmem:[#allocation2 + $0x1f8] sm:$0xff] 0.0
  $region17: #{whisper_audio_tower_forward.7} parent=0 // pred_fallthru
    _
  %v83 = vld [vmem:[#allocation2] sm:$0xff]
  %v84 = vld [vmem:[#allocation2 + $0x8] sm:$0xff]
  %v85 = vld [vmem:[#allocation2 + $0x10] sm:$0xff]
  %v86 = vld [vmem:[#allocation2 + $0x18] sm:$0xff]
  %v87 = vld [vmem:[#allocation2 + $0x20] sm:$0xff]
  %v88 = vld [vmem:[#allocation2 + $0x28] sm:$0xff]
  %v89 = vld [vmem:[#allocation2 + $0x30] sm:$0xff]
  %v90 = vld [vmem:[#allocation2 + $0x38] sm:$0xff]
  %v91 = vld [vmem:[#allocation2 + $0x40] sm:$0xff]
  %v92 = vld [vmem:[#allocation2 + $0x48] sm:$0xff]
  %v93 = vld [vmem:[#allocation2 + $0x50] sm:$0xff]
  %v94 = vld [vmem:[#allocation2 + $0x58] sm:$0xff]
  %v95 = vld [vmem:[#allocation2 + $0x60] sm:$0xff]
  %v96 = vld [vmem:[#allocation2 + $0x68] sm:$0xff]
  %v97 = vld [vmem:[#allocation2 + $0x70] sm:$0xff]
  %v98 = vld [vmem:[#allocation2 + $0x78] sm:$0xff]
  %v99 = vld [vmem:[#allocation2 + $0x80] sm:$0xff]
  %v100 = vld [vmem:[#allocation2 + $0x88] sm:$0xff]
  %v101 = vld [vmem:[#allocation2 + $0x90] sm:$0xff]
  %v102 = vld [vmem:[#allocation2 + $0x98] sm:$0xff]
  %v103 = vld [vmem:[#allocation2 + $0xa0] sm:$0xff]
  %v104 = vld [vmem:[#allocation2 + $0xa8] sm:$0xff]
  %v105 = vld [vmem:[#allocation2 + $0xb0] sm:$0xff]
  %v106 = vld [vmem:[#allocation2 + $0xb8] sm:$0xff]
  %v107 = vld [vmem:[#allocation2 + $0xc0] sm:$0xff]
  %v108 = vld [vmem:[#allocation2 + $0xc8] sm:$0xff]
  %v109 = vld [vmem:[#allocation2 + $0xd0] sm:$0xff]
  %v110 = vld [vmem:[#allocation2 + $0xd8] sm:$0xff]
  %v111 = vld [vmem:[#allocation2 + $0xe0] sm:$0xff]
  %v112 = vld [vmem:[#allocation2 + $0xe8] sm:$0xff]
  %v113 = vld [vmem:[#allocation2 + $0xf0] sm:$0xff]
  %v114 = vld [vmem:[#allocation2 + $0xf8] sm:$0xff]
  %v115 = vld [vmem:[#allocation2 + $0x100] sm:$0xff]
  %v116 = vld [vmem:[#allocation2 + $0x108] sm:$0xff]
  %v117 = vld [vmem:[#allocation2 + $0x110] sm:$0xff]
  %v118 = vld [vmem:[#allocation2 + $0x118] sm:$0xff]
  %v119 = vld [vmem:[#allocation2 + $0x120] sm:$0xff]
  %v120 = vld [vmem:[#allocation2 + $0x128] sm:$0xff]
  %v121 = vld [vmem:[#allocation2 + $0x130] sm:$0xff]
  %v122 = vld [vmem:[#allocation2 + $0x138] sm:$0xff]
  %v123 = vld [vmem:[#allocation2 + $0x140] sm:$0xff]
  %v124 = vld [vmem:[#allocation2 + $0x148] sm:$0xff]
  %v125 = vld [vmem:[#allocation2 + $0x150] sm:$0xff]
  %v126 = vld [vmem:[#allocation2 + $0x158] sm:$0xff]
  %v127 = vld [vmem:[#allocation2 + $0x160] sm:$0xff]
  %v128 = vld [vmem:[#allocation2 + $0x168] sm:$0xff]
  %v129 = vld [vmem:[#allocation2 + $0x170] sm:$0xff]
  %v130 = vld [vmem:[#allocation2 + $0x178] sm:$0xff]
  %v131 = vld [vmem:[#allocation2 + $0x180] sm:$0xff]
  %v132 = vld [vmem:[#allocation2 + $0x188] sm:$0xff]
  %v133 = vld [vmem:[#allocation2 + $0x190] sm:$0xff]
  %v134 = vld [vmem:[#allocation2 + $0x198] sm:$0xff]
  %v135 = vld [vmem:[#allocation2 + $0x1a0] sm:$0xff]
  %v136 = vld [vmem:[#allocation2 + $0x1a8] sm:$0xff]
  %v137 = vld [vmem:[#allocation2 + $0x1b0] sm:$0xff]
  %v138 = vld [vmem:[#allocation2 + $0x1b8] sm:$0xff]
  %v139 = vld [vmem:[#allocation2 + $0x1c0] sm:$0xff]
  %v140 = vld [vmem:[#allocation2 + $0x1c8] sm:$0xff]
  %v141 = vld [vmem:[#allocation2 + $0x1d0] sm:$0xff]
  %v142 = vld [vmem:[#allocation2 + $0x1d8] sm:$0xff]
  %v143 = vld [vmem:[#allocation2 + $0x1e0] sm:$0xff]
  %v144 = vld [vmem:[#allocation2 + $0x1e8] sm:$0xff]
  %v145 = vld [vmem:[#allocation2 + $0x1f0] sm:$0xff]
  %v146 = vld [vmem:[#allocation2 + $0x1f8] sm:$0xff]
  %v147 = vld [vmem:[%s0] sm:$0xf]
  %v148 = vld [vmem:[%s0 + $0x4] sm:$0xf]
  %v149 = vld [vmem:[%s0 + $0x8] sm:$0xf]
  %v150 = vld [vmem:[%s0 + $0xc] sm:$0xf]
  %v151 = vld [vmem:[%s0 + $0x10] sm:$0xf]
  %v152 = vld [vmem:[%s0 + $0x14] sm:$0xf]
  %v153 = vld [vmem:[%s0 + $0x18] sm:$0xf]
  %v154 = vld [vmem:[%s0 + $0x1c] sm:$0xf]
  %v155 = vld [vmem:[%s0 + $0x20] sm:$0xf]
  %v156 = vld [vmem:[%s0 + $0x24] sm:$0xf]
  %v157 = vld [vmem:[%s0 + $0x28] sm:$0xf]
  %v158 = vld [vmem:[%s0 + $0x2c] sm:$0xf]
  %v159 = vld [vmem:[%s0 + $0x30] sm:$0xf]
  %v160 = vld [vmem:[%s0 + $0x34] sm:$0xf]
  %v161 = vld [vmem:[%s0 + $0x38] sm:$0xf]
  %v162 = vld [vmem:[%s0 + $0x3c] sm:$0xf]
  %v163 = vld [vmem:[%s0 + $0x40] sm:$0xf]
  %v164 = vld [vmem:[%s0 + $0x44] sm:$0xf]
  %v165 = vld [vmem:[%s0 + $0x48] sm:$0xf]
  %v166 = vld [vmem:[%s0 + $0x4c] sm:$0xf]
  %v167 = vld [vmem:[%s0 + $0x50] sm:$0xf]
  %v168 = vld [vmem:[%s0 + $0x54] sm:$0xf]
  %v169 = vld [vmem:[%s0 + $0x58] sm:$0xf]
  %v170 = vld [vmem:[%s0 + $0x5c] sm:$0xf]
  %v171 = vld [vmem:[%s0 + $0x60] sm:$0xf]
  %v172 = vld [vmem:[%s0 + $0x64] sm:$0xf]
  %v173 = vld [vmem:[%s0 + $0x68] sm:$0xf]
  %v174 = vld [vmem:[%s0 + $0x6c] sm:$0xf]
  %v175 = vld [vmem:[%s0 + $0x70] sm:$0xf]
  %v176 = vld [vmem:[%s0 + $0x74] sm:$0xf]
  %v177 = vld [vmem:[%s0 + $0x78] sm:$0xf]
  %v178 = vld [vmem:[%s0 + $0x7c] sm:$0xf]
  %v179 = vld [vmem:[%s0 + $0x80] sm:$0xf]
  %v180 = vld [vmem:[%s0 + $0x84] sm:$0xf]
  %v181 = vld [vmem:[%s0 + $0x88] sm:$0xf]
  %v182 = vld [vmem:[%s0 + $0x8c] sm:$0xf]
  %v183 = vld [vmem:[%s0 + $0x90] sm:$0xf]
  %v184 = vld [vmem:[%s0 + $0x94] sm:$0xf]
  %v185 = vld [vmem:[%s0 + $0x98] sm:$0xf]
  %v186 = vld [vmem:[%s0 + $0x9c] sm:$0xf]
  %v187 = vld [vmem:[%s0 + $0xa0] sm:$0xf]
  %v188 = vld [vmem:[%s0 + $0xa4] sm:$0xf]
  %v189 = vld [vmem:[%s0 + $0xa8] sm:$0xf]
  %v190 = vld [vmem:[%s0 + $0xac] sm:$0xf]
  %v191 = vld [vmem:[%s0 + $0xb0] sm:$0xf]
  %v192 = vld [vmem:[%s0 + $0xb4] sm:$0xf]
  %v193 = vld [vmem:[%s0 + $0xb8] sm:$0xf]
  %v194 = vld [vmem:[%s0 + $0xbc] sm:$0xf]
  %v195 = vld [vmem:[%s0 + $0xc0] sm:$0xf]
  %v196 = vld [vmem:[%s0 + $0xc4] sm:$0xf]
  %v197 = vld [vmem:[%s0 + $0xc8] sm:$0xf]
  %v198 = vld [vmem:[%s0 + $0xcc] sm:$0xf]
  %v199 = vld [vmem:[%s0 + $0xd0] sm:$0xf]
  %v200 = vld [vmem:[%s0 + $0xd4] sm:$0xf]
  %v201 = vld [vmem:[%s0 + $0xd8] sm:$0xf]
  %v202 = vld [vmem:[%s0 + $0xdc] sm:$0xf]
  %v203 = vld [vmem:[%s0 + $0xe0] sm:$0xf]
  %v204 = vld [vmem:[%s0 + $0xe4] sm:$0xf]
  %v205 = vld [vmem:[%s0 + $0xe8] sm:$0xf]
  %v206 = vld [vmem:[%s0 + $0xec] sm:$0xf]
  %v207 = vld [vmem:[%s0 + $0xf0] sm:$0xf]
  %v208 = vld [vmem:[%s0 + $0xf4] sm:$0xf]
  %v209 = vld [vmem:[%s0 + $0xf8] sm:$0xf]
  %v210 = vld [vmem:[%s0 + $0xfc] sm:$0xf]
  %v211 = vld [vmem:[%s1] sm:$0xf]
  %v212 = vld [vmem:[%s1 + $0x4] sm:$0xf]
  %v213 = vld [vmem:[%s1 + $0x8] sm:$0xf]
  %v278 = vunpack.c.l.b16 %v147
  %v279 = vunpack.c.l.b16 %v148
  %v280 = vunpack.c.l.b16 %v149
  %v281 = vunpack.c.l.b16 %v150
  %v282 = vunpack.c.l.b16 %v151
  %v283 = vunpack.c.l.b16 %v152
  %v284 = vunpack.c.l.b16 %v153
  %v285 = vunpack.c.l.b16 %v154
  %v286 = vunpack.c.l.b16 %v155
  %v287 = vunpack.c.l.b16 %v156
  %v288 = vunpack.c.l.b16 %v157
  %v289 = vunpack.c.l.b16 %v158
  %v290 = vunpack.c.l.b16 %v159
  %v291 = vunpack.c.l.b16 %v160
  %v292 = vunpack.c.l.b16 %v161
  %v293 = vunpack.c.l.b16 %v162
  %v294 = vunpack.c.l.b16 %v163
  %v295 = vunpack.c.l.b16 %v164
  %v296 = vunpack.c.l.b16 %v165
  %v297 = vunpack.c.l.b16 %v166
  %v298 = vunpack.c.l.b16 %v167
  %v299 = vunpack.c.l.b16 %v168
  %v300 = vunpack.c.l.b16 %v169
  %v301 = vunpack.c.l.b16 %v170
  %v302 = vunpack.c.l.b16 %v171
  %v303 = vunpack.c.l.b16 %v172
  %v304 = vunpack.c.l.b16 %v173
  %v305 = vunpack.c.l.b16 %v174
  %v306 = vunpack.c.l.b16 %v175
  %v307 = vunpack.c.l.b16 %v176
  %v308 = vunpack.c.l.b16 %v177
  %v309 = vunpack.c.l.b16 %v178
  %v310 = vunpack.c.l.b16 %v179
  %v311 = vunpack.c.l.b16 %v180
  %v312 = vunpack.c.l.b16 %v181
  %v313 = vunpack.c.l.b16 %v182
  %v314 = vunpack.c.l.b16 %v183
  %v315 = vunpack.c.l.b16 %v184
  %v316 = vunpack.c.l.b16 %v185
  %v317 = vunpack.c.l.b16 %v186
  %v318 = vunpack.c.l.b16 %v187
  %v319 = vunpack.c.l.b16 %v188
  %v320 = vunpack.c.l.b16 %v189
  %v321 = vunpack.c.l.b16 %v190
  %v322 = vunpack.c.l.b16 %v191
  %v323 = vunpack.c.l.b16 %v192
  %v324 = vunpack.c.l.b16 %v193
  %v325 = vunpack.c.l.b16 %v194
  %v326 = vunpack.c.l.b16 %v195
  %v327 = vunpack.c.l.b16 %v196
  %v328 = vunpack.c.l.b16 %v197
  %v329 = vunpack.c.l.b16 %v198
  %v330 = vunpack.c.l.b16 %v199
  %v331 = vunpack.c.l.b16 %v200
  %v332 = vunpack.c.l.b16 %v201
  %v333 = vunpack.c.l.b16 %v202
  %v334 = vunpack.c.l.b16 %v203
  %v335 = vunpack.c.l.b16 %v204
  %v336 = vunpack.c.l.b16 %v205
  %v337 = vunpack.c.l.b16 %v206
  %v338 = vunpack.c.l.b16 %v207
  %v339 = vunpack.c.l.b16 %v208
  %v340 = vunpack.c.l.b16 %v209
  %v341 = vunpack.c.l.b16 %v210
  %v342 = vpack.c.b16 %v279, %v278
  %v343 = vpack.c.b16 %v281, %v280
  %v344 = vpack.c.b16 %v283, %v282
  %v345 = vpack.c.b16 %v285, %v284
  %v346 = vpack.c.b16 %v287, %v286
  %v347 = vpack.c.b16 %v289, %v288
  %v348 = vpack.c.b16 %v291, %v290
  %v349 = vpack.c.b16 %v293, %v292
  %v350 = vpack.c.b16 %v295, %v294
  %v351 = vpack.c.b16 %v297, %v296
  %v352 = vpack.c.b16 %v299, %v298
  %v353 = vpack.c.b16 %v301, %v300
  %v354 = vpack.c.b16 %v303, %v302
  %v355 = vpack.c.b16 %v305, %v304
  %v356 = vpack.c.b16 %v307, %v306
  %v357 = vpack.c.b16 %v309, %v308
  %v358 = vpack.c.b16 %v311, %v310
  %v359 = vpack.c.b16 %v313, %v312
  %v360 = vpack.c.b16 %v315, %v314
  %v361 = vpack.c.b16 %v317, %v316
  %v362 = vpack.c.b16 %v319, %v318
  %v363 = vpack.c.b16 %v321, %v320
  %v364 = vpack.c.b16 %v323, %v322
  %v365 = vpack.c.b16 %v325, %v324
  %v366 = vpack.c.b16 %v327, %v326
  %v367 = vpack.c.b16 %v329, %v328
  %v368 = vpack.c.b16 %v331, %v330
  %v369 = vpack.c.b16 %v333, %v332
  %v370 = vpack.c.b16 %v335, %v334
  %v371 = vpack.c.b16 %v337, %v336
  %v372 = vpack.c.b16 %v339, %v338
  %v373 = vpack.c.b16 %v341, %v340
  %v377 = vunpack.c.l.b16 %v211
  %v378 = vunpack.c.l.b16 %v212
  %v379 = vunpack.c.l.b16 %v213
  %v380 = vpack.c.b16 %v378, %v377
  %v381 = vpack.c.b16 %v379, %v379
  %vm383 = vcmask 195584
  %v385 = vsel %vm383, %v342, 0
  %v388 = vsel %vm383, %v343, 0
  %v391 = vsel %vm383, %v344, 0
  %v394 = vsel %vm383, %v345, 0
  %v397 = vsel %vm383, %v346, 0
  %v400 = vsel %vm383, %v347, 0
  %v403 = vsel %vm383, %v348, 0
  %v406 = vsel %vm383, %v349, 0
  %v409 = vsel %vm383, %v350, 0
  %v412 = vsel %vm383, %v351, 0
  %v415 = vsel %vm383, %v352, 0
  %v418 = vsel %vm383, %v353, 0
  %v421 = vsel %vm383, %v354, 0
  %v424 = vsel %vm383, %v355, 0
  %v427 = vsel %vm383, %v356, 0
  %v430 = vsel %vm383, %v357, 0
  %v433 = vsel %vm383, %v358, 0
  %v436 = vsel %vm383, %v359, 0
  %v439 = vsel %vm383, %v360, 0
  %v442 = vsel %vm383, %v361, 0
  %v445 = vsel %vm383, %v362, 0
  %v448 = vsel %vm383, %v363, 0
  %v451 = vsel %vm383, %v364, 0
  %v454 = vsel %vm383, %v365, 0
  %v457 = vsel %vm383, %v366, 0
  %v460 = vsel %vm383, %v367, 0
  %v463 = vsel %vm383, %v368, 0
  %v466 = vsel %vm383, %v369, 0
  %v469 = vsel %vm383, %v370, 0
  %v472 = vsel %vm383, %v371, 0
  %v475 = vsel %vm383, %v372, 0
  %v478 = vsel %vm383, %v373, 0
  %vm480 = vcmask 1043456
  %v482 = vsel %vm480, %v381, 0
  %484 = vmatprep.subr.bf16.mxu0 0
  %485 = vmatpush1.bf16.msra.mxu0 %v380
  %486 = vmatprep.subr.bf16.mxu0 0
  %487 = vmatpush1.bf16.msra.mxu0 %v482
  %488 = vmatprep.subr.bf16.mxu0 0
  %489 = vmatpush1.bf16.msra.mxu0 0
  %490 = vmatprep.subr.bf16.mxu0 0
  %491 = vmatpush1.bf16.msra.mxu0 0
  %492 = vmatprep.subr.bf16.mxu0 0
  %493 = vmatpush1.bf16.msra.mxu0 0
  %494 = vmatprep.subr.bf16.mxu0 0
  %495 = vmatpush1.bf16.msra.mxu0 0
  %496 = vmatprep.subr.bf16.mxu0 0
  %497 = vmatpush1.bf16.msra.mxu0 0
  %498 = vmatprep.subr.bf16.mxu0 0
  %499 = vmatpush1.bf16.msra.mxu0 0
  %500 = vmatprep.subr.bf16.mxu0 0
  %501 = vmatpush1.bf16.msra.mxu0 0
  %502 = vmatprep.subr.bf16.mxu0 0
  %503 = vmatpush1.bf16.msra.mxu0 0
  %504 = vmatprep.subr.bf16.mxu0 0
  %505 = vmatpush1.bf16.msra.mxu0 0
  %506 = vmatprep.subr.bf16.mxu0 0
  %507 = vmatpush1.bf16.msra.mxu0 0
  %508 = vmatprep.subr.bf16.mxu0 0
  %509 = vmatpush1.bf16.msra.mxu0 0
  %510 = vmatprep.subr.bf16.mxu0 0
  %511 = vmatpush1.bf16.msra.mxu0 0
  %512 = vmatprep.subr.bf16.mxu0 0
  %513 = vmatpush1.bf16.msra.mxu0 0
  %514 = vmatprep.subr.bf16.mxu0 0
  %515 = vmatpush1.bf16.msra.mxu0 0
  %516 = vmatprep.mubr.bf16.mxu0 0
  %517 = vmatmul.mubr.bf16.gmra.mrb[0].mxu0 %v385
  %v518 = vpop.f32.mrb[0].mxu0
  %v519 = vadd.f32 0.0, %v518
  %v520 = vpop.f32.mrb[0].mxu0
  %v521 = vpop.f32.mrb[0].mxu0
  %v522 = vadd.f32 0.0, %v521
  %v523 = vpop.f32.mrb[0].mxu0
  %524 = vmatprep.mubr.bf16.mxu0 0
  %525 = vmatmul.mubr.bf16.gmra.mrb[0].mxu0 %v388
  %v526 = vpop.f32.mrb[0].mxu0
  %v527 = vadd.f32 0.0, %v526
  %v528 = vpop.f32.mrb[0].mxu0
  %v529 = vpop.f32.mrb[0].mxu0
  %v530 = vadd.f32 0.0, %v529
  %v531 = vpop.f32.mrb[0].mxu0
  %532 = vmatprep.mubr.bf16.mxu0 0
  %533 = vmatmul.mubr.bf16.gmra.mrb[0].mxu0 %v391
  %v534 = vpop.f32.mrb[0].mxu0
  %v535 = vadd.f32 0.0, %v534
  %v536 = vpop.f32.mrb[0].mxu0
  %v537 = vpop.f32.mrb[0].mxu0
  %v538 = vadd.f32 0.0, %v537
  %v539 = vpop.f32.mrb[0].mxu0
  %540 = vmatprep.mubr.bf16.mxu0 0
  %541 = vmatmul.mubr.bf16.gmra.mrb[0].mxu0 %v394
  %v542 = vpop.f32.mrb[0].mxu0
  %v543 = vadd.f32 0.0, %v542
  %v544 = vpop.f32.mrb[0].mxu0
  %v545 = vpop.f32.mrb[0].mxu0
  %v546 = vadd.f32 0.0, %v545
  %v547 = vpop.f32.mrb[0].mxu0
  %548 = vmatprep.mubr.bf16.mxu0 0
  %549 = vmatmul.mubr.bf16.gmra.mrb[0].mxu0 %v397
  %v550 = vpop.f32.mrb[0].mxu0
  %v551 = vadd.f32 0.0, %v550
  %v552 = vpop.f32.mrb[0].mxu0
  %v553 = vpop.f32.mrb[0].mxu0
  %v554 = vadd.f32 0.0, %v553
  %v555 = vpop.f32.mrb[0].mxu0
  %556 = vmatprep.mubr.bf16.mxu0 0
  %557 = vmatmul.mubr.bf16.gmra.mrb[0].mxu0 %v400
  %v558 = vpop.f32.mrb[0].mxu0
  %v559 = vadd.f32 0.0, %v558
  %v560 = vpop.f32.mrb[0].mxu0
  %v561 = vpop.f32.mrb[0].mxu0
  %v562 = vadd.f32 0.0, %v561
  %v563 = vpop.f32.mrb[0].mxu0
  %564 = vmatprep.mubr.bf16.mxu0 0
  %565 = vmatmul.mubr.bf16.gmra.mrb[0].mxu0 %v403
  %v566 = vpop.f32.mrb[0].mxu0
  %v567 = vadd.f32 0.0, %v566
  %v568 = vpop.f32.mrb[0].mxu0
  %v569 = vpop.f32.mrb[0].mxu0
  %v570 = vadd.f32 0.0, %v569
  %v571 = vpop.f32.mrb[0].mxu0
  %572 = vmatprep.mubr.bf16.mxu0 0
  %573 = vmatmul.mubr.bf16.gmra.mrb[0].mxu0 %v406
  %v574 = vpop.f32.mrb[0].mxu0
  %v575 = vadd.f32 0.0, %v574
  %v576 = vpop.f32.mrb[0].mxu0
  %v577 = vpop.f32.mrb[0].mxu0
  %v578 = vadd.f32 0.0, %v577
  %v579 = vpop.f32.mrb[0].mxu0
  %580 = vmatprep.mubr.bf16.mxu0 0
  %581 = vmatmul.mubr.bf16.gmra.mrb[0].mxu0 %v409
  %v582 = vpop.f32.mrb[0].mxu0
  %v583 = vadd.f32 0.0, %v582
  %v584 = vpop.f32.mrb[0].mxu0
  %v585 = vpop.f32.mrb[0].mxu0
  %v586 = vadd.f32 0.0, %v585
  %v587 = vpop.f32.mrb[0].mxu0
  %588 = vmatprep.mubr.bf16.mxu0 0
  %589 = vmatmul.mubr.bf16.gmra.mrb[0].mxu0 %v412
  %v590 = vpop.f32.mrb[0].mxu0
  %v591 = vadd.f32 0.0, %v590
  %v592 = vpop.f32.mrb[0].mxu0
  %v593 = vpop.f32.mrb[0].mxu0
  %v594 = vadd.f32 0.0, %v593
  %v595 = vpop.f32.mrb[0].mxu0
  %596 = vmatprep.mubr.bf16.mxu0 0
  %597 = vmatmul.mubr.bf16.gmra.mrb[0].mxu0 %v415
  %v598 = vpop.f32.mrb[0].mxu0
  %v599 = vadd.f32 0.0, %v598
  %v600 = vpop.f32.mrb[0].mxu0
  %v601 = vpop.f32.mrb[0].mxu0
  %v602 = vadd.f32 0.0, %v601
  %v603 = vpop.f32.mrb[0].mxu0
  %604 = vmatprep.mubr.bf16.mxu0 0
  %605 = vmatmul.mubr.bf16.gmra.mrb[0].mxu0 %v418
  %v606 = vpop.f32.mrb[0].mxu0
  %v607 = vadd.f32 0.0, %v606
  %v608 = vpop.f32.mrb[0].mxu0
  %v609 = vpop.f32.mrb[0].mxu0
  %v610 = vadd.f32 0.0, %v609
  %v611 = vpop.f32.mrb[0].mxu0
  %612 = vmatprep.mubr.bf16.mxu0 0
  %613 = vmatmul.mubr.bf16.gmra.mrb[0].mxu0 %v421
  %v614 = vpop.f32.mrb[0].mxu0
  %v615 = vadd.f32 0.0, %v614
  %v616 = vpop.f32.mrb[0].mxu0
  %v617 = vpop.f32.mrb[0].mxu0
  %v618 = vadd.f32 0.0, %v617
  %v619 = vpop.f32.mrb[0].mxu0
  %620 = vmatprep.mubr.bf16.mxu0 0
  %621 = vmatmul.mubr.bf16.gmra.mrb[0].mxu0 %v424
  %v622 = vpop.f32.mrb[0].mxu0
  %v623 = vadd.f32 0.0, %v622
  %v624 = vpop.f32.mrb[0].mxu0
  %v625 = vpop.f32.mrb[0].mxu0
  %v626 = vadd.f32 0.0, %v625
  %v627 = vpop.f32.mrb[0].mxu0
  %628 = vmatprep.mubr.bf16.mxu0 0
  %629 = vmatmul.mubr.bf16.gmra.mrb[0].mxu0 %v427
  %v630 = vpop.f32.mrb[0].mxu0
  %v631 = vadd.f32 0.0, %v630
  %v632 = vpop.f32.mrb[0].mxu0
  %v633 = vpop.f32.mrb[0].mxu0
  %v634 = vadd.f32 0.0, %v633
  %v635 = vpop.f32.mrb[0].mxu0
  %636 = vmatprep.mubr.bf16.mxu0 0
  %637 = vmatmul.mubr.bf16.gmra.mrb[0].mxu0 %v430
  %v638 = vpop.f32.mrb[0].mxu0
  %v639 = vadd.f32 0.0, %v638
  %v640 = vpop.f32.mrb[0].mxu0
  %v641 = vpop.f32.mrb[0].mxu0
  %v642 = vadd.f32 0.0, %v641
  %v643 = vpop.f32.mrb[0].mxu0
  %644 = vmatprep.mubr.bf16.mxu0 0
  %645 = vmatmul.mubr.bf16.gmra.mrb[0].mxu0 %v433
  %v646 = vpop.f32.mrb[0].mxu0
  %v647 = vadd.f32 0.0, %v646
  %v648 = vpop.f32.mrb[0].mxu0
  %v649 = vpop.f32.mrb[0].mxu0
  %v650 = vadd.f32 0.0, %v649
  %v651 = vpop.f32.mrb[0].mxu0
  %652 = vmatprep.mubr.bf16.mxu0 0
  %653 = vmatmul.mubr.bf16.gmra.mrb[0].mxu0 %v436
  %v654 = vpop.f32.mrb[0].mxu0
  %v655 = vadd.f32 0.0, %v654
  %v656 = vpop.f32.mrb[0].mxu0
  %v657 = vpop.f32.mrb[0].mxu0
  %v658 = vadd.f32 0.0, %v657
  %v659 = vpop.f32.mrb[0].mxu0
  %660 = vmatprep.mubr.bf16.mxu0 0
  %661 = vmatmul.mubr.bf16.gmra.mrb[0].mxu0 %v439
  %v662 = vpop.f32.mrb[0].mxu0
  %v663 = vadd.f32 0.0, %v662
  %v664 = vpop.f32.mrb[0].mxu0
  %v665 = vpop.f32.mrb[0].mxu0
  %v666 = vadd.f32 0.0, %v665
  %v667 = vpop.f32.mrb[0].mxu0
  %668 = vmatprep.mubr.bf16.mxu0 0
  %669 = vmatmul.mubr.bf16.gmra.mrb[0].mxu0 %v442
  %v670 = vpop.f32.mrb[0].mxu0
  %v671 = vadd.f32 0.0, %v670
  %v672 = vpop.f32.mrb[0].mxu0
  %v673 = vpop.f32.mrb[0].mxu0
  %v674 = vadd.f32 0.0, %v673
  %v675 = vpop.f32.mrb[0].mxu0
  %676 = vmatprep.mubr.bf16.mxu0 0
  %677 = vmatmul.mubr.bf16.gmra.mrb[0].mxu0 %v445
  %v678 = vpop.f32.mrb[0].mxu0
  %v679 = vadd.f32 0.0, %v678
  %v680 = vpop.f32.mrb[0].mxu0
  %v681 = vpop.f32.mrb[0].mxu0
  %v682 = vadd.f32 0.0, %v681
  %v683 = vpop.f32.mrb[0].mxu0
  %684 = vmatprep.mubr.bf16.mxu0 0
  %685 = vmatmul.mubr.bf16.gmra.mrb[0].mxu0 %v448
  %v686 = vpop.f32.mrb[0].mxu0
  %v687 = vadd.f32 0.0, %v686
  %v688 = vpop.f32.mrb[0].mxu0
  %v689 = vpop.f32.mrb[0].mxu0
  %v690 = vadd.f32 0.0, %v689
  %v691 = vpop.f32.mrb[0].mxu0
  %692 = vmatprep.mubr.bf16.mxu0 0
  %693 = vmatmul.mubr.bf16.gmra.mrb[0].mxu0 %v451
  %v694 = vpop.f32.mrb[0].mxu0
  %v695 = vadd.f32 0.0, %v694
  %v696 = vpop.f32.mrb[0].mxu0
  %v697 = vpop.f32.mrb[0].mxu0
  %v698 = vadd.f32 0.0, %v697
  %v699 = vpop.f32.mrb[0].mxu0
  %700 = vmatprep.mubr.bf16.mxu0 0
  %701 = vmatmul.mubr.bf16.gmra.mrb[0].mxu0 %v454
  %v702 = vpop.f32.mrb[0].mxu0
  %v703 = vadd.f32 0.0, %v702
  %v704 = vpop.f32.mrb[0].mxu0
  %v705 = vpop.f32.mrb[0].mxu0
  %v706 = vadd.f32 0.0, %v705
  %v707 = vpop.f32.mrb[0].mxu0
  %708 = vmatprep.mubr.bf16.mxu0 0
  %709 = vmatmul.mubr.bf16.gmra.mrb[0].mxu0 %v457
  %v710 = vpop.f32.mrb[0].mxu0
  %v711 = vadd.f32 0.0, %v710
  %v712 = vpop.f32.mrb[0].mxu0
  %v713 = vpop.f32.mrb[0].mxu0
  %v714 = vadd.f32 0.0, %v713
  %v715 = vpop.f32.mrb[0].mxu0
  %716 = vmatprep.mubr.bf16.mxu0 0
  %717 = vmatmul.mubr.bf16.gmra.mrb[0].mxu0 %v460
  %v718 = vpop.f32.mrb[0].mxu0
  %v719 = vadd.f32 0.0, %v718
  %v720 = vpop.f32.mrb[0].mxu0
  %v721 = vpop.f32.mrb[0].mxu0
  %v722 = vadd.f32 0.0, %v721
  %v723 = vpop.f32.mrb[0].mxu0
  %724 = vmatprep.mubr.bf16.mxu0 0
  %725 = vmatmul.mubr.bf16.gmra.mrb[0].mxu0 %v463
  %v726 = vpop.f32.mrb[0].mxu0
  %v727 = vadd.f32 0.0, %v726
  %v728 = vpop.f32.mrb[0].mxu0
  %v729 = vpop.f32.mrb[0].mxu0
  %v730 = vadd.f32 0.0, %v729
  %v731 = vpop.f32.mrb[0].mxu0
  %732 = vmatprep.mubr.bf16.mxu0 0
  %733 = vmatmul.mubr.bf16.gmra.mrb[0].mxu0 %v466
  %v734 = vpop.f32.mrb[0].mxu0
  %v735 = vadd.f32 0.0, %v734
  %v736 = vpop.f32.mrb[0].mxu0
  %v737 = vpop.f32.mrb[0].mxu0
  %v738 = vadd.f32 0.0, %v737
  %v739 = vpop.f32.mrb[0].mxu0
  %740 = vmatprep.mubr.bf16.mxu0 0
  %741 = vmatmul.mubr.bf16.gmra.mrb[0].mxu0 %v469
  %v742 = vpop.f32.mrb[0].mxu0
  %v743 = vadd.f32 0.0, %v742
  %v744 = vpop.f32.mrb[0].mxu0
  %v745 = vpop.f32.mrb[0].mxu0
  %v746 = vadd.f32 0.0, %v745
  %v747 = vpop.f32.mrb[0].mxu0
  %748 = vmatprep.mubr.bf16.mxu0 0
  %749 = vmatmul.mubr.bf16.gmra.mrb[0].mxu0 %v472
  %v750 = vpop.f32.mrb[0].mxu0
  %v751 = vadd.f32 0.0, %v750
  %v752 = vpop.f32.mrb[0].mxu0
  %v753 = vpop.f32.mrb[0].mxu0
  %v754 = vadd.f32 0.0, %v753
  %v755 = vpop.f32.mrb[0].mxu0
  %756 = vmatprep.mubr.bf16.mxu0 0
  %757 = vmatmul.mubr.bf16.gmra.mrb[0].mxu0 %v475
  %v758 = vpop.f32.mrb[0].mxu0
  %v759 = vadd.f32 0.0, %v758
  %v760 = vpop.f32.mrb[0].mxu0
  %v761 = vpop.f32.mrb[0].mxu0
  %v762 = vadd.f32 0.0, %v761
  %v763 = vpop.f32.mrb[0].mxu0
  %764 = vmatprep.mubr.bf16.mxu0 0
  %765 = vmatmul.mubr.bf16.gmra.mrb[0].mxu0 %v478
  %v766 = vpop.f32.mrb[0].mxu0
  %v767 = vadd.f32 0.0, %v766
  %v768 = vpop.f32.mrb[0].mxu0
  %v769 = vpop.f32.mrb[0].mxu0
  %v770 = vadd.f32 0.0, %v769
  %v771 = vpop.f32.mrb[0].mxu0
  %772 = vdwg.mxu0
  %v773 = vadd.f32 %v83, %v519
  %v774 = vadd.f32 %v84, %v522
  %v775 = vadd.f32 %v85, %v527
  %v776 = vadd.f32 %v86, %v530
  %v777 = vadd.f32 %v87, %v535
  %v778 = vadd.f32 %v88, %v538
  %v779 = vadd.f32 %v89, %v543
  %v780 = vadd.f32 %v90, %v546
  %v781 = vadd.f32 %v91, %v551
  %v782 = vadd.f32 %v92, %v554
  %v783 = vadd.f32 %v93, %v559
  %v784 = vadd.f32 %v94, %v562
  %v785 = vadd.f32 %v95, %v567
  %v786 = vadd.f32 %v96, %v570
  %v787 = vadd.f32 %v97, %v575
  %v788 = vadd.f32 %v98, %v578
  %v789 = vadd.f32 %v99, %v583
  %v790 = vadd.f32 %v100, %v586
  %v791 = vadd.f32 %v101, %v591
  %v792 = vadd.f32 %v102, %v594
  %v793 = vadd.f32 %v103, %v599
  %v794 = vadd.f32 %v104, %v602
  %v795 = vadd.f32 %v105, %v607
  %v796 = vadd.f32 %v106, %v610
  %v797 = vadd.f32 %v107, %v615
  %v798 = vadd.f32 %v108, %v618
  %v799 = vadd.f32 %v109, %v623
  %v800 = vadd.f32 %v110, %v626
  %v801 = vadd.f32 %v111, %v631
  %v802 = vadd.f32 %v112, %v634
  %v803 = vadd.f32 %v113, %v639
  %v804 = vadd.f32 %v114, %v642
  %v805 = vadd.f32 %v115, %v647
  %v806 = vadd.f32 %v116, %v650
  %v807 = vadd.f32 %v117, %v655
  %v808 = vadd.f32 %v118, %v658
  %v809 = vadd.f32 %v119, %v663
  %v810 = vadd.f32 %v120, %v666
  %v811 = vadd.f32 %v121, %v671
  %v812 = vadd.f32 %v122, %v674
  %v813 = vadd.f32 %v123, %v679
  %v814 = vadd.f32 %v124, %v682
  %v815 = vadd.f32 %v125, %v687
  %v816 = vadd.f32 %v126, %v690
  %v817 = vadd.f32 %v127, %v695
  %v818 = vadd.f32 %v128, %v698
  %v819 = vadd.f32 %v129, %v703
  %v820 = vadd.f32 %v130, %v706
  %v821 = vadd.f32 %v131, %v711
  %v822 = vadd.f32 %v132, %v714
  %v823 = vadd.f32 %v133, %v719
  %v824 = vadd.f32 %v134, %v722
  %v825 = vadd.f32 %v135, %v727
  %v826 = vadd.f32 %v136, %v730
  %v827 = vadd.f32 %v137, %v735
  %v828 = vadd.f32 %v138, %v738
  %v829 = vadd.f32 %v139, %v743
  %v830 = vadd.f32 %v140, %v746
  %v831 = vadd.f32 %v141, %v751
  %v832 = vadd.f32 %v142, %v754
  %v833 = vadd.f32 %v143, %v759
  %v834 = vadd.f32 %v144, %v762
  %v835 = vadd.f32 %v145, %v767
  %v836 = vadd.f32 %v146, %v770
  %837 = vst [vmem:[#allocation2] sm:$0xff] %v773
  %838 = vst [vmem:[#allocation2 + $0x8] sm:$0xff] %v774
  %839 = vst [vmem:[#allocation2 + $0x10] sm:$0xff] %v775
  %840 = vst [vmem:[#allocation2 + $0x18] sm:$0xff] %v776
  %841 = vst [vmem:[#allocation2 + $0x20] sm:$0xff] %v777
  %842 = vst [vmem:[#allocation2 + $0x28] sm:$0xff] %v778
  %843 = vst [vmem:[#allocation2 + $0x30] sm:$0xff] %v779
  %844 = vst [vmem:[#allocation2 + $0x38] sm:$0xff] %v780
  %845 = vst [vmem:[#allocation2 + $0x40] sm:$0xff] %v781
  %846 = vst [vmem:[#allocation2 + $0x48] sm:$0xff] %v782
  %847 = vst [vmem:[#allocation2 + $0x50] sm:$0xff] %v783
  %848 = vst [vmem:[#allocation2 + $0x58] sm:$0xff] %v784
  %849 = vst [vmem:[#allocation2 + $0x60] sm:$0xff] %v785
  %850 = vst [vmem:[#allocation2 + $0x68] sm:$0xff] %v786
  %851 = vst [vmem:[#allocation2 + $0x70] sm:$0xff] %v787
  %852 = vst [vmem:[#allocation2 + $0x78] sm:$0xff] %v788
  %853 = vst [vmem:[#allocation2 + $0x80] sm:$0xff] %v789
  %854 = vst [vmem:[#allocation2 + $0x88] sm:$0xff] %v790
  %855 = vst [vmem:[#allocation2 + $0x90] sm:$0xff] %v791
  %856 = vst [vmem:[#allocation2 + $0x98] sm:$0xff] %v792
  %857 = vst [vmem:[#allocation2 + $0xa0] sm:$0xff] %v793
  %858 = vst [vmem:[#allocation2 + $0xa8] sm:$0xff] %v794
  %859 = vst [vmem:[#allocation2 + $0xb0] sm:$0xff] %v795
  %860 = vst [vmem:[#allocation2 + $0xb8] sm:$0xff] %v796
  %861 = vst [vmem:[#allocation2 + $0xc0] sm:$0xff] %v797
  %862 = vst [vmem:[#allocation2 + $0xc8] sm:$0xff] %v798
  %863 = vst [vmem:[#allocation2 + $0xd0] sm:$0xff] %v799
  %864 = vst [vmem:[#allocation2 + $0xd8] sm:$0xff] %v800
  %865 = vst [vmem:[#allocation2 + $0xe0] sm:$0xff] %v801
  %866 = vst [vmem:[#allocation2 + $0xe8] sm:$0xff] %v802
  %867 = vst [vmem:[#allocation2 + $0xf0] sm:$0xff] %v803
  %868 = vst [vmem:[#allocation2 + $0xf8] sm:$0xff] %v804
  %869 = vst [vmem:[#allocation2 + $0x100] sm:$0xff] %v805
  %870 = vst [vmem:[#allocation2 + $0x108] sm:$0xff] %v806
  %871 = vst [vmem:[#allocation2 + $0x110] sm:$0xff] %v807
  %872 = vst [vmem:[#allocation2 + $0x118] sm:$0xff] %v808
  %873 = vst [vmem:[#allocation2 + $0x120] sm:$0xff] %v809
  %874 = vst [vmem:[#allocation2 + $0x128] sm:$0xff] %v810
  %875 = vst [vmem:[#allocation2 + $0x130] sm:$0xff] %v811
  %876 = vst [vmem:[#allocation2 + $0x138] sm:$0xff] %v812
  %877 = vst [vmem:[#allocation2 + $0x140] sm:$0xff] %v813
  %878 = vst [vmem:[#allocation2 + $0x148] sm:$0xff] %v814
  %879 = vst [vmem:[#allocation2 + $0x150] sm:$0xff] %v815
  %880 = vst [vmem:[#allocation2 + $0x158] sm:$0xff] %v816
  %881 = vst [vmem:[#allocation2 + $0x160] sm:$0xff] %v817
  %882 = vst [vmem:[#allocation2 + $0x168] sm:$0xff] %v818
  %883 = vst [vmem:[#allocation2 + $0x170] sm:$0xff] %v819
  %884 = vst [vmem:[#allocation2 + $0x178] sm:$0xff] %v820
  %885 = vst [vmem:[#allocation2 + $0x180] sm:$0xff] %v821
  %886 = vst [vmem:[#allocation2 + $0x188] sm:$0xff] %v822
  %887 = vst [vmem:[#allocation2 + $0x190] sm:$0xff] %v823
  %888 = vst [vmem:[#allocation2 + $0x198] sm:$0xff] %v824
  %889 = vst [vmem:[#allocation2 + $0x1a0] sm:$0xff] %v825
  %890 = vst [vmem:[#allocation2 + $0x1a8] sm:$0xff] %v826
  %891 = vst [vmem:[#allocation2 + $0x1b0] sm:$0xff] %v827
  %892 = vst [vmem:[#allocation2 + $0x1b8] sm:$0xff] %v828
  %893 = vst [vmem:[#allocation2 + $0x1c0] sm:$0xff] %v829
  %894 = vst [vmem:[#allocation2 + $0x1c8] sm:$0xff] %v830
  %895 = vst [vmem:[#allocation2 + $0x1d0] sm:$0xff] %v831
  %896 = vst [vmem:[#allocation2 + $0x1d8] sm:$0xff] %v832
  %897 = vst [vmem:[#allocation2 + $0x1e0] sm:$0xff] %v833
  %898 = vst [vmem:[#allocation2 + $0x1e8] sm:$0xff] %v834
  %899 = vst [vmem:[#allocation2 + $0x1f0] sm:$0xff] %v835
  %900 = vst [vmem:[#allocation2 + $0x1f8] sm:$0xff] %v836
  // Predicated region
  $region18: #{whisper_audio_tower_forward.7} parent=0 // pred_check
    %p901 = pneg %p15
  $region19: #{whisper_audio_tower_forward.7} parent=0 // pred_check_branch
    %903 = sbr.rel (%p901) target = $region21
  $region20: #{whisper_audio_tower_forward.7} parent=0 // pred_region
    %v904 = vld [vmem:[#allocation2] sm:$0xff]
    %v905 = vld [vmem:[#allocation2 + $0x8] sm:$0xff]
    %v906 = vld [vmem:[#allocation2 + $0x10] sm:$0xff]
    %v907 = vld [vmem:[#allocation2 + $0x18] sm:$0xff]
    %v908 = vld [vmem:[#allocation2 + $0x20] sm:$0xff]
    %v909 = vld [vmem:[#allocation2 + $0x28] sm:$0xff]
    %v910 = vld [vmem:[#allocation2 + $0x30] sm:$0xff]
    %v911 = vld [vmem:[#allocation2 + $0x38] sm:$0xff]
    %v912 = vld [vmem:[#allocation2 + $0x40] sm:$0xff]
    %v913 = vld [vmem:[#allocation2 + $0x48] sm:$0xff]
    %v914 = vld [vmem:[#allocation2 + $0x50] sm:$0xff]
    %v915 = vld [vmem:[#allocation2 + $0x58] sm:$0xff]
    %v916 = vld [vmem:[#allocation2 + $0x60] sm:$0xff]
    %v917 = vld [vmem:[#allocation2 + $0x68] sm:$0xff]
    %v918 = vld [vmem:[#allocation2 + $0x70] sm:$0xff]
    %v919 = vld [vmem:[#allocation2 + $0x78] sm:$0xff]
    %v920 = vld [vmem:[#allocation2 + $0x80] sm:$0xff]
    %v921 = vld [vmem:[#allocation2 + $0x88] sm:$0xff]
    %v922 = vld [vmem:[#allocation2 + $0x90] sm:$0xff]
    %v923 = vld [vmem:[#allocation2 + $0x98] sm:$0xff]
    %v924 = vld [vmem:[#allocation2 + $0xa0] sm:$0xff]
    %v925 = vld [vmem:[#allocation2 + $0xa8] sm:$0xff]
    %v926 = vld [vmem:[#allocation2 + $0xb0] sm:$0xff]
    %v927 = vld [vmem:[#allocation2 + $0xb8] sm:$0xff]
    %v928 = vld [vmem:[#allocation2 + $0xc0] sm:$0xff]
    %v929 = vld [vmem:[#allocation2 + $0xc8] sm:$0xff]
    %v930 = vld [vmem:[#allocation2 + $0xd0] sm:$0xff]
    %v931 = vld [vmem:[#allocation2 + $0xd8] sm:$0xff]
    %v932 = vld [vmem:[#allocation2 + $0xe0] sm:$0xff]
    %v933 = vld [vmem:[#allocation2 + $0xe8] sm:$0xff]
    %v934 = vld [vmem:[#allocation2 + $0xf0] sm:$0xff]
    %v935 = vld [vmem:[#allocation2 + $0xf8] sm:$0xff]
    %v936 = vld [vmem:[#allocation2 + $0x100] sm:$0xff]
    %v937 = vld [vmem:[#allocation2 + $0x108] sm:$0xff]
    %v938 = vld [vmem:[#allocation2 + $0x110] sm:$0xff]
    %v939 = vld [vmem:[#allocation2 + $0x118] sm:$0xff]
    %v940 = vld [vmem:[#allocation2 + $0x120] sm:$0xff]
    %v941 = vld [vmem:[#allocation2 + $0x128] sm:$0xff]
    %v942 = vld [vmem:[#allocation2 + $0x130] sm:$0xff]
    %v943 = vld [vmem:[#allocation2 + $0x138] sm:$0xff]
    %v944 = vld [vmem:[#allocation2 + $0x140] sm:$0xff]
    %v945 = vld [vmem:[#allocation2 + $0x148] sm:$0xff]
    %v946 = vld [vmem:[#allocation2 + $0x150] sm:$0xff]
    %v947 = vld [vmem:[#allocation2 + $0x158] sm:$0xff]
    %v948 = vld [vmem:[#allocation2 + $0x160] sm:$0xff]
    %v949 = vld [vmem:[#allocation2 + $0x168] sm:$0xff]
    %v950 = vld [vmem:[#allocation2 + $0x170] sm:$0xff]
    %v951 = vld [vmem:[#allocation2 + $0x178] sm:$0xff]
    %v952 = vld [vmem:[#allocation2 + $0x180] sm:$0xff]
    %v953 = vld [vmem:[#allocation2 + $0x188] sm:$0xff]
    %v954 = vld [vmem:[#allocation2 + $0x190] sm:$0xff]
    %v955 = vld [vmem:[#allocation2 + $0x198] sm:$0xff]
    %v956 = vld [vmem:[#allocation2 + $0x1a0] sm:$0xff]
    %v957 = vld [vmem:[#allocation2 + $0x1a8] sm:$0xff]
    %v958 = vld [vmem:[#allocation2 + $0x1b0] sm:$0xff]
    %v959 = vld [vmem:[#allocation2 + $0x1b8] sm:$0xff]
    %v960 = vld [vmem:[#allocation2 + $0x1c0] sm:$0xff]
    %v961 = vld [vmem:[#allocation2 + $0x1c8] sm:$0xff]
    %v962 = vld [vmem:[#allocation2 + $0x1d0] sm:$0xff]
    %v963 = vld [vmem:[#allocation2 + $0x1d8] sm:$0xff]
    %v964 = vld [vmem:[#allocation2 + $0x1e0] sm:$0xff]
    %v965 = vld [vmem:[#allocation2 + $0x1e8] sm:$0xff]
    %v966 = vld [vmem:[#allocation2 + $0x1f0] sm:$0xff]
    %v967 = vld [vmem:[#allocation2 + $0x1f8] sm:$0xff]
    %v968 = vld [vmem:[%s2] sm:$0x1]
    %v969 = vunpack.c.l.bf16 %v968
    %v970 = vlaneseq
    %v971 = vshrl.u32 %v970, 7
    %v972 = vsub.s32 0, %v971
    %v973 = vrot.slane %v969, %v972
    %v974 = vadd.f32 %v904, %v973
    %v975 = vadd.f32 %v905, %v973
    %v976 = vadd.f32 %v906, %v973
    %v977 = vadd.f32 %v907, %v973
    %v978 = vadd.f32 %v908, %v973
    %v979 = vadd.f32 %v909, %v973
    %v980 = vadd.f32 %v910, %v973
    %v981 = vadd.f32 %v911, %v973
    %v982 = vadd.f32 %v912, %v973
    %v983 = vadd.f32 %v913, %v973
    %v984 = vadd.f32 %v914, %v973
    %v985 = vadd.f32 %v915, %v973
    %v986 = vadd.f32 %v916, %v973
    %v987 = vadd.f32 %v917, %v973
    %v988 = vadd.f32 %v918, %v973
    %v989 = vadd.f32 %v919, %v973
    %v990 = vadd.f32 %v920, %v973
    %v991 = vadd.f32 %v921, %v973
    %v992 = vadd.f32 %v922, %v973
    %v993 = vadd.f32 %v923, %v973
    %v994 = vadd.f32 %v924, %v973
    %v995 = vadd.f32 %v925, %v973
    %v996 = vadd.f32 %v926, %v973
    %v997 = vadd.f32 %v927, %v973
    %v998 = vadd.f32 %v928, %v973
    %v999 = vadd.f32 %v929, %v973
    %v1000 = vadd.f32 %v930, %v973
    %v1001 = vadd.f32 %v931, %v973
    %v1002 = vadd.f32 %v932, %v973
    %v1003 = vadd.f32 %v933, %v973
    %v1004 = vadd.f32 %v934, %v973
    %v1005 = vadd.f32 %v935, %v973
    %v1006 = vadd.f32 %v936, %v973
    %v1007 = vadd.f32 %v937, %v973
    %v1008 = vadd.f32 %v938, %v973
    %v1009 = vadd.f32 %v939, %v973
    %v1010 = vadd.f32 %v940, %v973
    %v1011 = vadd.f32 %v941, %v973
    %v1012 = vadd.f32 %v942, %v973
    %v1013 = vadd.f32 %v943, %v973
    %v1014 = vadd.f32 %v944, %v973
    %v1015 = vadd.f32 %v945, %v973
    %v1016 = vadd.f32 %v946, %v973
    %v1017 = vadd.f32 %v947, %v973
    %v1018 = vadd.f32 %v948, %v973
    %v1019 = vadd.f32 %v949, %v973
    %v1020 = vadd.f32 %v950, %v973
    %v1021 = vadd.f32 %v951, %v973
    %v1022 = vadd.f32 %v952, %v973
    %v1023 = vadd.f32 %v953, %v973
    %v1024 = vadd.f32 %v954, %v973
    %v1025 = vadd.f32 %v955, %v973
    %v1026 = vadd.f32 %v956, %v973
    %v1027 = vadd.f32 %v957, %v973
    %v1028 = vadd.f32 %v958, %v973
    %v1029 = vadd.f32 %v959, %v973
    %v1030 = vadd.f32 %v960, %v973
    %v1031 = vadd.f32 %v961, %v973
    %v1032 = vadd.f32 %v962, %v973
    %v1033 = vadd.f32 %v963, %v973
    %v1034 = vadd.f32 %v964, %v973
    %v1035 = vadd.f32 %v965, %v973
    %v1036 = vadd.f32 %v966, %v973
    %v1037 = vadd.f32 %v967, %v973
    %v1038 = vmul.f32 %v974, 0.5
    %v1039 = vmul.f32 %v975, 0.5
    %v1040 = vmul.f32 %v976, 0.5
    %v1041 = vmul.f32 %v977, 0.5
    %v1042 = vmul.f32 %v978, 0.5
    %v1043 = vmul.f32 %v979, 0.5
    %v1044 = vmul.f32 %v980, 0.5
    %v1045 = vmul.f32 %v981, 0.5
    %v1046 = vmul.f32 %v982, 0.5
    %v1047 = vmul.f32 %v983, 0.5
    %v1048 = vmul.f32 %v984, 0.5
    %v1049 = vmul.f32 %v985, 0.5
    %v1050 = vmul.f32 %v986, 0.5
    %v1051 = vmul.f32 %v987, 0.5
    %v1052 = vmul.f32 %v988, 0.5
    %v1053 = vmul.f32 %v989, 0.5
    %v1054 = vmul.f32 %v990, 0.5
    %v1055 = vmul.f32 %v991, 0.5
    %v1056 = vmul.f32 %v992, 0.5
    %v1057 = vmul.f32 %v993, 0.5
    %v1058 = vmul.f32 %v994, 0.5
    %v1059 = vmul.f32 %v995, 0.5
    %v1060 = vmul.f32 %v996, 0.5
    %v1061 = vmul.f32 %v997, 0.5
    %v1062 = vmul.f32 %v998, 0.5
    %v1063 = vmul.f32 %v999, 0.5
    %v1064 = vmul.f32 %v1000, 0.5
    %v1065 = vmul.f32 %v1001, 0.5
    %v1066 = vmul.f32 %v1002, 0.5
    %v1067 = vmul.f32 %v1003, 0.5
    %v1068 = vmul.f32 %v1004, 0.5
    %v1069 = vmul.f32 %v1005, 0.5
    %v1070 = vmul.f32 %v1006, 0.5
    %v1071 = vmul.f32 %v1007, 0.5
    %v1072 = vmul.f32 %v1008, 0.5
    %v1073 = vmul.f32 %v1009, 0.5
    %v1074 = vmul.f32 %v1010, 0.5
    %v1075 = vmul.f32 %v1011, 0.5
    %v1076 = vmul.f32 %v1012, 0.5
    %v1077 = vmul.f32 %v1013, 0.5
    %v1078 = vmul.f32 %v1014, 0.5
    %v1079 = vmul.f32 %v1015, 0.5
    %v1080 = vmul.f32 %v1016, 0.5
    %v1081 = vmul.f32 %v1017, 0.5
    %v1082 = vmul.f32 %v1018, 0.5
    %v1083 = vmul.f32 %v1019, 0.5
    %v1084 = vmul.f32 %v1020, 0.5
    %v1085 = vmul.f32 %v1021, 0.5
    %v1086 = vmul.f32 %v1022, 0.5
    %v1087 = vmul.f32 %v1023, 0.5
    %v1088 = vmul.f32 %v1024, 0.5
    %v1089 = vmul.f32 %v1025, 0.5
    %v1090 = vmul.f32 %v1026, 0.5
    %v1091 = vmul.f32 %v1027, 0.5
    %v1092 = vmul.f32 %v1028, 0.5
    %v1093 = vmul.f32 %v1029, 0.5
    %v1094 = vmul.f32 %v1030, 0.5
    %v1095 = vmul.f32 %v1031, 0.5
    %v1096 = vmul.f32 %v1032, 0.5
    %v1097 = vmul.f32 %v1033, 0.5
    %v1098 = vmul.f32 %v1034, 0.5
    %v1099 = vmul.f32 %v1035, 0.5
    %v1100 = vmul.f32 %v1036, 0.5
    %v1101 = vmul.f32 %v1037, 0.5
    %v1102 = vmul.f32 %v974, 0.044715
    %v1103 = vmul.f32 %v975, 0.044715
    %v1104 = vmul.f32 %v976, 0.044715
    %v1105 = vmul.f32 %v977, 0.044715
    %v1106 = vmul.f32 %v978, 0.044715
    %v1107 = vmul.f32 %v979, 0.044715
    %v1108 = vmul.f32 %v980, 0.044715
    %v1109 = vmul.f32 %v981, 0.044715
    %v1110 = vmul.f32 %v982, 0.044715
    %v1111 = vmul.f32 %v983, 0.044715
    %v1112 = vmul.f32 %v984, 0.044715
    %v1113 = vmul.f32 %v985, 0.044715
    %v1114 = vmul.f32 %v986, 0.044715
    %v1115 = vmul.f32 %v987, 0.044715
    %v1116 = vmul.f32 %v988, 0.044715
    %v1117 = vmul.f32 %v989, 0.044715
    %v1118 = vmul.f32 %v990, 0.044715
    %v1119 = vmul.f32 %v991, 0.044715
    %v1120 = vmul.f32 %v992, 0.044715
    %v1121 = vmul.f32 %v993, 0.044715
    %v1122 = vmul.f32 %v994, 0.044715
    %v1123 = vmul.f32 %v995, 0.044715
    %v1124 = vmul.f32 %v996, 0.044715
    %v1125 = vmul.f32 %v997, 0.044715
    %v1126 = vmul.f32 %v998, 0.044715
    %v1127 = vmul.f32 %v999, 0.044715
    %v1128 = vmul.f32 %v1000, 0.044715
    %v1129 = vmul.f32 %v1001, 0.044715
    %v1130 = vmul.f32 %v1002, 0.044715
    %v1131 = vmul.f32 %v1003, 0.044715
    %v1132 = vmul.f32 %v1004, 0.044715
    %v1133 = vmul.f32 %v1005, 0.044715
    %v1134 = vmul.f32 %v1006, 0.044715
    %v1135 = vmul.f32 %v1007, 0.044715
    %v1136 = vmul.f32 %v1008, 0.044715
    %v1137 = vmul.f32 %v1009, 0.044715
    %v1138 = vmul.f32 %v1010, 0.044715
    %v1139 = vmul.f32 %v1011, 0.044715
    %v1140 = vmul.f32 %v1012, 0.044715
    %v1141 = vmul.f32 %v1013, 0.044715
    %v1142 = vmul.f32 %v1014, 0.044715
    %v1143 = vmul.f32 %v1015, 0.044715
    %v1144 = vmul.f32 %v1016, 0.044715
    %v1145 = vmul.f32 %v1017, 0.044715
    %v1146 = vmul.f32 %v1018, 0.044715
    %v1147 = vmul.f32 %v1019, 0.044715
    %v1148 = vmul.f32 %v1020, 0.044715
    %v1149 = vmul.f32 %v1021, 0.044715
    %v1150 = vmul.f32 %v1022, 0.044715
    %v1151 = vmul.f32 %v1023, 0.044715
    %v1152 = vmul.f32 %v1024, 0.044715
    %v1153 = vmul.f32 %v1025, 0.044715
    %v1154 = vmul.f32 %v1026, 0.044715
    %v1155 = vmul.f32 %v1027, 0.044715
    %v1156 = vmul.f32 %v1028, 0.044715
    %v1157 = vmul.f32 %v1029, 0.044715
    %v1158 = vmul.f32 %v1030, 0.044715
    %v1159 = vmul.f32 %v1031, 0.044715
    %v1160 = vmul.f32 %v1032, 0.044715
    %v1161 = vmul.f32 %v1033, 0.044715
    %v1162 = vmul.f32 %v1034, 0.044715
    %v1163 = vmul.f32 %v1035, 0.044715
    %v1164 = vmul.f32 %v1036, 0.044715
    %v1165 = vmul.f32 %v1037, 0.044715
    %v1166 = vmul.f32 %v1102, %v974
    %v1167 = vmul.f32 %v1103, %v975
    %v1168 = vmul.f32 %v1104, %v976
    %v1169 = vmul.f32 %v1105, %v977
    %v1170 = vmul.f32 %v1106, %v978
    %v1171 = vmul.f32 %v1107, %v979
    %v1172 = vmul.f32 %v1108, %v980
    %v1173 = vmul.f32 %v1109, %v981
    %v1174 = vmul.f32 %v1110, %v982
    %v1175 = vmul.f32 %v1111, %v983
    %v1176 = vmul.f32 %v1112, %v984
    %v1177 = vmul.f32 %v1113, %v985
    %v1178 = vmul.f32 %v1114, %v986
    %v1179 = vmul.f32 %v1115, %v987
    %v1180 = vmul.f32 %v1116, %v988
    %v1181 = vmul.f32 %v1117, %v989
    %v1182 = vmul.f32 %v1118, %v990
    %v1183 = vmul.f32 %v1119, %v991
    %v1184 = vmul.f32 %v1120, %v992
    %v1185 = vmul.f32 %v1121, %v993
    %v1186 = vmul.f32 %v1122, %v994
    %v1187 = vmul.f32 %v1123, %v995
    %v1188 = vmul.f32 %v1124, %v996
    %v1189 = vmul.f32 %v1125, %v997
    %v1190 = vmul.f32 %v1126, %v998
    %v1191 = vmul.f32 %v1127, %v999
    %v1192 = vmul.f32 %v1128, %v1000
    %v1193 = vmul.f32 %v1129, %v1001
    %v1194 = vmul.f32 %v1130, %v1002
    %v1195 = vmul.f32 %v1131, %v1003
    %v1196 = vmul.f32 %v1132, %v1004
    %v1197 = vmul.f32 %v1133, %v1005
    %v1198 = vmul.f32 %v1134, %v1006
    %v1199 = vmul.f32 %v1135, %v1007
    %v1200 = vmul.f32 %v1136, %v1008
    %v1201 = vmul.f32 %v1137, %v1009
    %v1202 = vmul.f32 %v1138, %v1010
    %v1203 = vmul.f32 %v1139, %v1011
    %v1204 = vmul.f32 %v1140, %v1012
    %v1205 = vmul.f32 %v1141, %v1013
    %v1206 = vmul.f32 %v1142, %v1014
    %v1207 = vmul.f32 %v1143, %v1015
    %v1208 = vmul.f32 %v1144, %v1016
    %v1209 = vmul.f32 %v1145, %v1017
    %v1210 = vmul.f32 %v1146, %v1018
    %v1211 = vmul.f32 %v1147, %v1019
    %v1212 = vmul.f32 %v1148, %v1020
    %v1213 = vmul.f32 %v1149, %v1021
    %v1214 = vmul.f32 %v1150, %v1022
    %v1215 = vmul.f32 %v1151, %v1023
    %v1216 = vmul.f32 %v1152, %v1024
    %v1217 = vmul.f32 %v1153, %v1025
    %v1218 = vmul.f32 %v1154, %v1026
    %v1219 = vmul.f32 %v1155, %v1027
    %v1220 = vmul.f32 %v1156, %v1028
    %v1221 = vmul.f32 %v1157, %v1029
    %v1222 = vmul.f32 %v1158, %v1030
    %v1223 = vmul.f32 %v1159, %v1031
    %v1224 = vmul.f32 %v1160, %v1032
    %v1225 = vmul.f32 %v1161, %v1033
    %v1226 = vmul.f32 %v1162, %v1034
    %v1227 = vmul.f32 %v1163, %v1035
    %v1228 = vmul.f32 %v1164, %v1036
    %v1229 = vmul.f32 %v1165, %v1037
    %v1230 = vmul.f32 %v1166, %v974
    %v1231 = vmul.f32 %v1167, %v975
    %v1232 = vmul.f32 %v1168, %v976
    %v1233 = vmul.f32 %v1169, %v977
    %v1234 = vmul.f32 %v1170, %v978
    %v1235 = vmul.f32 %v1171, %v979
    %v1236 = vmul.f32 %v1172, %v980
    %v1237 = vmul.f32 %v1173, %v981
    %v1238 = vmul.f32 %v1174, %v982
    %v1239 = vmul.f32 %v1175, %v983
    %v1240 = vmul.f32 %v1176, %v984
    %v1241 = vmul.f32 %v1177, %v985
    %v1242 = vmul.f32 %v1178, %v986
    %v1243 = vmul.f32 %v1179, %v987
    %v1244 = vmul.f32 %v1180, %v988
    %v1245 = vmul.f32 %v1181, %v989
    %v1246 = vmul.f32 %v1182, %v990
    %v1247 = vmul.f32 %v1183, %v991
    %v1248 = vmul.f32 %v1184, %v992
    %v1249 = vmul.f32 %v1185, %v993
    %v1250 = vmul.f32 %v1186, %v994
    %v1251 = vmul.f32 %v1187, %v995
    %v1252 = vmul.f32 %v1188, %v996
    %v1253 = vmul.f32 %v1189, %v997
    %v1254 = vmul.f32 %v1190, %v998
    %v1255 = vmul.f32 %v1191, %v999
    %v1256 = vmul.f32 %v1192, %v1000
    %v1257 = vmul.f32 %v1193, %v1001
    %v1258 = vmul.f32 %v1194, %v1002
    %v1259 = vmul.f32 %v1195, %v1003
    %v1260 = vmul.f32 %v1196, %v1004
    %v1261 = vmul.f32 %v1197, %v1005
    %v1262 = vmul.f32 %v1198, %v1006
    %v1263 = vmul.f32 %v1199, %v1007
    %v1264 = vmul.f32 %v1200, %v1008
    %v1265 = vmul.f32 %v1201, %v1009
    %v1266 = vmul.f32 %v1202, %v1010
    %v1267 = vmul.f32 %v1203, %v1011
    %v1268 = vmul.f32 %v1204, %v1012
    %v1269 = vmul.f32 %v1205, %v1013
    %v1270 = vmul.f32 %v1206, %v1014
    %v1271 = vmul.f32 %v1207, %v1015
    %v1272 = vmul.f32 %v1208, %v1016
    %v1273 = vmul.f32 %v1209, %v1017
    %v1274 = vmul.f32 %v1210, %v1018
    %v1275 = vmul.f32 %v1211, %v1019
    %v1276 = vmul.f32 %v1212, %v1020
    %v1277 = vmul.f32 %v1213, %v1021
    %v1278 = vmul.f32 %v1214, %v1022
    %v1279 = vmul.f32 %v1215, %v1023
    %v1280 = vmul.f32 %v1216, %v1024
    %v1281 = vmul.f32 %v1217, %v1025
    %v1282 = vmul.f32 %v1218, %v1026
    %v1283 = vmul.f32 %v1219, %v1027
    %v1284 = vmul.f32 %v1220, %v1028
    %v1285 = vmul.f32 %v1221, %v1029
    %v1286 = vmul.f32 %v1222, %v1030
    %v1287 = vmul.f32 %v1223, %v1031
    %v1288 = vmul.f32 %v1224, %v1032
    %v1289 = vmul.f32 %v1225, %v1033
    %v1290 = vmul.f32 %v1226, %v1034
    %v1291 = vmul.f32 %v1227, %v1035
    %v1292 = vmul.f32 %v1228, %v1036
    %v1293 = vmul.f32 %v1229, %v1037
    %v1294 = vadd.f32 %v974, %v1230
    %v1295 = vadd.f32 %v975, %v1231
    %v1296 = vadd.f32 %v976, %v1232
    %v1297 = vadd.f32 %v977, %v1233
    %v1298 = vadd.f32 %v978, %v1234
    %v1299 = vadd.f32 %v979, %v1235
    %v1300 = vadd.f32 %v980, %v1236
    %v1301 = vadd.f32 %v981, %v1237
    %v1302 = vadd.f32 %v982, %v1238
    %v1303 = vadd.f32 %v983, %v1239
    %v1304 = vadd.f32 %v984, %v1240
    %v1305 = vadd.f32 %v985, %v1241
    %v1306 = vadd.f32 %v986, %v1242
    %v1307 = vadd.f32 %v987, %v1243
    %v1308 = vadd.f32 %v988, %v1244
    %v1309 = vadd.f32 %v989, %v1245
    %v1310 = vadd.f32 %v990, %v1246
    %v1311 = vadd.f32 %v991, %v1247
    %v1312 = vadd.f32 %v992, %v1248
    %v1313 = vadd.f32 %v993, %v1249
    %v1314 = vadd.f32 %v994, %v1250
    %v1315 = vadd.f32 %v995, %v1251
    %v1316 = vadd.f32 %v996, %v1252
    %v1317 = vadd.f32 %v997, %v1253
    %v1318 = vadd.f32 %v998, %v1254
    %v1319 = vadd.f32 %v999, %v1255
    %v1320 = vadd.f32 %v1000, %v1256
    %v1321 = vadd.f32 %v1001, %v1257
    %v1322 = vadd.f32 %v1002, %v1258
    %v1323 = vadd.f32 %v1003, %v1259
    %v1324 = vadd.f32 %v1004, %v1260
    %v1325 = vadd.f32 %v1005, %v1261
    %v1326 = vadd.f32 %v1006, %v1262
    %v1327 = vadd.f32 %v1007, %v1263
    %v1328 = vadd.f32 %v1008, %v1264
    %v1329 = vadd.f32 %v1009, %v1265
    %v1330 = vadd.f32 %v1010, %v1266
    %v1331 = vadd.f32 %v1011, %v1267
    %v1332 = vadd.f32 %v1012, %v1268
    %v1333 = vadd.f32 %v1013, %v1269
    %v1334 = vadd.f32 %v1014, %v1270
    %v1335 = vadd.f32 %v1015, %v1271
    %v1336 = vadd.f32 %v1016, %v1272
    %v1337 = vadd.f32 %v1017, %v1273
    %v1338 = vadd.f32 %v1018, %v1274
    %v1339 = vadd.f32 %v1019, %v1275
    %v1340 = vadd.f32 %v1020, %v1276
    %v1341 = vadd.f32 %v1021, %v1277
    %v1342 = vadd.f32 %v1022, %v1278
    %v1343 = vadd.f32 %v1023, %v1279
    %v1344 = vadd.f32 %v1024, %v1280
    %v1345 = vadd.f32 %v1025, %v1281
    %v1346 = vadd.f32 %v1026, %v1282
    %v1347 = vadd.f32 %v1027, %v1283
    %v1348 = vadd.f32 %v1028, %v1284
    %v1349 = vadd.f32 %v1029, %v1285
    %v1350 = vadd.f32 %v1030, %v1286
    %v1351 = vadd.f32 %v1031, %v1287
    %v1352 = vadd.f32 %v1032, %v1288
    %v1353 = vadd.f32 %v1033, %v1289
    %v1354 = vadd.f32 %v1034, %v1290
    %v1355 = vadd.f32 %v1035, %v1291
    %v1356 = vadd.f32 %v1036, %v1292
    %v1357 = vadd.f32 %v1037, %v1293
    %v1358 = vmul.f32 %v1294, 0.7978846
    %v1359 = vmul.f32 %v1295, 0.7978846
    %v1360 = vmul.f32 %v1296, 0.7978846
    %v1361 = vmul.f32 %v1297, 0.7978846
    %v1362 = vmul.f32 %v1298, 0.7978846
    %v1363 = vmul.f32 %v1299, 0.7978846
    %v1364 = vmul.f32 %v1300, 0.7978846
    %v1365 = vmul.f32 %v1301, 0.7978846
    %v1366 = vmul.f32 %v1302, 0.7978846
    %v1367 = vmul.f32 %v1303, 0.7978846
    %v1368 = vmul.f32 %v1304, 0.7978846
    %v1369 = vmul.f32 %v1305, 0.7978846
    %v1370 = vmul.f32 %v1306, 0.7978846
    %v1371 = vmul.f32 %v1307, 0.7978846
    %v1372 = vmul.f32 %v1308, 0.7978846
    %v1373 = vmul.f32 %v1309, 0.7978846
    %v1374 = vmul.f32 %v1310, 0.7978846
    %v1375 = vmul.f32 %v1311, 0.7978846
    %v1376 = vmul.f32 %v1312, 0.7978846
    %v1377 = vmul.f32 %v1313, 0.7978846
    %v1378 = vmul.f32 %v1314, 0.7978846
    %v1379 = vmul.f32 %v1315, 0.7978846
    %v1380 = vmul.f32 %v1316, 0.7978846
    %v1381 = vmul.f32 %v1317, 0.7978846
    %v1382 = vmul.f32 %v1318, 0.7978846
    %v1383 = vmul.f32 %v1319, 0.7978846
    %v1384 = vmul.f32 %v1320, 0.7978846
    %v1385 = vmul.f32 %v1321, 0.7978846
    %v1386 = vmul.f32 %v1322, 0.7978846
    %v1387 = vmul.f32 %v1323, 0.7978846
    %v1388 = vmul.f32 %v1324, 0.7978846
    %v1389 = vmul.f32 %v1325, 0.7978846
    %v1390 = vmul.f32 %v1326, 0.7978846
    %v1391 = vmul.f32 %v1327, 0.7978846
    %v1392 = vmul.f32 %v1328, 0.7978846
    %v1393 = vmul.f32 %v1329, 0.7978846
    %v1394 = vmul.f32 %v1330, 0.7978846
    %v1395 = vmul.f32 %v1331, 0.7978846
    %v1396 = vmul.f32 %v1332, 0.7978846
    %v1397 = vmul.f32 %v1333, 0.7978846
    %v1398 = vmul.f32 %v1334, 0.7978846
    %v1399 = vmul.f32 %v1335, 0.7978846
    %v1400 = vmul.f32 %v1336, 0.7978846
    %v1401 = vmul.f32 %v1337, 0.7978846
    %v1402 = vmul.f32 %v1338, 0.7978846
    %v1403 = vmul.f32 %v1339, 0.7978846
    %v1404 = vmul.f32 %v1340, 0.7978846
    %v1405 = vmul.f32 %v1341, 0.7978846
    %v1406 = vmul.f32 %v1342, 0.7978846
    %v1407 = vmul.f32 %v1343, 0.7978846
    %v1408 = vmul.f32 %v1344, 0.7978846
    %v1409 = vmul.f32 %v1345, 0.7978846
    %v1410 = vmul.f32 %v1346, 0.7978846
    %v1411 = vmul.f32 %v1347, 0.7978846
    %v1412 = vmul.f32 %v1348, 0.7978846
    %v1413 = vmul.f32 %v1349, 0.7978846
    %v1414 = vmul.f32 %v1350, 0.7978846
    %v1415 = vmul.f32 %v1351, 0.7978846
    %v1416 = vmul.f32 %v1352, 0.7978846
    %v1417 = vmul.f32 %v1353, 0.7978846
    %v1418 = vmul.f32 %v1354, 0.7978846
    %v1419 = vmul.f32 %v1355, 0.7978846
    %v1420 = vmul.f32 %v1356, 0.7978846
    %v1421 = vmul.f32 %v1357, 0.7978846
    %v1422 = vtanh.pop %v1358
    %v1423 = vtanh.pop %v1359
    %v1424 = vtanh.pop %v1360
    %v1425 = vtanh.pop %v1361
    %v1426 = vtanh.pop %v1362
    %v1427 = vtanh.pop %v1363
    %v1428 = vtanh.pop %v1364
    %v1429 = vtanh.pop %v1365
    %v1430 = vtanh.pop %v1366
    %v1431 = vtanh.pop %v1367
    %v1432 = vtanh.pop %v1368
    %v1433 = vtanh.pop %v1369
    %v1434 = vtanh.pop %v1370
    %v1435 = vtanh.pop %v1371
    %v1436 = vtanh.pop %v1372
    %v1437 = vtanh.pop %v1373
    %v1438 = vtanh.pop %v1374
    %v1439 = vtanh.pop %v1375
    %v1440 = vtanh.pop %v1376
    %v1441 = vtanh.pop %v1377
    %v1442 = vtanh.pop %v1378
    %v1443 = vtanh.pop %v1379
    %v1444 = vtanh.pop %v1380
    %v1445 = vtanh.pop %v1381
    %v1446 = vtanh.pop %v1382
    %v1447 = vtanh.pop %v1383
    %v1448 = vtanh.pop %v1384
    %v1449 = vtanh.pop %v1385
    %v1450 = vtanh.pop %v1386
    %v1451 = vtanh.pop %v1387
    %v1452 = vtanh.pop %v1388
    %v1453 = vtanh.pop %v1389
    %v1454 = vtanh.pop %v1390
    %v1455 = vtanh.pop %v1391
    %v1456 = vtanh.pop %v1392
    %v1457 = vtanh.pop %v1393
    %v1458 = vtanh.pop %v1394
    %v1459 = vtanh.pop %v1395
    %v1460 = vtanh.pop %v1396
    %v1461 = vtanh.pop %v1397
    %v1462 = vtanh.pop %v1398
    %v1463 = vtanh.pop %v1399
    %v1464 = vtanh.pop %v1400
    %v1465 = vtanh.pop %v1401
    %v1466 = vtanh.pop %v1402
    %v1467 = vtanh.pop %v1403
    %v1468 = vtanh.pop %v1404
    %v1469 = vtanh.pop %v1405
    %v1470 = vtanh.pop %v1406
    %v1471 = vtanh.pop %v1407
    %v1472 = vtanh.pop %v1408
    %v1473 = vtanh.pop %v1409
    %v1474 = vtanh.pop %v1410
    %v1475 = vtanh.pop %v1411
    %v1476 = vtanh.pop %v1412
    %v1477 = vtanh.pop %v1413
    %v1478 = vtanh.pop %v1414
    %v1479 = vtanh.pop %v1415
    %v1480 = vtanh.pop %v1416
    %v1481 = vtanh.pop %v1417
    %v1482 = vtanh.pop %v1418
    %v1483 = vtanh.pop %v1419
    %v1484 = vtanh.pop %v1420
    %v1485 = vtanh.pop %v1421
    %v1486 = vadd.f32 %v1422, 1.0
    %v1487 = vadd.f32 %v1423, 1.0
    %v1488 = vadd.f32 %v1424, 1.0
    %v1489 = vadd.f32 %v1425, 1.0
    %v1490 = vadd.f32 %v1426, 1.0
    %v1491 = vadd.f32 %v1427, 1.0
    %v1492 = vadd.f32 %v1428, 1.0
    %v1493 = vadd.f32 %v1429, 1.0
    %v1494 = vadd.f32 %v1430, 1.0
    %v1495 = vadd.f32 %v1431, 1.0
    %v1496 = vadd.f32 %v1432, 1.0
    %v1497 = vadd.f32 %v1433, 1.0
    %v1498 = vadd.f32 %v1434, 1.0
    %v1499 = vadd.f32 %v1435, 1.0
    %v1500 = vadd.f32 %v1436, 1.0
    %v1501 = vadd.f32 %v1437, 1.0
    %v1502 = vadd.f32 %v1438, 1.0
    %v1503 = vadd.f32 %v1439, 1.0
    %v1504 = vadd.f32 %v1440, 1.0
    %v1505 = vadd.f32 %v1441, 1.0
    %v1506 = vadd.f32 %v1442, 1.0
    %v1507 = vadd.f32 %v1443, 1.0
    %v1508 = vadd.f32 %v1444, 1.0
    %v1509 = vadd.f32 %v1445, 1.0
    %v1510 = vadd.f32 %v1446, 1.0
    %v1511 = vadd.f32 %v1447, 1.0
    %v1512 = vadd.f32 %v1448, 1.0
    %v1513 = vadd.f32 %v1449, 1.0
    %v1514 = vadd.f32 %v1450, 1.0
    %v1515 = vadd.f32 %v1451, 1.0
    %v1516 = vadd.f32 %v1452, 1.0
    %v1517 = vadd.f32 %v1453, 1.0
    %v1518 = vadd.f32 %v1454, 1.0
    %v1519 = vadd.f32 %v1455, 1.0
    %v1520 = vadd.f32 %v1456, 1.0
    %v1521 = vadd.f32 %v1457, 1.0
    %v1522 = vadd.f32 %v1458, 1.0
    %v1523 = vadd.f32 %v1459, 1.0
    %v1524 = vadd.f32 %v1460, 1.0
    %v1525 = vadd.f32 %v1461, 1.0
    %v1526 = vadd.f32 %v1462, 1.0
    %v1527 = vadd.f32 %v1463, 1.0
    %v1528 = vadd.f32 %v1464, 1.0
    %v1529 = vadd.f32 %v1465, 1.0
    %v1530 = vadd.f32 %v1466, 1.0
    %v1531 = vadd.f32 %v1467, 1.0
    %v1532 = vadd.f32 %v1468, 1.0
    %v1533 = vadd.f32 %v1469, 1.0
    %v1534 = vadd.f32 %v1470, 1.0
    %v1535 = vadd.f32 %v1471, 1.0
    %v1536 = vadd.f32 %v1472, 1.0
    %v1537 = vadd.f32 %v1473, 1.0
    %v1538 = vadd.f32 %v1474, 1.0
    %v1539 = vadd.f32 %v1475, 1.0
    %v1540 = vadd.f32 %v1476, 1.0
    %v1541 = vadd.f32 %v1477, 1.0
    %v1542 = vadd.f32 %v1478, 1.0
    %v1543 = vadd.f32 %v1479, 1.0
    %v1544 = vadd.f32 %v1480, 1.0
    %v1545 = vadd.f32 %v1481, 1.0
    %v1546 = vadd.f32 %v1482, 1.0
    %v1547 = vadd.f32 %v1483, 1.0
    %v1548 = vadd.f32 %v1484, 1.0
    %v1549 = vadd.f32 %v1485, 1.0
    %v1550 = vmul.f32 %v1038, %v1486
    %v1551 = vmul.f32 %v1039, %v1487
    %v1552 = vmul.f32 %v1040, %v1488
    %v1553 = vmul.f32 %v1041, %v1489
    %v1554 = vmul.f32 %v1042, %v1490
    %v1555 = vmul.f32 %v1043, %v1491
    %v1556 = vmul.f32 %v1044, %v1492
    %v1557 = vmul.f32 %v1045, %v1493
    %v1558 = vmul.f32 %v1046, %v1494
    %v1559 = vmul.f32 %v1047, %v1495
    %v1560 = vmul.f32 %v1048, %v1496
    %v1561 = vmul.f32 %v1049, %v1497
    %v1562 = vmul.f32 %v1050, %v1498
    %v1563 = vmul.f32 %v1051, %v1499
    %v1564 = vmul.f32 %v1052, %v1500
    %v1565 = vmul.f32 %v1053, %v1501
    %v1566 = vmul.f32 %v1054, %v1502
    %v1567 = vmul.f32 %v1055, %v1503
    %v1568 = vmul.f32 %v1056, %v1504
    %v1569 = vmul.f32 %v1057, %v1505
    %v1570 = vmul.f32 %v1058, %v1506
    %v1571 = vmul.f32 %v1059, %v1507
    %v1572 = vmul.f32 %v1060, %v1508
    %v1573 = vmul.f32 %v1061, %v1509
    %v1574 = vmul.f32 %v1062, %v1510
    %v1575 = vmul.f32 %v1063, %v1511
    %v1576 = vmul.f32 %v1064, %v1512
    %v1577 = vmul.f32 %v1065, %v1513
    %v1578 = vmul.f32 %v1066, %v1514
    %v1579 = vmul.f32 %v1067, %v1515
    %v1580 = vmul.f32 %v1068, %v1516
    %v1581 = vmul.f32 %v1069, %v1517
    %v1582 = vmul.f32 %v1070, %v1518
    %v1583 = vmul.f32 %v1071, %v1519
    %v1584 = vmul.f32 %v1072, %v1520
    %v1585 = vmul.f32 %v1073, %v1521
    %v1586 = vmul.f32 %v1074, %v1522
    %v1587 = vmul.f32 %v1075, %v1523
    %v1588 = vmul.f32 %v1076, %v1524
    %v1589 = vmul.f32 %v1077, %v1525
    %v1590 = vmul.f32 %v1078, %v1526
    %v1591 = vmul.f32 %v1079, %v1527
    %v1592 = vmul.f32 %v1080, %v1528
    %v1593 = vmul.f32 %v1081, %v1529
    %v1594 = vmul.f32 %v1082, %v1530
    %v1595 = vmul.f32 %v1083, %v1531
    %v1596 = vmul.f32 %v1084, %v1532
    %v1597 = vmul.f32 %v1085, %v1533
    %v1598 = vmul.f32 %v1086, %v1534
    %v1599 = vmul.f32 %v1087, %v1535
    %v1600 = vmul.f32 %v1088, %v1536
    %v1601 = vmul.f32 %v1089, %v1537
    %v1602 = vmul.f32 %v1090, %v1538
    %v1603 = vmul.f32 %v1091, %v1539
    %v1604 = vmul.f32 %v1092, %v1540
    %v1605 = vmul.f32 %v1093, %v1541
    %v1606 = vmul.f32 %v1094, %v1542
    %v1607 = vmul.f32 %v1095, %v1543
    %v1608 = vmul.f32 %v1096, %v1544
    %v1609 = vmul.f32 %v1097, %v1545
    %v1610 = vmul.f32 %v1098, %v1546
    %v1611 = vmul.f32 %v1099, %v1547
    %v1612 = vmul.f32 %v1100, %v1548
    %v1613 = vmul.f32 %v1101, %v1549
    %v1614 = vpack.c.bf16 %v1551, %v1550
    %v1615 = vpack.c.bf16 %v1553, %v1552
    %v1616 = vpack.c.bf16 %v1555, %v1554
    %v1617 = vpack.c.bf16 %v1557, %v1556
    %v1618 = vpack.c.bf16 %v1559, %v1558
    %v1619 = vpack.c.bf16 %v1561, %v1560
    %v1620 = vpack.c.bf16 %v1563, %v1562
    %v1621 = vpack.c.bf16 %v1565, %v1564
    %v1622 = vpack.c.bf16 %v1567, %v1566
    %v1623 = vpack.c.bf16 %v1569, %v1568
    %v1624 = vpack.c.bf16 %v1571, %v1570
    %v1625 = vpack.c.bf16 %v1573, %v1572
    %v1626 = vpack.c.bf16 %v1575, %v1574
    %v1627 = vpack.c.bf16 %v1577, %v1576
    %v1628 = vpack.c.bf16 %v1579, %v1578
    %v1629 = vpack.c.bf16 %v1581, %v1580
    %v1630 = vpack.c.bf16 %v1583, %v1582
    %v1631 = vpack.c.bf16 %v1585, %v1584
    %v1632 = vpack.c.bf16 %v1587, %v1586
    %v1633 = vpack.c.bf16 %v1589, %v1588
    %v1634 = vpack.c.bf16 %v1591, %v1590
    %v1635 = vpack.c.bf16 %v1593, %v1592
    %v1636 = vpack.c.bf16 %v1595, %v1594
    %v1637 = vpack.c.bf16 %v1597, %v1596
    %v1638 = vpack.c.bf16 %v1599, %v1598
    %v1639 = vpack.c.bf16 %v1601, %v1600
    %v1640 = vpack.c.bf16 %v1603, %v1602
    %v1641 = vpack.c.bf16 %v1605, %v1604
    %v1642 = vpack.c.bf16 %v1607, %v1606
    %v1643 = vpack.c.bf16 %v1609, %v1608
    %v1644 = vpack.c.bf16 %v1611, %v1610
    %v1645 = vpack.c.bf16 %v1613, %v1612
    %v1678 = vunpack.c.l.b16 %v1614
    %v1679 = vunpack.c.h.b16 %v1614
    %v1680 = vunpack.c.l.b16 %v1615
    %v1681 = vunpack.c.h.b16 %v1615
    %v1682 = vunpack.c.l.b16 %v1616
    %v1683 = vunpack.c.h.b16 %v1616
    %v1684 = vunpack.c.l.b16 %v1617
    %v1685 = vunpack.c.h.b16 %v1617
    %v1686 = vunpack.c.l.b16 %v1618
    %v1687 = vunpack.c.h.b16 %v1618
    %v1688 = vunpack.c.l.b16 %v1619
    %v1689 = vunpack.c.h.b16 %v1619
    %v1690 = vunpack.c.l.b16 %v1620
    %v1691 = vunpack.c.h.b16 %v1620
    %v1692 = vunpack.c.l.b16 %v1621
    %v1693 = vunpack.c.h.b16 %v1621
    %v1694 = vunpack.c.l.b16 %v1622
    %v1695 = vunpack.c.h.b16 %v1622
    %v1696 = vunpack.c.l.b16 %v1623
    %v1697 = vunpack.c.h.b16 %v1623
    %v1698 = vunpack.c.l.b16 %v1624
    %v1699 = vunpack.c.h.b16 %v1624
    %v1700 = vunpack.c.l.b16 %v1625
    %v1701 = vunpack.c.h.b16 %v1625
    %v1702 = vunpack.c.l.b16 %v1626
    %v1703 = vunpack.c.h.b16 %v1626
    %v1704 = vunpack.c.l.b16 %v1627
    %v1705 = vunpack.c.h.b16 %v1627
    %v1706 = vunpack.c.l.b16 %v1628
    %v1707 = vunpack.c.h.b16 %v1628
    %v1708 = vunpack.c.l.b16 %v1629
    %v1709 = vunpack.c.h.b16 %v1629
    %v1710 = vunpack.c.l.b16 %v1630
    %v1711 = vunpack.c.h.b16 %v1630
    %v1712 = vunpack.c.l.b16 %v1631
    %v1713 = vunpack.c.h.b16 %v1631
    %v1714 = vunpack.c.l.b16 %v1632
    %v1715 = vunpack.c.h.b16 %v1632
    %v1716 = vunpack.c.l.b16 %v1633
    %v1717 = vunpack.c.h.b16 %v1633
    %v1718 = vunpack.c.l.b16 %v1634
    %v1719 = vunpack.c.h.b16 %v1634
    %v1720 = vunpack.c.l.b16 %v1635
    %v1721 = vunpack.c.h.b16 %v1635
    %v1722 = vunpack.c.l.b16 %v1636
    %v1723 = vunpack.c.h.b16 %v1636
    %v1724 = vunpack.c.l.b16 %v1637
    %v1725 = vunpack.c.h.b16 %v1637
    %v1726 = vunpack.c.l.b16 %v1638
    %v1727 = vunpack.c.h.b16 %v1638
    %v1728 = vunpack.c.l.b16 %v1639
    %v1729 = vunpack.c.h.b16 %v1639
    %v1730 = vunpack.c.l.b16 %v1640
    %v1731 = vunpack.c.h.b16 %v1640
    %v1732 = vunpack.c.l.b16 %v1641
    %v1733 = vunpack.c.h.b16 %v1641
    %v1734 = vunpack.c.l.b16 %v1642
    %v1735 = vunpack.c.h.b16 %v1642
    %v1736 = vunpack.c.l.b16 %v1643
    %v1737 = vunpack.c.h.b16 %v1643
    %v1738 = vunpack.c.l.b16 %v1644
    %v1739 = vunpack.c.h.b16 %v1644
    %v1740 = vunpack.c.l.b16 %v1645
    %v1741 = vunpack.c.h.b16 %v1645
    %v1742 = vpack.c.b16 %v1678, %v1678
    %v1743 = vpack.c.b16 %v1679, %v1679
    %v1744 = vpack.c.b16 %v1680, %v1680
    %v1745 = vpack.c.b16 %v1681, %v1681
    %v1746 = vpack.c.b16 %v1682, %v1682
    %v1747 = vpack.c.b16 %v1683, %v1683
    %v1748 = vpack.c.b16 %v1684, %v1684
    %v1749 = vpack.c.b16 %v1685, %v1685
    %v1750 = vpack.c.b16 %v1686, %v1686
    %v1751 = vpack.c.b16 %v1687, %v1687
    %v1752 = vpack.c.b16 %v1688, %v1688
    %v1753 = vpack.c.b16 %v1689, %v1689
    %v1754 = vpack.c.b16 %v1690, %v1690
    %v1755 = vpack.c.b16 %v1691, %v1691
    %v1756 = vpack.c.b16 %v1692, %v1692
    %v1757 = vpack.c.b16 %v1693, %v1693
    %v1758 = vpack.c.b16 %v1694, %v1694
    %v1759 = vpack.c.b16 %v1695, %v1695
    %v1760 = vpack.c.b16 %v1696, %v1696
    %v1761 = vpack.c.b16 %v1697, %v1697
    %v1762 = vpack.c.b16 %v1698, %v1698
    %v1763 = vpack.c.b16 %v1699, %v1699
    %v1764 = vpack.c.b16 %v1700, %v1700
    %v1765 = vpack.c.b16 %v1701, %v1701
    %v1766 = vpack.c.b16 %v1702, %v1702
    %v1767 = vpack.c.b16 %v1703, %v1703
    %v1768 = vpack.c.b16 %v1704, %v1704
    %v1769 = vpack.c.b16 %v1705, %v1705
    %v1770 = vpack.c.b16 %v1706, %v1706
    %v1771 = vpack.c.b16 %v1707, %v1707
    %v1772 = vpack.c.b16 %v1708, %v1708
    %v1773 = vpack.c.b16 %v1709, %v1709
    %v1774 = vpack.c.b16 %v1710, %v1710
    %v1775 = vpack.c.b16 %v1711, %v1711
    %v1776 = vpack.c.b16 %v1712, %v1712
    %v1777 = vpack.c.b16 %v1713, %v1713
    %v1778 = vpack.c.b16 %v1714, %v1714
    %v1779 = vpack.c.b16 %v1715, %v1715
    %v1780 = vpack.c.b16 %v1716, %v1716
    %v1781 = vpack.c.b16 %v1717, %v1717
    %v1782 = vpack.c.b16 %v1718, %v1718
    %v1783 = vpack.c.b16 %v1719, %v1719
    %v1784 = vpack.c.b16 %v1720, %v1720
    %v1785 = vpack.c.b16 %v1721, %v1721
    %v1786 = vpack.c.b16 %v1722, %v1722
    %v1787 = vpack.c.b16 %v1723, %v1723
    %v1788 = vpack.c.b16 %v1724, %v1724
    %v1789 = vpack.c.b16 %v1725, %v1725
    %v1790 = vpack.c.b16 %v1726, %v1726
    %v1791 = vpack.c.b16 %v1727, %v1727
    %v1792 = vpack.c.b16 %v1728, %v1728
    %v1793 = vpack.c.b16 %v1729, %v1729
    %v1794 = vpack.c.b16 %v1730, %v1730
    %v1795 = vpack.c.b16 %v1731, %v1731
    %v1796 = vpack.c.b16 %v1732, %v1732
    %v1797 = vpack.c.b16 %v1733, %v1733
    %v1798 = vpack.c.b16 %v1734, %v1734
    %v1799 = vpack.c.b16 %v1735, %v1735
    %v1800 = vpack.c.b16 %v1736, %v1736
    %v1801 = vpack.c.b16 %v1737, %v1737
    %v1802 = vpack.c.b16 %v1738, %v1738
    %v1803 = vpack.c.b16 %v1739, %v1739
    %v1804 = vpack.c.b16 %v1740, %v1740
    %v1805 = vpack.c.b16 %v1741, %v1741
    %1870 = vst [vmem:[%s3] sm:$0xf] %v1742
    %1871 = vst [vmem:[%s3 + $0x4] sm:$0xf] %v1743
    %1872 = vst [vmem:[%s3 + $0x8] sm:$0xf] %v1744
    %1873 = vst [vmem:[%s3 + $0xc] sm:$0xf] %v1745
    %1874 = vst [vmem:[%s3 + $0x10] sm:$0xf] %v1746
    %1875 = vst [vmem:[%s3 + $0x14] sm:$0xf] %v1747
    %1876 = vst [vmem:[%s3 + $0x18] sm:$0xf] %v1748
    %1877 = vst [vmem:[%s3 + $0x1c] sm:$0xf] %v1749
    %1878 = vst [vmem:[%s3 + $0x20] sm:$0xf] %v1750
    %1879 = vst [vmem:[%s3 + $0x24] sm:$0xf] %v1751
    %1880 = vst [vmem:[%s3 + $0x28] sm:$0xf] %v1752
    %1881 = vst [vmem:[%s3 + $0x2c] sm:$0xf] %v1753
    %1882 = vst [vmem:[%s3 + $0x30] sm:$0xf] %v1754
    %1883 = vst [vmem:[%s3 + $0x34] sm:$0xf] %v1755
    %1884 = vst [vmem:[%s3 + $0x38] sm:$0xf] %v1756
    %1885 = vst [vmem:[%s3 + $0x3c] sm:$0xf] %v1757
    %1886 = vst [vmem:[%s3 + $0x40] sm:$0xf] %v1758
    %1887 = vst [vmem:[%s3 + $0x44] sm:$0xf] %v1759
    %1888 = vst [vmem:[%s3 + $0x48] sm:$0xf] %v1760
    %1889 = vst [vmem:[%s3 + $0x4c] sm:$0xf] %v1761
    %1890 = vst [vmem:[%s3 + $0x50] sm:$0xf] %v1762
    %1891 = vst [vmem:[%s3 + $0x54] sm:$0xf] %v1763
    %1892 = vst [vmem:[%s3 + $0x58] sm:$0xf] %v1764
    %1893 = vst [vmem:[%s3 + $0x5c] sm:$0xf] %v1765
    %1894 = vst [vmem:[%s3 + $0x60] sm:$0xf] %v1766
    %1895 = vst [vmem:[%s3 + $0x64] sm:$0xf] %v1767
    %1896 = vst [vmem:[%s3 + $0x68] sm:$0xf] %v1768
    %1897 = vst [vmem:[%s3 + $0x6c] sm:$0xf] %v1769
    %1898 = vst [vmem:[%s3 + $0x70] sm:$0xf] %v1770
    %1899 = vst [vmem:[%s3 + $0x74] sm:$0xf] %v1771
    %1900 = vst [vmem:[%s3 + $0x78] sm:$0xf] %v1772
    %1901 = vst [vmem:[%s3 + $0x7c] sm:$0xf] %v1773
    %1902 = vst [vmem:[%s3 + $0x80] sm:$0xf] %v1774
    %1903 = vst [vmem:[%s3 + $0x84] sm:$0xf] %v1775
    %1904 = vst [vmem:[%s3 + $0x88] sm:$0xf] %v1776
    %1905 = vst [vmem:[%s3 + $0x8c] sm:$0xf] %v1777
    %1906 = vst [vmem:[%s3 + $0x90] sm:$0xf] %v1778
    %1907 = vst [vmem:[%s3 + $0x94] sm:$0xf] %v1779
    %1908 = vst [vmem:[%s3 + $0x98] sm:$0xf] %v1780
    %1909 = vst [vmem:[%s3 + $0x9c] sm:$0xf] %v1781
    %1910 = vst [vmem:[%s3 + $0xa0] sm:$0xf] %v1782
    %1911 = vst [vmem:[%s3 + $0xa4] sm:$0xf] %v1783
    %1912 = vst [vmem:[%s3 + $0xa8] sm:$0xf] %v1784
    %1913 = vst [vmem:[%s3 + $0xac] sm:$0xf] %v1785
    %1914 = vst [vmem:[%s3 + $0xb0] sm:$0xf] %v1786
    %1915 = vst [vmem:[%s3 + $0xb4] sm:$0xf] %v1787
    %1916 = vst [vmem:[%s3 + $0xb8] sm:$0xf] %v1788
    %1917 = vst [vmem:[%s3 + $0xbc] sm:$0xf] %v1789
    %1918 = vst [vmem:[%s3 + $0xc0] sm:$0xf] %v1790
    %1919 = vst [vmem:[%s3 + $0xc4] sm:$0xf] %v1791
    %1920 = vst [vmem:[%s3 + $0xc8] sm:$0xf] %v1792
    %1921 = vst [vmem:[%s3 + $0xcc] sm:$0xf] %v1793
    %1922 = vst [vmem:[%s3 + $0xd0] sm:$0xf] %v1794
    %1923 = vst [vmem:[%s3 + $0xd4] sm:$0xf] %v1795
    %1924 = vst [vmem:[%s3 + $0xd8] sm:$0xf] %v1796
    %1925 = vst [vmem:[%s3 + $0xdc] sm:$0xf] %v1797
    %1926 = vst [vmem:[%s3 + $0xe0] sm:$0xf] %v1798
    %1927 = vst [vmem:[%s3 + $0xe4] sm:$0xf] %v1799
    %1928 = vst [vmem:[%s3 + $0xe8] sm:$0xf] %v1800
    %1929 = vst [vmem:[%s3 + $0xec] sm:$0xf] %v1801
    %1930 = vst [vmem:[%s3 + $0xf0] sm:$0xf] %v1802
    %1931 = vst [vmem:[%s3 + $0xf4] sm:$0xf] %v1803
    %1932 = vst [vmem:[%s3 + $0xf8] sm:$0xf] %v1804
    %1933 = vst [vmem:[%s3 + $0xfc] sm:$0xf] %v1805
  $region21: #{whisper_audio_tower_forward.7} parent=0 // pred_fallthru
    _
  // Predicated region
  $region22: #{whisper_audio_tower_forward.7} parent=0 // pred_check
    _
  $region23: #{whisper_audio_tower_forward.7} parent=0 // pred_check_branch
    %1935 = sbr.rel (0) target = $region25
  $region24: #{whisper_audio_tower_forward.7} parent=0 // pred_region
    _
  $region25: #{whisper_audio_tower_forward.7} parent=0 // pred_fallthru
    _
  // Predicated region
  $region26: #{whisper_audio_tower_forward.7} parent=0 // pred_check
    _
  $region27: #{whisper_audio_tower_forward.7} parent=0 // pred_check_branch
    %1937 = sbr.rel (0) target = $region29
  $region28: #{whisper_audio_tower_forward.7} parent=0 // pred_region
    _
  $region29: #{whisper_audio_tower_forward.7} parent=0 // pred_fallthru
    _

// kernel: whisper_audio_tower_forward.8
$region0: #{whisper_audio_tower_forward.8}
  #allocation0 [shape = 'u32[]', space=smem, size = 0x4, offset = 0x4, fixed_abs, tag = 'smem constant byte address 0x4 - core index']
  #allocation1 [shape = 'u32[144,128]{1,0:T(1,128)}', space=vmem, size = 0x12000, scoped, tag = 'internal scratch']
  #allocation2 [shape = 'f32[128,128]{1,0:T(8,128)}', space=vmem, size = 0x10000, scoped, tag = 'scratch operand']
  %s0 = inlined_call_operand.vmem [shape: bf16[256,384], index: 0, kind: input, shape index: {}]
  %s1 = inlined_call_operand.vmem [shape: bf16[384,128], index: 1, kind: input, shape index: {}]
  %s2 = inlined_call_operand.vmem [shape: bf16[1,128], index: 2, kind: input, shape index: {}]
  %s3 = inlined_call_operand.vmem [shape: bf16[128,128], index: 3, kind: input, shape index: {}]
  %s4 = inlined_call_operand.vmem [shape: bf16[256,128], index: 4, kind: output, shape index: {}]
  %s5 = sld [smem:[#allocation0]]
  $region57: #{whisper_audio_tower_forward.8} parent=0
    _
  %s7 = ssub.s32 1, %s5
  %s8 = scalar_select 0, %s7, %s5
  loop: start=0, step=1, limit=4
  $region2: #{whisper_audio_tower_forward.8} parent=0 // loop_pre_header
    _
  $region3: #{whisper_audio_tower_forward.8} parent=0 // loop_header
    %s10 = sphi 0, %s14
    %p11 = scmp.ge.s32.totalorder %s10, 4
    %s17 = sphi 0, %s36
    %s18 = sphi 0, %s32
    %s19 = sphi 0, %s28
    %s20 = sphi 0, %s17
    %s21 = sphi 0, %s18
    %s22 = sphi 0, %s19
    %s23 = sphi 0, %s20
    %s24 = sphi 0, %s21
    %s25 = sphi 0, %s22
    %s41 = sphi 0, %s43
    %s44 = sphi 0, %s41
    %s45 = sphi 0, %s44
    %s61 = sphi 0, %s45
    %s69 = sphi 0, %s71
    %s72 = sphi 0, %s69
    %s73 = sphi 0, %s72
    %s89 = sphi 0, %s73
    %s95 = sphi 0, %s97
    %s98 = sphi 0, %s95
    %s99 = sphi 0, %s98
    %s115 = sphi 0, %s99
    %s121 = sphi 0, %s123
    %s124 = sphi 0, %s121
    %s125 = sphi 0, %s124
    %s141 = sphi 0, %s125
    %s149 = sphi 0, %s151
    %s152 = sphi 0, %s149
    %s153 = sphi 0, %s152
    %s169 = sphi 0, %s153
  $region4: #{whisper_audio_tower_forward.8} parent=0 // loop_header_branch
    %13 = sbr.rel (%p11) target = $region8
  $region5: #{whisper_audio_tower_forward.8} parent=0 // loop_body
    %s15 = ssub.s32 %s10, 1
    %s16 = ssub.s32 %s10, 2
    %s26 = sadd.s32 1, %s19
    %p27 = scmp.ge.s32.totalorder %s26, 1
    %s28 = scalar_select %p27, 0, %s26
    %s29 = sadd.s32 1, %s18
    %s30 = scalar_select %p27, %s29, %s18
    %p31 = scmp.ge.s32.totalorder %s30, 1
    %s32 = scalar_select %p31, 0, %s30
    %s33 = sadd.s32 1, %s17
    %s34 = scalar_select %p31, %s33, %s17
    %p35 = scmp.ge.s32.totalorder %s34, 2
    %s36 = scalar_select %p35, 0, %s34
    %s37 = ssub.s32 %s17, %s36
    %s38 = ssub.s32 %s19, %s28
    %s39 = sor.u32 %s37, %s38
    %p40 = scmp.eq.s32.totalorder %s39, 0
    %s42 = sadd.s32 %s41, 1
    %s43 = scalar_select %p40, %s41, %s42
    %p46 = pneg %p40
    %p47 = scmp.eq.s32.totalorder %s10, 1
    %p48 = por %p46, %p47
    %p49 = scmp.ne.s32.totalorder %s41, %s44
    %p50 = scmp.eq.s32.totalorder %s10, 0
    %p51 = por %p49, %p50
    %p52 = scmp.ne.s32.totalorder %s41, %s44
    %p53 = scmp.eq.s32.totalorder %s15, 1
    %p54 = por %p52, %p53
    %p55 = scmp.ne.s32.totalorder %s44, %s45
    %p56 = scmp.eq.s32.totalorder %s15, 0
    %p57 = por %p55, %p56
    %p58 = scmp.ne.s32.totalorder %s44, %s45
    %p59 = scmp.eq.s32.totalorder %s16, 1
    %p60 = por %p58, %p59
    %p62 = scmp.ne.s32.totalorder %s45, %s61
    %p63 = scmp.eq.s32.totalorder %s16, 0
    %p64 = por %p62, %p63
    %s65 = ssub.s32 %s19, %s28
    %s66 = ssub.s32 %s18, %s32
    %s67 = sor.u32 %s65, %s66
    %p68 = scmp.eq.s32.totalorder %s67, 0
    %s70 = sadd.s32 %s69, 1
    %s71 = scalar_select %p68, %s69, %s70
    %p74 = pneg %p68
    %p75 = scmp.eq.s32.totalorder %s10, 1
    %p76 = por %p74, %p75
    %p77 = scmp.ne.s32.totalorder %s69, %s72
    %p78 = scmp.eq.s32.totalorder %s10, 0
    %p79 = por %p77, %p78
    %p80 = scmp.ne.s32.totalorder %s69, %s72
    %p81 = scmp.eq.s32.totalorder %s15, 1
    %p82 = por %p80, %p81
    %p83 = scmp.ne.s32.totalorder %s72, %s73
    %p84 = scmp.eq.s32.totalorder %s15, 0
    %p85 = por %p83, %p84
    %p86 = scmp.ne.s32.totalorder %s72, %s73
    %p87 = scmp.eq.s32.totalorder %s16, 1
    %p88 = por %p86, %p87
    %p90 = scmp.ne.s32.totalorder %s73, %s89
    %p91 = scmp.eq.s32.totalorder %s16, 0
    %p92 = por %p90, %p91
    %s93 = ssub.s32 %s18, %s32
    %p94 = scmp.eq.s32.totalorder %s93, 0
    %s96 = sadd.s32 %s95, 1
    %s97 = scalar_select %p94, %s95, %s96
    %p100 = pneg %p94
    %p101 = scmp.eq.s32.totalorder %s10, 1
    %p102 = por %p100, %p101
    %p103 = scmp.ne.s32.totalorder %s95, %s98
    %p104 = scmp.eq.s32.totalorder %s10, 0
    %p105 = por %p103, %p104
    %p106 = scmp.ne.s32.totalorder %s95, %s98
    %p107 = scmp.eq.s32.totalorder %s15, 1
    %p108 = por %p106, %p107
    %p109 = scmp.ne.s32.totalorder %s98, %s99
    %p110 = scmp.eq.s32.totalorder %s15, 0
    %p111 = por %p109, %p110
    %p112 = scmp.ne.s32.totalorder %s98, %s99
    %p113 = scmp.eq.s32.totalorder %s16, 1
    %p114 = por %p112, %p113
    %p116 = scmp.ne.s32.totalorder %s99, %s115
    %p117 = scmp.eq.s32.totalorder %s16, 0
    %p118 = por %p116, %p117
    %s119 = ssub.s32 %s18, %s32
    %p120 = scmp.eq.s32.totalorder %s119, 0
    %s122 = sadd.s32 %s121, 1
    %s123 = scalar_select %p120, %s121, %s122
    %p126 = pneg %p120
    %p127 = scmp.eq.s32.totalorder %s10, 1
    %p128 = por %p126, %p127
    %p129 = scmp.ne.s32.totalorder %s121, %s124
    %p130 = scmp.eq.s32.totalorder %s10, 0
    %p131 = por %p129, %p130
    %p132 = scmp.ne.s32.totalorder %s121, %s124
    %p133 = scmp.eq.s32.totalorder %s15, 1
    %p134 = por %p132, %p133
    %p135 = scmp.ne.s32.totalorder %s124, %s125
    %p136 = scmp.eq.s32.totalorder %s15, 0
    %p137 = por %p135, %p136
    %p138 = scmp.ne.s32.totalorder %s124, %s125
    %p139 = scmp.eq.s32.totalorder %s16, 1
    %p140 = por %p138, %p139
    %p142 = scmp.ne.s32.totalorder %s125, %s141
    %p143 = scmp.eq.s32.totalorder %s16, 0
    %p144 = por %p142, %p143
    %s145 = ssub.s32 %s17, %s36
    %s146 = ssub.s32 %s18, %s32
    %s147 = sor.u32 %s145, %s146
    %p148 = scmp.eq.s32.totalorder %s147, 0
    %s150 = sadd.s32 %s149, 1
    %s151 = scalar_select %p148, %s149, %s150
    %p154 = pneg %p148
    %p155 = scmp.eq.s32.totalorder %s10, 1
    %p156 = por %p154, %p155
    %p157 = scmp.ne.s32.totalorder %s149, %s152
    %p158 = scmp.eq.s32.totalorder %s10, 0
    %p159 = por %p157, %p158
    %p160 = scmp.ne.s32.totalorder %s149, %s152
    %p161 = scmp.eq.s32.totalorder %s15, 1
    %p162 = por %p160, %p161
    %p163 = scmp.ne.s32.totalorder %s152, %s153
    %p164 = scmp.eq.s32.totalorder %s15, 0
    %p165 = por %p163, %p164
    %p166 = scmp.ne.s32.totalorder %s152, %s153
    %p167 = scmp.eq.s32.totalorder %s16, 1
    %p168 = por %p166, %p167
    %p170 = scmp.ne.s32.totalorder %s153, %s169
    %p171 = scmp.eq.s32.totalorder %s16, 0
    %p172 = por %p170, %p171
    %p173 = scmp.le.s32.totalorder 1, %s10
    %p174 = scmp.lt.s32.totalorder %s10, 3
    %p175 = pnand %p173, %p174
    %p176 = pneg %p175
    // Predicated region
    $region9: #{whisper_audio_tower_forward.8} parent=5 // pred_check
      _
    $region10: #{whisper_audio_tower_forward.8} parent=5 // pred_check_branch
      %178 = sbr.rel (%p175) target = $region12
    $region11: #{whisper_audio_tower_forward.8} parent=5 // pred_region
      %s179 = ssub.s32 %s10, 1
      // Predicated region
      $region13: #{whisper_audio_tower_forward.8} parent=11 // pred_check
        %p180 = pneg %p85
      $region14: #{whisper_audio_tower_forward.8} parent=11 // pred_check_branch
        %182 = sbr.rel (%p180) target = $region16
      $region15: #{whisper_audio_tower_forward.8} parent=11 // pred_region
        %s183 = smul.u32 48, %s22
        %p184 = scmp.lt.s32.totalorder %s183, 47
        %s185 = scalar_select %p184, %s183, 47
        %p186 = scmp.lt.s32.totalorder %s21, 0
        %s187 = scalar_select %p186, %s21, 0
        %s188 = sadd.s32 %s187, %s185
        %s189 = smul.addr %s188, 4
        %s190 = scalar_lea.vmem %s1, %s189
        %s191 = smul.u32 48, %s22
      $region16: #{whisper_audio_tower_forward.8} parent=11 // pred_fallthru
        _
      // Predicated region
      $region17: #{whisper_audio_tower_forward.8} parent=11 // pred_check
        %p192 = pneg %p111
      $region18: #{whisper_audio_tower_forward.8} parent=11 // pred_check_branch
        %194 = sbr.rel (%p192) target = $region20
      $region19: #{whisper_audio_tower_forward.8} parent=11 // pred_region
        %p195 = scmp.lt.s32.totalorder %s21, 0
        %s196 = scalar_select %p195, %s21, 0
        %s197 = scalar_lea.vmem %s2, %s196
      $region20: #{whisper_audio_tower_forward.8} parent=11 // pred_fallthru
        _
      // Predicated region
      $region21: #{whisper_audio_tower_forward.8} parent=11 // pred_check
        %p198 = pneg %p137
      $region22: #{whisper_audio_tower_forward.8} parent=11 // pred_check_branch
        %200 = sbr.rel (%p198) target = $region24
      $region23: #{whisper_audio_tower_forward.8} parent=11 // pred_region
        %p201 = scmp.lt.s32.totalorder %s21, 0
        %s202 = scalar_select %p201, %s21, 0
        %s203 = smul.addr %s202, 4
        %s204 = scalar_lea.vmem %s3, %s203
      $region24: #{whisper_audio_tower_forward.8} parent=11 // pred_fallthru
        _
    $region12: #{whisper_audio_tower_forward.8} parent=5 // pred_fallthru
      _
    %p205 = scmp.lt.s32.totalorder %s10, 2
    // Predicated region
    $region25: #{whisper_audio_tower_forward.8} parent=5 // pred_check
      %p206 = pneg %p205
    $region26: #{whisper_audio_tower_forward.8} parent=5 // pred_check_branch
      %208 = sbr.rel (%p206) target = $region28
    $region27: #{whisper_audio_tower_forward.8} parent=5 // pred_region
      // Predicated region
      $region29: #{whisper_audio_tower_forward.8} parent=27 // pred_check
        %p209 = pneg %p51
      $region30: #{whisper_audio_tower_forward.8} parent=27 // pred_check_branch
        %211 = sbr.rel (%p209) target = $region32
      $region31: #{whisper_audio_tower_forward.8} parent=27 // pred_region
        %s212 = smul.u32 16, %s17
        %s213 = smul.u32 3, %s19
        %p214 = scmp.lt.s32.totalorder %s212, 31
        %s215 = scalar_select %p214, %s212, 31
        %p216 = scmp.lt.s32.totalorder %s213, 2
        %s217 = scalar_select %p216, %s213, 2
        %s218 = smul.addr %s215, 3
        %s219 = sadd.s32 %s217, %s218
        %s220 = smul.addr %s219, 4
        %s221 = scalar_lea.vmem %s0, %s220
        %s222 = smul.u32 16, %s17
        %s223 = smul.u32 3, %s19
      $region32: #{whisper_audio_tower_forward.8} parent=27 // pred_fallthru
        _
    $region28: #{whisper_audio_tower_forward.8} parent=5 // pred_fallthru
      _
    %p224 = scmp.le.s32.totalorder 1, %s10
    %p225 = scmp.lt.s32.totalorder %s10, 3
    %p226 = pnand %p224, %p225
    %p227 = pneg %p226
    // Predicated region
    $region33: #{whisper_audio_tower_forward.8} parent=5 // pred_check
      _
    $region34: #{whisper_audio_tower_forward.8} parent=5 // pred_check_branch
      %229 = sbr.rel (%p226) target = $region36
    $region35: #{whisper_audio_tower_forward.8} parent=5 // pred_region
      %s230 = ssub.s32 %s10, 1
      %s231 = smul.u32 16, %s20
      %s232 = smul.u32 3, %s22
      %p233 = scmp.lt.s32.totalorder %s231, 31
      %s234 = scalar_select %p233, %s231, 31
      %p235 = scmp.lt.s32.totalorder %s232, 2
      %s236 = scalar_select %p235, %s232, 2
      %s237 = smul.addr %s234, 3
      %s238 = sadd.s32 %s236, %s237
      %s239 = smul.addr %s238, 4
      %s240 = scalar_lea.vmem %s0, %s239
      %p241 = pneg %p57
      %p242 = pneg %p54
      %s243 = smul.u32 48, %s22
      %p244 = scmp.lt.s32.totalorder %s243, 47
      %s245 = scalar_select %p244, %s243, 47
      %p246 = scmp.lt.s32.totalorder %s21, 0
      %s247 = scalar_select %p246, %s21, 0
      %s248 = sadd.s32 %s247, %s245
      %s249 = smul.addr %s248, 4
      %s250 = scalar_lea.vmem %s1, %s249
      %p251 = pneg %p85
      %p252 = pneg %p82
      %p253 = scmp.lt.s32.totalorder %s21, 0
      %s254 = scalar_select %p253, %s21, 0
      %s255 = scalar_lea.vmem %s2, %s254
      %p256 = pneg %p111
      %p257 = pneg %p108
      %p258 = scmp.lt.s32.totalorder %s21, 0
      %s259 = scalar_select %p258, %s21, 0
      %s260 = smul.addr %s259, 4
      %s261 = scalar_lea.vmem %s3, %s260
      %p262 = pneg %p137
      %p263 = pneg %p134
      %p264 = pneg %p165
      %p265 = pneg %p162
      %s266 = smul.u32 16, %s20
      %p267 = scmp.lt.s32.totalorder %s266, 31
      %s268 = scalar_select %p267, %s266, 31
      %p269 = scmp.lt.s32.totalorder %s21, 0
      %s270 = scalar_select %p269, %s21, 0
      %s271 = sadd.s32 %s270, %s268
      %s272 = smul.addr %s271, 4
      %s273 = scalar_lea.vmem %s4, %s272
      %s274 = smul.u32 16, %s20
      %s275 = smul.u32 3, %s22
      %p276 = scmp.lt.s32.totalorder %s274, 31
      %s277 = scalar_select %p276, %s274, 31
      %p278 = scmp.lt.s32.totalorder %s275, 2
      %s279 = scalar_select %p278, %s275, 2
      %s280 = smul.addr %s277, 3
      %s281 = sadd.s32 %s279, %s280
      %s282 = smul.addr %s281, 4
      %s283 = scalar_lea.vmem %s0, %s282
      %s284 = smul.u32 16, %s20
      %s285 = smul.u32 3, %s22
      %s286 = smul.u32 48, %s22
      %p287 = scmp.lt.s32.totalorder %s286, 47
      %s288 = scalar_select %p287, %s286, 47
      %p289 = scmp.lt.s32.totalorder %s21, 0
      %s290 = scalar_select %p289, %s21, 0
      %s291 = sadd.s32 %s290, %s288
      %s292 = smul.addr %s291, 4
      %s293 = scalar_lea.vmem %s1, %s292
      %s294 = smul.u32 48, %s22
      %p295 = scmp.lt.s32.totalorder %s21, 0
      %s296 = scalar_select %p295, %s21, 0
      %s297 = scalar_lea.vmem %s2, %s296
      %p298 = scmp.lt.s32.totalorder %s21, 0
      %s299 = scalar_select %p298, %s21, 0
      %s300 = smul.addr %s299, 4
      %s301 = scalar_lea.vmem %s3, %s300
      %s302 = smul.u32 16, %s20
      %p303 = scmp.lt.s32.totalorder %s302, 31
      %s304 = scalar_select %p303, %s302, 31
      %p305 = scmp.lt.s32.totalorder %s21, 0
      %s306 = scalar_select %p305, %s21, 0
      %s307 = sadd.s32 %s306, %s304
      %s308 = smul.addr %s307, 4
      %s309 = scalar_lea.vmem %s4, %s308
      %s310 = smul.u32 16, %s20
      %p312 = scmp.eq.s32.totalorder %s22, 0
      // Predicated region
      $region37: #{whisper_audio_tower_forward.8} parent=35 // pred_check
        %p313 = pneg %p312
      $region38: #{whisper_audio_tower_forward.8} parent=35 // pred_check_branch
        %315 = sbr.rel (%p313) target = $region40
      $region39: #{whisper_audio_tower_forward.8} parent=35 // pred_region
        %316 = vst [vmem:[#allocation2] sm:$0xff] 0.0
        %317 = vst [vmem:[#allocation2 + $0x8] sm:$0xff] 0.0
        %318 = vst [vmem:[#allocation2 + $0x10] sm:$0xff] 0.0
        %319 = vst [vmem:[#allocation2 + $0x18] sm:$0xff] 0.0
        %320 = vst [vmem:[#allocation2 + $0x20] sm:$0xff] 0.0
        %321 = vst [vmem:[#allocation2 + $0x28] sm:$0xff] 0.0
        %322 = vst [vmem:[#allocation2 + $0x30] sm:$0xff] 0.0
        %323 = vst [vmem:[#allocation2 + $0x38] sm:$0xff] 0.0
        %324 = vst [vmem:[#allocation2 + $0x40] sm:$0xff] 0.0
        %325 = vst [vmem:[#allocation2 + $0x48] sm:$0xff] 0.0
        %326 = vst [vmem:[#allocation2 + $0x50] sm:$0xff] 0.0
        %327 = vst [vmem:[#allocation2 + $0x58] sm:$0xff] 0.0
        %328 = vst [vmem:[#allocation2 + $0x60] sm:$0xff] 0.0
        %329 = vst [vmem:[#allocation2 + $0x68] sm:$0xff] 0.0
        %330 = vst [vmem:[#allocation2 + $0x70] sm:$0xff] 0.0
        %331 = vst [vmem:[#allocation2 + $0x78] sm:$0xff] 0.0
      $region40: #{whisper_audio_tower_forward.8} parent=35 // pred_fallthru
        _
      %v332 = vld [vmem:[#allocation2] sm:$0xff]
      %v333 = vld [vmem:[#allocation2 + $0x8] sm:$0xff]
      %v334 = vld [vmem:[#allocation2 + $0x10] sm:$0xff]
      %v335 = vld [vmem:[#allocation2 + $0x18] sm:$0xff]
      %v336 = vld [vmem:[#allocation2 + $0x20] sm:$0xff]
      %v337 = vld [vmem:[#allocation2 + $0x28] sm:$0xff]
      %v338 = vld [vmem:[#allocation2 + $0x30] sm:$0xff]
      %v339 = vld [vmem:[#allocation2 + $0x38] sm:$0xff]
      %v340 = vld [vmem:[#allocation2 + $0x40] sm:$0xff]
      %v341 = vld [vmem:[#allocation2 + $0x48] sm:$0xff]
      %v342 = vld [vmem:[#allocation2 + $0x50] sm:$0xff]
      %v343 = vld [vmem:[#allocation2 + $0x58] sm:$0xff]
      %v344 = vld [vmem:[#allocation2 + $0x60] sm:$0xff]
      %v345 = vld [vmem:[#allocation2 + $0x68] sm:$0xff]
      %v346 = vld [vmem:[#allocation2 + $0x70] sm:$0xff]
      %v347 = vld [vmem:[#allocation2 + $0x78] sm:$0xff]
      %v348 = vld [vmem:[%s283] sm:$0xff]
      %v349 = vld [vmem:[%s283 + $0x8] sm:$0xf]
      %v350 = vld [vmem:[%s283 + $0xc] sm:$0xff]
      %v351 = vld [vmem:[%s283 + $0x14] sm:$0xf]
      %v352 = vld [vmem:[%s283 + $0x18] sm:$0xff]
      %v353 = vld [vmem:[%s283 + $0x20] sm:$0xf]
      %v354 = vld [vmem:[%s283 + $0x24] sm:$0xff]
      %v355 = vld [vmem:[%s283 + $0x2c] sm:$0xf]
      %v356 = vld [vmem:[%s283 + $0x30] sm:$0xff]
      %v357 = vld [vmem:[%s283 + $0x38] sm:$0xf]
      %v358 = vld [vmem:[%s283 + $0x3c] sm:$0xff]
      %v359 = vld [vmem:[%s283 + $0x44] sm:$0xf]
      %v360 = vld [vmem:[%s283 + $0x48] sm:$0xff]
      %v361 = vld [vmem:[%s283 + $0x50] sm:$0xf]
      %v362 = vld [vmem:[%s283 + $0x54] sm:$0xff]
      %v363 = vld [vmem:[%s283 + $0x5c] sm:$0xf]
      %v364 = vld [vmem:[%s283 + $0x60] sm:$0xff]
      %v365 = vld [vmem:[%s283 + $0x68] sm:$0xf]
      %v366 = vld [vmem:[%s283 + $0x6c] sm:$0xff]
      %v367 = vld [vmem:[%s283 + $0x74] sm:$0xf]
      %v368 = vld [vmem:[%s283 + $0x78] sm:$0xff]
      %v369 = vld [vmem:[%s283 + $0x80] sm:$0xf]
      %v370 = vld [vmem:[%s283 + $0x84] sm:$0xff]
      %v371 = vld [vmem:[%s283 + $0x8c] sm:$0xf]
      %v372 = vld [vmem:[%s283 + $0x90] sm:$0xff]
      %v373 = vld [vmem:[%s283 + $0x98] sm:$0xf]
      %v374 = vld [vmem:[%s283 + $0x9c] sm:$0xff]
      %v375 = vld [vmem:[%s283 + $0xa4] sm:$0xf]
      %v376 = vld [vmem:[%s283 + $0xa8] sm:$0xff]
      %v377 = vld [vmem:[%s283 + $0xb0] sm:$0xf]
      %v378 = vld [vmem:[%s283 + $0xb4] sm:$0xff]
      %v379 = vld [vmem:[%s283 + $0xbc] sm:$0xf]
      %v380 = vld [vmem:[%s293] sm:$0xf]
      %v381 = vld [vmem:[%s293 + $0x4] sm:$0xf]
      %v382 = vld [vmem:[%s293 + $0x8] sm:$0xf]
      %v383 = vld [vmem:[%s293 + $0xc] sm:$0xf]
      %v384 = vld [vmem:[%s293 + $0x10] sm:$0xf]
      %v385 = vld [vmem:[%s293 + $0x14] sm:$0xf]
      %v386 = vld [vmem:[%s293 + $0x18] sm:$0xf]
      %v387 = vld [vmem:[%s293 + $0x1c] sm:$0xf]
      %v388 = vld [vmem:[%s293 + $0x20] sm:$0xf]
      %v389 = vld [vmem:[%s293 + $0x24] sm:$0xf]
      %v390 = vld [vmem:[%s293 + $0x28] sm:$0xf]
      %v391 = vld [vmem:[%s293 + $0x2c] sm:$0xf]
      %v392 = vld [vmem:[%s293 + $0x30] sm:$0xf]
      %v393 = vld [vmem:[%s293 + $0x34] sm:$0xf]
      %v394 = vld [vmem:[%s293 + $0x38] sm:$0xf]
      %v395 = vld [vmem:[%s293 + $0x3c] sm:$0xf]
      %v396 = vld [vmem:[%s293 + $0x40] sm:$0xf]
      %v397 = vld [vmem:[%s293 + $0x44] sm:$0xf]
      %v398 = vld [vmem:[%s293 + $0x48] sm:$0xf]
      %v399 = vld [vmem:[%s293 + $0x4c] sm:$0xf]
      %v400 = vld [vmem:[%s293 + $0x50] sm:$0xf]
      %v401 = vld [vmem:[%s293 + $0x54] sm:$0xf]
      %v402 = vld [vmem:[%s293 + $0x58] sm:$0xf]
      %v403 = vld [vmem:[%s293 + $0x5c] sm:$0xf]
      %v404 = vld [vmem:[%s293 + $0x60] sm:$0xf]
      %v405 = vld [vmem:[%s293 + $0x64] sm:$0xf]
      %v406 = vld [vmem:[%s293 + $0x68] sm:$0xf]
      %v407 = vld [vmem:[%s293 + $0x6c] sm:$0xf]
      %v408 = vld [vmem:[%s293 + $0x70] sm:$0xf]
      %v409 = vld [vmem:[%s293 + $0x74] sm:$0xf]
      %v410 = vld [vmem:[%s293 + $0x78] sm:$0xf]
      %v411 = vld [vmem:[%s293 + $0x7c] sm:$0xf]
      %v412 = vld [vmem:[%s293 + $0x80] sm:$0xf]
      %v413 = vld [vmem:[%s293 + $0x84] sm:$0xf]
      %v414 = vld [vmem:[%s293 + $0x88] sm:$0xf]
      %v415 = vld [vmem:[%s293 + $0x8c] sm:$0xf]
      %v416 = vld [vmem:[%s293 + $0x90] sm:$0xf]
      %v417 = vld [vmem:[%s293 + $0x94] sm:$0xf]
      %v418 = vld [vmem:[%s293 + $0x98] sm:$0xf]
      %v419 = vld [vmem:[%s293 + $0x9c] sm:$0xf]
      %v420 = vld [vmem:[%s293 + $0xa0] sm:$0xf]
      %v421 = vld [vmem:[%s293 + $0xa4] sm:$0xf]
      %v422 = vld [vmem:[%s293 + $0xa8] sm:$0xf]
      %v423 = vld [vmem:[%s293 + $0xac] sm:$0xf]
      %v424 = vld [vmem:[%s293 + $0xb0] sm:$0xf]
      %v425 = vld [vmem:[%s293 + $0xb4] sm:$0xf]
      %v426 = vld [vmem:[%s293 + $0xb8] sm:$0xf]
      %v427 = vld [vmem:[%s293 + $0xbc] sm:$0xf]
      %v460 = vunpack.c.l.b16 %v348
      %v461 = vunpack.c.h.b16 %v348
      %v462 = vunpack.c.l.b16 %v349
      %v463 = vunpack.c.l.b16 %v350
      %v464 = vunpack.c.h.b16 %v350
      %v465 = vunpack.c.l.b16 %v351
      %v466 = vunpack.c.l.b16 %v352
      %v467 = vunpack.c.h.b16 %v352
      %v468 = vunpack.c.l.b16 %v353
      %v469 = vunpack.c.l.b16 %v354
      %v470 = vunpack.c.h.b16 %v354
      %v471 = vunpack.c.l.b16 %v355
      %v472 = vunpack.c.l.b16 %v356
      %v473 = vunpack.c.h.b16 %v356
      %v474 = vunpack.c.l.b16 %v357
      %v475 = vunpack.c.l.b16 %v358
      %v476 = vunpack.c.h.b16 %v358
      %v477 = vunpack.c.l.b16 %v359
      %v478 = vunpack.c.l.b16 %v360
      %v479 = vunpack.c.h.b16 %v360
      %v480 = vunpack.c.l.b16 %v361
      %v481 = vunpack.c.l.b16 %v362
      %v482 = vunpack.c.h.b16 %v362
      %v483 = vunpack.c.l.b16 %v363
      %v484 = vunpack.c.l.b16 %v364
      %v485 = vunpack.c.h.b16 %v364
      %v486 = vunpack.c.l.b16 %v365
      %v487 = vunpack.c.l.b16 %v366
      %v488 = vunpack.c.h.b16 %v366
      %v489 = vunpack.c.l.b16 %v367
      %v490 = vunpack.c.l.b16 %v368
      %v491 = vunpack.c.h.b16 %v368
      %v492 = vunpack.c.l.b16 %v369
      %v493 = vunpack.c.l.b16 %v370
      %v494 = vunpack.c.h.b16 %v370
      %v495 = vunpack.c.l.b16 %v371
      %v496 = vunpack.c.l.b16 %v372
      %v497 = vunpack.c.h.b16 %v372
      %v498 = vunpack.c.l.b16 %v373
      %v499 = vunpack.c.l.b16 %v374
      %v500 = vunpack.c.h.b16 %v374
      %v501 = vunpack.c.l.b16 %v375
      %v502 = vunpack.c.l.b16 %v376
      %v503 = vunpack.c.h.b16 %v376
      %v504 = vunpack.c.l.b16 %v377
      %v505 = vunpack.c.l.b16 %v378
      %v506 = vunpack.c.h.b16 %v378
      %v507 = vunpack.c.l.b16 %v379
      %v508 = vpack.c.b16 %v463, %v460
      %v509 = vpack.c.b16 %v464, %v461
      %v510 = vpack.c.b16 %v465, %v462
      %v511 = vpack.c.b16 %v469, %v466
      %v512 = vpack.c.b16 %v470, %v467
      %v513 = vpack.c.b16 %v471, %v468
      %v514 = vpack.c.b16 %v475, %v472
      %v515 = vpack.c.b16 %v476, %v473
      %v516 = vpack.c.b16 %v477, %v474
      %v517 = vpack.c.b16 %v481, %v478
      %v518 = vpack.c.b16 %v482, %v479
      %v519 = vpack.c.b16 %v483, %v480
      %v520 = vpack.c.b16 %v487, %v484
      %v521 = vpack.c.b16 %v488, %v485
      %v522 = vpack.c.b16 %v489, %v486
      %v523 = vpack.c.b16 %v493, %v490
      %v524 = vpack.c.b16 %v494, %v491
      %v525 = vpack.c.b16 %v495, %v492
      %v526 = vpack.c.b16 %v499, %v496
      %v527 = vpack.c.b16 %v500, %v497
      %v528 = vpack.c.b16 %v501, %v498
      %v529 = vpack.c.b16 %v505, %v502
      %v530 = vpack.c.b16 %v506, %v503
      %v531 = vpack.c.b16 %v507, %v504
      %v604 = vunpack.c.l.b16 %v380
      %v605 = vunpack.c.l.b16 %v381
      %v606 = vunpack.c.l.b16 %v382
      %v607 = vunpack.c.l.b16 %v383
      %v608 = vunpack.c.l.b16 %v384
      %v609 = vunpack.c.l.b16 %v385
      %v610 = vunpack.c.l.b16 %v386
      %v611 = vunpack.c.l.b16 %v387
      %v612 = vunpack.c.l.b16 %v388
      %v613 = vunpack.c.l.b16 %v389
      %v614 = vunpack.c.l.b16 %v390
      %v615 = vunpack.c.l.b16 %v391
      %v616 = vunpack.c.l.b16 %v392
      %v617 = vunpack.c.l.b16 %v393
      %v618 = vunpack.c.l.b16 %v394
      %v619 = vunpack.c.l.b16 %v395
      %v620 = vunpack.c.l.b16 %v396
      %v621 = vunpack.c.l.b16 %v397
      %v622 = vunpack.c.l.b16 %v398
      %v623 = vunpack.c.l.b16 %v399
      %v624 = vunpack.c.l.b16 %v400
      %v625 = vunpack.c.l.b16 %v401
      %v626 = vunpack.c.l.b16 %v402
      %v627 = vunpack.c.l.b16 %v403
      %v628 = vunpack.c.l.b16 %v404
      %v629 = vunpack.c.l.b16 %v405
      %v630 = vunpack.c.l.b16 %v406
      %v631 = vunpack.c.l.b16 %v407
      %v632 = vunpack.c.l.b16 %v408
      %v633 = vunpack.c.l.b16 %v409
      %v634 = vunpack.c.l.b16 %v410
      %v635 = vunpack.c.l.b16 %v411
      %v636 = vunpack.c.l.b16 %v412
      %v637 = vunpack.c.l.b16 %v413
      %v638 = vunpack.c.l.b16 %v414
      %v639 = vunpack.c.l.b16 %v415
      %v640 = vunpack.c.l.b16 %v416
      %v641 = vunpack.c.l.b16 %v417
      %v642 = vunpack.c.l.b16 %v418
      %v643 = vunpack.c.l.b16 %v419
      %v644 = vunpack.c.l.b16 %v420
      %v645 = vunpack.c.l.b16 %v421
      %v646 = vunpack.c.l.b16 %v422
      %v647 = vunpack.c.l.b16 %v423
      %v648 = vunpack.c.l.b16 %v424
      %v649 = vunpack.c.l.b16 %v425
      %v650 = vunpack.c.l.b16 %v426
      %v651 = vunpack.c.l.b16 %v427
      %v652 = vpack.c.b16 %v605, %v604
      %v653 = vpack.c.b16 %v607, %v606
      %v654 = vpack.c.b16 %v609, %v608
      %v655 = vpack.c.b16 %v611, %v610
      %v656 = vpack.c.b16 %v613, %v612
      %v657 = vpack.c.b16 %v615, %v614
      %v658 = vpack.c.b16 %v617, %v616
      %v659 = vpack.c.b16 %v619, %v618
      %v660 = vpack.c.b16 %v621, %v620
      %v661 = vpack.c.b16 %v623, %v622
      %v662 = vpack.c.b16 %v625, %v624
      %v663 = vpack.c.b16 %v627, %v626
      %v664 = vpack.c.b16 %v629, %v628
      %v665 = vpack.c.b16 %v631, %v630
      %v666 = vpack.c.b16 %v633, %v632
      %v667 = vpack.c.b16 %v635, %v634
      %v668 = vpack.c.b16 %v637, %v636
      %v669 = vpack.c.b16 %v639, %v638
      %v670 = vpack.c.b16 %v641, %v640
      %v671 = vpack.c.b16 %v643, %v642
      %v672 = vpack.c.b16 %v645, %v644
      %v673 = vpack.c.b16 %v647, %v646
      %v674 = vpack.c.b16 %v649, %v648
      %v675 = vpack.c.b16 %v651, %v650
      %700 = vmatprep.subr.bf16.mxu0 0
      %701 = vmatpush1.bf16.msra.mxu0 %v652
      %702 = vmatprep.subr.bf16.mxu0 0
      %703 = vmatpush1.bf16.msra.mxu0 %v653
      %704 = vmatprep.subr.bf16.mxu0 0
      %705 = vmatpush1.bf16.msra.mxu0 %v654
      %706 = vmatprep.subr.bf16.mxu0 0
      %707 = vmatpush1.bf16.msra.mxu0 %v655
      %708 = vmatprep.subr.bf16.mxu0 0
      %709 = vmatpush1.bf16.msra.mxu0 %v656
      %710 = vmatprep.subr.bf16.mxu0 0
      %711 = vmatpush1.bf16.msra.mxu0 %v657
      %712 = vmatprep.subr.bf16.mxu0 0
      %713 = vmatpush1.bf16.msra.mxu0 %v658
      %714 = vmatprep.subr.bf16.mxu0 0
      %715 = vmatpush1.bf16.msra.mxu0 %v659
      %716 = vmatprep.subr.bf16.mxu0 0
      %717 = vmatpush1.bf16.msra.mxu0 %v660
      %718 = vmatprep.subr.bf16.mxu0 0
      %719 = vmatpush1.bf16.msra.mxu0 %v661
      %720 = vmatprep.subr.bf16.mxu0 0
      %721 = vmatpush1.bf16.msra.mxu0 %v662
      %722 = vmatprep.subr.bf16.mxu0 0
      %723 = vmatpush1.bf16.msra.mxu0 %v663
      %724 = vmatprep.subr.bf16.mxu0 0
      %725 = vmatpush1.bf16.msra.mxu0 %v664
      %726 = vmatprep.subr.bf16.mxu0 0
      %727 = vmatpush1.bf16.msra.mxu0 %v665
      %728 = vmatprep.subr.bf16.mxu0 0
      %729 = vmatpush1.bf16.msra.mxu0 %v666
      %730 = vmatprep.subr.bf16.mxu0 0
      %731 = vmatpush1.bf16.msra.mxu0 %v667
      %732 = vmatprep.mubr.bf16.mxu0 %v509
      %733 = vmatmul.mubr.bf16.gmra.mrb[0].mxu0 %v508
      %v734 = vpop.f32.mrb[0].mxu0
      %v735 = vadd.f32 0.0, %v734
      %v736 = vpop.f32.mrb[0].mxu0
      %v737 = vpop.f32.mrb[0].mxu0
      %v738 = vadd.f32 0.0, %v737
      %v739 = vpop.f32.mrb[0].mxu0
      %740 = vmatprep.mubr.bf16.mxu0 %v512
      %741 = vmatmul.mubr.bf16.gmra.mrb[0].mxu0 %v511
      %v742 = vpop.f32.mrb[0].mxu0
      %v743 = vadd.f32 0.0, %v742
      %v744 = vpop.f32.mrb[0].mxu0
      %v745 = vpop.f32.mrb[0].mxu0
      %v746 = vadd.f32 0.0, %v745
      %v747 = vpop.f32.mrb[0].mxu0
      %748 = vmatprep.mubr.bf16.mxu0 %v515
      %749 = vmatmul.mubr.bf16.gmra.mrb[0].mxu0 %v514
      %v750 = vpop.f32.mrb[0].mxu0
      %v751 = vadd.f32 0.0, %v750
      %v752 = vpop.f32.mrb[0].mxu0
      %v753 = vpop.f32.mrb[0].mxu0
      %v754 = vadd.f32 0.0, %v753
      %v755 = vpop.f32.mrb[0].mxu0
      %756 = vmatprep.mubr.bf16.mxu0 %v518
      %757 = vmatmul.mubr.bf16.gmra.mrb[0].mxu0 %v517
      %v758 = vpop.f32.mrb[0].mxu0
      %v759 = vadd.f32 0.0, %v758
      %v760 = vpop.f32.mrb[0].mxu0
      %v761 = vpop.f32.mrb[0].mxu0
      %v762 = vadd.f32 0.0, %v761
      %v763 = vpop.f32.mrb[0].mxu0
      %764 = vmatprep.mubr.bf16.mxu0 %v521
      %765 = vmatmul.mubr.bf16.gmra.mrb[0].mxu0 %v520
      %v766 = vpop.f32.mrb[0].mxu0
      %v767 = vadd.f32 0.0, %v766
      %v768 = vpop.f32.mrb[0].mxu0
      %v769 = vpop.f32.mrb[0].mxu0
      %v770 = vadd.f32 0.0, %v769
      %v771 = vpop.f32.mrb[0].mxu0
      %772 = vmatprep.mubr.bf16.mxu0 %v524
      %773 = vmatmul.mubr.bf16.gmra.mrb[0].mxu0 %v523
      %v774 = vpop.f32.mrb[0].mxu0
      %v775 = vadd.f32 0.0, %v774
      %v776 = vpop.f32.mrb[0].mxu0
      %v777 = vpop.f32.mrb[0].mxu0
      %v778 = vadd.f32 0.0, %v777
      %v779 = vpop.f32.mrb[0].mxu0
      %780 = vmatprep.mubr.bf16.mxu0 %v527
      %781 = vmatmul.mubr.bf16.gmra.mrb[0].mxu0 %v526
      %v782 = vpop.f32.mrb[0].mxu0
      %v783 = vadd.f32 0.0, %v782
      %v784 = vpop.f32.mrb[0].mxu0
      %v785 = vpop.f32.mrb[0].mxu0
      %v786 = vadd.f32 0.0, %v785
      %v787 = vpop.f32.mrb[0].mxu0
      %788 = vmatprep.mubr.bf16.mxu0 %v530
      %789 = vmatmul.mubr.bf16.gmra.mrb[0].mxu0 %v529
      %v790 = vpop.f32.mrb[0].mxu0
      %v791 = vadd.f32 0.0, %v790
      %v792 = vpop.f32.mrb[0].mxu0
      %v793 = vpop.f32.mrb[0].mxu0
      %v794 = vadd.f32 0.0, %v793
      %v795 = vpop.f32.mrb[0].mxu0
      %796 = vdwg.mxu0
      %797 = vmatprep.subr.bf16.mxu0 0
      %798 = vmatpush1.bf16.msra.mxu0 %v668
      %799 = vmatprep.subr.bf16.mxu0 0
      %800 = vmatpush1.bf16.msra.mxu0 %v669
      %801 = vmatprep.subr.bf16.mxu0 0
      %802 = vmatpush1.bf16.msra.mxu0 %v670
      %803 = vmatprep.subr.bf16.mxu0 0
      %804 = vmatpush1.bf16.msra.mxu0 %v671
      %805 = vmatprep.subr.bf16.mxu0 0
      %806 = vmatpush1.bf16.msra.mxu0 %v672
      %807 = vmatprep.subr.bf16.mxu0 0
      %808 = vmatpush1.bf16.msra.mxu0 %v673
      %809 = vmatprep.subr.bf16.mxu0 0
      %810 = vmatpush1.bf16.msra.mxu0 %v674
      %811 = vmatprep.subr.bf16.mxu0 0
      %812 = vmatpush1.bf16.msra.mxu0 %v675
      %813 = vmatprep.subr.bf16.mxu0 0
      %814 = vmatpush1.bf16.msra.mxu0 0
      %815 = vmatprep.subr.bf16.mxu0 0
      %816 = vmatpush1.bf16.msra.mxu0 0
      %817 = vmatprep.subr.bf16.mxu0 0
      %818 = vmatpush1.bf16.msra.mxu0 0
      %819 = vmatprep.subr.bf16.mxu0 0
      %820 = vmatpush1.bf16.msra.mxu0 0
      %821 = vmatprep.subr.bf16.mxu0 0
      %822 = vmatpush1.bf16.msra.mxu0 0
      %823 = vmatprep.subr.bf16.mxu0 0
      %824 = vmatpush1.bf16.msra.mxu0 0
      %825 = vmatprep.subr.bf16.mxu0 0
      %826 = vmatpush1.bf16.msra.mxu0 0
      %827 = vmatprep.subr.bf16.mxu0 0
      %828 = vmatpush1.bf16.msra.mxu0 0
      %829 = vmatprep.mubr.bf16.mxu0 0
      %830 = vmatmul.mubr.bf16.gmra.mrb[0].mxu0 %v510
      %v831 = vpop.f32.mrb[0].mxu0
      %v832 = vadd.f32 %v735, %v831
      %v833 = vpop.f32.mrb[0].mxu0
      %v834 = vpop.f32.mrb[0].mxu0
      %v835 = vadd.f32 %v738, %v834
      %v836 = vpop.f32.mrb[0].mxu0
      %837 = vmatprep.mubr.bf16.mxu0 0
      %838 = vmatmul.mubr.bf16.gmra.mrb[0].mxu0 %v513
      %v839 = vpop.f32.mrb[0].mxu0
      %v840 = vadd.f32 %v743, %v839
      %v841 = vpop.f32.mrb[0].mxu0
      %v842 = vpop.f32.mrb[0].mxu0
      %v843 = vadd.f32 %v746, %v842
      %v844 = vpop.f32.mrb[0].mxu0
      %845 = vmatprep.mubr.bf16.mxu0 0
      %846 = vmatmul.mubr.bf16.gmra.mrb[0].mxu0 %v516
      %v847 = vpop.f32.mrb[0].mxu0
      %v848 = vadd.f32 %v751, %v847
      %v849 = vpop.f32.mrb[0].mxu0
      %v850 = vpop.f32.mrb[0].mxu0
      %v851 = vadd.f32 %v754, %v850
      %v852 = vpop.f32.mrb[0].mxu0
      %853 = vmatprep.mubr.bf16.mxu0 0
      %854 = vmatmul.mubr.bf16.gmra.mrb[0].mxu0 %v519
      %v855 = vpop.f32.mrb[0].mxu0
      %v856 = vadd.f32 %v759, %v855
      %v857 = vpop.f32.mrb[0].mxu0
      %v858 = vpop.f32.mrb[0].mxu0
      %v859 = vadd.f32 %v762, %v858
      %v860 = vpop.f32.mrb[0].mxu0
      %861 = vmatprep.mubr.bf16.mxu0 0
      %862 = vmatmul.mubr.bf16.gmra.mrb[0].mxu0 %v522
      %v863 = vpop.f32.mrb[0].mxu0
      %v864 = vadd.f32 %v767, %v863
      %v865 = vpop.f32.mrb[0].mxu0
      %v866 = vpop.f32.mrb[0].mxu0
      %v867 = vadd.f32 %v770, %v866
      %v868 = vpop.f32.mrb[0].mxu0
      %869 = vmatprep.mubr.bf16.mxu0 0
      %870 = vmatmul.mubr.bf16.gmra.mrb[0].mxu0 %v525
      %v871 = vpop.f32.mrb[0].mxu0
      %v872 = vadd.f32 %v775, %v871
      %v873 = vpop.f32.mrb[0].mxu0
      %v874 = vpop.f32.mrb[0].mxu0
      %v875 = vadd.f32 %v778, %v874
      %v876 = vpop.f32.mrb[0].mxu0
      %877 = vmatprep.mubr.bf16.mxu0 0
      %878 = vmatmul.mubr.bf16.gmra.mrb[0].mxu0 %v528
      %v879 = vpop.f32.mrb[0].mxu0
      %v880 = vadd.f32 %v783, %v879
      %v881 = vpop.f32.mrb[0].mxu0
      %v882 = vpop.f32.mrb[0].mxu0
      %v883 = vadd.f32 %v786, %v882
      %v884 = vpop.f32.mrb[0].mxu0
      %885 = vmatprep.mubr.bf16.mxu0 0
      %886 = vmatmul.mubr.bf16.gmra.mrb[0].mxu0 %v531
      %v887 = vpop.f32.mrb[0].mxu0
      %v888 = vadd.f32 %v791, %v887
      %v889 = vpop.f32.mrb[0].mxu0
      %v890 = vpop.f32.mrb[0].mxu0
      %v891 = vadd.f32 %v794, %v890
      %v892 = vpop.f32.mrb[0].mxu0
      %893 = vdwg.mxu0
      %v894 = vadd.f32 %v332, %v832
      %v895 = vadd.f32 %v333, %v835
      %v896 = vadd.f32 %v334, %v840
      %v897 = vadd.f32 %v335, %v843
      %v898 = vadd.f32 %v336, %v848
      %v899 = vadd.f32 %v337, %v851
      %v900 = vadd.f32 %v338, %v856
      %v901 = vadd.f32 %v339, %v859
      %v902 = vadd.f32 %v340, %v864
      %v903 = vadd.f32 %v341, %v867
      %v904 = vadd.f32 %v342, %v872
      %v905 = vadd.f32 %v343, %v875
      %v906 = vadd.f32 %v344, %v880
      %v907 = vadd.f32 %v345, %v883
      %v908 = vadd.f32 %v346, %v888
      %v909 = vadd.f32 %v347, %v891
      %910 = vst [vmem:[#allocation2] sm:$0xff] %v894
      %911 = vst [vmem:[#allocation2 + $0x8] sm:$0xff] %v895
      %912 = vst [vmem:[#allocation2 + $0x10] sm:$0xff] %v896
      %913 = vst [vmem:[#allocation2 + $0x18] sm:$0xff] %v897
      %914 = vst [vmem:[#allocation2 + $0x20] sm:$0xff] %v898
      %915 = vst [vmem:[#allocation2 + $0x28] sm:$0xff] %v899
      %916 = vst [vmem:[#allocation2 + $0x30] sm:$0xff] %v900
      %917 = vst [vmem:[#allocation2 + $0x38] sm:$0xff] %v901
      %918 = vst [vmem:[#allocation2 + $0x40] sm:$0xff] %v902
      %919 = vst [vmem:[#allocation2 + $0x48] sm:$0xff] %v903
      %920 = vst [vmem:[#allocation2 + $0x50] sm:$0xff] %v904
      %921 = vst [vmem:[#allocation2 + $0x58] sm:$0xff] %v905
      %922 = vst [vmem:[#allocation2 + $0x60] sm:$0xff] %v906
      %923 = vst [vmem:[#allocation2 + $0x68] sm:$0xff] %v907
      %924 = vst [vmem:[#allocation2 + $0x70] sm:$0xff] %v908
      %925 = vst [vmem:[#allocation2 + $0x78] sm:$0xff] %v909
      // Predicated region
      $region41: #{whisper_audio_tower_forward.8} parent=35 // pred_check
        %p926 = pneg %p312
      $region42: #{whisper_audio_tower_forward.8} parent=35 // pred_check_branch
        %928 = sbr.rel (%p926) target = $region44
      $region43: #{whisper_audio_tower_forward.8} parent=35 // pred_region
        %v929 = vld [vmem:[#allocation2] sm:$0xff]
        %v930 = vld [vmem:[#allocation2 + $0x8] sm:$0xff]
        %v931 = vld [vmem:[#allocation2 + $0x10] sm:$0xff]
        %v932 = vld [vmem:[#allocation2 + $0x18] sm:$0xff]
        %v933 = vld [vmem:[#allocation2 + $0x20] sm:$0xff]
        %v934 = vld [vmem:[#allocation2 + $0x28] sm:$0xff]
        %v935 = vld [vmem:[#allocation2 + $0x30] sm:$0xff]
        %v936 = vld [vmem:[#allocation2 + $0x38] sm:$0xff]
        %v937 = vld [vmem:[#allocation2 + $0x40] sm:$0xff]
        %v938 = vld [vmem:[#allocation2 + $0x48] sm:$0xff]
        %v939 = vld [vmem:[#allocation2 + $0x50] sm:$0xff]
        %v940 = vld [vmem:[#allocation2 + $0x58] sm:$0xff]
        %v941 = vld [vmem:[#allocation2 + $0x60] sm:$0xff]
        %v942 = vld [vmem:[#allocation2 + $0x68] sm:$0xff]
        %v943 = vld [vmem:[#allocation2 + $0x70] sm:$0xff]
        %v944 = vld [vmem:[#allocation2 + $0x78] sm:$0xff]
        %v945 = vld [vmem:[%s297] sm:$0x1]
        %v946 = vunpack.c.l.bf16 %v945
        %v947 = vlaneseq
        %v948 = vshrl.u32 %v947, 7
        %v949 = vsub.s32 0, %v948
        %v950 = vrot.slane %v946, %v949
        %v951 = vadd.f32 %v929, %v950
        %v952 = vadd.f32 %v930, %v950
        %v953 = vadd.f32 %v931, %v950
        %v954 = vadd.f32 %v932, %v950
        %v955 = vadd.f32 %v933, %v950
        %v956 = vadd.f32 %v934, %v950
        %v957 = vadd.f32 %v935, %v950
        %v958 = vadd.f32 %v936, %v950
        %v959 = vadd.f32 %v937, %v950
        %v960 = vadd.f32 %v938, %v950
        %v961 = vadd.f32 %v939, %v950
        %v962 = vadd.f32 %v940, %v950
        %v963 = vadd.f32 %v941, %v950
        %v964 = vadd.f32 %v942, %v950
        %v965 = vadd.f32 %v943, %v950
        %v966 = vadd.f32 %v944, %v950
        %v967 = vmul.f32 %v951, 0.5
        %v968 = vmul.f32 %v952, 0.5
        %v969 = vmul.f32 %v953, 0.5
        %v970 = vmul.f32 %v954, 0.5
        %v971 = vmul.f32 %v955, 0.5
        %v972 = vmul.f32 %v956, 0.5
        %v973 = vmul.f32 %v957, 0.5
        %v974 = vmul.f32 %v958, 0.5
        %v975 = vmul.f32 %v959, 0.5
        %v976 = vmul.f32 %v960, 0.5
        %v977 = vmul.f32 %v961, 0.5
        %v978 = vmul.f32 %v962, 0.5
        %v979 = vmul.f32 %v963, 0.5
        %v980 = vmul.f32 %v964, 0.5
        %v981 = vmul.f32 %v965, 0.5
        %v982 = vmul.f32 %v966, 0.5
        %v983 = vmul.f32 %v951, 0.044715
        %v984 = vmul.f32 %v952, 0.044715
        %v985 = vmul.f32 %v953, 0.044715
        %v986 = vmul.f32 %v954, 0.044715
        %v987 = vmul.f32 %v955, 0.044715
        %v988 = vmul.f32 %v956, 0.044715
        %v989 = vmul.f32 %v957, 0.044715
        %v990 = vmul.f32 %v958, 0.044715
        %v991 = vmul.f32 %v959, 0.044715
        %v992 = vmul.f32 %v960, 0.044715
        %v993 = vmul.f32 %v961, 0.044715
        %v994 = vmul.f32 %v962, 0.044715
        %v995 = vmul.f32 %v963, 0.044715
        %v996 = vmul.f32 %v964, 0.044715
        %v997 = vmul.f32 %v965, 0.044715
        %v998 = vmul.f32 %v966, 0.044715
        %v999 = vmul.f32 %v983, %v951
        %v1000 = vmul.f32 %v984, %v952
        %v1001 = vmul.f32 %v985, %v953
        %v1002 = vmul.f32 %v986, %v954
        %v1003 = vmul.f32 %v987, %v955
        %v1004 = vmul.f32 %v988, %v956
        %v1005 = vmul.f32 %v989, %v957
        %v1006 = vmul.f32 %v990, %v958
        %v1007 = vmul.f32 %v991, %v959
        %v1008 = vmul.f32 %v992, %v960
        %v1009 = vmul.f32 %v993, %v961
        %v1010 = vmul.f32 %v994, %v962
        %v1011 = vmul.f32 %v995, %v963
        %v1012 = vmul.f32 %v996, %v964
        %v1013 = vmul.f32 %v997, %v965
        %v1014 = vmul.f32 %v998, %v966
        %v1015 = vmul.f32 %v999, %v951
        %v1016 = vmul.f32 %v1000, %v952
        %v1017 = vmul.f32 %v1001, %v953
        %v1018 = vmul.f32 %v1002, %v954
        %v1019 = vmul.f32 %v1003, %v955
        %v1020 = vmul.f32 %v1004, %v956
        %v1021 = vmul.f32 %v1005, %v957
        %v1022 = vmul.f32 %v1006, %v958
        %v1023 = vmul.f32 %v1007, %v959
        %v1024 = vmul.f32 %v1008, %v960
        %v1025 = vmul.f32 %v1009, %v961
        %v1026 = vmul.f32 %v1010, %v962
        %v1027 = vmul.f32 %v1011, %v963
        %v1028 = vmul.f32 %v1012, %v964
        %v1029 = vmul.f32 %v1013, %v965
        %v1030 = vmul.f32 %v1014, %v966
        %v1031 = vadd.f32 %v951, %v1015
        %v1032 = vadd.f32 %v952, %v1016
        %v1033 = vadd.f32 %v953, %v1017
        %v1034 = vadd.f32 %v954, %v1018
        %v1035 = vadd.f32 %v955, %v1019
        %v1036 = vadd.f32 %v956, %v1020
        %v1037 = vadd.f32 %v957, %v1021
        %v1038 = vadd.f32 %v958, %v1022
        %v1039 = vadd.f32 %v959, %v1023
        %v1040 = vadd.f32 %v960, %v1024
        %v1041 = vadd.f32 %v961, %v1025
        %v1042 = vadd.f32 %v962, %v1026
        %v1043 = vadd.f32 %v963, %v1027
        %v1044 = vadd.f32 %v964, %v1028
        %v1045 = vadd.f32 %v965, %v1029
        %v1046 = vadd.f32 %v966, %v1030
        %v1047 = vmul.f32 %v1031, 0.7978846
        %v1048 = vmul.f32 %v1032, 0.7978846
        %v1049 = vmul.f32 %v1033, 0.7978846
        %v1050 = vmul.f32 %v1034, 0.7978846
        %v1051 = vmul.f32 %v1035, 0.7978846
        %v1052 = vmul.f32 %v1036, 0.7978846
        %v1053 = vmul.f32 %v1037, 0.7978846
        %v1054 = vmul.f32 %v1038, 0.7978846
        %v1055 = vmul.f32 %v1039, 0.7978846
        %v1056 = vmul.f32 %v1040, 0.7978846
        %v1057 = vmul.f32 %v1041, 0.7978846
        %v1058 = vmul.f32 %v1042, 0.7978846
        %v1059 = vmul.f32 %v1043, 0.7978846
        %v1060 = vmul.f32 %v1044, 0.7978846
        %v1061 = vmul.f32 %v1045, 0.7978846
        %v1062 = vmul.f32 %v1046, 0.7978846
        %v1063 = vtanh.pop %v1047
        %v1064 = vtanh.pop %v1048
        %v1065 = vtanh.pop %v1049
        %v1066 = vtanh.pop %v1050
        %v1067 = vtanh.pop %v1051
        %v1068 = vtanh.pop %v1052
        %v1069 = vtanh.pop %v1053
        %v1070 = vtanh.pop %v1054
        %v1071 = vtanh.pop %v1055
        %v1072 = vtanh.pop %v1056
        %v1073 = vtanh.pop %v1057
        %v1074 = vtanh.pop %v1058
        %v1075 = vtanh.pop %v1059
        %v1076 = vtanh.pop %v1060
        %v1077 = vtanh.pop %v1061
        %v1078 = vtanh.pop %v1062
        %v1079 = vadd.f32 %v1063, 1.0
        %v1080 = vadd.f32 %v1064, 1.0
        %v1081 = vadd.f32 %v1065, 1.0
        %v1082 = vadd.f32 %v1066, 1.0
        %v1083 = vadd.f32 %v1067, 1.0
        %v1084 = vadd.f32 %v1068, 1.0
        %v1085 = vadd.f32 %v1069, 1.0
        %v1086 = vadd.f32 %v1070, 1.0
        %v1087 = vadd.f32 %v1071, 1.0
        %v1088 = vadd.f32 %v1072, 1.0
        %v1089 = vadd.f32 %v1073, 1.0
        %v1090 = vadd.f32 %v1074, 1.0
        %v1091 = vadd.f32 %v1075, 1.0
        %v1092 = vadd.f32 %v1076, 1.0
        %v1093 = vadd.f32 %v1077, 1.0
        %v1094 = vadd.f32 %v1078, 1.0
        %v1095 = vmul.f32 %v967, %v1079
        %v1096 = vmul.f32 %v968, %v1080
        %v1097 = vmul.f32 %v969, %v1081
        %v1098 = vmul.f32 %v970, %v1082
        %v1099 = vmul.f32 %v971, %v1083
        %v1100 = vmul.f32 %v972, %v1084
        %v1101 = vmul.f32 %v973, %v1085
        %v1102 = vmul.f32 %v974, %v1086
        %v1103 = vmul.f32 %v975, %v1087
        %v1104 = vmul.f32 %v976, %v1088
        %v1105 = vmul.f32 %v977, %v1089
        %v1106 = vmul.f32 %v978, %v1090
        %v1107 = vmul.f32 %v979, %v1091
        %v1108 = vmul.f32 %v980, %v1092
        %v1109 = vmul.f32 %v981, %v1093
        %v1110 = vmul.f32 %v982, %v1094
        %v1111 = vld [vmem:[%s301] sm:$0xf]
        %v1112 = vld [vmem:[%s301 + $0x4] sm:$0xf]
        %v1113 = vld [vmem:[%s301 + $0x8] sm:$0xf]
        %v1114 = vld [vmem:[%s301 + $0xc] sm:$0xf]
        %v1115 = vld [vmem:[%s301 + $0x10] sm:$0xf]
        %v1116 = vld [vmem:[%s301 + $0x14] sm:$0xf]
        %v1117 = vld [vmem:[%s301 + $0x18] sm:$0xf]
        %v1118 = vld [vmem:[%s301 + $0x1c] sm:$0xf]
        %v1119 = vld [vmem:[%s301 + $0x20] sm:$0xf]
        %v1120 = vld [vmem:[%s301 + $0x24] sm:$0xf]
        %v1121 = vld [vmem:[%s301 + $0x28] sm:$0xf]
        %v1122 = vld [vmem:[%s301 + $0x2c] sm:$0xf]
        %v1123 = vld [vmem:[%s301 + $0x30] sm:$0xf]
        %v1124 = vld [vmem:[%s301 + $0x34] sm:$0xf]
        %v1125 = vld [vmem:[%s301 + $0x38] sm:$0xf]
        %v1126 = vld [vmem:[%s301 + $0x3c] sm:$0xf]
        %v1127 = vunpack.c.l.bf16 %v1111
        %v1128 = vunpack.c.l.bf16 %v1112
        %v1129 = vunpack.c.l.bf16 %v1113
        %v1130 = vunpack.c.l.bf16 %v1114
        %v1131 = vunpack.c.l.bf16 %v1115
        %v1132 = vunpack.c.l.bf16 %v1116
        %v1133 = vunpack.c.l.bf16 %v1117
        %v1134 = vunpack.c.l.bf16 %v1118
        %v1135 = vunpack.c.l.bf16 %v1119
        %v1136 = vunpack.c.l.bf16 %v1120
        %v1137 = vunpack.c.l.bf16 %v1121
        %v1138 = vunpack.c.l.bf16 %v1122
        %v1139 = vunpack.c.l.bf16 %v1123
        %v1140 = vunpack.c.l.bf16 %v1124
        %v1141 = vunpack.c.l.bf16 %v1125
        %v1142 = vunpack.c.l.bf16 %v1126
        %v1143 = vadd.f32 %v1095, %v1127
        %v1144 = vadd.f32 %v1096, %v1128
        %v1145 = vadd.f32 %v1097, %v1129
        %v1146 = vadd.f32 %v1098, %v1130
        %v1147 = vadd.f32 %v1099, %v1131
        %v1148 = vadd.f32 %v1100, %v1132
        %v1149 = vadd.f32 %v1101, %v1133
        %v1150 = vadd.f32 %v1102, %v1134
        %v1151 = vadd.f32 %v1103, %v1135
        %v1152 = vadd.f32 %v1104, %v1136
        %v1153 = vadd.f32 %v1105, %v1137
        %v1154 = vadd.f32 %v1106, %v1138
        %v1155 = vadd.f32 %v1107, %v1139
        %v1156 = vadd.f32 %v1108, %v1140
        %v1157 = vadd.f32 %v1109, %v1141
        %v1158 = vadd.f32 %v1110, %v1142
        %v1159 = vpack.c.bf16 %v1144, %v1143
        %v1160 = vpack.c.bf16 %v1146, %v1145
        %v1161 = vpack.c.bf16 %v1148, %v1147
        %v1162 = vpack.c.bf16 %v1150, %v1149
        %v1163 = vpack.c.bf16 %v1152, %v1151
        %v1164 = vpack.c.bf16 %v1154, %v1153
        %v1165 = vpack.c.bf16 %v1156, %v1155
        %v1166 = vpack.c.bf16 %v1158, %v1157
        %v1175 = vunpack.c.l.b16 %v1159
        %v1176 = vunpack.c.h.b16 %v1159
        %v1177 = vunpack.c.l.b16 %v1160
        %v1178 = vunpack.c.h.b16 %v1160
        %v1179 = vunpack.c.l.b16 %v1161
        %v1180 = vunpack.c.h.b16 %v1161
        %v1181 = vunpack.c.l.b16 %v1162
        %v1182 = vunpack.c.h.b16 %v1162
        %v1183 = vunpack.c.l.b16 %v1163
        %v1184 = vunpack.c.h.b16 %v1163
        %v1185 = vunpack.c.l.b16 %v1164
        %v1186 = vunpack.c.h.b16 %v1164
        %v1187 = vunpack.c.l.b16 %v1165
        %v1188 = vunpack.c.h.b16 %v1165
        %v1189 = vunpack.c.l.b16 %v1166
        %v1190 = vunpack.c.h.b16 %v1166
        %v1191 = vpack.c.b16 %v1175, %v1175
        %v1192 = vpack.c.b16 %v1176, %v1176
        %v1193 = vpack.c.b16 %v1177, %v1177
        %v1194 = vpack.c.b16 %v1178, %v1178
        %v1195 = vpack.c.b16 %v1179, %v1179
        %v1196 = vpack.c.b16 %v1180, %v1180
        %v1197 = vpack.c.b16 %v1181, %v1181
        %v1198 = vpack.c.b16 %v1182, %v1182
        %v1199 = vpack.c.b16 %v1183, %v1183
        %v1200 = vpack.c.b16 %v1184, %v1184
        %v1201 = vpack.c.b16 %v1185, %v1185
        %v1202 = vpack.c.b16 %v1186, %v1186
        %v1203 = vpack.c.b16 %v1187, %v1187
        %v1204 = vpack.c.b16 %v1188, %v1188
        %v1205 = vpack.c.b16 %v1189, %v1189
        %v1206 = vpack.c.b16 %v1190, %v1190
        %1223 = vst [vmem:[%s309] sm:$0xf] %v1191
        %1224 = vst [vmem:[%s309 + $0x4] sm:$0xf] %v1192
        %1225 = vst [vmem:[%s309 + $0x8] sm:$0xf] %v1193
        %1226 = vst [vmem:[%s309 + $0xc] sm:$0xf] %v1194
        %1227 = vst [vmem:[%s309 + $0x10] sm:$0xf] %v1195
        %1228 = vst [vmem:[%s309 + $0x14] sm:$0xf] %v1196
        %1229 = vst [vmem:[%s309 + $0x18] sm:$0xf] %v1197
        %1230 = vst [vmem:[%s309 + $0x1c] sm:$0xf] %v1198
        %1231 = vst [vmem:[%s309 + $0x20] sm:$0xf] %v1199
        %1232 = vst [vmem:[%s309 + $0x24] sm:$0xf] %v1200
        %1233 = vst [vmem:[%s309 + $0x28] sm:$0xf] %v1201
        %1234 = vst [vmem:[%s309 + $0x2c] sm:$0xf] %v1202
        %1235 = vst [vmem:[%s309 + $0x30] sm:$0xf] %v1203
        %1236 = vst [vmem:[%s309 + $0x34] sm:$0xf] %v1204
        %1237 = vst [vmem:[%s309 + $0x38] sm:$0xf] %v1205
        %1238 = vst [vmem:[%s309 + $0x3c] sm:$0xf] %v1206
      $region44: #{whisper_audio_tower_forward.8} parent=35 // pred_fallthru
        _
      %s1239 = smul.u32 16, %s20
      %p1240 = scmp.lt.s32.totalorder %s1239, 31
      %s1241 = scalar_select %p1240, %s1239, 31
      %p1242 = scmp.lt.s32.totalorder %s21, 0
      %s1243 = scalar_select %p1242, %s21, 0
      %s1244 = sadd.s32 %s1243, %s1241
      %s1245 = smul.addr %s1244, 4
      %s1246 = scalar_lea.vmem %s4, %s1245
      // Predicated region
      $region45: #{whisper_audio_tower_forward.8} parent=35 // pred_check
        %p1247 = pneg %p162
      $region46: #{whisper_audio_tower_forward.8} parent=35 // pred_check_branch
        %1249 = sbr.rel (%p1247) target = $region48
      $region47: #{whisper_audio_tower_forward.8} parent=35 // pred_region
        %s1250 = smul.u32 16, %s20
      $region48: #{whisper_audio_tower_forward.8} parent=35 // pred_fallthru
        _
    $region36: #{whisper_audio_tower_forward.8} parent=5 // pred_fallthru
      _
    %p1251 = scmp.le.s32.totalorder 2, %s10
    // Predicated region
    $region49: #{whisper_audio_tower_forward.8} parent=5 // pred_check
      %p1252 = pneg %p1251
    $region50: #{whisper_audio_tower_forward.8} parent=5 // pred_check_branch
      %1254 = sbr.rel (%p1252) target = $region52
    $region51: #{whisper_audio_tower_forward.8} parent=5 // pred_region
      %s1255 = ssub.s32 %s10, 2
      // Predicated region
      $region53: #{whisper_audio_tower_forward.8} parent=51 // pred_check
        %p1256 = pneg %p168
      $region54: #{whisper_audio_tower_forward.8} parent=51 // pred_check_branch
        %1258 = sbr.rel (%p1256) target = $region56
      $region55: #{whisper_audio_tower_forward.8} parent=51 // pred_region
        %s1259 = smul.u32 16, %s23
        %p1260 = scmp.lt.s32.totalorder %s1259, 31
        %s1261 = scalar_select %p1260, %s1259, 31
        %p1262 = scmp.lt.s32.totalorder %s24, 0
        %s1263 = scalar_select %p1262, %s24, 0
        %s1264 = sadd.s32 %s1263, %s1261
        %s1265 = smul.addr %s1264, 4
        %s1266 = scalar_lea.vmem %s4, %s1265
      $region56: #{whisper_audio_tower_forward.8} parent=51 // pred_fallthru
        _
    $region52: #{whisper_audio_tower_forward.8} parent=5 // pred_fallthru
      _
  $region6: #{whisper_audio_tower_forward.8} parent=0 // loop_footer
    %s14 = sadd.s32 1, %s10
  $region7: #{whisper_audio_tower_forward.8} parent=0 // loop_footer_branch
    %9 = sbr.rel target = $region3
  $region8: #{whisper_audio_tower_forward.8} parent=0 // loop_exit
    _

// kernel: whisper_audio_tower_forward.9
$region0: #{whisper_audio_tower_forward.9}
  #allocation0 [shape = 'u32[]', space=smem, size = 0x4, offset = 0x4, fixed_abs, tag = 'smem constant byte address 0x4 - core index']
  #allocation1 [shape = 'u32[144,128]{1,0:T(1,128)}', space=vmem, size = 0x12000, scoped, tag = 'internal scratch']
  #allocation2 [shape = 'bf16[256,128]{1,0:T(16,128)(2,1)}', space=vmem, size = 0x10000, scoped, tag = 'scratch operand']
  %s0 = inlined_call_operand.vmem [shape: bf16[256,128], index: 0, kind: input, shape index: {}]
  %s1 = inlined_call_operand.vmem [shape: bf16[1,128], index: 1, kind: input, shape index: {}]
  %s2 = inlined_call_operand.vmem [shape: bf16[1,128], index: 2, kind: input, shape index: {}]
  %s3 = inlined_call_operand.vmem [shape: bf16[128,384], index: 3, kind: input, shape index: {}]
  %s4 = inlined_call_operand.vmem [shape: bf16[1,384], index: 4, kind: input, shape index: {}]
  %s5 = inlined_call_operand.vmem [shape: bf16[256,384], index: 5, kind: output, shape index: {}]
  %s6 = sld [smem:[#allocation0]]
  $region34: #{whisper_audio_tower_forward.9} parent=0
    _
  %s8 = ssub.s32 1, %s6
  %s9 = scalar_select 0, %s8, %s6
  // Predicated region
  $region2: #{whisper_audio_tower_forward.9} parent=0 // pred_check
    _
  $region3: #{whisper_audio_tower_forward.9} parent=0 // pred_check_branch
    %11 = sbr.rel (0) target = $region5
  $region4: #{whisper_audio_tower_forward.9} parent=0 // pred_region
    _
  $region5: #{whisper_audio_tower_forward.9} parent=0 // pred_fallthru
    _
  // Predicated region
  $region6: #{whisper_audio_tower_forward.9} parent=0 // pred_check
    _
  $region7: #{whisper_audio_tower_forward.9} parent=0 // pred_check_branch
    %13 = sbr.rel (0) target = $region9
  $region8: #{whisper_audio_tower_forward.9} parent=0 // pred_region
    _
  $region9: #{whisper_audio_tower_forward.9} parent=0 // pred_fallthru
    _
  // Predicated region
  $region10: #{whisper_audio_tower_forward.9} parent=0 // pred_check
    _
  $region11: #{whisper_audio_tower_forward.9} parent=0 // pred_check_branch
    %15 = sbr.rel (0) target = $region13
  $region12: #{whisper_audio_tower_forward.9} parent=0 // pred_region
    _
  $region13: #{whisper_audio_tower_forward.9} parent=0 // pred_fallthru
    _
  // Predicated region
  $region14: #{whisper_audio_tower_forward.9} parent=0 // pred_check
    _
  $region15: #{whisper_audio_tower_forward.9} parent=0 // pred_check_branch
    %17 = sbr.rel (0) target = $region17
  $region16: #{whisper_audio_tower_forward.9} parent=0 // pred_region
    _
  $region17: #{whisper_audio_tower_forward.9} parent=0 // pred_fallthru
    _
  // Predicated region
  $region18: #{whisper_audio_tower_forward.9} parent=0 // pred_check
    _
  $region19: #{whisper_audio_tower_forward.9} parent=0 // pred_check_branch
    %19 = sbr.rel (0) target = $region21
  $region20: #{whisper_audio_tower_forward.9} parent=0 // pred_region
    _
  $region21: #{whisper_audio_tower_forward.9} parent=0 // pred_fallthru
    _
  %p21 = scmp.eq.s32.totalorder 0, 0
  // Predicated region
  $region22: #{whisper_audio_tower_forward.9} parent=0 // pred_check
    %p22 = pneg %p21
  $region23: #{whisper_audio_tower_forward.9} parent=0 // pred_check_branch
    %24 = sbr.rel (%p22) target = $region25
  $region24: #{whisper_audio_tower_forward.9} parent=0 // pred_region
    %v25 = vld [vmem:[%s0] sm:$0xf]
    %v26 = vld [vmem:[%s0 + $0x4] sm:$0xf]
    %v27 = vld [vmem:[%s0 + $0x8] sm:$0xf]
    %v28 = vld [vmem:[%s0 + $0xc] sm:$0xf]
    %v29 = vld [vmem:[%s0 + $0x10] sm:$0xf]
    %v30 = vld [vmem:[%s0 + $0x14] sm:$0xf]
    %v31 = vld [vmem:[%s0 + $0x18] sm:$0xf]
    %v32 = vld [vmem:[%s0 + $0x1c] sm:$0xf]
    %v33 = vld [vmem:[%s0 + $0x20] sm:$0xf]
    %v34 = vld [vmem:[%s0 + $0x24] sm:$0xf]
    %v35 = vld [vmem:[%s0 + $0x28] sm:$0xf]
    %v36 = vld [vmem:[%s0 + $0x2c] sm:$0xf]
    %v37 = vld [vmem:[%s0 + $0x30] sm:$0xf]
    %v38 = vld [vmem:[%s0 + $0x34] sm:$0xf]
    %v39 = vld [vmem:[%s0 + $0x38] sm:$0xf]
    %v40 = vld [vmem:[%s0 + $0x3c] sm:$0xf]
    %v41 = vld [vmem:[%s0 + $0x40] sm:$0xf]
    %v42 = vld [vmem:[%s0 + $0x44] sm:$0xf]
    %v43 = vld [vmem:[%s0 + $0x48] sm:$0xf]
    %v44 = vld [vmem:[%s0 + $0x4c] sm:$0xf]
    %v45 = vld [vmem:[%s0 + $0x50] sm:$0xf]
    %v46 = vld [vmem:[%s0 + $0x54] sm:$0xf]
    %v47 = vld [vmem:[%s0 + $0x58] sm:$0xf]
    %v48 = vld [vmem:[%s0 + $0x5c] sm:$0xf]
    %v49 = vld [vmem:[%s0 + $0x60] sm:$0xf]
    %v50 = vld [vmem:[%s0 + $0x64] sm:$0xf]
    %v51 = vld [vmem:[%s0 + $0x68] sm:$0xf]
    %v52 = vld [vmem:[%s0 + $0x6c] sm:$0xf]
    %v53 = vld [vmem:[%s0 + $0x70] sm:$0xf]
    %v54 = vld [vmem:[%s0 + $0x74] sm:$0xf]
    %v55 = vld [vmem:[%s0 + $0x78] sm:$0xf]
    %v56 = vld [vmem:[%s0 + $0x7c] sm:$0xf]
    %v57 = vunpack.c.l.bf16 %v25
    %v58 = vunpack.c.l.bf16 %v26
    %v59 = vunpack.c.l.bf16 %v27
    %v60 = vunpack.c.l.bf16 %v28
    %v61 = vunpack.c.l.bf16 %v29
    %v62 = vunpack.c.l.bf16 %v30
    %v63 = vunpack.c.l.bf16 %v31
    %v64 = vunpack.c.l.bf16 %v32
    %v65 = vunpack.c.l.bf16 %v33
    %v66 = vunpack.c.l.bf16 %v34
    %v67 = vunpack.c.l.bf16 %v35
    %v68 = vunpack.c.l.bf16 %v36
    %v69 = vunpack.c.l.bf16 %v37
    %v70 = vunpack.c.l.bf16 %v38
    %v71 = vunpack.c.l.bf16 %v39
    %v72 = vunpack.c.l.bf16 %v40
    %v73 = vunpack.c.l.bf16 %v41
    %v74 = vunpack.c.l.bf16 %v42
    %v75 = vunpack.c.l.bf16 %v43
    %v76 = vunpack.c.l.bf16 %v44
    %v77 = vunpack.c.l.bf16 %v45
    %v78 = vunpack.c.l.bf16 %v46
    %v79 = vunpack.c.l.bf16 %v47
    %v80 = vunpack.c.l.bf16 %v48
    %v81 = vunpack.c.l.bf16 %v49
    %v82 = vunpack.c.l.bf16 %v50
    %v83 = vunpack.c.l.bf16 %v51
    %v84 = vunpack.c.l.bf16 %v52
    %v85 = vunpack.c.l.bf16 %v53
    %v86 = vunpack.c.l.bf16 %v54
    %v87 = vunpack.c.l.bf16 %v55
    %v88 = vunpack.c.l.bf16 %v56
    %89 = vadd.xlane.f32.xlu0 %v57
    %v90 = vpop.xlane.xlu0 %89
    %91 = vadd.xlane.f32.xlu0 %v58
    %v92 = vpop.xlane.xlu0 %91
    %93 = vadd.xlane.f32.xlu0 %v59
    %v94 = vpop.xlane.xlu0 %93
    %95 = vadd.xlane.f32.xlu0 %v60
    %v96 = vpop.xlane.xlu0 %95
    %97 = vadd.xlane.f32.xlu0 %v61
    %v98 = vpop.xlane.xlu0 %97
    %99 = vadd.xlane.f32.xlu0 %v62
    %v100 = vpop.xlane.xlu0 %99
    %101 = vadd.xlane.f32.xlu0 %v63
    %v102 = vpop.xlane.xlu0 %101
    %103 = vadd.xlane.f32.xlu0 %v64
    %v104 = vpop.xlane.xlu0 %103
    %105 = vadd.xlane.f32.xlu0 %v65
    %v106 = vpop.xlane.xlu0 %105
    %107 = vadd.xlane.f32.xlu0 %v66
    %v108 = vpop.xlane.xlu0 %107
    %109 = vadd.xlane.f32.xlu0 %v67
    %v110 = vpop.xlane.xlu0 %109
    %111 = vadd.xlane.f32.xlu0 %v68
    %v112 = vpop.xlane.xlu0 %111
    %113 = vadd.xlane.f32.xlu0 %v69
    %v114 = vpop.xlane.xlu0 %113
    %115 = vadd.xlane.f32.xlu0 %v70
    %v116 = vpop.xlane.xlu0 %115
    %117 = vadd.xlane.f32.xlu0 %v71
    %v118 = vpop.xlane.xlu0 %117
    %119 = vadd.xlane.f32.xlu0 %v72
    %v120 = vpop.xlane.xlu0 %119
    %121 = vadd.xlane.f32.xlu0 %v73
    %v122 = vpop.xlane.xlu0 %121
    %123 = vadd.xlane.f32.xlu0 %v74
    %v124 = vpop.xlane.xlu0 %123
    %125 = vadd.xlane.f32.xlu0 %v75
    %v126 = vpop.xlane.xlu0 %125
    %127 = vadd.xlane.f32.xlu0 %v76
    %v128 = vpop.xlane.xlu0 %127
    %129 = vadd.xlane.f32.xlu0 %v77
    %v130 = vpop.xlane.xlu0 %129
    %131 = vadd.xlane.f32.xlu0 %v78
    %v132 = vpop.xlane.xlu0 %131
    %133 = vadd.xlane.f32.xlu0 %v79
    %v134 = vpop.xlane.xlu0 %133
    %135 = vadd.xlane.f32.xlu0 %v80
    %v136 = vpop.xlane.xlu0 %135
    %137 = vadd.xlane.f32.xlu0 %v81
    %v138 = vpop.xlane.xlu0 %137
    %139 = vadd.xlane.f32.xlu0 %v82
    %v140 = vpop.xlane.xlu0 %139
    %141 = vadd.xlane.f32.xlu0 %v83
    %v142 = vpop.xlane.xlu0 %141
    %143 = vadd.xlane.f32.xlu0 %v84
    %v144 = vpop.xlane.xlu0 %143
    %145 = vadd.xlane.f32.xlu0 %v85
    %v146 = vpop.xlane.xlu0 %145
    %147 = vadd.xlane.f32.xlu0 %v86
    %v148 = vpop.xlane.xlu0 %147
    %149 = vadd.xlane.f32.xlu0 %v87
    %v150 = vpop.xlane.xlu0 %149
    %151 = vadd.xlane.f32.xlu0 %v88
    %v152 = vpop.xlane.xlu0 %151
    %v153 = vrcp.pop 128.0
    %v154 = vmul.f32 %v90, %v153
    %v155 = vmul.f32 %v92, %v153
    %v156 = vmul.f32 %v94, %v153
    %v157 = vmul.f32 %v96, %v153
    %v158 = vmul.f32 %v98, %v153
    %v159 = vmul.f32 %v100, %v153
    %v160 = vmul.f32 %v102, %v153
    %v161 = vmul.f32 %v104, %v153
    %v162 = vmul.f32 %v106, %v153
    %v163 = vmul.f32 %v108, %v153
    %v164 = vmul.f32 %v110, %v153
    %v165 = vmul.f32 %v112, %v153
    %v166 = vmul.f32 %v114, %v153
    %v167 = vmul.f32 %v116, %v153
    %v168 = vmul.f32 %v118, %v153
    %v169 = vmul.f32 %v120, %v153
    %v170 = vmul.f32 %v122, %v153
    %v171 = vmul.f32 %v124, %v153
    %v172 = vmul.f32 %v126, %v153
    %v173 = vmul.f32 %v128, %v153
    %v174 = vmul.f32 %v130, %v153
    %v175 = vmul.f32 %v132, %v153
    %v176 = vmul.f32 %v134, %v153
    %v177 = vmul.f32 %v136, %v153
    %v178 = vmul.f32 %v138, %v153
    %v179 = vmul.f32 %v140, %v153
    %v180 = vmul.f32 %v142, %v153
    %v181 = vmul.f32 %v144, %v153
    %v182 = vmul.f32 %v146, %v153
    %v183 = vmul.f32 %v148, %v153
    %v184 = vmul.f32 %v150, %v153
    %v185 = vmul.f32 %v152, %v153
    %v186 = vsub.f32 %v57, %v154
    %v187 = vsub.f32 %v58, %v155
    %v188 = vsub.f32 %v59, %v156
    %v189 = vsub.f32 %v60, %v157
    %v190 = vsub.f32 %v61, %v158
    %v191 = vsub.f32 %v62, %v159
    %v192 = vsub.f32 %v63, %v160
    %v193 = vsub.f32 %v64, %v161
    %v194 = vsub.f32 %v65, %v162
    %v195 = vsub.f32 %v66, %v163
    %v196 = vsub.f32 %v67, %v164
    %v197 = vsub.f32 %v68, %v165
    %v198 = vsub.f32 %v69, %v166
    %v199 = vsub.f32 %v70, %v167
    %v200 = vsub.f32 %v71, %v168
    %v201 = vsub.f32 %v72, %v169
    %v202 = vsub.f32 %v73, %v170
    %v203 = vsub.f32 %v74, %v171
    %v204 = vsub.f32 %v75, %v172
    %v205 = vsub.f32 %v76, %v173
    %v206 = vsub.f32 %v77, %v174
    %v207 = vsub.f32 %v78, %v175
    %v208 = vsub.f32 %v79, %v176
    %v209 = vsub.f32 %v80, %v177
    %v210 = vsub.f32 %v81, %v178
    %v211 = vsub.f32 %v82, %v179
    %v212 = vsub.f32 %v83, %v180
    %v213 = vsub.f32 %v84, %v181
    %v214 = vsub.f32 %v85, %v182
    %v215 = vsub.f32 %v86, %v183
    %v216 = vsub.f32 %v87, %v184
    %v217 = vsub.f32 %v88, %v185
    %v218 = vmul.f32 %v186, %v186
    %v219 = vmul.f32 %v187, %v187
    %v220 = vmul.f32 %v188, %v188
    %v221 = vmul.f32 %v189, %v189
    %v222 = vmul.f32 %v190, %v190
    %v223 = vmul.f32 %v191, %v191
    %v224 = vmul.f32 %v192, %v192
    %v225 = vmul.f32 %v193, %v193
    %v226 = vmul.f32 %v194, %v194
    %v227 = vmul.f32 %v195, %v195
    %v228 = vmul.f32 %v196, %v196
    %v229 = vmul.f32 %v197, %v197
    %v230 = vmul.f32 %v198, %v198
    %v231 = vmul.f32 %v199, %v199
    %v232 = vmul.f32 %v200, %v200
    %v233 = vmul.f32 %v201, %v201
    %v234 = vmul.f32 %v202, %v202
    %v235 = vmul.f32 %v203, %v203
    %v236 = vmul.f32 %v204, %v204
    %v237 = vmul.f32 %v205, %v205
    %v238 = vmul.f32 %v206, %v206
    %v239 = vmul.f32 %v207, %v207
    %v240 = vmul.f32 %v208, %v208
    %v241 = vmul.f32 %v209, %v209
    %v242 = vmul.f32 %v210, %v210
    %v243 = vmul.f32 %v211, %v211
    %v244 = vmul.f32 %v212, %v212
    %v245 = vmul.f32 %v213, %v213
    %v246 = vmul.f32 %v214, %v214
    %v247 = vmul.f32 %v215, %v215
    %v248 = vmul.f32 %v216, %v216
    %v249 = vmul.f32 %v217, %v217
    %250 = vadd.xlane.f32.xlu0 %v218
    %v251 = vpop.xlane.xlu0 %250
    %252 = vadd.xlane.f32.xlu0 %v219
    %v253 = vpop.xlane.xlu0 %252
    %254 = vadd.xlane.f32.xlu0 %v220
    %v255 = vpop.xlane.xlu0 %254
    %256 = vadd.xlane.f32.xlu0 %v221
    %v257 = vpop.xlane.xlu0 %256
    %258 = vadd.xlane.f32.xlu0 %v222
    %v259 = vpop.xlane.xlu0 %258
    %260 = vadd.xlane.f32.xlu0 %v223
    %v261 = vpop.xlane.xlu0 %260
    %262 = vadd.xlane.f32.xlu0 %v224
    %v263 = vpop.xlane.xlu0 %262
    %264 = vadd.xlane.f32.xlu0 %v225
    %v265 = vpop.xlane.xlu0 %264
    %266 = vadd.xlane.f32.xlu0 %v226
    %v267 = vpop.xlane.xlu0 %266
    %268 = vadd.xlane.f32.xlu0 %v227
    %v269 = vpop.xlane.xlu0 %268
    %270 = vadd.xlane.f32.xlu0 %v228
    %v271 = vpop.xlane.xlu0 %270
    %272 = vadd.xlane.f32.xlu0 %v229
    %v273 = vpop.xlane.xlu0 %272
    %274 = vadd.xlane.f32.xlu0 %v230
    %v275 = vpop.xlane.xlu0 %274
    %276 = vadd.xlane.f32.xlu0 %v231
    %v277 = vpop.xlane.xlu0 %276
    %278 = vadd.xlane.f32.xlu0 %v232
    %v279 = vpop.xlane.xlu0 %278
    %280 = vadd.xlane.f32.xlu0 %v233
    %v281 = vpop.xlane.xlu0 %280
    %282 = vadd.xlane.f32.xlu0 %v234
    %v283 = vpop.xlane.xlu0 %282
    %284 = vadd.xlane.f32.xlu0 %v235
    %v285 = vpop.xlane.xlu0 %284
    %286 = vadd.xlane.f32.xlu0 %v236
    %v287 = vpop.xlane.xlu0 %286
    %288 = vadd.xlane.f32.xlu0 %v237
    %v289 = vpop.xlane.xlu0 %288
    %290 = vadd.xlane.f32.xlu0 %v238
    %v291 = vpop.xlane.xlu0 %290
    %292 = vadd.xlane.f32.xlu0 %v239
    %v293 = vpop.xlane.xlu0 %292
    %294 = vadd.xlane.f32.xlu0 %v240
    %v295 = vpop.xlane.xlu0 %294
    %296 = vadd.xlane.f32.xlu0 %v241
    %v297 = vpop.xlane.xlu0 %296
    %298 = vadd.xlane.f32.xlu0 %v242
    %v299 = vpop.xlane.xlu0 %298
    %300 = vadd.xlane.f32.xlu0 %v243
    %v301 = vpop.xlane.xlu0 %300
    %302 = vadd.xlane.f32.xlu0 %v244
    %v303 = vpop.xlane.xlu0 %302
    %304 = vadd.xlane.f32.xlu0 %v245
    %v305 = vpop.xlane.xlu0 %304
    %306 = vadd.xlane.f32.xlu0 %v246
    %v307 = vpop.xlane.xlu0 %306
    %308 = vadd.xlane.f32.xlu0 %v247
    %v309 = vpop.xlane.xlu0 %308
    %310 = vadd.xlane.f32.xlu0 %v248
    %v311 = vpop.xlane.xlu0 %310
    %312 = vadd.xlane.f32.xlu0 %v249
    %v313 = vpop.xlane.xlu0 %312
    %v314 = vmul.f32 %v251, %v153
    %v315 = vmul.f32 %v253, %v153
    %v316 = vmul.f32 %v255, %v153
    %v317 = vmul.f32 %v257, %v153
    %v318 = vmul.f32 %v259, %v153
    %v319 = vmul.f32 %v261, %v153
    %v320 = vmul.f32 %v263, %v153
    %v321 = vmul.f32 %v265, %v153
    %v322 = vmul.f32 %v267, %v153
    %v323 = vmul.f32 %v269, %v153
    %v324 = vmul.f32 %v271, %v153
    %v325 = vmul.f32 %v273, %v153
    %v326 = vmul.f32 %v275, %v153
    %v327 = vmul.f32 %v277, %v153
    %v328 = vmul.f32 %v279, %v153
    %v329 = vmul.f32 %v281, %v153
    %v330 = vmul.f32 %v283, %v153
    %v331 = vmul.f32 %v285, %v153
    %v332 = vmul.f32 %v287, %v153
    %v333 = vmul.f32 %v289, %v153
    %v334 = vmul.f32 %v291, %v153
    %v335 = vmul.f32 %v293, %v153
    %v336 = vmul.f32 %v295, %v153
    %v337 = vmul.f32 %v297, %v153
    %v338 = vmul.f32 %v299, %v153
    %v339 = vmul.f32 %v301, %v153
    %v340 = vmul.f32 %v303, %v153
    %v341 = vmul.f32 %v305, %v153
    %v342 = vmul.f32 %v307, %v153
    %v343 = vmul.f32 %v309, %v153
    %v344 = vmul.f32 %v311, %v153
    %v345 = vmul.f32 %v313, %v153
    %v346 = vadd.f32 %v314, 1e-05
    %v347 = vadd.f32 %v315, 1e-05
    %v348 = vadd.f32 %v316, 1e-05
    %v349 = vadd.f32 %v317, 1e-05
    %v350 = vadd.f32 %v318, 1e-05
    %v351 = vadd.f32 %v319, 1e-05
    %v352 = vadd.f32 %v320, 1e-05
    %v353 = vadd.f32 %v321, 1e-05
    %v354 = vadd.f32 %v322, 1e-05
    %v355 = vadd.f32 %v323, 1e-05
    %v356 = vadd.f32 %v324, 1e-05
    %v357 = vadd.f32 %v325, 1e-05
    %v358 = vadd.f32 %v326, 1e-05
    %v359 = vadd.f32 %v327, 1e-05
    %v360 = vadd.f32 %v328, 1e-05
    %v361 = vadd.f32 %v329, 1e-05
    %v362 = vadd.f32 %v330, 1e-05
    %v363 = vadd.f32 %v331, 1e-05
    %v364 = vadd.f32 %v332, 1e-05
    %v365 = vadd.f32 %v333, 1e-05
    %v366 = vadd.f32 %v334, 1e-05
    %v367 = vadd.f32 %v335, 1e-05
    %v368 = vadd.f32 %v336, 1e-05
    %v369 = vadd.f32 %v337, 1e-05
    %v370 = vadd.f32 %v338, 1e-05
    %v371 = vadd.f32 %v339, 1e-05
    %v372 = vadd.f32 %v340, 1e-05
    %v373 = vadd.f32 %v341, 1e-05
    %v374 = vadd.f32 %v342, 1e-05
    %v375 = vadd.f32 %v343, 1e-05
    %v376 = vadd.f32 %v344, 1e-05
    %v377 = vadd.f32 %v345, 1e-05
    %v378 = vrsqrt.pop %v346
    %v379 = vrsqrt.pop %v347
    %v380 = vrsqrt.pop %v348
    %v381 = vrsqrt.pop %v349
    %v382 = vrsqrt.pop %v350
    %v383 = vrsqrt.pop %v351
    %v384 = vrsqrt.pop %v352
    %v385 = vrsqrt.pop %v353
    %v386 = vrsqrt.pop %v354
    %v387 = vrsqrt.pop %v355
    %v388 = vrsqrt.pop %v356
    %v389 = vrsqrt.pop %v357
    %v390 = vrsqrt.pop %v358
    %v391 = vrsqrt.pop %v359
    %v392 = vrsqrt.pop %v360
    %v393 = vrsqrt.pop %v361
    %v394 = vrsqrt.pop %v362
    %v395 = vrsqrt.pop %v363
    %v396 = vrsqrt.pop %v364
    %v397 = vrsqrt.pop %v365
    %v398 = vrsqrt.pop %v366
    %v399 = vrsqrt.pop %v367
    %v400 = vrsqrt.pop %v368
    %v401 = vrsqrt.pop %v369
    %v402 = vrsqrt.pop %v370
    %v403 = vrsqrt.pop %v371
    %v404 = vrsqrt.pop %v372
    %v405 = vrsqrt.pop %v373
    %v406 = vrsqrt.pop %v374
    %v407 = vrsqrt.pop %v375
    %v408 = vrsqrt.pop %v376
    %v409 = vrsqrt.pop %v377
    %v410 = vmul.f32 %v186, %v378
    %v411 = vmul.f32 %v187, %v379
    %v412 = vmul.f32 %v188, %v380
    %v413 = vmul.f32 %v189, %v381
    %v414 = vmul.f32 %v190, %v382
    %v415 = vmul.f32 %v191, %v383
    %v416 = vmul.f32 %v192, %v384
    %v417 = vmul.f32 %v193, %v385
    %v418 = vmul.f32 %v194, %v386
    %v419 = vmul.f32 %v195, %v387
    %v420 = vmul.f32 %v196, %v388
    %v421 = vmul.f32 %v197, %v389
    %v422 = vmul.f32 %v198, %v390
    %v423 = vmul.f32 %v199, %v391
    %v424 = vmul.f32 %v200, %v392
    %v425 = vmul.f32 %v201, %v393
    %v426 = vmul.f32 %v202, %v394
    %v427 = vmul.f32 %v203, %v395
    %v428 = vmul.f32 %v204, %v396
    %v429 = vmul.f32 %v205, %v397
    %v430 = vmul.f32 %v206, %v398
    %v431 = vmul.f32 %v207, %v399
    %v432 = vmul.f32 %v208, %v400
    %v433 = vmul.f32 %v209, %v401
    %v434 = vmul.f32 %v210, %v402
    %v435 = vmul.f32 %v211, %v403
    %v436 = vmul.f32 %v212, %v404
    %v437 = vmul.f32 %v213, %v405
    %v438 = vmul.f32 %v214, %v406
    %v439 = vmul.f32 %v215, %v407
    %v440 = vmul.f32 %v216, %v408
    %v441 = vmul.f32 %v217, %v409
    %v442 = vld [vmem:[%s1] sm:$0x1]
    %v443 = vunpack.c.l.bf16 %v442
    %v444 = vlaneseq
    %v445 = vshrl.u32 %v444, 7
    %v446 = vsub.s32 0, %v445
    %v447 = vrot.slane %v443, %v446
    %v448 = vmul.f32 %v410, %v447
    %v449 = vmul.f32 %v411, %v447
    %v450 = vmul.f32 %v412, %v447
    %v451 = vmul.f32 %v413, %v447
    %v452 = vmul.f32 %v414, %v447
    %v453 = vmul.f32 %v415, %v447
    %v454 = vmul.f32 %v416, %v447
    %v455 = vmul.f32 %v417, %v447
    %v456 = vmul.f32 %v418, %v447
    %v457 = vmul.f32 %v419, %v447
    %v458 = vmul.f32 %v420, %v447
    %v459 = vmul.f32 %v421, %v447
    %v460 = vmul.f32 %v422, %v447
    %v461 = vmul.f32 %v423, %v447
    %v462 = vmul.f32 %v424, %v447
    %v463 = vmul.f32 %v425, %v447
    %v464 = vmul.f32 %v426, %v447
    %v465 = vmul.f32 %v427, %v447
    %v466 = vmul.f32 %v428, %v447
    %v467 = vmul.f32 %v429, %v447
    %v468 = vmul.f32 %v430, %v447
    %v469 = vmul.f32 %v431, %v447
    %v470 = vmul.f32 %v432, %v447
    %v471 = vmul.f32 %v433, %v447
    %v472 = vmul.f32 %v434, %v447
    %v473 = vmul.f32 %v435, %v447
    %v474 = vmul.f32 %v436, %v447
    %v475 = vmul.f32 %v437, %v447
    %v476 = vmul.f32 %v438, %v447
    %v477 = vmul.f32 %v439, %v447
    %v478 = vmul.f32 %v440, %v447
    %v479 = vmul.f32 %v441, %v447
    %v480 = vld [vmem:[%s2] sm:$0x1]
    %v481 = vunpack.c.l.bf16 %v480
    %v482 = vlaneseq
    %v483 = vshrl.u32 %v482, 7
    %v484 = vsub.s32 0, %v483
    %v485 = vrot.slane %v481, %v484
    %v486 = vadd.f32 %v448, %v485
    %v487 = vadd.f32 %v449, %v485
    %v488 = vadd.f32 %v450, %v485
    %v489 = vadd.f32 %v451, %v485
    %v490 = vadd.f32 %v452, %v485
    %v491 = vadd.f32 %v453, %v485
    %v492 = vadd.f32 %v454, %v485
    %v493 = vadd.f32 %v455, %v485
    %v494 = vadd.f32 %v456, %v485
    %v495 = vadd.f32 %v457, %v485
    %v496 = vadd.f32 %v458, %v485
    %v497 = vadd.f32 %v459, %v485
    %v498 = vadd.f32 %v460, %v485
    %v499 = vadd.f32 %v461, %v485
    %v500 = vadd.f32 %v462, %v485
    %v501 = vadd.f32 %v463, %v485
    %v502 = vadd.f32 %v464, %v485
    %v503 = vadd.f32 %v465, %v485
    %v504 = vadd.f32 %v466, %v485
    %v505 = vadd.f32 %v467, %v485
    %v506 = vadd.f32 %v468, %v485
    %v507 = vadd.f32 %v469, %v485
    %v508 = vadd.f32 %v470, %v485
    %v509 = vadd.f32 %v471, %v485
    %v510 = vadd.f32 %v472, %v485
    %v511 = vadd.f32 %v473, %v485
    %v512 = vadd.f32 %v474, %v485
    %v513 = vadd.f32 %v475, %v485
    %v514 = vadd.f32 %v476, %v485
    %v515 = vadd.f32 %v477, %v485
    %v516 = vadd.f32 %v478, %v485
    %v517 = vadd.f32 %v479, %v485
    %v518 = vpack.c.bf16 %v487, %v486
    %v519 = vpack.c.bf16 %v489, %v488
    %v520 = vpack.c.bf16 %v491, %v490
    %v521 = vpack.c.bf16 %v493, %v492
    %v522 = vpack.c.bf16 %v495, %v494
    %v523 = vpack.c.bf16 %v497, %v496
    %v524 = vpack.c.bf16 %v499, %v498
    %v525 = vpack.c.bf16 %v501, %v500
    %v526 = vpack.c.bf16 %v503, %v502
    %v527 = vpack.c.bf16 %v505, %v504
    %v528 = vpack.c.bf16 %v507, %v506
    %v529 = vpack.c.bf16 %v509, %v508
    %v530 = vpack.c.bf16 %v511, %v510
    %v531 = vpack.c.bf16 %v513, %v512
    %v532 = vpack.c.bf16 %v515, %v514
    %v533 = vpack.c.bf16 %v517, %v516
    %534 = vst [vmem:[#allocation2] sm:$0xff] %v518
    %535 = vst [vmem:[#allocation2 + $0x8] sm:$0xff] %v519
    %536 = vst [vmem:[#allocation2 + $0x10] sm:$0xff] %v520
    %537 = vst [vmem:[#allocation2 + $0x18] sm:$0xff] %v521
    %538 = vst [vmem:[#allocation2 + $0x20] sm:$0xff] %v522
    %539 = vst [vmem:[#allocation2 + $0x28] sm:$0xff] %v523
    %540 = vst [vmem:[#allocation2 + $0x30] sm:$0xff] %v524
    %541 = vst [vmem:[#allocation2 + $0x38] sm:$0xff] %v525
    %542 = vst [vmem:[#allocation2 + $0x40] sm:$0xff] %v526
    %543 = vst [vmem:[#allocation2 + $0x48] sm:$0xff] %v527
    %544 = vst [vmem:[#allocation2 + $0x50] sm:$0xff] %v528
    %545 = vst [vmem:[#allocation2 + $0x58] sm:$0xff] %v529
    %546 = vst [vmem:[#allocation2 + $0x60] sm:$0xff] %v530
    %547 = vst [vmem:[#allocation2 + $0x68] sm:$0xff] %v531
    %548 = vst [vmem:[#allocation2 + $0x70] sm:$0xff] %v532
    %549 = vst [vmem:[#allocation2 + $0x78] sm:$0xff] %v533
  $region25: #{whisper_audio_tower_forward.9} parent=0 // pred_fallthru
    _
  %v550 = vld [vmem:[#allocation2] sm:$0xff]
  %v551 = vld [vmem:[#allocation2 + $0x8] sm:$0xff]
  %v552 = vld [vmem:[#allocation2 + $0x10] sm:$0xff]
  %v553 = vld [vmem:[#allocation2 + $0x18] sm:$0xff]
  %v554 = vld [vmem:[#allocation2 + $0x20] sm:$0xff]
  %v555 = vld [vmem:[#allocation2 + $0x28] sm:$0xff]
  %v556 = vld [vmem:[#allocation2 + $0x30] sm:$0xff]
  %v557 = vld [vmem:[#allocation2 + $0x38] sm:$0xff]
  %v558 = vld [vmem:[#allocation2 + $0x40] sm:$0xff]
  %v559 = vld [vmem:[#allocation2 + $0x48] sm:$0xff]
  %v560 = vld [vmem:[#allocation2 + $0x50] sm:$0xff]
  %v561 = vld [vmem:[#allocation2 + $0x58] sm:$0xff]
  %v562 = vld [vmem:[#allocation2 + $0x60] sm:$0xff]
  %v563 = vld [vmem:[#allocation2 + $0x68] sm:$0xff]
  %v564 = vld [vmem:[#allocation2 + $0x70] sm:$0xff]
  %v565 = vld [vmem:[#allocation2 + $0x78] sm:$0xff]
  %v566 = vld [vmem:[%s3] sm:$0xff]
  %v567 = vld [vmem:[%s3 + $0x8] sm:$0xf]
  %v568 = vld [vmem:[%s3 + $0xc] sm:$0xff]
  %v569 = vld [vmem:[%s3 + $0x14] sm:$0xf]
  %v570 = vld [vmem:[%s3 + $0x18] sm:$0xff]
  %v571 = vld [vmem:[%s3 + $0x20] sm:$0xf]
  %v572 = vld [vmem:[%s3 + $0x24] sm:$0xff]
  %v573 = vld [vmem:[%s3 + $0x2c] sm:$0xf]
  %v574 = vld [vmem:[%s3 + $0x30] sm:$0xff]
  %v575 = vld [vmem:[%s3 + $0x38] sm:$0xf]
  %v576 = vld [vmem:[%s3 + $0x3c] sm:$0xff]
  %v577 = vld [vmem:[%s3 + $0x44] sm:$0xf]
  %v578 = vld [vmem:[%s3 + $0x48] sm:$0xff]
  %v579 = vld [vmem:[%s3 + $0x50] sm:$0xf]
  %v580 = vld [vmem:[%s3 + $0x54] sm:$0xff]
  %v581 = vld [vmem:[%s3 + $0x5c] sm:$0xf]
  %v582 = vld [vmem:[%s3 + $0x60] sm:$0xff]
  %v583 = vld [vmem:[%s3 + $0x68] sm:$0xf]
  %v584 = vld [vmem:[%s3 + $0x6c] sm:$0xff]
  %v585 = vld [vmem:[%s3 + $0x74] sm:$0xf]
  %v586 = vld [vmem:[%s3 + $0x78] sm:$0xff]
  %v587 = vld [vmem:[%s3 + $0x80] sm:$0xf]
  %v588 = vld [vmem:[%s3 + $0x84] sm:$0xff]
  %v589 = vld [vmem:[%s3 + $0x8c] sm:$0xf]
  %v590 = vld [vmem:[%s3 + $0x90] sm:$0xff]
  %v591 = vld [vmem:[%s3 + $0x98] sm:$0xf]
  %v592 = vld [vmem:[%s3 + $0x9c] sm:$0xff]
  %v593 = vld [vmem:[%s3 + $0xa4] sm:$0xf]
  %v594 = vld [vmem:[%s3 + $0xa8] sm:$0xff]
  %v595 = vld [vmem:[%s3 + $0xb0] sm:$0xf]
  %v596 = vld [vmem:[%s3 + $0xb4] sm:$0xff]
  %v597 = vld [vmem:[%s3 + $0xbc] sm:$0xf]
  %v598 = vld [vmem:[%s4] sm:$0x7]
  %v599 = vunpack.c.l.bf16 %v598
  %v601 = vlaneseq
  %v602 = vshrl.u32 %v601, 7
  %v603 = vsub.s32 0, %v602
  %v604 = vrot.slane %v599, %v603
  %v605 = vlaneseq
  %v606 = vshrl.u32 %v605, 7
  %v607 = vsub.s32 2, %v606
  %v608 = vrot.slane %v599, %v607
  %v609 = vlaneseq
  %v610 = vshrl.u32 %v609, 7
  %v611 = vsub.s32 4, %v610
  %v612 = vrot.slane %v599, %v611
  %v616 = vlaneseq
  %v617 = vshrl.u32 %v616, 7
  %v618 = vsub.s32 0, %v617
  %v619 = vrot.slane %v604, %v618
  %v620 = vlaneseq
  %v621 = vshrl.u32 %v620, 7
  %v622 = vsub.s32 0, %v621
  %v623 = vrot.slane %v608, %v622
  %v624 = vlaneseq
  %v625 = vshrl.u32 %v624, 7
  %v626 = vsub.s32 0, %v625
  %v627 = vrot.slane %v612, %v626
  %v660 = vunpack.c.l.b16 %v566
  %v661 = vunpack.c.h.b16 %v566
  %v662 = vunpack.c.l.b16 %v567
  %v663 = vunpack.c.l.b16 %v568
  %v664 = vunpack.c.h.b16 %v568
  %v665 = vunpack.c.l.b16 %v569
  %v666 = vunpack.c.l.b16 %v570
  %v667 = vunpack.c.h.b16 %v570
  %v668 = vunpack.c.l.b16 %v571
  %v669 = vunpack.c.l.b16 %v572
  %v670 = vunpack.c.h.b16 %v572
  %v671 = vunpack.c.l.b16 %v573
  %v672 = vunpack.c.l.b16 %v574
  %v673 = vunpack.c.h.b16 %v574
  %v674 = vunpack.c.l.b16 %v575
  %v675 = vunpack.c.l.b16 %v576
  %v676 = vunpack.c.h.b16 %v576
  %v677 = vunpack.c.l.b16 %v577
  %v678 = vunpack.c.l.b16 %v578
  %v679 = vunpack.c.h.b16 %v578
  %v680 = vunpack.c.l.b16 %v579
  %v681 = vunpack.c.l.b16 %v580
  %v682 = vunpack.c.h.b16 %v580
  %v683 = vunpack.c.l.b16 %v581
  %v684 = vunpack.c.l.b16 %v582
  %v685 = vunpack.c.h.b16 %v582
  %v686 = vunpack.c.l.b16 %v583
  %v687 = vunpack.c.l.b16 %v584
  %v688 = vunpack.c.h.b16 %v584
  %v689 = vunpack.c.l.b16 %v585
  %v690 = vunpack.c.l.b16 %v586
  %v691 = vunpack.c.h.b16 %v586
  %v692 = vunpack.c.l.b16 %v587
  %v693 = vunpack.c.l.b16 %v588
  %v694 = vunpack.c.h.b16 %v588
  %v695 = vunpack.c.l.b16 %v589
  %v696 = vunpack.c.l.b16 %v590
  %v697 = vunpack.c.h.b16 %v590
  %v698 = vunpack.c.l.b16 %v591
  %v699 = vunpack.c.l.b16 %v592
  %v700 = vunpack.c.h.b16 %v592
  %v701 = vunpack.c.l.b16 %v593
  %v702 = vunpack.c.l.b16 %v594
  %v703 = vunpack.c.h.b16 %v594
  %v704 = vunpack.c.l.b16 %v595
  %v705 = vunpack.c.l.b16 %v596
  %v706 = vunpack.c.h.b16 %v596
  %v707 = vunpack.c.l.b16 %v597
  %v708 = vpack.c.b16 %v663, %v660
  %v709 = vpack.c.b16 %v664, %v661
  %v710 = vpack.c.b16 %v665, %v662
  %v711 = vpack.c.b16 %v669, %v666
  %v712 = vpack.c.b16 %v670, %v667
  %v713 = vpack.c.b16 %v671, %v668
  %v714 = vpack.c.b16 %v675, %v672
  %v715 = vpack.c.b16 %v676, %v673
  %v716 = vpack.c.b16 %v677, %v674
  %v717 = vpack.c.b16 %v681, %v678
  %v718 = vpack.c.b16 %v682, %v679
  %v719 = vpack.c.b16 %v683, %v680
  %v720 = vpack.c.b16 %v687, %v684
  %v721 = vpack.c.b16 %v688, %v685
  %v722 = vpack.c.b16 %v689, %v686
  %v723 = vpack.c.b16 %v693, %v690
  %v724 = vpack.c.b16 %v694, %v691
  %v725 = vpack.c.b16 %v695, %v692
  %v726 = vpack.c.b16 %v699, %v696
  %v727 = vpack.c.b16 %v700, %v697
  %v728 = vpack.c.b16 %v701, %v698
  %v729 = vpack.c.b16 %v705, %v702
  %v730 = vpack.c.b16 %v706, %v703
  %v731 = vpack.c.b16 %v707, %v704
  %756 = vmatprep.subr.bf16.mxu0 %v709
  %757 = vmatpush1.bf16.msra.mxu0 %v708
  %758 = vmatprep.subr.bf16.mxu0 %v712
  %759 = vmatpush1.bf16.msra.mxu0 %v711
  %760 = vmatprep.subr.bf16.mxu0 %v715
  %761 = vmatpush1.bf16.msra.mxu0 %v714
  %762 = vmatprep.subr.bf16.mxu0 %v718
  %763 = vmatpush1.bf16.msra.mxu0 %v717
  %764 = vmatprep.subr.bf16.mxu0 %v721
  %765 = vmatpush1.bf16.msra.mxu0 %v720
  %766 = vmatprep.subr.bf16.mxu0 %v724
  %767 = vmatpush1.bf16.msra.mxu0 %v723
  %768 = vmatprep.subr.bf16.mxu0 %v727
  %769 = vmatpush1.bf16.msra.mxu0 %v726
  %770 = vmatprep.subr.bf16.mxu0 %v730
  %771 = vmatpush1.bf16.msra.mxu0 %v729
  %772 = vmatprep.subr.bf16.mxu0 0
  %773 = vmatpush1.bf16.msra.mxu0 0
  %774 = vmatprep.subr.bf16.mxu0 0
  %775 = vmatpush1.bf16.msra.mxu0 0
  %776 = vmatprep.subr.bf16.mxu0 0
  %777 = vmatpush1.bf16.msra.mxu0 0
  %778 = vmatprep.subr.bf16.mxu0 0
  %779 = vmatpush1.bf16.msra.mxu0 0
  %780 = vmatprep.subr.bf16.mxu0 0
  %781 = vmatpush1.bf16.msra.mxu0 0
  %782 = vmatprep.subr.bf16.mxu0 0
  %783 = vmatpush1.bf16.msra.mxu0 0
  %784 = vmatprep.subr.bf16.mxu0 0
  %785 = vmatpush1.bf16.msra.mxu0 0
  %786 = vmatprep.subr.bf16.mxu0 0
  %787 = vmatpush1.bf16.msra.mxu0 0
  %788 = vmatprep.mubr.bf16.mxu0 0
  %789 = vmatmul.mubr.bf16.gmra.mrb[0].mxu0 %v550
  %v790 = vpop.f32.mrb[0].mxu0
  %v791 = vadd.f32 %v619, %v790
  %v792 = vpop.f32.mrb[0].mxu0
  %v793 = vadd.f32 %v623, %v792
  %v794 = vpop.f32.mrb[0].mxu0
  %v795 = vadd.f32 %v619, %v794
  %v796 = vpop.f32.mrb[0].mxu0
  %v797 = vadd.f32 %v623, %v796
  %798 = vmatprep.mubr.bf16.mxu0 0
  %799 = vmatmul.mubr.bf16.gmra.mrb[0].mxu0 %v551
  %v800 = vpop.f32.mrb[0].mxu0
  %v801 = vadd.f32 %v619, %v800
  %v802 = vpop.f32.mrb[0].mxu0
  %v803 = vadd.f32 %v623, %v802
  %v804 = vpop.f32.mrb[0].mxu0
  %v805 = vadd.f32 %v619, %v804
  %v806 = vpop.f32.mrb[0].mxu0
  %v807 = vadd.f32 %v623, %v806
  %808 = vmatprep.mubr.bf16.mxu0 0
  %809 = vmatmul.mubr.bf16.gmra.mrb[0].mxu0 %v552
  %v810 = vpop.f32.mrb[0].mxu0
  %v811 = vadd.f32 %v619, %v810
  %v812 = vpop.f32.mrb[0].mxu0
  %v813 = vadd.f32 %v623, %v812
  %v814 = vpop.f32.mrb[0].mxu0
  %v815 = vadd.f32 %v619, %v814
  %v816 = vpop.f32.mrb[0].mxu0
  %v817 = vadd.f32 %v623, %v816
  %818 = vmatprep.mubr.bf16.mxu0 0
  %819 = vmatmul.mubr.bf16.gmra.mrb[0].mxu0 %v553
  %v820 = vpop.f32.mrb[0].mxu0
  %v821 = vadd.f32 %v619, %v820
  %v822 = vpop.f32.mrb[0].mxu0
  %v823 = vadd.f32 %v623, %v822
  %v824 = vpop.f32.mrb[0].mxu0
  %v825 = vadd.f32 %v619, %v824
  %v826 = vpop.f32.mrb[0].mxu0
  %v827 = vadd.f32 %v623, %v826
  %828 = vmatprep.mubr.bf16.mxu0 0
  %829 = vmatmul.mubr.bf16.gmra.mrb[0].mxu0 %v554
  %v830 = vpop.f32.mrb[0].mxu0
  %v831 = vadd.f32 %v619, %v830
  %v832 = vpop.f32.mrb[0].mxu0
  %v833 = vadd.f32 %v623, %v832
  %v834 = vpop.f32.mrb[0].mxu0
  %v835 = vadd.f32 %v619, %v834
  %v836 = vpop.f32.mrb[0].mxu0
  %v837 = vadd.f32 %v623, %v836
  %838 = vmatprep.mubr.bf16.mxu0 0
  %839 = vmatmul.mubr.bf16.gmra.mrb[0].mxu0 %v555
  %v840 = vpop.f32.mrb[0].mxu0
  %v841 = vadd.f32 %v619, %v840
  %v842 = vpop.f32.mrb[0].mxu0
  %v843 = vadd.f32 %v623, %v842
  %v844 = vpop.f32.mrb[0].mxu0
  %v845 = vadd.f32 %v619, %v844
  %v846 = vpop.f32.mrb[0].mxu0
  %v847 = vadd.f32 %v623, %v846
  %848 = vmatprep.mubr.bf16.mxu0 0
  %849 = vmatmul.mubr.bf16.gmra.mrb[0].mxu0 %v556
  %v850 = vpop.f32.mrb[0].mxu0
  %v851 = vadd.f32 %v619, %v850
  %v852 = vpop.f32.mrb[0].mxu0
  %v853 = vadd.f32 %v623, %v852
  %v854 = vpop.f32.mrb[0].mxu0
  %v855 = vadd.f32 %v619, %v854
  %v856 = vpop.f32.mrb[0].mxu0
  %v857 = vadd.f32 %v623, %v856
  %858 = vmatprep.mubr.bf16.mxu0 0
  %859 = vmatmul.mubr.bf16.gmra.mrb[0].mxu0 %v557
  %v860 = vpop.f32.mrb[0].mxu0
  %v861 = vadd.f32 %v619, %v860
  %v862 = vpop.f32.mrb[0].mxu0
  %v863 = vadd.f32 %v623, %v862
  %v864 = vpop.f32.mrb[0].mxu0
  %v865 = vadd.f32 %v619, %v864
  %v866 = vpop.f32.mrb[0].mxu0
  %v867 = vadd.f32 %v623, %v866
  %868 = vmatprep.mubr.bf16.mxu0 0
  %869 = vmatmul.mubr.bf16.gmra.mrb[0].mxu0 %v558
  %v870 = vpop.f32.mrb[0].mxu0
  %v871 = vadd.f32 %v619, %v870
  %v872 = vpop.f32.mrb[0].mxu0
  %v873 = vadd.f32 %v623, %v872
  %v874 = vpop.f32.mrb[0].mxu0
  %v875 = vadd.f32 %v619, %v874
  %v876 = vpop.f32.mrb[0].mxu0
  %v877 = vadd.f32 %v623, %v876
  %878 = vmatprep.mubr.bf16.mxu0 0
  %879 = vmatmul.mubr.bf16.gmra.mrb[0].mxu0 %v559
  %v880 = vpop.f32.mrb[0].mxu0
  %v881 = vadd.f32 %v619, %v880
  %v882 = vpop.f32.mrb[0].mxu0
  %v883 = vadd.f32 %v623, %v882
  %v884 = vpop.f32.mrb[0].mxu0
  %v885 = vadd.f32 %v619, %v884
  %v886 = vpop.f32.mrb[0].mxu0
  %v887 = vadd.f32 %v623, %v886
  %888 = vmatprep.mubr.bf16.mxu0 0
  %889 = vmatmul.mubr.bf16.gmra.mrb[0].mxu0 %v560
  %v890 = vpop.f32.mrb[0].mxu0
  %v891 = vadd.f32 %v619, %v890
  %v892 = vpop.f32.mrb[0].mxu0
  %v893 = vadd.f32 %v623, %v892
  %v894 = vpop.f32.mrb[0].mxu0
  %v895 = vadd.f32 %v619, %v894
  %v896 = vpop.f32.mrb[0].mxu0
  %v897 = vadd.f32 %v623, %v896
  %898 = vmatprep.mubr.bf16.mxu0 0
  %899 = vmatmul.mubr.bf16.gmra.mrb[0].mxu0 %v561
  %v900 = vpop.f32.mrb[0].mxu0
  %v901 = vadd.f32 %v619, %v900
  %v902 = vpop.f32.mrb[0].mxu0
  %v903 = vadd.f32 %v623, %v902
  %v904 = vpop.f32.mrb[0].mxu0
  %v905 = vadd.f32 %v619, %v904
  %v906 = vpop.f32.mrb[0].mxu0
  %v907 = vadd.f32 %v623, %v906
  %908 = vmatprep.mubr.bf16.mxu0 0
  %909 = vmatmul.mubr.bf16.gmra.mrb[0].mxu0 %v562
  %v910 = vpop.f32.mrb[0].mxu0
  %v911 = vadd.f32 %v619, %v910
  %v912 = vpop.f32.mrb[0].mxu0
  %v913 = vadd.f32 %v623, %v912
  %v914 = vpop.f32.mrb[0].mxu0
  %v915 = vadd.f32 %v619, %v914
  %v916 = vpop.f32.mrb[0].mxu0
  %v917 = vadd.f32 %v623, %v916
  %918 = vmatprep.mubr.bf16.mxu0 0
  %919 = vmatmul.mubr.bf16.gmra.mrb[0].mxu0 %v563
  %v920 = vpop.f32.mrb[0].mxu0
  %v921 = vadd.f32 %v619, %v920
  %v922 = vpop.f32.mrb[0].mxu0
  %v923 = vadd.f32 %v623, %v922
  %v924 = vpop.f32.mrb[0].mxu0
  %v925 = vadd.f32 %v619, %v924
  %v926 = vpop.f32.mrb[0].mxu0
  %v927 = vadd.f32 %v623, %v926
  %928 = vmatprep.mubr.bf16.mxu0 0
  %929 = vmatmul.mubr.bf16.gmra.mrb[0].mxu0 %v564
  %v930 = vpop.f32.mrb[0].mxu0
  %v931 = vadd.f32 %v619, %v930
  %v932 = vpop.f32.mrb[0].mxu0
  %v933 = vadd.f32 %v623, %v932
  %v934 = vpop.f32.mrb[0].mxu0
  %v935 = vadd.f32 %v619, %v934
  %v936 = vpop.f32.mrb[0].mxu0
  %v937 = vadd.f32 %v623, %v936
  %938 = vmatprep.mubr.bf16.mxu0 0
  %939 = vmatmul.mubr.bf16.gmra.mrb[0].mxu0 %v565
  %v940 = vpop.f32.mrb[0].mxu0
  %v941 = vadd.f32 %v619, %v940
  %v942 = vpop.f32.mrb[0].mxu0
  %v943 = vadd.f32 %v623, %v942
  %v944 = vpop.f32.mrb[0].mxu0
  %v945 = vadd.f32 %v619, %v944
  %v946 = vpop.f32.mrb[0].mxu0
  %v947 = vadd.f32 %v623, %v946
  %948 = vdwg.mxu0
  %949 = vmatprep.subr.bf16.mxu0 0
  %950 = vmatpush1.bf16.msra.mxu0 %v710
  %951 = vmatprep.subr.bf16.mxu0 0
  %952 = vmatpush1.bf16.msra.mxu0 %v713
  %953 = vmatprep.subr.bf16.mxu0 0
  %954 = vmatpush1.bf16.msra.mxu0 %v716
  %955 = vmatprep.subr.bf16.mxu0 0
  %956 = vmatpush1.bf16.msra.mxu0 %v719
  %957 = vmatprep.subr.bf16.mxu0 0
  %958 = vmatpush1.bf16.msra.mxu0 %v722
  %959 = vmatprep.subr.bf16.mxu0 0
  %960 = vmatpush1.bf16.msra.mxu0 %v725
  %961 = vmatprep.subr.bf16.mxu0 0
  %962 = vmatpush1.bf16.msra.mxu0 %v728
  %963 = vmatprep.subr.bf16.mxu0 0
  %964 = vmatpush1.bf16.msra.mxu0 %v731
  %965 = vmatprep.subr.bf16.mxu0 0
  %966 = vmatpush1.bf16.msra.mxu0 0
  %967 = vmatprep.subr.bf16.mxu0 0
  %968 = vmatpush1.bf16.msra.mxu0 0
  %969 = vmatprep.subr.bf16.mxu0 0
  %970 = vmatpush1.bf16.msra.mxu0 0
  %971 = vmatprep.subr.bf16.mxu0 0
  %972 = vmatpush1.bf16.msra.mxu0 0
  %973 = vmatprep.subr.bf16.mxu0 0
  %974 = vmatpush1.bf16.msra.mxu0 0
  %975 = vmatprep.subr.bf16.mxu0 0
  %976 = vmatpush1.bf16.msra.mxu0 0
  %977 = vmatprep.subr.bf16.mxu0 0
  %978 = vmatpush1.bf16.msra.mxu0 0
  %979 = vmatprep.subr.bf16.mxu0 0
  %980 = vmatpush1.bf16.msra.mxu0 0
  %981 = vmatprep.mubr.bf16.mxu0 0
  %982 = vmatmul.mubr.bf16.gmra.mrb[0].mxu0 %v550
  %v983 = vpop.f32.mrb[0].mxu0
  %v984 = vadd.f32 %v627, %v983
  %v985 = vpop.f32.mrb[0].mxu0
  %v986 = vpop.f32.mrb[0].mxu0
  %v987 = vadd.f32 %v627, %v986
  %v988 = vpop.f32.mrb[0].mxu0
  %989 = vmatprep.mubr.bf16.mxu0 0
  %990 = vmatmul.mubr.bf16.gmra.mrb[0].mxu0 %v551
  %v991 = vpop.f32.mrb[0].mxu0
  %v992 = vadd.f32 %v627, %v991
  %v993 = vpop.f32.mrb[0].mxu0
  %v994 = vpop.f32.mrb[0].mxu0
  %v995 = vadd.f32 %v627, %v994
  %v996 = vpop.f32.mrb[0].mxu0
  %997 = vmatprep.mubr.bf16.mxu0 0
  %998 = vmatmul.mubr.bf16.gmra.mrb[0].mxu0 %v552
  %v999 = vpop.f32.mrb[0].mxu0
  %v1000 = vadd.f32 %v627, %v999
  %v1001 = vpop.f32.mrb[0].mxu0
  %v1002 = vpop.f32.mrb[0].mxu0
  %v1003 = vadd.f32 %v627, %v1002
  %v1004 = vpop.f32.mrb[0].mxu0
  %1005 = vmatprep.mubr.bf16.mxu0 0
  %1006 = vmatmul.mubr.bf16.gmra.mrb[0].mxu0 %v553
  %v1007 = vpop.f32.mrb[0].mxu0
  %v1008 = vadd.f32 %v627, %v1007
  %v1009 = vpop.f32.mrb[0].mxu0
  %v1010 = vpop.f32.mrb[0].mxu0
  %v1011 = vadd.f32 %v627, %v1010
  %v1012 = vpop.f32.mrb[0].mxu0
  %1013 = vmatprep.mubr.bf16.mxu0 0
  %1014 = vmatmul.mubr.bf16.gmra.mrb[0].mxu0 %v554
  %v1015 = vpop.f32.mrb[0].mxu0
  %v1016 = vadd.f32 %v627, %v1015
  %v1017 = vpop.f32.mrb[0].mxu0
  %v1018 = vpop.f32.mrb[0].mxu0
  %v1019 = vadd.f32 %v627, %v1018
  %v1020 = vpop.f32.mrb[0].mxu0
  %1021 = vmatprep.mubr.bf16.mxu0 0
  %1022 = vmatmul.mubr.bf16.gmra.mrb[0].mxu0 %v555
  %v1023 = vpop.f32.mrb[0].mxu0
  %v1024 = vadd.f32 %v627, %v1023
  %v1025 = vpop.f32.mrb[0].mxu0
  %v1026 = vpop.f32.mrb[0].mxu0
  %v1027 = vadd.f32 %v627, %v1026
  %v1028 = vpop.f32.mrb[0].mxu0
  %1029 = vmatprep.mubr.bf16.mxu0 0
  %1030 = vmatmul.mubr.bf16.gmra.mrb[0].mxu0 %v556
  %v1031 = vpop.f32.mrb[0].mxu0
  %v1032 = vadd.f32 %v627, %v1031
  %v1033 = vpop.f32.mrb[0].mxu0
  %v1034 = vpop.f32.mrb[0].mxu0
  %v1035 = vadd.f32 %v627, %v1034
  %v1036 = vpop.f32.mrb[0].mxu0
  %1037 = vmatprep.mubr.bf16.mxu0 0
  %1038 = vmatmul.mubr.bf16.gmra.mrb[0].mxu0 %v557
  %v1039 = vpop.f32.mrb[0].mxu0
  %v1040 = vadd.f32 %v627, %v1039
  %v1041 = vpop.f32.mrb[0].mxu0
  %v1042 = vpop.f32.mrb[0].mxu0
  %v1043 = vadd.f32 %v627, %v1042
  %v1044 = vpop.f32.mrb[0].mxu0
  %1045 = vmatprep.mubr.bf16.mxu0 0
  %1046 = vmatmul.mubr.bf16.gmra.mrb[0].mxu0 %v558
  %v1047 = vpop.f32.mrb[0].mxu0
  %v1048 = vadd.f32 %v627, %v1047
  %v1049 = vpop.f32.mrb[0].mxu0
  %v1050 = vpop.f32.mrb[0].mxu0
  %v1051 = vadd.f32 %v627, %v1050
  %v1052 = vpop.f32.mrb[0].mxu0
  %1053 = vmatprep.mubr.bf16.mxu0 0
  %1054 = vmatmul.mubr.bf16.gmra.mrb[0].mxu0 %v559
  %v1055 = vpop.f32.mrb[0].mxu0
  %v1056 = vadd.f32 %v627, %v1055
  %v1057 = vpop.f32.mrb[0].mxu0
  %v1058 = vpop.f32.mrb[0].mxu0
  %v1059 = vadd.f32 %v627, %v1058
  %v1060 = vpop.f32.mrb[0].mxu0
  %1061 = vmatprep.mubr.bf16.mxu0 0
  %1062 = vmatmul.mubr.bf16.gmra.mrb[0].mxu0 %v560
  %v1063 = vpop.f32.mrb[0].mxu0
  %v1064 = vadd.f32 %v627, %v1063
  %v1065 = vpop.f32.mrb[0].mxu0
  %v1066 = vpop.f32.mrb[0].mxu0
  %v1067 = vadd.f32 %v627, %v1066
  %v1068 = vpop.f32.mrb[0].mxu0
  %1069 = vmatprep.mubr.bf16.mxu0 0
  %1070 = vmatmul.mubr.bf16.gmra.mrb[0].mxu0 %v561
  %v1071 = vpop.f32.mrb[0].mxu0
  %v1072 = vadd.f32 %v627, %v1071
  %v1073 = vpop.f32.mrb[0].mxu0
  %v1074 = vpop.f32.mrb[0].mxu0
  %v1075 = vadd.f32 %v627, %v1074
  %v1076 = vpop.f32.mrb[0].mxu0
  %1077 = vmatprep.mubr.bf16.mxu0 0
  %1078 = vmatmul.mubr.bf16.gmra.mrb[0].mxu0 %v562
  %v1079 = vpop.f32.mrb[0].mxu0
  %v1080 = vadd.f32 %v627, %v1079
  %v1081 = vpop.f32.mrb[0].mxu0
  %v1082 = vpop.f32.mrb[0].mxu0
  %v1083 = vadd.f32 %v627, %v1082
  %v1084 = vpop.f32.mrb[0].mxu0
  %1085 = vmatprep.mubr.bf16.mxu0 0
  %1086 = vmatmul.mubr.bf16.gmra.mrb[0].mxu0 %v563
  %v1087 = vpop.f32.mrb[0].mxu0
  %v1088 = vadd.f32 %v627, %v1087
  %v1089 = vpop.f32.mrb[0].mxu0
  %v1090 = vpop.f32.mrb[0].mxu0
  %v1091 = vadd.f32 %v627, %v1090
  %v1092 = vpop.f32.mrb[0].mxu0
  %1093 = vmatprep.mubr.bf16.mxu0 0
  %1094 = vmatmul.mubr.bf16.gmra.mrb[0].mxu0 %v564
  %v1095 = vpop.f32.mrb[0].mxu0
  %v1096 = vadd.f32 %v627, %v1095
  %v1097 = vpop.f32.mrb[0].mxu0
  %v1098 = vpop.f32.mrb[0].mxu0
  %v1099 = vadd.f32 %v627, %v1098
  %v1100 = vpop.f32.mrb[0].mxu0
  %1101 = vmatprep.mubr.bf16.mxu0 0
  %1102 = vmatmul.mubr.bf16.gmra.mrb[0].mxu0 %v565
  %v1103 = vpop.f32.mrb[0].mxu0
  %v1104 = vadd.f32 %v627, %v1103
  %v1105 = vpop.f32.mrb[0].mxu0
  %v1106 = vpop.f32.mrb[0].mxu0
  %v1107 = vadd.f32 %v627, %v1106
  %v1108 = vpop.f32.mrb[0].mxu0
  %1109 = vdwg.mxu0
  %v1110 = vpack.c.bf16 %v795, %v791
  %v1111 = vpack.c.bf16 %v797, %v793
  %v1112 = vpack.c.bf16 %v987, %v984
  %v1113 = vpack.c.bf16 %v805, %v801
  %v1114 = vpack.c.bf16 %v807, %v803
  %v1115 = vpack.c.bf16 %v995, %v992
  %v1116 = vpack.c.bf16 %v815, %v811
  %v1117 = vpack.c.bf16 %v817, %v813
  %v1118 = vpack.c.bf16 %v1003, %v1000
  %v1119 = vpack.c.bf16 %v825, %v821
  %v1120 = vpack.c.bf16 %v827, %v823
  %v1121 = vpack.c.bf16 %v1011, %v1008
  %v1122 = vpack.c.bf16 %v835, %v831
  %v1123 = vpack.c.bf16 %v837, %v833
  %v1124 = vpack.c.bf16 %v1019, %v1016
  %v1125 = vpack.c.bf16 %v845, %v841
  %v1126 = vpack.c.bf16 %v847, %v843
  %v1127 = vpack.c.bf16 %v1027, %v1024
  %v1128 = vpack.c.bf16 %v855, %v851
  %v1129 = vpack.c.bf16 %v857, %v853
  %v1130 = vpack.c.bf16 %v1035, %v1032
  %v1131 = vpack.c.bf16 %v865, %v861
  %v1132 = vpack.c.bf16 %v867, %v863
  %v1133 = vpack.c.bf16 %v1043, %v1040
  %v1134 = vpack.c.bf16 %v875, %v871
  %v1135 = vpack.c.bf16 %v877, %v873
  %v1136 = vpack.c.bf16 %v1051, %v1048
  %v1137 = vpack.c.bf16 %v885, %v881
  %v1138 = vpack.c.bf16 %v887, %v883
  %v1139 = vpack.c.bf16 %v1059, %v1056
  %v1140 = vpack.c.bf16 %v895, %v891
  %v1141 = vpack.c.bf16 %v897, %v893
  %v1142 = vpack.c.bf16 %v1067, %v1064
  %v1143 = vpack.c.bf16 %v905, %v901
  %v1144 = vpack.c.bf16 %v907, %v903
  %v1145 = vpack.c.bf16 %v1075, %v1072
  %v1146 = vpack.c.bf16 %v915, %v911
  %v1147 = vpack.c.bf16 %v917, %v913
  %v1148 = vpack.c.bf16 %v1083, %v1080
  %v1149 = vpack.c.bf16 %v925, %v921
  %v1150 = vpack.c.bf16 %v927, %v923
  %v1151 = vpack.c.bf16 %v1091, %v1088
  %v1152 = vpack.c.bf16 %v935, %v931
  %v1153 = vpack.c.bf16 %v937, %v933
  %v1154 = vpack.c.bf16 %v1099, %v1096
  %v1155 = vpack.c.bf16 %v945, %v941
  %v1156 = vpack.c.bf16 %v947, %v943
  %v1157 = vpack.c.bf16 %v1107, %v1104
  %v1206 = vunpack.c.l.b16 %v1110
  %v1207 = vunpack.c.l.b16 %v1111
  %v1208 = vunpack.c.l.b16 %v1112
  %v1209 = vunpack.c.h.b16 %v1110
  %v1210 = vunpack.c.h.b16 %v1111
  %v1211 = vunpack.c.h.b16 %v1112
  %v1212 = vunpack.c.l.b16 %v1113
  %v1213 = vunpack.c.l.b16 %v1114
  %v1214 = vunpack.c.l.b16 %v1115
  %v1215 = vunpack.c.h.b16 %v1113
  %v1216 = vunpack.c.h.b16 %v1114
  %v1217 = vunpack.c.h.b16 %v1115
  %v1218 = vunpack.c.l.b16 %v1116
  %v1219 = vunpack.c.l.b16 %v1117
  %v1220 = vunpack.c.l.b16 %v1118
  %v1221 = vunpack.c.h.b16 %v1116
  %v1222 = vunpack.c.h.b16 %v1117
  %v1223 = vunpack.c.h.b16 %v1118
  %v1224 = vunpack.c.l.b16 %v1119
  %v1225 = vunpack.c.l.b16 %v1120
  %v1226 = vunpack.c.l.b16 %v1121
  %v1227 = vunpack.c.h.b16 %v1119
  %v1228 = vunpack.c.h.b16 %v1120
  %v1229 = vunpack.c.h.b16 %v1121
  %v1230 = vunpack.c.l.b16 %v1122
  %v1231 = vunpack.c.l.b16 %v1123
  %v1232 = vunpack.c.l.b16 %v1124
  %v1233 = vunpack.c.h.b16 %v1122
  %v1234 = vunpack.c.h.b16 %v1123
  %v1235 = vunpack.c.h.b16 %v1124
  %v1236 = vunpack.c.l.b16 %v1125
  %v1237 = vunpack.c.l.b16 %v1126
  %v1238 = vunpack.c.l.b16 %v1127
  %v1239 = vunpack.c.h.b16 %v1125
  %v1240 = vunpack.c.h.b16 %v1126
  %v1241 = vunpack.c.h.b16 %v1127
  %v1242 = vunpack.c.l.b16 %v1128
  %v1243 = vunpack.c.l.b16 %v1129
  %v1244 = vunpack.c.l.b16 %v1130
  %v1245 = vunpack.c.h.b16 %v1128
  %v1246 = vunpack.c.h.b16 %v1129
  %v1247 = vunpack.c.h.b16 %v1130
  %v1248 = vunpack.c.l.b16 %v1131
  %v1249 = vunpack.c.l.b16 %v1132
  %v1250 = vunpack.c.l.b16 %v1133
  %v1251 = vunpack.c.h.b16 %v1131
  %v1252 = vunpack.c.h.b16 %v1132
  %v1253 = vunpack.c.h.b16 %v1133
  %v1254 = vunpack.c.l.b16 %v1134
  %v1255 = vunpack.c.l.b16 %v1135
  %v1256 = vunpack.c.l.b16 %v1136
  %v1257 = vunpack.c.h.b16 %v1134
  %v1258 = vunpack.c.h.b16 %v1135
  %v1259 = vunpack.c.h.b16 %v1136
  %v1260 = vunpack.c.l.b16 %v1137
  %v1261 = vunpack.c.l.b16 %v1138
  %v1262 = vunpack.c.l.b16 %v1139
  %v1263 = vunpack.c.h.b16 %v1137
  %v1264 = vunpack.c.h.b16 %v1138
  %v1265 = vunpack.c.h.b16 %v1139
  %v1266 = vunpack.c.l.b16 %v1140
  %v1267 = vunpack.c.l.b16 %v1141
  %v1268 = vunpack.c.l.b16 %v1142
  %v1269 = vunpack.c.h.b16 %v1140
  %v1270 = vunpack.c.h.b16 %v1141
  %v1271 = vunpack.c.h.b16 %v1142
  %v1272 = vunpack.c.l.b16 %v1143
  %v1273 = vunpack.c.l.b16 %v1144
  %v1274 = vunpack.c.l.b16 %v1145
  %v1275 = vunpack.c.h.b16 %v1143
  %v1276 = vunpack.c.h.b16 %v1144
  %v1277 = vunpack.c.h.b16 %v1145
  %v1278 = vunpack.c.l.b16 %v1146
  %v1279 = vunpack.c.l.b16 %v1147
  %v1280 = vunpack.c.l.b16 %v1148
  %v1281 = vunpack.c.h.b16 %v1146
  %v1282 = vunpack.c.h.b16 %v1147
  %v1283 = vunpack.c.h.b16 %v1148
  %v1284 = vunpack.c.l.b16 %v1149
  %v1285 = vunpack.c.l.b16 %v1150
  %v1286 = vunpack.c.l.b16 %v1151
  %v1287 = vunpack.c.h.b16 %v1149
  %v1288 = vunpack.c.h.b16 %v1150
  %v1289 = vunpack.c.h.b16 %v1151
  %v1290 = vunpack.c.l.b16 %v1152
  %v1291 = vunpack.c.l.b16 %v1153
  %v1292 = vunpack.c.l.b16 %v1154
  %v1293 = vunpack.c.h.b16 %v1152
  %v1294 = vunpack.c.h.b16 %v1153
  %v1295 = vunpack.c.h.b16 %v1154
  %v1296 = vunpack.c.l.b16 %v1155
  %v1297 = vunpack.c.l.b16 %v1156
  %v1298 = vunpack.c.l.b16 %v1157
  %v1299 = vunpack.c.h.b16 %v1155
  %v1300 = vunpack.c.h.b16 %v1156
  %v1301 = vunpack.c.h.b16 %v1157
  %v1302 = vpack.c.b16 %v1207, %v1206
  %v1303 = vpack.c.b16 %v1208, %v1208
  %v1304 = vpack.c.b16 %v1210, %v1209
  %v1305 = vpack.c.b16 %v1211, %v1211
  %v1306 = vpack.c.b16 %v1213, %v1212
  %v1307 = vpack.c.b16 %v1214, %v1214
  %v1308 = vpack.c.b16 %v1216, %v1215
  %v1309 = vpack.c.b16 %v1217, %v1217
  %v1310 = vpack.c.b16 %v1219, %v1218
  %v1311 = vpack.c.b16 %v1220, %v1220
  %v1312 = vpack.c.b16 %v1222, %v1221
  %v1313 = vpack.c.b16 %v1223, %v1223
  %v1314 = vpack.c.b16 %v1225, %v1224
  %v1315 = vpack.c.b16 %v1226, %v1226
  %v1316 = vpack.c.b16 %v1228, %v1227
  %v1317 = vpack.c.b16 %v1229, %v1229
  %v1318 = vpack.c.b16 %v1231, %v1230
  %v1319 = vpack.c.b16 %v1232, %v1232
  %v1320 = vpack.c.b16 %v1234, %v1233
  %v1321 = vpack.c.b16 %v1235, %v1235
  %v1322 = vpack.c.b16 %v1237, %v1236
  %v1323 = vpack.c.b16 %v1238, %v1238
  %v1324 = vpack.c.b16 %v1240, %v1239
  %v1325 = vpack.c.b16 %v1241, %v1241
  %v1326 = vpack.c.b16 %v1243, %v1242
  %v1327 = vpack.c.b16 %v1244, %v1244
  %v1328 = vpack.c.b16 %v1246, %v1245
  %v1329 = vpack.c.b16 %v1247, %v1247
  %v1330 = vpack.c.b16 %v1249, %v1248
  %v1331 = vpack.c.b16 %v1250, %v1250
  %v1332 = vpack.c.b16 %v1252, %v1251
  %v1333 = vpack.c.b16 %v1253, %v1253
  %v1334 = vpack.c.b16 %v1255, %v1254
  %v1335 = vpack.c.b16 %v1256, %v1256
  %v1336 = vpack.c.b16 %v1258, %v1257
  %v1337 = vpack.c.b16 %v1259, %v1259
  %v1338 = vpack.c.b16 %v1261, %v1260
  %v1339 = vpack.c.b16 %v1262, %v1262
  %v1340 = vpack.c.b16 %v1264, %v1263
  %v1341 = vpack.c.b16 %v1265, %v1265
  %v1342 = vpack.c.b16 %v1267, %v1266
  %v1343 = vpack.c.b16 %v1268, %v1268
  %v1344 = vpack.c.b16 %v1270, %v1269
  %v1345 = vpack.c.b16 %v1271, %v1271
  %v1346 = vpack.c.b16 %v1273, %v1272
  %v1347 = vpack.c.b16 %v1274, %v1274
  %v1348 = vpack.c.b16 %v1276, %v1275
  %v1349 = vpack.c.b16 %v1277, %v1277
  %v1350 = vpack.c.b16 %v1279, %v1278
  %v1351 = vpack.c.b16 %v1280, %v1280
  %v1352 = vpack.c.b16 %v1282, %v1281
  %v1353 = vpack.c.b16 %v1283, %v1283
  %v1354 = vpack.c.b16 %v1285, %v1284
  %v1355 = vpack.c.b16 %v1286, %v1286
  %v1356 = vpack.c.b16 %v1288, %v1287
  %v1357 = vpack.c.b16 %v1289, %v1289
  %v1358 = vpack.c.b16 %v1291, %v1290
  %v1359 = vpack.c.b16 %v1292, %v1292
  %v1360 = vpack.c.b16 %v1294, %v1293
  %v1361 = vpack.c.b16 %v1295, %v1295
  %v1362 = vpack.c.b16 %v1297, %v1296
  %v1363 = vpack.c.b16 %v1298, %v1298
  %v1364 = vpack.c.b16 %v1300, %v1299
  %v1365 = vpack.c.b16 %v1301, %v1301
  %1430 = vst [vmem:[%s5] sm:$0xff] %v1302
  %1431 = vst [vmem:[%s5 + $0x8] sm:$0xf] %v1303
  %1432 = vst [vmem:[%s5 + $0xc] sm:$0xff] %v1304
  %1433 = vst [vmem:[%s5 + $0x14] sm:$0xf] %v1305
  %1434 = vst [vmem:[%s5 + $0x18] sm:$0xff] %v1306
  %1435 = vst [vmem:[%s5 + $0x20] sm:$0xf] %v1307
  %1436 = vst [vmem:[%s5 + $0x24] sm:$0xff] %v1308
  %1437 = vst [vmem:[%s5 + $0x2c] sm:$0xf] %v1309
  %1438 = vst [vmem:[%s5 + $0x30] sm:$0xff] %v1310
  %1439 = vst [vmem:[%s5 + $0x38] sm:$0xf] %v1311
  %1440 = vst [vmem:[%s5 + $0x3c] sm:$0xff] %v1312
  %1441 = vst [vmem:[%s5 + $0x44] sm:$0xf] %v1313
  %1442 = vst [vmem:[%s5 + $0x48] sm:$0xff] %v1314
  %1443 = vst [vmem:[%s5 + $0x50] sm:$0xf] %v1315
  %1444 = vst [vmem:[%s5 + $0x54] sm:$0xff] %v1316
  %1445 = vst [vmem:[%s5 + $0x5c] sm:$0xf] %v1317
  %1446 = vst [vmem:[%s5 + $0x60] sm:$0xff] %v1318
  %1447 = vst [vmem:[%s5 + $0x68] sm:$0xf] %v1319
  %1448 = vst [vmem:[%s5 + $0x6c] sm:$0xff] %v1320
  %1449 = vst [vmem:[%s5 + $0x74] sm:$0xf] %v1321
  %1450 = vst [vmem:[%s5 + $0x78] sm:$0xff] %v1322
  %1451 = vst [vmem:[%s5 + $0x80] sm:$0xf] %v1323
  %1452 = vst [vmem:[%s5 + $0x84] sm:$0xff] %v1324
  %1453 = vst [vmem:[%s5 + $0x8c] sm:$0xf] %v1325
  %1454 = vst [vmem:[%s5 + $0x90] sm:$0xff] %v1326
  %1455 = vst [vmem:[%s5 + $0x98] sm:$0xf] %v1327
  %1456 = vst [vmem:[%s5 + $0x9c] sm:$0xff] %v1328
  %1457 = vst [vmem:[%s5 + $0xa4] sm:$0xf] %v1329
  %1458 = vst [vmem:[%s5 + $0xa8] sm:$0xff] %v1330
  %1459 = vst [vmem:[%s5 + $0xb0] sm:$0xf] %v1331
  %1460 = vst [vmem:[%s5 + $0xb4] sm:$0xff] %v1332
  %1461 = vst [vmem:[%s5 + $0xbc] sm:$0xf] %v1333
  %1462 = vst [vmem:[%s5 + $0xc0] sm:$0xff] %v1334
  %1463 = vst [vmem:[%s5 + $0xc8] sm:$0xf] %v1335
  %1464 = vst [vmem:[%s5 + $0xcc] sm:$0xff] %v1336
  %1465 = vst [vmem:[%s5 + $0xd4] sm:$0xf] %v1337
  %1466 = vst [vmem:[%s5 + $0xd8] sm:$0xff] %v1338
  %1467 = vst [vmem:[%s5 + $0xe0] sm:$0xf] %v1339
  %1468 = vst [vmem:[%s5 + $0xe4] sm:$0xff] %v1340
  %1469 = vst [vmem:[%s5 + $0xec] sm:$0xf] %v1341
  %1470 = vst [vmem:[%s5 + $0xf0] sm:$0xff] %v1342
  %1471 = vst [vmem:[%s5 + $0xf8] sm:$0xf] %v1343
  %1472 = vst [vmem:[%s5 + $0xfc] sm:$0xff] %v1344
  %1473 = vst [vmem:[%s5 + $0x104] sm:$0xf] %v1345
  %1474 = vst [vmem:[%s5 + $0x108] sm:$0xff] %v1346
  %1475 = vst [vmem:[%s5 + $0x110] sm:$0xf] %v1347
  %1476 = vst [vmem:[%s5 + $0x114] sm:$0xff] %v1348
  %1477 = vst [vmem:[%s5 + $0x11c] sm:$0xf] %v1349
  %1478 = vst [vmem:[%s5 + $0x120] sm:$0xff] %v1350
  %1479 = vst [vmem:[%s5 + $0x128] sm:$0xf] %v1351
  %1480 = vst [vmem:[%s5 + $0x12c] sm:$0xff] %v1352
  %1481 = vst [vmem:[%s5 + $0x134] sm:$0xf] %v1353
  %1482 = vst [vmem:[%s5 + $0x138] sm:$0xff] %v1354
  %1483 = vst [vmem:[%s5 + $0x140] sm:$0xf] %v1355
  %1484 = vst [vmem:[%s5 + $0x144] sm:$0xff] %v1356
  %1485 = vst [vmem:[%s5 + $0x14c] sm:$0xf] %v1357
  %1486 = vst [vmem:[%s5 + $0x150] sm:$0xff] %v1358
  %1487 = vst [vmem:[%s5 + $0x158] sm:$0xf] %v1359
  %1488 = vst [vmem:[%s5 + $0x15c] sm:$0xff] %v1360
  %1489 = vst [vmem:[%s5 + $0x164] sm:$0xf] %v1361
  %1490 = vst [vmem:[%s5 + $0x168] sm:$0xff] %v1362
  %1491 = vst [vmem:[%s5 + $0x170] sm:$0xf] %v1363
  %1492 = vst [vmem:[%s5 + $0x174] sm:$0xff] %v1364
  %1493 = vst [vmem:[%s5 + $0x17c] sm:$0xf] %v1365
  // Predicated region
  $region26: #{whisper_audio_tower_forward.9} parent=0 // pred_check
    _
  $region27: #{whisper_audio_tower_forward.9} parent=0 // pred_check_branch
    %1495 = sbr.rel (0) target = $region29
  $region28: #{whisper_audio_tower_forward.9} parent=0 // pred_region
    _
  $region29: #{whisper_audio_tower_forward.9} parent=0 // pred_fallthru
    _
  // Predicated region
  $region30: #{whisper_audio_tower_forward.9} parent=0 // pred_check
    _
  $region31: #{whisper_audio_tower_forward.9} parent=0 // pred_check_branch
    %1497 = sbr.rel (0) target = $region33
  $region32: #{whisper_audio_tower_forward.9} parent=0 // pred_region
    _
  $region33: #{whisper_audio_tower_forward.9} parent=0 // pred_fallthru
    _

// kernel: whisper_audio_tower_forward.10
$region0: #{whisper_audio_tower_forward.10}
  #allocation0 [shape = 'u32[]', space=smem, size = 0x4, offset = 0x4, fixed_abs, tag = 'smem constant byte address 0x4 - core index']
  #allocation1 [shape = 'u32[144,128]{1,0:T(1,128)}', space=vmem, size = 0x12000, scoped, tag = 'internal scratch']
  %s0 = inlined_call_operand.vmem [shape: bf16[2,128,384], index: 0, kind: input, shape index: {}, may-alias: {0,1,2}]
  %s1 = inlined_call_operand.vmem [shape: bf16[2,128,384], index: 1, kind: input, shape index: {}, may-alias: {0,1,2}]
  %s2 = inlined_call_operand.vmem [shape: bf16[2,128,384], index: 2, kind: input, shape index: {}, may-alias: {0,1,2}]
  %s3 = inlined_call_operand.vmem [shape: bf16[2,128,128], index: 3, kind: output, shape index: {}]
  %s4 = sld [smem:[#allocation0]]
  $region168: #{whisper_audio_tower_forward.10} parent=0
    _
  %s6 = ssub.s32 1, %s4
  %s7 = scalar_select 0, %s6, %s4
  $region1: #{whisper_audio_tower_forward.10} parent=0
    #allocation2 [shape = 'u8[65536]{0}', space=vmem, size = 0x10000, scoped, tag = 'input window, operand 0']
    #allocation3 [shape = 'u8[65536]{0}', space=vmem, size = 0x10000, scoped, tag = 'input window, operand 1']
    #allocation4 [shape = 'u8[65536]{0}', space=vmem, size = 0x10000, scoped, tag = 'input window, operand 2']
    loop: start=0, step=1, limit=4
    $region2: #{whisper_audio_tower_forward.10} parent=1 // loop_pre_header
      _
    $region3: #{whisper_audio_tower_forward.10} parent=1 // loop_header
      %s9 = sphi 0, %s13
      %p10 = scmp.ge.s32.totalorder %s9, 4
      %s16 = sphi 0, %s35
      %s17 = sphi 0, %s31
      %s18 = sphi 0, %s27
      %s19 = sphi 0, %s16
      %s20 = sphi 0, %s17
      %s21 = sphi 0, %s18
      %s22 = sphi 0, %s19
      %s23 = sphi 0, %s20
      %s24 = sphi 0, %s21
      %s42 = sphi 0, %s44
      %s45 = sphi 0, %s42
      %s46 = sphi 0, %s45
      %s62 = sphi 0, %s46
      %s72 = sphi 0, %s74
      %s75 = sphi 0, %s72
      %s76 = sphi 0, %s75
      %s92 = sphi 0, %s76
      %s102 = sphi 0, %s104
      %s105 = sphi 0, %s102
      %s106 = sphi 0, %s105
      %s122 = sphi 0, %s106
      %s132 = sphi 0, %s134
      %s135 = sphi 0, %s132
      %s136 = sphi 0, %s135
      %s152 = sphi 0, %s136
    $region4: #{whisper_audio_tower_forward.10} parent=1 // loop_header_branch
      %12 = sbr.rel (%p10) target = $region8
    $region5: #{whisper_audio_tower_forward.10} parent=1 // loop_body
      %s14 = ssub.s32 %s9, 1
      %s15 = ssub.s32 %s9, 2
      %s25 = sadd.s32 1, %s18
      %p26 = scmp.ge.s32.totalorder %s25, 1
      %s27 = scalar_select %p26, 0, %s25
      %s28 = sadd.s32 1, %s17
      %s29 = scalar_select %p26, %s28, %s17
      %p30 = scmp.ge.s32.totalorder %s29, 1
      %s31 = scalar_select %p30, 0, %s29
      %s32 = sadd.s32 1, %s16
      %s33 = scalar_select %p30, %s32, %s16
      %p34 = scmp.ge.s32.totalorder %s33, 2
      %s35 = scalar_select %p34, 0, %s33
      %s36 = ssub.s32 %s16, %s35
      %s37 = ssub.s32 %s18, %s27
      %s38 = sor.u32 %s36, %s37
      %s39 = ssub.s32 %s17, %s31
      %s40 = sor.u32 %s38, %s39
      %p41 = scmp.eq.s32.totalorder %s40, 0
      %s43 = sadd.s32 %s42, 1
      %s44 = scalar_select %p41, %s42, %s43
      %p47 = pneg %p41
      %p48 = scmp.eq.s32.totalorder %s9, 1
      %p49 = por %p47, %p48
      %p50 = scmp.ne.s32.totalorder %s42, %s45
      %p51 = scmp.eq.s32.totalorder %s9, 0
      %p52 = por %p50, %p51
      %p53 = scmp.ne.s32.totalorder %s42, %s45
      %p54 = scmp.eq.s32.totalorder %s14, 1
      %p55 = por %p53, %p54
      %p56 = scmp.ne.s32.totalorder %s45, %s46
      %p57 = scmp.eq.s32.totalorder %s14, 0
      %p58 = por %p56, %p57
      %p59 = scmp.ne.s32.totalorder %s45, %s46
      %p60 = scmp.eq.s32.totalorder %s15, 1
      %p61 = por %p59, %p60
      %p63 = scmp.ne.s32.totalorder %s46, %s62
      %p64 = scmp.eq.s32.totalorder %s15, 0
      %p65 = por %p63, %p64
      %s66 = sadd.s32 %s17, 1
      %s67 = sadd.s32 %s31, 1
      %s68 = ssub.s32 %s16, %s35
      %s69 = ssub.s32 %s66, %s67
      %s70 = sor.u32 %s68, %s69
      %p71 = scmp.eq.s32.totalorder %s70, 0
      %s73 = sadd.s32 %s72, 1
      %s74 = scalar_select %p71, %s72, %s73
      %p77 = pneg %p71
      %p78 = scmp.eq.s32.totalorder %s9, 1
      %p79 = por %p77, %p78
      %p80 = scmp.ne.s32.totalorder %s72, %s75
      %p81 = scmp.eq.s32.totalorder %s9, 0
      %p82 = por %p80, %p81
      %p83 = scmp.ne.s32.totalorder %s72, %s75
      %p84 = scmp.eq.s32.totalorder %s14, 1
      %p85 = por %p83, %p84
      %p86 = scmp.ne.s32.totalorder %s75, %s76
      %p87 = scmp.eq.s32.totalorder %s14, 0
      %p88 = por %p86, %p87
      %p89 = scmp.ne.s32.totalorder %s75, %s76
      %p90 = scmp.eq.s32.totalorder %s15, 1
      %p91 = por %p89, %p90
      %p93 = scmp.ne.s32.totalorder %s76, %s92
      %p94 = scmp.eq.s32.totalorder %s15, 0
      %p95 = por %p93, %p94
      %s96 = sadd.s32 %s17, 2
      %s97 = sadd.s32 %s31, 2
      %s98 = ssub.s32 %s16, %s35
      %s99 = ssub.s32 %s96, %s97
      %s100 = sor.u32 %s98, %s99
      %p101 = scmp.eq.s32.totalorder %s100, 0
      %s103 = sadd.s32 %s102, 1
      %s104 = scalar_select %p101, %s102, %s103
      %p107 = pneg %p101
      %p108 = scmp.eq.s32.totalorder %s9, 1
      %p109 = por %p107, %p108
      %p110 = scmp.ne.s32.totalorder %s102, %s105
      %p111 = scmp.eq.s32.totalorder %s9, 0
      %p112 = por %p110, %p111
      %p113 = scmp.ne.s32.totalorder %s102, %s105
      %p114 = scmp.eq.s32.totalorder %s14, 1
      %p115 = por %p113, %p114
      %p116 = scmp.ne.s32.totalorder %s105, %s106
      %p117 = scmp.eq.s32.totalorder %s14, 0
      %p118 = por %p116, %p117
      %p119 = scmp.ne.s32.totalorder %s105, %s106
      %p120 = scmp.eq.s32.totalorder %s15, 1
      %p121 = por %p119, %p120
      %p123 = scmp.ne.s32.totalorder %s106, %s122
      %p124 = scmp.eq.s32.totalorder %s15, 0
      %p125 = por %p123, %p124
      %s126 = ssub.s32 %s16, %s35
      %s127 = ssub.s32 %s18, %s27
      %s128 = sor.u32 %s126, %s127
      %s129 = ssub.s32 %s17, %s31
      %s130 = sor.u32 %s128, %s129
      %p131 = scmp.eq.s32.totalorder %s130, 0
      %s133 = sadd.s32 %s132, 1
      %s134 = scalar_select %p131, %s132, %s133
      %p137 = pneg %p131
      %p138 = scmp.eq.s32.totalorder %s9, 1
      %p139 = por %p137, %p138
      %p140 = scmp.ne.s32.totalorder %s132, %s135
      %p141 = scmp.eq.s32.totalorder %s9, 0
      %p142 = por %p140, %p141
      %p143 = scmp.ne.s32.totalorder %s132, %s135
      %p144 = scmp.eq.s32.totalorder %s14, 1
      %p145 = por %p143, %p144
      %p146 = scmp.ne.s32.totalorder %s135, %s136
      %p147 = scmp.eq.s32.totalorder %s14, 0
      %p148 = por %p146, %p147
      %p149 = scmp.ne.s32.totalorder %s135, %s136
      %p150 = scmp.eq.s32.totalorder %s15, 1
      %p151 = por %p149, %p150
      %p153 = scmp.ne.s32.totalorder %s136, %s152
      %p154 = scmp.eq.s32.totalorder %s15, 0
      %p155 = por %p153, %p154
      %p156 = scmp.le.s32.totalorder 1, %s9
      %p157 = scmp.lt.s32.totalorder %s9, 3
      %p158 = pnand %p156, %p157
      %p159 = pneg %p158
      // Predicated region
      $region9: #{whisper_audio_tower_forward.10} parent=5 // pred_check
        _
      $region10: #{whisper_audio_tower_forward.10} parent=5 // pred_check_branch
        %161 = sbr.rel (%p158) target = $region12
      $region11: #{whisper_audio_tower_forward.10} parent=5 // pred_region
        %s162 = ssub.s32 %s9, 1
      $region12: #{whisper_audio_tower_forward.10} parent=5 // pred_fallthru
        _
      %p163 = scmp.lt.s32.totalorder %s9, 2
      // Predicated region
      $region13: #{whisper_audio_tower_forward.10} parent=5 // pred_check
        %p164 = pneg %p163
      $region14: #{whisper_audio_tower_forward.10} parent=5 // pred_check_branch
        %166 = sbr.rel (%p164) target = $region16
      $region15: #{whisper_audio_tower_forward.10} parent=5 // pred_region
        // Predicated region
        $region17: #{whisper_audio_tower_forward.10} parent=15 // pred_check
          %p167 = pneg %p52
        $region18: #{whisper_audio_tower_forward.10} parent=15 // pred_check_branch
          %169 = sbr.rel (%p167) target = $region20
        $region19: #{whisper_audio_tower_forward.10} parent=15 // pred_region
          %s170 = sand.u32 %s42, 1
          %s171 = sand.u32 %s42, 1
          %s172 = smul.addr %s171, 64
          %s173 = scalar_lea.vmem [#allocation2], %s172
          %s174 = smul.u32 16, %s18
          %s175 = smul.addr %s174, 3
          %s176 = sadd.s32 %s17, %s175
          %s177 = smul.addr %s16, 48
          %s178 = sadd.s32 %s176, %s177
          %s179 = smul.addr %s178, 4
          %s180 = scalar_lea.vmem %s0, %s179
          // Predicated region
          $region21: #{whisper_audio_tower_forward.10} parent=19 // pred_check
            _
          $region22: #{whisper_audio_tower_forward.10} parent=19 // pred_check_branch
            %182 = sbr.rel (0) target = $region24
          $region23: #{whisper_audio_tower_forward.10} parent=19 // pred_region
            // Predicated region
            $region25: #{whisper_audio_tower_forward.10} parent=23 // pred_check
              _
            $region26: #{whisper_audio_tower_forward.10} parent=23 // pred_check_branch
              %184 = sbr.rel target = $region28
            $region27: #{whisper_audio_tower_forward.10} parent=23 // pred_region
              // Predicated region
              $region40: #{whisper_audio_tower_forward.10} parent=27 // pred_check
                _
              $region41: #{whisper_audio_tower_forward.10} parent=27 // pred_check_branch
                %229 = sbr.rel (0) target = $region43
              $region42: #{whisper_audio_tower_forward.10} parent=27 // pred_region
                loop: start=0, step=1, limit=1
                $region44: #{whisper_audio_tower_forward.10} parent=42 // loop_pre_header
                  _
                $region45: #{whisper_audio_tower_forward.10} parent=42 // loop_header
                  %s231 = sphi 0, %s235
                  %p232 = scmp.ge.s32.totalorder %s231, 1
                  %s236 = sphi %s180, %s180
                  %s237 = sphi %s173, %s173
                $region46: #{whisper_audio_tower_forward.10} parent=42 // loop_header_branch
                  %234 = sbr.rel (%p232) target = $region50
                $region47: #{whisper_audio_tower_forward.10} parent=42 // loop_body
                  _
                $region48: #{whisper_audio_tower_forward.10} parent=42 // loop_footer
                  %s235 = sadd.s32 1, %s231
                $region49: #{whisper_audio_tower_forward.10} parent=42 // loop_footer_branch
                  %230 = sbr.rel target = $region45
                $region50: #{whisper_audio_tower_forward.10} parent=42 // loop_exit
                  _
                loop: start=0, step=1, limit=1
                $region51: #{whisper_audio_tower_forward.10} parent=42 // loop_pre_header
                  _
                $region52: #{whisper_audio_tower_forward.10} parent=42 // loop_header
                  %s240 = sphi 0, %s244
                  %p241 = scmp.ge.s32.totalorder %s240, 1
                  %s245 = sphi %s180, %s180
                  %s246 = sphi %s173, %s173
                $region53: #{whisper_audio_tower_forward.10} parent=42 // loop_header_branch
                  %243 = sbr.rel (%p241) target = $region57
                $region54: #{whisper_audio_tower_forward.10} parent=42 // loop_body
                  %v247 = vld [vmem:[%s245] sm:$0xf]
                  %248 = vst [vmem:[%s246] sm:$0xf] %v247
                  %v249 = vld [vmem:[%s245 + $0xc] sm:$0xf]
                  %250 = vst [vmem:[%s246 + $0x4] sm:$0xf] %v249
                  %v251 = vld [vmem:[%s245 + $0x18] sm:$0xf]
                  %252 = vst [vmem:[%s246 + $0x8] sm:$0xf] %v251
                  %v253 = vld [vmem:[%s245 + $0x24] sm:$0xf]
                  %254 = vst [vmem:[%s246 + $0xc] sm:$0xf] %v253
                  %v255 = vld [vmem:[%s245 + $0x30] sm:$0xf]
                  %256 = vst [vmem:[%s246 + $0x10] sm:$0xf] %v255
                  %v257 = vld [vmem:[%s245 + $0x3c] sm:$0xf]
                  %258 = vst [vmem:[%s246 + $0x14] sm:$0xf] %v257
                  %v259 = vld [vmem:[%s245 + $0x48] sm:$0xf]
                  %260 = vst [vmem:[%s246 + $0x18] sm:$0xf] %v259
                  %v261 = vld [vmem:[%s245 + $0x54] sm:$0xf]
                  %262 = vst [vmem:[%s246 + $0x1c] sm:$0xf] %v261
                  %v263 = vld [vmem:[%s245 + $0x60] sm:$0xf]
                  %264 = vst [vmem:[%s246 + $0x20] sm:$0xf] %v263
                  %v265 = vld [vmem:[%s245 + $0x6c] sm:$0xf]
                  %266 = vst [vmem:[%s246 + $0x24] sm:$0xf] %v265
                  %v267 = vld [vmem:[%s245 + $0x78] sm:$0xf]
                  %268 = vst [vmem:[%s246 + $0x28] sm:$0xf] %v267
                  %v269 = vld [vmem:[%s245 + $0x84] sm:$0xf]
                  %270 = vst [vmem:[%s246 + $0x2c] sm:$0xf] %v269
                  %v271 = vld [vmem:[%s245 + $0x90] sm:$0xf]
                  %272 = vst [vmem:[%s246 + $0x30] sm:$0xf] %v271
                  %v273 = vld [vmem:[%s245 + $0x9c] sm:$0xf]
                  %274 = vst [vmem:[%s246 + $0x34] sm:$0xf] %v273
                  %v275 = vld [vmem:[%s245 + $0xa8] sm:$0xf]
                  %276 = vst [vmem:[%s246 + $0x38] sm:$0xf] %v275
                  %v277 = vld [vmem:[%s245 + $0xb4] sm:$0xf]
                  %278 = vst [vmem:[%s246 + $0x3c] sm:$0xf] %v277
                $region55: #{whisper_audio_tower_forward.10} parent=42 // loop_footer
                  %s244 = sadd.s32 1, %s240
                $region56: #{whisper_audio_tower_forward.10} parent=42 // loop_footer_branch
                  %239 = sbr.rel target = $region52
                $region57: #{whisper_audio_tower_forward.10} parent=42 // loop_exit
                  _
              $region43: #{whisper_audio_tower_forward.10} parent=27 // pred_fallthru
                _
            $region28: #{whisper_audio_tower_forward.10} parent=23 // pred_fallthru
              _
            // Predicated region
            $region29: #{whisper_audio_tower_forward.10} parent=23 // pred_check
              _
            $region30: #{whisper_audio_tower_forward.10} parent=23 // pred_check_branch
              %186 = sbr.rel (0) target = $region32
            $region31: #{whisper_audio_tower_forward.10} parent=23 // pred_region
              loop: start=0, step=1, limit=1
              $region33: #{whisper_audio_tower_forward.10} parent=31 // loop_pre_header
                _
              $region34: #{whisper_audio_tower_forward.10} parent=31 // loop_header
                %s189 = sphi 0, %s193
                %p190 = scmp.ge.s32.totalorder %s189, 1
                %s194 = sphi %s180, %s180
                %s195 = sphi %s173, %s173
              $region35: #{whisper_audio_tower_forward.10} parent=31 // loop_header_branch
                %192 = sbr.rel (%p190) target = $region39
              $region36: #{whisper_audio_tower_forward.10} parent=31 // loop_body
                %v196 = vld [vmem:[%s194] sm:$0xf]
                %197 = vst [vmem:[%s195] sm:$0xf] %v196
                %v198 = vld [vmem:[%s194 + $0xc] sm:$0xf]
                %199 = vst [vmem:[%s195 + $0x4] sm:$0xf] %v198
                %v200 = vld [vmem:[%s194 + $0x18] sm:$0xf]
                %201 = vst [vmem:[%s195 + $0x8] sm:$0xf] %v200
                %v202 = vld [vmem:[%s194 + $0x24] sm:$0xf]
                %203 = vst [vmem:[%s195 + $0xc] sm:$0xf] %v202
                %v204 = vld [vmem:[%s194 + $0x30] sm:$0xf]
                %205 = vst [vmem:[%s195 + $0x10] sm:$0xf] %v204
                %v206 = vld [vmem:[%s194 + $0x3c] sm:$0xf]
                %207 = vst [vmem:[%s195 + $0x14] sm:$0xf] %v206
                %v208 = vld [vmem:[%s194 + $0x48] sm:$0xf]
                %209 = vst [vmem:[%s195 + $0x18] sm:$0xf] %v208
                %v210 = vld [vmem:[%s194 + $0x54] sm:$0xf]
                %211 = vst [vmem:[%s195 + $0x1c] sm:$0xf] %v210
                %v212 = vld [vmem:[%s194 + $0x60] sm:$0xf]
                %213 = vst [vmem:[%s195 + $0x20] sm:$0xf] %v212
                %v214 = vld [vmem:[%s194 + $0x6c] sm:$0xf]
                %215 = vst [vmem:[%s195 + $0x24] sm:$0xf] %v214
                %v216 = vld [vmem:[%s194 + $0x78] sm:$0xf]
                %217 = vst [vmem:[%s195 + $0x28] sm:$0xf] %v216
                %v218 = vld [vmem:[%s194 + $0x84] sm:$0xf]
                %219 = vst [vmem:[%s195 + $0x2c] sm:$0xf] %v218
                %v220 = vld [vmem:[%s194 + $0x90] sm:$0xf]
                %221 = vst [vmem:[%s195 + $0x30] sm:$0xf] %v220
                %v222 = vld [vmem:[%s194 + $0x9c] sm:$0xf]
                %223 = vst [vmem:[%s195 + $0x34] sm:$0xf] %v222
                %v224 = vld [vmem:[%s194 + $0xa8] sm:$0xf]
                %225 = vst [vmem:[%s195 + $0x38] sm:$0xf] %v224
                %v226 = vld [vmem:[%s194 + $0xb4] sm:$0xf]
                %227 = vst [vmem:[%s195 + $0x3c] sm:$0xf] %v226
              $region37: #{whisper_audio_tower_forward.10} parent=31 // loop_footer
                %s193 = sadd.s32 1, %s189
              $region38: #{whisper_audio_tower_forward.10} parent=31 // loop_footer_branch
                %188 = sbr.rel target = $region34
              $region39: #{whisper_audio_tower_forward.10} parent=31 // loop_exit
                _
            $region32: #{whisper_audio_tower_forward.10} parent=23 // pred_fallthru
              _
          $region24: #{whisper_audio_tower_forward.10} parent=19 // pred_fallthru
            _
          %279 = vnop
        $region20: #{whisper_audio_tower_forward.10} parent=15 // pred_fallthru
          _
        // Predicated region
        $region58: #{whisper_audio_tower_forward.10} parent=15 // pred_check
          %p280 = pneg %p82
        $region59: #{whisper_audio_tower_forward.10} parent=15 // pred_check_branch
          %282 = sbr.rel (%p280) target = $region61
        $region60: #{whisper_audio_tower_forward.10} parent=15 // pred_region
          %s283 = sand.u32 %s72, 1
          %s284 = sand.u32 %s72, 1
          %s285 = smul.addr %s284, 64
          %s286 = scalar_lea.vmem [#allocation3], %s285
          %s287 = sadd.s32 %s17, 1
          %s288 = smul.addr %s16, 48
          %s289 = sadd.s32 %s287, %s288
          %s290 = smul.addr %s289, 4
          %s291 = scalar_lea.vmem %s1, %s290
          // Predicated region
          $region62: #{whisper_audio_tower_forward.10} parent=60 // pred_check
            _
          $region63: #{whisper_audio_tower_forward.10} parent=60 // pred_check_branch
            %293 = sbr.rel (0) target = $region65
          $region64: #{whisper_audio_tower_forward.10} parent=60 // pred_region
            // Predicated region
            $region66: #{whisper_audio_tower_forward.10} parent=64 // pred_check
              _
            $region67: #{whisper_audio_tower_forward.10} parent=64 // pred_check_branch
              %295 = sbr.rel target = $region69
            $region68: #{whisper_audio_tower_forward.10} parent=64 // pred_region
              // Predicated region
              $region81: #{whisper_audio_tower_forward.10} parent=68 // pred_check
                _
              $region82: #{whisper_audio_tower_forward.10} parent=68 // pred_check_branch
                %340 = sbr.rel (0) target = $region84
              $region83: #{whisper_audio_tower_forward.10} parent=68 // pred_region
                loop: start=0, step=1, limit=1
                $region85: #{whisper_audio_tower_forward.10} parent=83 // loop_pre_header
                  _
                $region86: #{whisper_audio_tower_forward.10} parent=83 // loop_header
                  %s342 = sphi 0, %s346
                  %p343 = scmp.ge.s32.totalorder %s342, 1
                  %s347 = sphi %s291, %s291
                  %s348 = sphi %s286, %s286
                $region87: #{whisper_audio_tower_forward.10} parent=83 // loop_header_branch
                  %345 = sbr.rel (%p343) target = $region91
                $region88: #{whisper_audio_tower_forward.10} parent=83 // loop_body
                  _
                $region89: #{whisper_audio_tower_forward.10} parent=83 // loop_footer
                  %s346 = sadd.s32 1, %s342
                $region90: #{whisper_audio_tower_forward.10} parent=83 // loop_footer_branch
                  %341 = sbr.rel target = $region86
                $region91: #{whisper_audio_tower_forward.10} parent=83 // loop_exit
                  _
                loop: start=0, step=1, limit=1
                $region92: #{whisper_audio_tower_forward.10} parent=83 // loop_pre_header
                  _
                $region93: #{whisper_audio_tower_forward.10} parent=83 // loop_header
                  %s351 = sphi 0, %s355
                  %p352 = scmp.ge.s32.totalorder %s351, 1
                  %s356 = sphi %s291, %s291
                  %s357 = sphi %s286, %s286
                $region94: #{whisper_audio_tower_forward.10} parent=83 // loop_header_branch
                  %354 = sbr.rel (%p352) target = $region98
                $region95: #{whisper_audio_tower_forward.10} parent=83 // loop_body
                  %v358 = vld [vmem:[%s356] sm:$0xf]
                  %359 = vst [vmem:[%s357] sm:$0xf] %v358
                  %v360 = vld [vmem:[%s356 + $0xc] sm:$0xf]
                  %361 = vst [vmem:[%s357 + $0x4] sm:$0xf] %v360
                  %v362 = vld [vmem:[%s356 + $0x18] sm:$0xf]
                  %363 = vst [vmem:[%s357 + $0x8] sm:$0xf] %v362
                  %v364 = vld [vmem:[%s356 + $0x24] sm:$0xf]
                  %365 = vst [vmem:[%s357 + $0xc] sm:$0xf] %v364
                  %v366 = vld [vmem:[%s356 + $0x30] sm:$0xf]
                  %367 = vst [vmem:[%s357 + $0x10] sm:$0xf] %v366
                  %v368 = vld [vmem:[%s356 + $0x3c] sm:$0xf]
                  %369 = vst [vmem:[%s357 + $0x14] sm:$0xf] %v368
                  %v370 = vld [vmem:[%s356 + $0x48] sm:$0xf]
                  %371 = vst [vmem:[%s357 + $0x18] sm:$0xf] %v370
                  %v372 = vld [vmem:[%s356 + $0x54] sm:$0xf]
                  %373 = vst [vmem:[%s357 + $0x1c] sm:$0xf] %v372
                  %v374 = vld [vmem:[%s356 + $0x60] sm:$0xf]
                  %375 = vst [vmem:[%s357 + $0x20] sm:$0xf] %v374
                  %v376 = vld [vmem:[%s356 + $0x6c] sm:$0xf]
                  %377 = vst [vmem:[%s357 + $0x24] sm:$0xf] %v376
                  %v378 = vld [vmem:[%s356 + $0x78] sm:$0xf]
                  %379 = vst [vmem:[%s357 + $0x28] sm:$0xf] %v378
                  %v380 = vld [vmem:[%s356 + $0x84] sm:$0xf]
                  %381 = vst [vmem:[%s357 + $0x2c] sm:$0xf] %v380
                  %v382 = vld [vmem:[%s356 + $0x90] sm:$0xf]
                  %383 = vst [vmem:[%s357 + $0x30] sm:$0xf] %v382
                  %v384 = vld [vmem:[%s356 + $0x9c] sm:$0xf]
                  %385 = vst [vmem:[%s357 + $0x34] sm:$0xf] %v384
                  %v386 = vld [vmem:[%s356 + $0xa8] sm:$0xf]
                  %387 = vst [vmem:[%s357 + $0x38] sm:$0xf] %v386
                  %v388 = vld [vmem:[%s356 + $0xb4] sm:$0xf]
                  %389 = vst [vmem:[%s357 + $0x3c] sm:$0xf] %v388
                $region96: #{whisper_audio_tower_forward.10} parent=83 // loop_footer
                  %s355 = sadd.s32 1, %s351
                $region97: #{whisper_audio_tower_forward.10} parent=83 // loop_footer_branch
                  %350 = sbr.rel target = $region93
                $region98: #{whisper_audio_tower_forward.10} parent=83 // loop_exit
                  _
              $region84: #{whisper_audio_tower_forward.10} parent=68 // pred_fallthru
                _
            $region69: #{whisper_audio_tower_forward.10} parent=64 // pred_fallthru
              _
            // Predicated region
            $region70: #{whisper_audio_tower_forward.10} parent=64 // pred_check
              _
            $region71: #{whisper_audio_tower_forward.10} parent=64 // pred_check_branch
              %297 = sbr.rel (0) target = $region73
            $region72: #{whisper_audio_tower_forward.10} parent=64 // pred_region
              loop: start=0, step=1, limit=1
              $region74: #{whisper_audio_tower_forward.10} parent=72 // loop_pre_header
                _
              $region75: #{whisper_audio_tower_forward.10} parent=72 // loop_header
                %s300 = sphi 0, %s304
                %p301 = scmp.ge.s32.totalorder %s300, 1
                %s305 = sphi %s291, %s291
                %s306 = sphi %s286, %s286
              $region76: #{whisper_audio_tower_forward.10} parent=72 // loop_header_branch
                %303 = sbr.rel (%p301) target = $region80
              $region77: #{whisper_audio_tower_forward.10} parent=72 // loop_body
                %v307 = vld [vmem:[%s305] sm:$0xf]
                %308 = vst [vmem:[%s306] sm:$0xf] %v307
                %v309 = vld [vmem:[%s305 + $0xc] sm:$0xf]
                %310 = vst [vmem:[%s306 + $0x4] sm:$0xf] %v309
                %v311 = vld [vmem:[%s305 + $0x18] sm:$0xf]
                %312 = vst [vmem:[%s306 + $0x8] sm:$0xf] %v311
                %v313 = vld [vmem:[%s305 + $0x24] sm:$0xf]
                %314 = vst [vmem:[%s306 + $0xc] sm:$0xf] %v313
                %v315 = vld [vmem:[%s305 + $0x30] sm:$0xf]
                %316 = vst [vmem:[%s306 + $0x10] sm:$0xf] %v315
                %v317 = vld [vmem:[%s305 + $0x3c] sm:$0xf]
                %318 = vst [vmem:[%s306 + $0x14] sm:$0xf] %v317
                %v319 = vld [vmem:[%s305 + $0x48] sm:$0xf]
                %320 = vst [vmem:[%s306 + $0x18] sm:$0xf] %v319
                %v321 = vld [vmem:[%s305 + $0x54] sm:$0xf]
                %322 = vst [vmem:[%s306 + $0x1c] sm:$0xf] %v321
                %v323 = vld [vmem:[%s305 + $0x60] sm:$0xf]
                %324 = vst [vmem:[%s306 + $0x20] sm:$0xf] %v323
                %v325 = vld [vmem:[%s305 + $0x6c] sm:$0xf]
                %326 = vst [vmem:[%s306 + $0x24] sm:$0xf] %v325
                %v327 = vld [vmem:[%s305 + $0x78] sm:$0xf]
                %328 = vst [vmem:[%s306 + $0x28] sm:$0xf] %v327
                %v329 = vld [vmem:[%s305 + $0x84] sm:$0xf]
                %330 = vst [vmem:[%s306 + $0x2c] sm:$0xf] %v329
                %v331 = vld [vmem:[%s305 + $0x90] sm:$0xf]
                %332 = vst [vmem:[%s306 + $0x30] sm:$0xf] %v331
                %v333 = vld [vmem:[%s305 + $0x9c] sm:$0xf]
                %334 = vst [vmem:[%s306 + $0x34] sm:$0xf] %v333
                %v335 = vld [vmem:[%s305 + $0xa8] sm:$0xf]
                %336 = vst [vmem:[%s306 + $0x38] sm:$0xf] %v335
                %v337 = vld [vmem:[%s305 + $0xb4] sm:$0xf]
                %338 = vst [vmem:[%s306 + $0x3c] sm:$0xf] %v337
              $region78: #{whisper_audio_tower_forward.10} parent=72 // loop_footer
                %s304 = sadd.s32 1, %s300
              $region79: #{whisper_audio_tower_forward.10} parent=72 // loop_footer_branch
                %299 = sbr.rel target = $region75
              $region80: #{whisper_audio_tower_forward.10} parent=72 // loop_exit
                _
            $region73: #{whisper_audio_tower_forward.10} parent=64 // pred_fallthru
              _
          $region65: #{whisper_audio_tower_forward.10} parent=60 // pred_fallthru
            _
          %390 = vnop
        $region61: #{whisper_audio_tower_forward.10} parent=15 // pred_fallthru
          _
        // Predicated region
        $region99: #{whisper_audio_tower_forward.10} parent=15 // pred_check
          %p391 = pneg %p112
        $region100: #{whisper_audio_tower_forward.10} parent=15 // pred_check_branch
          %393 = sbr.rel (%p391) target = $region102
        $region101: #{whisper_audio_tower_forward.10} parent=15 // pred_region
          %s394 = sand.u32 %s102, 1
          %s395 = sand.u32 %s102, 1
          %s396 = smul.addr %s395, 64
          %s397 = scalar_lea.vmem [#allocation4], %s396
          %s398 = sadd.s32 %s17, 2
          %s399 = smul.addr %s16, 48
          %s400 = sadd.s32 %s398, %s399
          %s401 = smul.addr %s400, 4
          %s402 = scalar_lea.vmem %s2, %s401
          // Predicated region
          $region103: #{whisper_audio_tower_forward.10} parent=101 // pred_check
            _
          $region104: #{whisper_audio_tower_forward.10} parent=101 // pred_check_branch
            %404 = sbr.rel (0) target = $region106
          $region105: #{whisper_audio_tower_forward.10} parent=101 // pred_region
            // Predicated region
            $region107: #{whisper_audio_tower_forward.10} parent=105 // pred_check
              _
            $region108: #{whisper_audio_tower_forward.10} parent=105 // pred_check_branch
              %406 = sbr.rel target = $region110
            $region109: #{whisper_audio_tower_forward.10} parent=105 // pred_region
              // Predicated region
              $region122: #{whisper_audio_tower_forward.10} parent=109 // pred_check
                _
              $region123: #{whisper_audio_tower_forward.10} parent=109 // pred_check_branch
                %451 = sbr.rel (0) target = $region125
              $region124: #{whisper_audio_tower_forward.10} parent=109 // pred_region
                loop: start=0, step=1, limit=1
                $region126: #{whisper_audio_tower_forward.10} parent=124 // loop_pre_header
                  _
                $region127: #{whisper_audio_tower_forward.10} parent=124 // loop_header
                  %s453 = sphi 0, %s457
                  %p454 = scmp.ge.s32.totalorder %s453, 1
                  %s458 = sphi %s402, %s402
                  %s459 = sphi %s397, %s397
                $region128: #{whisper_audio_tower_forward.10} parent=124 // loop_header_branch
                  %456 = sbr.rel (%p454) target = $region132
                $region129: #{whisper_audio_tower_forward.10} parent=124 // loop_body
                  _
                $region130: #{whisper_audio_tower_forward.10} parent=124 // loop_footer
                  %s457 = sadd.s32 1, %s453
                $region131: #{whisper_audio_tower_forward.10} parent=124 // loop_footer_branch
                  %452 = sbr.rel target = $region127
                $region132: #{whisper_audio_tower_forward.10} parent=124 // loop_exit
                  _
                loop: start=0, step=1, limit=1
                $region133: #{whisper_audio_tower_forward.10} parent=124 // loop_pre_header
                  _
                $region134: #{whisper_audio_tower_forward.10} parent=124 // loop_header
                  %s462 = sphi 0, %s466
                  %p463 = scmp.ge.s32.totalorder %s462, 1
                  %s467 = sphi %s402, %s402
                  %s468 = sphi %s397, %s397
                $region135: #{whisper_audio_tower_forward.10} parent=124 // loop_header_branch
                  %465 = sbr.rel (%p463) target = $region139
                $region136: #{whisper_audio_tower_forward.10} parent=124 // loop_body
                  %v469 = vld [vmem:[%s467] sm:$0xf]
                  %470 = vst [vmem:[%s468] sm:$0xf] %v469
                  %v471 = vld [vmem:[%s467 + $0xc] sm:$0xf]
                  %472 = vst [vmem:[%s468 + $0x4] sm:$0xf] %v471
                  %v473 = vld [vmem:[%s467 + $0x18] sm:$0xf]
                  %474 = vst [vmem:[%s468 + $0x8] sm:$0xf] %v473
                  %v475 = vld [vmem:[%s467 + $0x24] sm:$0xf]
                  %476 = vst [vmem:[%s468 + $0xc] sm:$0xf] %v475
                  %v477 = vld [vmem:[%s467 + $0x30] sm:$0xf]
                  %478 = vst [vmem:[%s468 + $0x10] sm:$0xf] %v477
                  %v479 = vld [vmem:[%s467 + $0x3c] sm:$0xf]
                  %480 = vst [vmem:[%s468 + $0x14] sm:$0xf] %v479
                  %v481 = vld [vmem:[%s467 + $0x48] sm:$0xf]
                  %482 = vst [vmem:[%s468 + $0x18] sm:$0xf] %v481
                  %v483 = vld [vmem:[%s467 + $0x54] sm:$0xf]
                  %484 = vst [vmem:[%s468 + $0x1c] sm:$0xf] %v483
                  %v485 = vld [vmem:[%s467 + $0x60] sm:$0xf]
                  %486 = vst [vmem:[%s468 + $0x20] sm:$0xf] %v485
                  %v487 = vld [vmem:[%s467 + $0x6c] sm:$0xf]
                  %488 = vst [vmem:[%s468 + $0x24] sm:$0xf] %v487
                  %v489 = vld [vmem:[%s467 + $0x78] sm:$0xf]
                  %490 = vst [vmem:[%s468 + $0x28] sm:$0xf] %v489
                  %v491 = vld [vmem:[%s467 + $0x84] sm:$0xf]
                  %492 = vst [vmem:[%s468 + $0x2c] sm:$0xf] %v491
                  %v493 = vld [vmem:[%s467 + $0x90] sm:$0xf]
                  %494 = vst [vmem:[%s468 + $0x30] sm:$0xf] %v493
                  %v495 = vld [vmem:[%s467 + $0x9c] sm:$0xf]
                  %496 = vst [vmem:[%s468 + $0x34] sm:$0xf] %v495
                  %v497 = vld [vmem:[%s467 + $0xa8] sm:$0xf]
                  %498 = vst [vmem:[%s468 + $0x38] sm:$0xf] %v497
                  %v499 = vld [vmem:[%s467 + $0xb4] sm:$0xf]
                  %500 = vst [vmem:[%s468 + $0x3c] sm:$0xf] %v499
                $region137: #{whisper_audio_tower_forward.10} parent=124 // loop_footer
                  %s466 = sadd.s32 1, %s462
                $region138: #{whisper_audio_tower_forward.10} parent=124 // loop_footer_branch
                  %461 = sbr.rel target = $region134
                $region139: #{whisper_audio_tower_forward.10} parent=124 // loop_exit
                  _
              $region125: #{whisper_audio_tower_forward.10} parent=109 // pred_fallthru
                _
            $region110: #{whisper_audio_tower_forward.10} parent=105 // pred_fallthru
              _
            // Predicated region
            $region111: #{whisper_audio_tower_forward.10} parent=105 // pred_check
              _
            $region112: #{whisper_audio_tower_forward.10} parent=105 // pred_check_branch
              %408 = sbr.rel (0) target = $region114
            $region113: #{whisper_audio_tower_forward.10} parent=105 // pred_region
              loop: start=0, step=1, limit=1
              $region115: #{whisper_audio_tower_forward.10} parent=113 // loop_pre_header
                _
              $region116: #{whisper_audio_tower_forward.10} parent=113 // loop_header
                %s411 = sphi 0, %s415
                %p412 = scmp.ge.s32.totalorder %s411, 1
                %s416 = sphi %s402, %s402
                %s417 = sphi %s397, %s397
              $region117: #{whisper_audio_tower_forward.10} parent=113 // loop_header_branch
                %414 = sbr.rel (%p412) target = $region121
              $region118: #{whisper_audio_tower_forward.10} parent=113 // loop_body
                %v418 = vld [vmem:[%s416] sm:$0xf]
                %419 = vst [vmem:[%s417] sm:$0xf] %v418
                %v420 = vld [vmem:[%s416 + $0xc] sm:$0xf]
                %421 = vst [vmem:[%s417 + $0x4] sm:$0xf] %v420
                %v422 = vld [vmem:[%s416 + $0x18] sm:$0xf]
                %423 = vst [vmem:[%s417 + $0x8] sm:$0xf] %v422
                %v424 = vld [vmem:[%s416 + $0x24] sm:$0xf]
                %425 = vst [vmem:[%s417 + $0xc] sm:$0xf] %v424
                %v426 = vld [vmem:[%s416 + $0x30] sm:$0xf]
                %427 = vst [vmem:[%s417 + $0x10] sm:$0xf] %v426
                %v428 = vld [vmem:[%s416 + $0x3c] sm:$0xf]
                %429 = vst [vmem:[%s417 + $0x14] sm:$0xf] %v428
                %v430 = vld [vmem:[%s416 + $0x48] sm:$0xf]
                %431 = vst [vmem:[%s417 + $0x18] sm:$0xf] %v430
                %v432 = vld [vmem:[%s416 + $0x54] sm:$0xf]
                %433 = vst [vmem:[%s417 + $0x1c] sm:$0xf] %v432
                %v434 = vld [vmem:[%s416 + $0x60] sm:$0xf]
                %435 = vst [vmem:[%s417 + $0x20] sm:$0xf] %v434
                %v436 = vld [vmem:[%s416 + $0x6c] sm:$0xf]
                %437 = vst [vmem:[%s417 + $0x24] sm:$0xf] %v436
                %v438 = vld [vmem:[%s416 + $0x78] sm:$0xf]
                %439 = vst [vmem:[%s417 + $0x28] sm:$0xf] %v438
                %v440 = vld [vmem:[%s416 + $0x84] sm:$0xf]
                %441 = vst [vmem:[%s417 + $0x2c] sm:$0xf] %v440
                %v442 = vld [vmem:[%s416 + $0x90] sm:$0xf]
                %443 = vst [vmem:[%s417 + $0x30] sm:$0xf] %v442
                %v444 = vld [vmem:[%s416 + $0x9c] sm:$0xf]
                %445 = vst [vmem:[%s417 + $0x34] sm:$0xf] %v444
                %v446 = vld [vmem:[%s416 + $0xa8] sm:$0xf]
                %447 = vst [vmem:[%s417 + $0x38] sm:$0xf] %v446
                %v448 = vld [vmem:[%s416 + $0xb4] sm:$0xf]
                %449 = vst [vmem:[%s417 + $0x3c] sm:$0xf] %v448
              $region119: #{whisper_audio_tower_forward.10} parent=113 // loop_footer
                %s415 = sadd.s32 1, %s411
              $region120: #{whisper_audio_tower_forward.10} parent=113 // loop_footer_branch
                %410 = sbr.rel target = $region116
              $region121: #{whisper_audio_tower_forward.10} parent=113 // loop_exit
                _
            $region114: #{whisper_audio_tower_forward.10} parent=105 // pred_fallthru
              _
          $region106: #{whisper_audio_tower_forward.10} parent=101 // pred_fallthru
            _
          %501 = vnop
        $region102: #{whisper_audio_tower_forward.10} parent=15 // pred_fallthru
          _
      $region16: #{whisper_audio_tower_forward.10} parent=5 // pred_fallthru
        _
      %p502 = scmp.le.s32.totalorder 1, %s9
      %p503 = scmp.lt.s32.totalorder %s9, 3
      %p504 = pnand %p502, %p503
      %p505 = pneg %p504
      // Predicated region
      $region140: #{whisper_audio_tower_forward.10} parent=5 // pred_check
        _
      $region141: #{whisper_audio_tower_forward.10} parent=5 // pred_check_branch
        %507 = sbr.rel (%p504) target = $region143
      $region142: #{whisper_audio_tower_forward.10} parent=5 // pred_region
        %s508 = ssub.s32 %s9, 1
        %s509 = sand.u32 %s45, 1
        %s510 = sand.u32 %s45, 1
        %s511 = smul.addr %s510, 64
        %s512 = scalar_lea.vmem [#allocation2], %s511
        // Predicated region
        $region144: #{whisper_audio_tower_forward.10} parent=142 // pred_check
          %p513 = pneg %p58
        $region145: #{whisper_audio_tower_forward.10} parent=142 // pred_check_branch
          %515 = sbr.rel (%p513) target = $region147
        $region146: #{whisper_audio_tower_forward.10} parent=142 // pred_region
          _
        $region147: #{whisper_audio_tower_forward.10} parent=142 // pred_fallthru
          _
        %s516 = sand.u32 %s75, 1
        %s517 = sand.u32 %s75, 1
        %s518 = smul.addr %s517, 64
        %s519 = scalar_lea.vmem [#allocation3], %s518
        // Predicated region
        $region148: #{whisper_audio_tower_forward.10} parent=142 // pred_check
          %p520 = pneg %p88
        $region149: #{whisper_audio_tower_forward.10} parent=142 // pred_check_branch
          %522 = sbr.rel (%p520) target = $region151
        $region150: #{whisper_audio_tower_forward.10} parent=142 // pred_region
          _
        $region151: #{whisper_audio_tower_forward.10} parent=142 // pred_fallthru
          _
        %s523 = sand.u32 %s105, 1
        %s524 = sand.u32 %s105, 1
        %s525 = smul.addr %s524, 64
        %s526 = scalar_lea.vmem [#allocation4], %s525
        // Predicated region
        $region152: #{whisper_audio_tower_forward.10} parent=142 // pred_check
          %p527 = pneg %p118
        $region153: #{whisper_audio_tower_forward.10} parent=142 // pred_check_branch
          %529 = sbr.rel (%p527) target = $region155
        $region154: #{whisper_audio_tower_forward.10} parent=142 // pred_region
          _
        $region155: #{whisper_audio_tower_forward.10} parent=142 // pred_fallthru
          _
        %s530 = sand.u32 %s45, 1
        %s531 = sand.u32 %s45, 1
        %s532 = smul.addr %s531, 64
        %s533 = scalar_lea.vmem [#allocation2], %s532
        %p534 = pneg %p58
        %p535 = pneg %p55
        %s536 = sand.u32 %s75, 1
        %s537 = sand.u32 %s75, 1
        %s538 = smul.addr %s537, 64
        %s539 = scalar_lea.vmem [#allocation3], %s538
        %p540 = pneg %p88
        %p541 = pneg %p85
        %s542 = sand.u32 %s105, 1
        %s543 = sand.u32 %s105, 1
        %s544 = smul.addr %s543, 64
        %s545 = scalar_lea.vmem [#allocation4], %s544
        %p546 = pneg %p118
        %p547 = pneg %p115
        %p548 = pneg %p148
        %p549 = pneg %p145
        %s550 = smul.u32 16, %s21
        %p551 = scmp.lt.s32.totalorder %s19, 1
        %s552 = scalar_select %p551, %s19, 1
        %p553 = scmp.lt.s32.totalorder %s550, 15
        %s554 = scalar_select %p553, %s550, 15
        %p555 = scmp.lt.s32.totalorder %s20, 0
        %s556 = scalar_select %p555, %s20, 0
        %s557 = sadd.s32 %s556, %s554
        %s558 = smul.addr %s552, 16
        %s559 = sadd.s32 %s557, %s558
        %s560 = smul.addr %s559, 4
        %s561 = scalar_lea.vmem %s3, %s560
        %s562 = smul.u32 16, %s21
        %s563 = sadd.s32 %s20, 1
        %s564 = sadd.s32 %s20, 2
        %s565 = smul.u32 16, %s21
        %p566 = scmp.lt.s32.totalorder %s19, 1
        %s567 = scalar_select %p566, %s19, 1
        %p568 = scmp.lt.s32.totalorder %s565, 15
        %s569 = scalar_select %p568, %s565, 15
        %p570 = scmp.lt.s32.totalorder %s20, 0
        %s571 = scalar_select %p570, %s20, 0
        %s572 = sadd.s32 %s571, %s569
        %s573 = smul.addr %s567, 16
        %s574 = sadd.s32 %s572, %s573
        %s575 = smul.addr %s574, 4
        %s576 = scalar_lea.vmem %s3, %s575
        %s577 = smul.u32 16, %s21
        %v579 = vld [vmem:[%s512] sm:$0xf]
        %v580 = vld [vmem:[%s512 + $0x4] sm:$0xf]
        %v581 = vld [vmem:[%s512 + $0x8] sm:$0xf]
        %v582 = vld [vmem:[%s512 + $0xc] sm:$0xf]
        %v583 = vld [vmem:[%s512 + $0x10] sm:$0xf]
        %v584 = vld [vmem:[%s512 + $0x14] sm:$0xf]
        %v585 = vld [vmem:[%s512 + $0x18] sm:$0xf]
        %v586 = vld [vmem:[%s512 + $0x1c] sm:$0xf]
        %v587 = vld [vmem:[%s512 + $0x20] sm:$0xf]
        %v588 = vld [vmem:[%s512 + $0x24] sm:$0xf]
        %v589 = vld [vmem:[%s512 + $0x28] sm:$0xf]
        %v590 = vld [vmem:[%s512 + $0x2c] sm:$0xf]
        %v591 = vld [vmem:[%s512 + $0x30] sm:$0xf]
        %v592 = vld [vmem:[%s512 + $0x34] sm:$0xf]
        %v593 = vld [vmem:[%s512 + $0x38] sm:$0xf]
        %v594 = vld [vmem:[%s512 + $0x3c] sm:$0xf]
        %v595 = vld [vmem:[%s519] sm:$0xf]
        %v596 = vld [vmem:[%s519 + $0x4] sm:$0xf]
        %v597 = vld [vmem:[%s519 + $0x8] sm:$0xf]
        %v598 = vld [vmem:[%s519 + $0xc] sm:$0xf]
        %v599 = vld [vmem:[%s519 + $0x10] sm:$0xf]
        %v600 = vld [vmem:[%s519 + $0x14] sm:$0xf]
        %v601 = vld [vmem:[%s519 + $0x18] sm:$0xf]
        %v602 = vld [vmem:[%s519 + $0x1c] sm:$0xf]
        %v603 = vld [vmem:[%s519 + $0x20] sm:$0xf]
        %v604 = vld [vmem:[%s519 + $0x24] sm:$0xf]
        %v605 = vld [vmem:[%s519 + $0x28] sm:$0xf]
        %v606 = vld [vmem:[%s519 + $0x2c] sm:$0xf]
        %v607 = vld [vmem:[%s519 + $0x30] sm:$0xf]
        %v608 = vld [vmem:[%s519 + $0x34] sm:$0xf]
        %v609 = vld [vmem:[%s519 + $0x38] sm:$0xf]
        %v610 = vld [vmem:[%s519 + $0x3c] sm:$0xf]
        %v611 = vld [vmem:[%s526] sm:$0xf]
        %v612 = vld [vmem:[%s526 + $0x4] sm:$0xf]
        %v613 = vld [vmem:[%s526 + $0x8] sm:$0xf]
        %v614 = vld [vmem:[%s526 + $0xc] sm:$0xf]
        %v615 = vld [vmem:[%s526 + $0x10] sm:$0xf]
        %v616 = vld [vmem:[%s526 + $0x14] sm:$0xf]
        %v617 = vld [vmem:[%s526 + $0x18] sm:$0xf]
        %v618 = vld [vmem:[%s526 + $0x1c] sm:$0xf]
        %v619 = vld [vmem:[%s526 + $0x20] sm:$0xf]
        %v620 = vld [vmem:[%s526 + $0x24] sm:$0xf]
        %v621 = vld [vmem:[%s526 + $0x28] sm:$0xf]
        %v622 = vld [vmem:[%s526 + $0x2c] sm:$0xf]
        %v623 = vld [vmem:[%s526 + $0x30] sm:$0xf]
        %v624 = vld [vmem:[%s526 + $0x34] sm:$0xf]
        %v625 = vld [vmem:[%s526 + $0x38] sm:$0xf]
        %v626 = vld [vmem:[%s526 + $0x3c] sm:$0xf]
        %v627 = vlaneseq
        %v628 = vand.u32 %v627, 127
        %vm629 = vcmp.lt.s32.totalorder %v628, 16
        %v646 = vunpack.c.l.b16 %v579
        %v647 = vunpack.c.l.b16 %v580
        %v648 = vunpack.c.l.b16 %v581
        %v649 = vunpack.c.l.b16 %v582
        %v650 = vunpack.c.l.b16 %v583
        %v651 = vunpack.c.l.b16 %v584
        %v652 = vunpack.c.l.b16 %v585
        %v653 = vunpack.c.l.b16 %v586
        %v654 = vunpack.c.l.b16 %v587
        %v655 = vunpack.c.l.b16 %v588
        %v656 = vunpack.c.l.b16 %v589
        %v657 = vunpack.c.l.b16 %v590
        %v658 = vunpack.c.l.b16 %v591
        %v659 = vunpack.c.l.b16 %v592
        %v660 = vunpack.c.l.b16 %v593
        %v661 = vunpack.c.l.b16 %v594
        %v662 = vpack.c.b16 %v647, %v646
        %v663 = vpack.c.b16 %v649, %v648
        %v664 = vpack.c.b16 %v651, %v650
        %v665 = vpack.c.b16 %v653, %v652
        %v666 = vpack.c.b16 %v655, %v654
        %v667 = vpack.c.b16 %v657, %v656
        %v668 = vpack.c.b16 %v659, %v658
        %v669 = vpack.c.b16 %v661, %v660
        %v686 = vunpack.c.l.b16 %v595
        %v687 = vunpack.c.l.b16 %v596
        %v688 = vunpack.c.l.b16 %v597
        %v689 = vunpack.c.l.b16 %v598
        %v690 = vunpack.c.l.b16 %v599
        %v691 = vunpack.c.l.b16 %v600
        %v692 = vunpack.c.l.b16 %v601
        %v693 = vunpack.c.l.b16 %v602
        %v694 = vunpack.c.l.b16 %v603
        %v695 = vunpack.c.l.b16 %v604
        %v696 = vunpack.c.l.b16 %v605
        %v697 = vunpack.c.l.b16 %v606
        %v698 = vunpack.c.l.b16 %v607
        %v699 = vunpack.c.l.b16 %v608
        %v700 = vunpack.c.l.b16 %v609
        %v701 = vunpack.c.l.b16 %v610
        %v702 = vpack.c.b16 %v687, %v686
        %v703 = vpack.c.b16 %v689, %v688
        %v704 = vpack.c.b16 %v691, %v690
        %v705 = vpack.c.b16 %v693, %v692
        %v706 = vpack.c.b16 %v695, %v694
        %v707 = vpack.c.b16 %v697, %v696
        %v708 = vpack.c.b16 %v699, %v698
        %v709 = vpack.c.b16 %v701, %v700
        %vm710 = vcmask 523264
        %v712 = vsel %vm710, %v662, 0
        %v715 = vsel %vm710, %v663, 0
        %v718 = vsel %vm710, %v664, 0
        %v721 = vsel %vm710, %v665, 0
        %v724 = vsel %vm710, %v666, 0
        %v727 = vsel %vm710, %v667, 0
        %v730 = vsel %vm710, %v668, 0
        %v733 = vsel %vm710, %v669, 0
        %v736 = vsel %vm710, %v702, 0
        %v739 = vsel %vm710, %v703, 0
        %v742 = vsel %vm710, %v704, 0
        %v745 = vsel %vm710, %v705, 0
        %v748 = vsel %vm710, %v706, 0
        %v751 = vsel %vm710, %v707, 0
        %v754 = vsel %vm710, %v708, 0
        %v757 = vsel %vm710, %v709, 0
        %759 = vmatprep.subr.bf16.mxu0 0
        %760 = vmatpush1.bf16.xpose.msra.mxu0 %v736
        %761 = vmatprep.subr.bf16.mxu0 0
        %762 = vmatpush1.bf16.xpose.msra.mxu0 %v739
        %763 = vmatprep.subr.bf16.mxu0 0
        %764 = vmatpush1.bf16.xpose.msra.mxu0 %v742
        %765 = vmatprep.subr.bf16.mxu0 0
        %766 = vmatpush1.bf16.xpose.msra.mxu0 %v745
        %767 = vmatprep.subr.bf16.mxu0 0
        %768 = vmatpush1.bf16.xpose.msra.mxu0 %v748
        %769 = vmatprep.subr.bf16.mxu0 0
        %770 = vmatpush1.bf16.xpose.msra.mxu0 %v751
        %771 = vmatprep.subr.bf16.mxu0 0
        %772 = vmatpush1.bf16.xpose.msra.mxu0 %v754
        %773 = vmatprep.subr.bf16.mxu0 0
        %774 = vmatpush1.bf16.xpose.msra.mxu0 %v757
        %775 = vmatprep.subr.bf16.mxu0 0
        %776 = vmatpush1.bf16.xpose.msra.mxu0 0
        %777 = vmatprep.subr.bf16.mxu0 0
        %778 = vmatpush1.bf16.xpose.msra.mxu0 0
        %779 = vmatprep.subr.bf16.mxu0 0
        %780 = vmatpush1.bf16.xpose.msra.mxu0 0
        %781 = vmatprep.subr.bf16.mxu0 0
        %782 = vmatpush1.bf16.xpose.msra.mxu0 0
        %783 = vmatprep.subr.bf16.mxu0 0
        %784 = vmatpush1.bf16.xpose.msra.mxu0 0
        %785 = vmatprep.subr.bf16.mxu0 0
        %786 = vmatpush1.bf16.xpose.msra.mxu0 0
        %787 = vmatprep.subr.bf16.mxu0 0
        %788 = vmatpush1.bf16.xpose.msra.mxu0 0
        %789 = vmatprep.subr.bf16.mxu0 0
        %790 = vmatpush1.bf16.xpose.msra.mxu0 0
        %791 = vmatprep.mubr.bf16.mxu0 0
        %792 = vmatmul.mubr.bf16.gmra.mrb[0].mxu0 %v712
        %v793 = vpop.f32.mrb[0].mxu0
        %v794 = vadd.f32 0.0, %v793
        %v795 = vpop.f32.mrb[0].mxu0
        %v796 = vpop.f32.mrb[0].mxu0
        %v797 = vadd.f32 0.0, %v796
        %v798 = vpop.f32.mrb[0].mxu0
        %799 = vmatprep.mubr.bf16.mxu0 0
        %800 = vmatmul.mubr.bf16.gmra.mrb[0].mxu0 %v715
        %v801 = vpop.f32.mrb[0].mxu0
        %v802 = vadd.f32 0.0, %v801
        %v803 = vpop.f32.mrb[0].mxu0
        %v804 = vpop.f32.mrb[0].mxu0
        %v805 = vadd.f32 0.0, %v804
        %v806 = vpop.f32.mrb[0].mxu0
        %807 = vmatprep.mubr.bf16.mxu0 0
        %808 = vmatmul.mubr.bf16.gmra.mrb[0].mxu0 %v718
        %v809 = vpop.f32.mrb[0].mxu0
        %v810 = vadd.f32 0.0, %v809
        %v811 = vpop.f32.mrb[0].mxu0
        %v812 = vpop.f32.mrb[0].mxu0
        %v813 = vadd.f32 0.0, %v812
        %v814 = vpop.f32.mrb[0].mxu0
        %815 = vmatprep.mubr.bf16.mxu0 0
        %816 = vmatmul.mubr.bf16.gmra.mrb[0].mxu0 %v721
        %v817 = vpop.f32.mrb[0].mxu0
        %v818 = vadd.f32 0.0, %v817
        %v819 = vpop.f32.mrb[0].mxu0
        %v820 = vpop.f32.mrb[0].mxu0
        %v821 = vadd.f32 0.0, %v820
        %v822 = vpop.f32.mrb[0].mxu0
        %823 = vmatprep.mubr.bf16.mxu0 0
        %824 = vmatmul.mubr.bf16.gmra.mrb[0].mxu0 %v724
        %v825 = vpop.f32.mrb[0].mxu0
        %v826 = vadd.f32 0.0, %v825
        %v827 = vpop.f32.mrb[0].mxu0
        %v828 = vpop.f32.mrb[0].mxu0
        %v829 = vadd.f32 0.0, %v828
        %v830 = vpop.f32.mrb[0].mxu0
        %831 = vmatprep.mubr.bf16.mxu0 0
        %832 = vmatmul.mubr.bf16.gmra.mrb[0].mxu0 %v727
        %v833 = vpop.f32.mrb[0].mxu0
        %v834 = vadd.f32 0.0, %v833
        %v835 = vpop.f32.mrb[0].mxu0
        %v836 = vpop.f32.mrb[0].mxu0
        %v837 = vadd.f32 0.0, %v836
        %v838 = vpop.f32.mrb[0].mxu0
        %839 = vmatprep.mubr.bf16.mxu0 0
        %840 = vmatmul.mubr.bf16.gmra.mrb[0].mxu0 %v730
        %v841 = vpop.f32.mrb[0].mxu0
        %v842 = vadd.f32 0.0, %v841
        %v843 = vpop.f32.mrb[0].mxu0
        %v844 = vpop.f32.mrb[0].mxu0
        %v845 = vadd.f32 0.0, %v844
        %v846 = vpop.f32.mrb[0].mxu0
        %847 = vmatprep.mubr.bf16.mxu0 0
        %848 = vmatmul.mubr.bf16.gmra.mrb[0].mxu0 %v733
        %v849 = vpop.f32.mrb[0].mxu0
        %v850 = vadd.f32 0.0, %v849
        %v851 = vpop.f32.mrb[0].mxu0
        %v852 = vpop.f32.mrb[0].mxu0
        %v853 = vadd.f32 0.0, %v852
        %v854 = vpop.f32.mrb[0].mxu0
        %855 = vdwg.mxu0
        %v856 = vsel %vm629, %v794, -1e+30
        %v857 = vsel %vm629, %v797, -1e+30
        %v858 = vsel %vm629, %v802, -1e+30
        %v859 = vsel %vm629, %v805, -1e+30
        %v860 = vsel %vm629, %v810, -1e+30
        %v861 = vsel %vm629, %v813, -1e+30
        %v862 = vsel %vm629, %v818, -1e+30
        %v863 = vsel %vm629, %v821, -1e+30
        %v864 = vsel %vm629, %v826, -1e+30
        %v865 = vsel %vm629, %v829, -1e+30
        %v866 = vsel %vm629, %v834, -1e+30
        %v867 = vsel %vm629, %v837, -1e+30
        %v868 = vsel %vm629, %v842, -1e+30
        %v869 = vsel %vm629, %v845, -1e+30
        %v870 = vsel %vm629, %v850, -1e+30
        %v871 = vsel %vm629, %v853, -1e+30
        %872 = vmax.xlane.f32.xlu0 %v856
        %v873 = vpop.xlane.xlu0 %872
        %874 = vmax.xlane.f32.xlu0 %v857
        %v875 = vpop.xlane.xlu0 %874
        %876 = vmax.xlane.f32.xlu0 %v858
        %v877 = vpop.xlane.xlu0 %876
        %878 = vmax.xlane.f32.xlu0 %v859
        %v879 = vpop.xlane.xlu0 %878
        %880 = vmax.xlane.f32.xlu0 %v860
        %v881 = vpop.xlane.xlu0 %880
        %882 = vmax.xlane.f32.xlu0 %v861
        %v883 = vpop.xlane.xlu0 %882
        %884 = vmax.xlane.f32.xlu0 %v862
        %v885 = vpop.xlane.xlu0 %884
        %886 = vmax.xlane.f32.xlu0 %v863
        %v887 = vpop.xlane.xlu0 %886
        %888 = vmax.xlane.f32.xlu0 %v864
        %v889 = vpop.xlane.xlu0 %888
        %890 = vmax.xlane.f32.xlu0 %v865
        %v891 = vpop.xlane.xlu0 %890
        %892 = vmax.xlane.f32.xlu0 %v866
        %v893 = vpop.xlane.xlu0 %892
        %894 = vmax.xlane.f32.xlu0 %v867
        %v895 = vpop.xlane.xlu0 %894
        %896 = vmax.xlane.f32.xlu0 %v868
        %v897 = vpop.xlane.xlu0 %896
        %898 = vmax.xlane.f32.xlu0 %v869
        %v899 = vpop.xlane.xlu0 %898
        %900 = vmax.xlane.f32.xlu0 %v870
        %v901 = vpop.xlane.xlu0 %900
        %902 = vmax.xlane.f32.xlu0 %v871
        %v903 = vpop.xlane.xlu0 %902
        %v904 = vsub.f32 %v856, %v873
        %v905 = vsub.f32 %v857, %v875
        %v906 = vsub.f32 %v858, %v877
        %v907 = vsub.f32 %v859, %v879
        %v908 = vsub.f32 %v860, %v881
        %v909 = vsub.f32 %v861, %v883
        %v910 = vsub.f32 %v862, %v885
        %v911 = vsub.f32 %v863, %v887
        %v912 = vsub.f32 %v864, %v889
        %v913 = vsub.f32 %v865, %v891
        %v914 = vsub.f32 %v866, %v893
        %v915 = vsub.f32 %v867, %v895
        %v916 = vsub.f32 %v868, %v897
        %v917 = vsub.f32 %v869, %v899
        %v918 = vsub.f32 %v870, %v901
        %v919 = vsub.f32 %v871, %v903
        %v920 = vmul.f32 %v904, 1.442695
        %v921 = vpow.pop %v920
        %v922 = vmul.f32 %v905, 1.442695
        %v923 = vpow.pop %v922
        %v924 = vmul.f32 %v906, 1.442695
        %v925 = vpow.pop %v924
        %v926 = vmul.f32 %v907, 1.442695
        %v927 = vpow.pop %v926
        %v928 = vmul.f32 %v908, 1.442695
        %v929 = vpow.pop %v928
        %v930 = vmul.f32 %v909, 1.442695
        %v931 = vpow.pop %v930
        %v932 = vmul.f32 %v910, 1.442695
        %v933 = vpow.pop %v932
        %v934 = vmul.f32 %v911, 1.442695
        %v935 = vpow.pop %v934
        %v936 = vmul.f32 %v912, 1.442695
        %v937 = vpow.pop %v936
        %v938 = vmul.f32 %v913, 1.442695
        %v939 = vpow.pop %v938
        %v940 = vmul.f32 %v914, 1.442695
        %v941 = vpow.pop %v940
        %v942 = vmul.f32 %v915, 1.442695
        %v943 = vpow.pop %v942
        %v944 = vmul.f32 %v916, 1.442695
        %v945 = vpow.pop %v944
        %v946 = vmul.f32 %v917, 1.442695
        %v947 = vpow.pop %v946
        %v948 = vmul.f32 %v918, 1.442695
        %v949 = vpow.pop %v948
        %v950 = vmul.f32 %v919, 1.442695
        %v951 = vpow.pop %v950
        %952 = vadd.xlane.f32.xlu0 %v921
        %v953 = vpop.xlane.xlu0 %952
        %954 = vadd.xlane.f32.xlu0 %v923
        %v955 = vpop.xlane.xlu0 %954
        %956 = vadd.xlane.f32.xlu0 %v925
        %v957 = vpop.xlane.xlu0 %956
        %958 = vadd.xlane.f32.xlu0 %v927
        %v959 = vpop.xlane.xlu0 %958
        %960 = vadd.xlane.f32.xlu0 %v929
        %v961 = vpop.xlane.xlu0 %960
        %962 = vadd.xlane.f32.xlu0 %v931
        %v963 = vpop.xlane.xlu0 %962
        %964 = vadd.xlane.f32.xlu0 %v933
        %v965 = vpop.xlane.xlu0 %964
        %966 = vadd.xlane.f32.xlu0 %v935
        %v967 = vpop.xlane.xlu0 %966
        %968 = vadd.xlane.f32.xlu0 %v937
        %v969 = vpop.xlane.xlu0 %968
        %970 = vadd.xlane.f32.xlu0 %v939
        %v971 = vpop.xlane.xlu0 %970
        %972 = vadd.xlane.f32.xlu0 %v941
        %v973 = vpop.xlane.xlu0 %972
        %974 = vadd.xlane.f32.xlu0 %v943
        %v975 = vpop.xlane.xlu0 %974
        %976 = vadd.xlane.f32.xlu0 %v945
        %v977 = vpop.xlane.xlu0 %976
        %978 = vadd.xlane.f32.xlu0 %v947
        %v979 = vpop.xlane.xlu0 %978
        %980 = vadd.xlane.f32.xlu0 %v949
        %v981 = vpop.xlane.xlu0 %980
        %982 = vadd.xlane.f32.xlu0 %v951
        %v983 = vpop.xlane.xlu0 %982
        %v984 = vpack.c.bf16 %v923, %v921
        %v985 = vpack.c.bf16 %v927, %v925
        %v986 = vpack.c.bf16 %v931, %v929
        %v987 = vpack.c.bf16 %v935, %v933
        %v988 = vpack.c.bf16 %v939, %v937
        %v989 = vpack.c.bf16 %v943, %v941
        %v990 = vpack.c.bf16 %v947, %v945
        %v991 = vpack.c.bf16 %v951, %v949
        %v1008 = vunpack.c.l.b16 %v611
        %v1009 = vunpack.c.l.b16 %v612
        %v1010 = vunpack.c.l.b16 %v613
        %v1011 = vunpack.c.l.b16 %v614
        %v1012 = vunpack.c.l.b16 %v615
        %v1013 = vunpack.c.l.b16 %v616
        %v1014 = vunpack.c.l.b16 %v617
        %v1015 = vunpack.c.l.b16 %v618
        %v1016 = vunpack.c.l.b16 %v619
        %v1017 = vunpack.c.l.b16 %v620
        %v1018 = vunpack.c.l.b16 %v621
        %v1019 = vunpack.c.l.b16 %v622
        %v1020 = vunpack.c.l.b16 %v623
        %v1021 = vunpack.c.l.b16 %v624
        %v1022 = vunpack.c.l.b16 %v625
        %v1023 = vunpack.c.l.b16 %v626
        %v1024 = vpack.c.b16 %v1009, %v1008
        %v1025 = vpack.c.b16 %v1011, %v1010
        %v1026 = vpack.c.b16 %v1013, %v1012
        %v1027 = vpack.c.b16 %v1015, %v1014
        %v1028 = vpack.c.b16 %v1017, %v1016
        %v1029 = vpack.c.b16 %v1019, %v1018
        %v1030 = vpack.c.b16 %v1021, %v1020
        %v1031 = vpack.c.b16 %v1023, %v1022
        %1040 = vmatprep.subr.bf16.mxu0 0
        %1041 = vmatpush1.bf16.msra.mxu0 %v1024
        %1042 = vmatprep.subr.bf16.mxu0 0
        %1043 = vmatpush1.bf16.msra.mxu0 %v1025
        %1044 = vmatprep.subr.bf16.mxu0 0
        %1045 = vmatpush1.bf16.msra.mxu0 %v1026
        %1046 = vmatprep.subr.bf16.mxu0 0
        %1047 = vmatpush1.bf16.msra.mxu0 %v1027
        %1048 = vmatprep.subr.bf16.mxu0 0
        %1049 = vmatpush1.bf16.msra.mxu0 %v1028
        %1050 = vmatprep.subr.bf16.mxu0 0
        %1051 = vmatpush1.bf16.msra.mxu0 %v1029
        %1052 = vmatprep.subr.bf16.mxu0 0
        %1053 = vmatpush1.bf16.msra.mxu0 %v1030
        %1054 = vmatprep.subr.bf16.mxu0 0
        %1055 = vmatpush1.bf16.msra.mxu0 %v1031
        %1056 = vmatprep.subr.bf16.mxu0 0
        %1057 = vmatpush1.bf16.msra.mxu0 0
        %1058 = vmatprep.subr.bf16.mxu0 0
        %1059 = vmatpush1.bf16.msra.mxu0 0
        %1060 = vmatprep.subr.bf16.mxu0 0
        %1061 = vmatpush1.bf16.msra.mxu0 0
        %1062 = vmatprep.subr.bf16.mxu0 0
        %1063 = vmatpush1.bf16.msra.mxu0 0
        %1064 = vmatprep.subr.bf16.mxu0 0
        %1065 = vmatpush1.bf16.msra.mxu0 0
        %1066 = vmatprep.subr.bf16.mxu0 0
        %1067 = vmatpush1.bf16.msra.mxu0 0
        %1068 = vmatprep.subr.bf16.mxu0 0
        %1069 = vmatpush1.bf16.msra.mxu0 0
        %1070 = vmatprep.subr.bf16.mxu0 0
        %1071 = vmatpush1.bf16.msra.mxu0 0
        %1072 = vmatprep.mubr.bf16.mxu0 0
        %1073 = vmatmul.mubr.bf16.gmra.mrb[0].mxu0 %v984
        %v1074 = vpop.f32.mrb[0].mxu0
        %v1075 = vadd.f32 0.0, %v1074
        %v1076 = vpop.f32.mrb[0].mxu0
        %v1077 = vpop.f32.mrb[0].mxu0
        %v1078 = vadd.f32 0.0, %v1077
        %v1079 = vpop.f32.mrb[0].mxu0
        %1080 = vmatprep.mubr.bf16.mxu0 0
        %1081 = vmatmul.mubr.bf16.gmra.mrb[0].mxu0 %v985
        %v1082 = vpop.f32.mrb[0].mxu0
        %v1083 = vadd.f32 0.0, %v1082
        %v1084 = vpop.f32.mrb[0].mxu0
        %v1085 = vpop.f32.mrb[0].mxu0
        %v1086 = vadd.f32 0.0, %v1085
        %v1087 = vpop.f32.mrb[0].mxu0
        %1088 = vmatprep.mubr.bf16.mxu0 0
        %1089 = vmatmul.mubr.bf16.gmra.mrb[0].mxu0 %v986
        %v1090 = vpop.f32.mrb[0].mxu0
        %v1091 = vadd.f32 0.0, %v1090
        %v1092 = vpop.f32.mrb[0].mxu0
        %v1093 = vpop.f32.mrb[0].mxu0
        %v1094 = vadd.f32 0.0, %v1093
        %v1095 = vpop.f32.mrb[0].mxu0
        %1096 = vmatprep.mubr.bf16.mxu0 0
        %1097 = vmatmul.mubr.bf16.gmra.mrb[0].mxu0 %v987
        %v1098 = vpop.f32.mrb[0].mxu0
        %v1099 = vadd.f32 0.0, %v1098
        %v1100 = vpop.f32.mrb[0].mxu0
        %v1101 = vpop.f32.mrb[0].mxu0
        %v1102 = vadd.f32 0.0, %v1101
        %v1103 = vpop.f32.mrb[0].mxu0
        %1104 = vmatprep.mubr.bf16.mxu0 0
        %1105 = vmatmul.mubr.bf16.gmra.mrb[0].mxu0 %v988
        %v1106 = vpop.f32.mrb[0].mxu0
        %v1107 = vadd.f32 0.0, %v1106
        %v1108 = vpop.f32.mrb[0].mxu0
        %v1109 = vpop.f32.mrb[0].mxu0
        %v1110 = vadd.f32 0.0, %v1109
        %v1111 = vpop.f32.mrb[0].mxu0
        %1112 = vmatprep.mubr.bf16.mxu0 0
        %1113 = vmatmul.mubr.bf16.gmra.mrb[0].mxu0 %v989
        %v1114 = vpop.f32.mrb[0].mxu0
        %v1115 = vadd.f32 0.0, %v1114
        %v1116 = vpop.f32.mrb[0].mxu0
        %v1117 = vpop.f32.mrb[0].mxu0
        %v1118 = vadd.f32 0.0, %v1117
        %v1119 = vpop.f32.mrb[0].mxu0
        %1120 = vmatprep.mubr.bf16.mxu0 0
        %1121 = vmatmul.mubr.bf16.gmra.mrb[0].mxu0 %v990
        %v1122 = vpop.f32.mrb[0].mxu0
        %v1123 = vadd.f32 0.0, %v1122
        %v1124 = vpop.f32.mrb[0].mxu0
        %v1125 = vpop.f32.mrb[0].mxu0
        %v1126 = vadd.f32 0.0, %v1125
        %v1127 = vpop.f32.mrb[0].mxu0
        %1128 = vmatprep.mubr.bf16.mxu0 0
        %1129 = vmatmul.mubr.bf16.gmra.mrb[0].mxu0 %v991
        %v1130 = vpop.f32.mrb[0].mxu0
        %v1131 = vadd.f32 0.0, %v1130
        %v1132 = vpop.f32.mrb[0].mxu0
        %v1133 = vpop.f32.mrb[0].mxu0
        %v1134 = vadd.f32 0.0, %v1133
        %v1135 = vpop.f32.mrb[0].mxu0
        %1136 = vdwg.mxu0
        %v1137 = vrcp.pop %v953
        %v1138 = vrcp.pop %v955
        %v1139 = vrcp.pop %v957
        %v1140 = vrcp.pop %v959
        %v1141 = vrcp.pop %v961
        %v1142 = vrcp.pop %v963
        %v1143 = vrcp.pop %v965
        %v1144 = vrcp.pop %v967
        %v1145 = vrcp.pop %v969
        %v1146 = vrcp.pop %v971
        %v1147 = vrcp.pop %v973
        %v1148 = vrcp.pop %v975
        %v1149 = vrcp.pop %v977
        %v1150 = vrcp.pop %v979
        %v1151 = vrcp.pop %v981
        %v1152 = vrcp.pop %v983
        %v1153 = vmul.f32 %v1075, %v1137
        %v1154 = vmul.f32 %v1078, %v1138
        %v1155 = vmul.f32 %v1083, %v1139
        %v1156 = vmul.f32 %v1086, %v1140
        %v1157 = vmul.f32 %v1091, %v1141
        %v1158 = vmul.f32 %v1094, %v1142
        %v1159 = vmul.f32 %v1099, %v1143
        %v1160 = vmul.f32 %v1102, %v1144
        %v1161 = vmul.f32 %v1107, %v1145
        %v1162 = vmul.f32 %v1110, %v1146
        %v1163 = vmul.f32 %v1115, %v1147
        %v1164 = vmul.f32 %v1118, %v1148
        %v1165 = vmul.f32 %v1123, %v1149
        %v1166 = vmul.f32 %v1126, %v1150
        %v1167 = vmul.f32 %v1131, %v1151
        %v1168 = vmul.f32 %v1134, %v1152
        %1169 = vrot.lane.b32.xlu0 %v662, 64
        %v1170 = vpop.permute.xlu0 %1169
        %1171 = vrot.lane.b32.xlu0 %v663, 64
        %v1172 = vpop.permute.xlu0 %1171
        %1173 = vrot.lane.b32.xlu0 %v664, 64
        %v1174 = vpop.permute.xlu0 %1173
        %1175 = vrot.lane.b32.xlu0 %v665, 64
        %v1176 = vpop.permute.xlu0 %1175
        %1177 = vrot.lane.b32.xlu0 %v666, 64
        %v1178 = vpop.permute.xlu0 %1177
        %1179 = vrot.lane.b32.xlu0 %v667, 64
        %v1180 = vpop.permute.xlu0 %1179
        %1181 = vrot.lane.b32.xlu0 %v668, 64
        %v1182 = vpop.permute.xlu0 %1181
        %1183 = vrot.lane.b32.xlu0 %v669, 64
        %v1184 = vpop.permute.xlu0 %1183
        %1185 = vrot.lane.b32.xlu0 %v702, 64
        %v1186 = vpop.permute.xlu0 %1185
        %1187 = vrot.lane.b32.xlu0 %v703, 64
        %v1188 = vpop.permute.xlu0 %1187
        %1189 = vrot.lane.b32.xlu0 %v704, 64
        %v1190 = vpop.permute.xlu0 %1189
        %1191 = vrot.lane.b32.xlu0 %v705, 64
        %v1192 = vpop.permute.xlu0 %1191
        %1193 = vrot.lane.b32.xlu0 %v706, 64
        %v1194 = vpop.permute.xlu0 %1193
        %1195 = vrot.lane.b32.xlu0 %v707, 64
        %v1196 = vpop.permute.xlu0 %1195
        %1197 = vrot.lane.b32.xlu0 %v708, 64
        %v1198 = vpop.permute.xlu0 %1197
        %1199 = vrot.lane.b32.xlu0 %v709, 64
        %v1200 = vpop.permute.xlu0 %1199
        %v1202 = vsel %vm710, %v1170, 0
        %v1205 = vsel %vm710, %v1172, 0
        %v1208 = vsel %vm710, %v1174, 0
        %v1211 = vsel %vm710, %v1176, 0
        %v1214 = vsel %vm710, %v1178, 0
        %v1217 = vsel %vm710, %v1180, 0
        %v1220 = vsel %vm710, %v1182, 0
        %v1223 = vsel %vm710, %v1184, 0
        %v1226 = vsel %vm710, %v1186, 0
        %v1229 = vsel %vm710, %v1188, 0
        %v1232 = vsel %vm710, %v1190, 0
        %v1235 = vsel %vm710, %v1192, 0
        %v1238 = vsel %vm710, %v1194, 0
        %v1241 = vsel %vm710, %v1196, 0
        %v1244 = vsel %vm710, %v1198, 0
        %v1247 = vsel %vm710, %v1200, 0
        %1249 = vmatprep.subr.bf16.mxu0 0
        %1250 = vmatpush1.bf16.xpose.msra.mxu0 %v1226
        %1251 = vmatprep.subr.bf16.mxu0 0
        %1252 = vmatpush1.bf16.xpose.msra.mxu0 %v1229
        %1253 = vmatprep.subr.bf16.mxu0 0
        %1254 = vmatpush1.bf16.xpose.msra.mxu0 %v1232
        %1255 = vmatprep.subr.bf16.mxu0 0
        %1256 = vmatpush1.bf16.xpose.msra.mxu0 %v1235
        %1257 = vmatprep.subr.bf16.mxu0 0
        %1258 = vmatpush1.bf16.xpose.msra.mxu0 %v1238
        %1259 = vmatprep.subr.bf16.mxu0 0
        %1260 = vmatpush1.bf16.xpose.msra.mxu0 %v1241
        %1261 = vmatprep.subr.bf16.mxu0 0
        %1262 = vmatpush1.bf16.xpose.msra.mxu0 %v1244
        %1263 = vmatprep.subr.bf16.mxu0 0
        %1264 = vmatpush1.bf16.xpose.msra.mxu0 %v1247
        %1265 = vmatprep.subr.bf16.mxu0 0
        %1266 = vmatpush1.bf16.xpose.msra.mxu0 0
        %1267 = vmatprep.subr.bf16.mxu0 0
        %1268 = vmatpush1.bf16.xpose.msra.mxu0 0
        %1269 = vmatprep.subr.bf16.mxu0 0
        %1270 = vmatpush1.bf16.xpose.msra.mxu0 0
        %1271 = vmatprep.subr.bf16.mxu0 0
        %1272 = vmatpush1.bf16.xpose.msra.mxu0 0
        %1273 = vmatprep.subr.bf16.mxu0 0
        %1274 = vmatpush1.bf16.xpose.msra.mxu0 0
        %1275 = vmatprep.subr.bf16.mxu0 0
        %1276 = vmatpush1.bf16.xpose.msra.mxu0 0
        %1277 = vmatprep.subr.bf16.mxu0 0
        %1278 = vmatpush1.bf16.xpose.msra.mxu0 0
        %1279 = vmatprep.subr.bf16.mxu0 0
        %1280 = vmatpush1.bf16.xpose.msra.mxu0 0
        %1281 = vmatprep.mubr.bf16.mxu0 0
        %1282 = vmatmul.mubr.bf16.gmra.mrb[0].mxu0 %v1202
        %v1283 = vpop.f32.mrb[0].mxu0
        %v1284 = vadd.f32 0.0, %v1283
        %v1285 = vpop.f32.mrb[0].mxu0
        %v1286 = vpop.f32.mrb[0].mxu0
        %v1287 = vadd.f32 0.0, %v1286
        %v1288 = vpop.f32.mrb[0].mxu0
        %1289 = vmatprep.mubr.bf16.mxu0 0
        %1290 = vmatmul.mubr.bf16.gmra.mrb[0].mxu0 %v1205
        %v1291 = vpop.f32.mrb[0].mxu0
        %v1292 = vadd.f32 0.0, %v1291
        %v1293 = vpop.f32.mrb[0].mxu0
        %v1294 = vpop.f32.mrb[0].mxu0
        %v1295 = vadd.f32 0.0, %v1294
        %v1296 = vpop.f32.mrb[0].mxu0
        %1297 = vmatprep.mubr.bf16.mxu0 0
        %1298 = vmatmul.mubr.bf16.gmra.mrb[0].mxu0 %v1208
        %v1299 = vpop.f32.mrb[0].mxu0
        %v1300 = vadd.f32 0.0, %v1299
        %v1301 = vpop.f32.mrb[0].mxu0
        %v1302 = vpop.f32.mrb[0].mxu0
        %v1303 = vadd.f32 0.0, %v1302
        %v1304 = vpop.f32.mrb[0].mxu0
        %1305 = vmatprep.mubr.bf16.mxu0 0
        %1306 = vmatmul.mubr.bf16.gmra.mrb[0].mxu0 %v1211
        %v1307 = vpop.f32.mrb[0].mxu0
        %v1308 = vadd.f32 0.0, %v1307
        %v1309 = vpop.f32.mrb[0].mxu0
        %v1310 = vpop.f32.mrb[0].mxu0
        %v1311 = vadd.f32 0.0, %v1310
        %v1312 = vpop.f32.mrb[0].mxu0
        %1313 = vmatprep.mubr.bf16.mxu0 0
        %1314 = vmatmul.mubr.bf16.gmra.mrb[0].mxu0 %v1214
        %v1315 = vpop.f32.mrb[0].mxu0
        %v1316 = vadd.f32 0.0, %v1315
        %v1317 = vpop.f32.mrb[0].mxu0
        %v1318 = vpop.f32.mrb[0].mxu0
        %v1319 = vadd.f32 0.0, %v1318
        %v1320 = vpop.f32.mrb[0].mxu0
        %1321 = vmatprep.mubr.bf16.mxu0 0
        %1322 = vmatmul.mubr.bf16.gmra.mrb[0].mxu0 %v1217
        %v1323 = vpop.f32.mrb[0].mxu0
        %v1324 = vadd.f32 0.0, %v1323
        %v1325 = vpop.f32.mrb[0].mxu0
        %v1326 = vpop.f32.mrb[0].mxu0
        %v1327 = vadd.f32 0.0, %v1326
        %v1328 = vpop.f32.mrb[0].mxu0
        %1329 = vmatprep.mubr.bf16.mxu0 0
        %1330 = vmatmul.mubr.bf16.gmra.mrb[0].mxu0 %v1220
        %v1331 = vpop.f32.mrb[0].mxu0
        %v1332 = vadd.f32 0.0, %v1331
        %v1333 = vpop.f32.mrb[0].mxu0
        %v1334 = vpop.f32.mrb[0].mxu0
        %v1335 = vadd.f32 0.0, %v1334
        %v1336 = vpop.f32.mrb[0].mxu0
        %1337 = vmatprep.mubr.bf16.mxu0 0
        %1338 = vmatmul.mubr.bf16.gmra.mrb[0].mxu0 %v1223
        %v1339 = vpop.f32.mrb[0].mxu0
        %v1340 = vadd.f32 0.0, %v1339
        %v1341 = vpop.f32.mrb[0].mxu0
        %v1342 = vpop.f32.mrb[0].mxu0
        %v1343 = vadd.f32 0.0, %v1342
        %v1344 = vpop.f32.mrb[0].mxu0
        %1345 = vdwg.mxu0
        %v1346 = vsel %vm629, %v1284, -1e+30
        %v1347 = vsel %vm629, %v1287, -1e+30
        %v1348 = vsel %vm629, %v1292, -1e+30
        %v1349 = vsel %vm629, %v1295, -1e+30
        %v1350 = vsel %vm629, %v1300, -1e+30
        %v1351 = vsel %vm629, %v1303, -1e+30
        %v1352 = vsel %vm629, %v1308, -1e+30
        %v1353 = vsel %vm629, %v1311, -1e+30
        %v1354 = vsel %vm629, %v1316, -1e+30
        %v1355 = vsel %vm629, %v1319, -1e+30
        %v1356 = vsel %vm629, %v1324, -1e+30
        %v1357 = vsel %vm629, %v1327, -1e+30
        %v1358 = vsel %vm629, %v1332, -1e+30
        %v1359 = vsel %vm629, %v1335, -1e+30
        %v1360 = vsel %vm629, %v1340, -1e+30
        %v1361 = vsel %vm629, %v1343, -1e+30
        %1362 = vmax.xlane.f32.xlu0 %v1346
        %v1363 = vpop.xlane.xlu0 %1362
        %1364 = vmax.xlane.f32.xlu0 %v1347
        %v1365 = vpop.xlane.xlu0 %1364
        %1366 = vmax.xlane.f32.xlu0 %v1348
        %v1367 = vpop.xlane.xlu0 %1366
        %1368 = vmax.xlane.f32.xlu0 %v1349
        %v1369 = vpop.xlane.xlu0 %1368
        %1370 = vmax.xlane.f32.xlu0 %v1350
        %v1371 = vpop.xlane.xlu0 %1370
        %1372 = vmax.xlane.f32.xlu0 %v1351
        %v1373 = vpop.xlane.xlu0 %1372
        %1374 = vmax.xlane.f32.xlu0 %v1352
        %v1375 = vpop.xlane.xlu0 %1374
        %1376 = vmax.xlane.f32.xlu0 %v1353
        %v1377 = vpop.xlane.xlu0 %1376
        %1378 = vmax.xlane.f32.xlu0 %v1354
        %v1379 = vpop.xlane.xlu0 %1378
        %1380 = vmax.xlane.f32.xlu0 %v1355
        %v1381 = vpop.xlane.xlu0 %1380
        %1382 = vmax.xlane.f32.xlu0 %v1356
        %v1383 = vpop.xlane.xlu0 %1382
        %1384 = vmax.xlane.f32.xlu0 %v1357
        %v1385 = vpop.xlane.xlu0 %1384
        %1386 = vmax.xlane.f32.xlu0 %v1358
        %v1387 = vpop.xlane.xlu0 %1386
        %1388 = vmax.xlane.f32.xlu0 %v1359
        %v1389 = vpop.xlane.xlu0 %1388
        %1390 = vmax.xlane.f32.xlu0 %v1360
        %v1391 = vpop.xlane.xlu0 %1390
        %1392 = vmax.xlane.f32.xlu0 %v1361
        %v1393 = vpop.xlane.xlu0 %1392
        %v1394 = vsub.f32 %v1346, %v1363
        %v1395 = vsub.f32 %v1347, %v1365
        %v1396 = vsub.f32 %v1348, %v1367
        %v1397 = vsub.f32 %v1349, %v1369
        %v1398 = vsub.f32 %v1350, %v1371
        %v1399 = vsub.f32 %v1351, %v1373
        %v1400 = vsub.f32 %v1352, %v1375
        %v1401 = vsub.f32 %v1353, %v1377
        %v1402 = vsub.f32 %v1354, %v1379
        %v1403 = vsub.f32 %v1355, %v1381
        %v1404 = vsub.f32 %v1356, %v1383
        %v1405 = vsub.f32 %v1357, %v1385
        %v1406 = vsub.f32 %v1358, %v1387
        %v1407 = vsub.f32 %v1359, %v1389
        %v1408 = vsub.f32 %v1360, %v1391
        %v1409 = vsub.f32 %v1361, %v1393
        %v1410 = vmul.f32 %v1394, 1.442695
        %v1411 = vpow.pop %v1410
        %v1412 = vmul.f32 %v1395, 1.442695
        %v1413 = vpow.pop %v1412
        %v1414 = vmul.f32 %v1396, 1.442695
        %v1415 = vpow.pop %v1414
        %v1416 = vmul.f32 %v1397, 1.442695
        %v1417 = vpow.pop %v1416
        %v1418 = vmul.f32 %v1398, 1.442695
        %v1419 = vpow.pop %v1418
        %v1420 = vmul.f32 %v1399, 1.442695
        %v1421 = vpow.pop %v1420
        %v1422 = vmul.f32 %v1400, 1.442695
        %v1423 = vpow.pop %v1422
        %v1424 = vmul.f32 %v1401, 1.442695
        %v1425 = vpow.pop %v1424
        %v1426 = vmul.f32 %v1402, 1.442695
        %v1427 = vpow.pop %v1426
        %v1428 = vmul.f32 %v1403, 1.442695
        %v1429 = vpow.pop %v1428
        %v1430 = vmul.f32 %v1404, 1.442695
        %v1431 = vpow.pop %v1430
        %v1432 = vmul.f32 %v1405, 1.442695
        %v1433 = vpow.pop %v1432
        %v1434 = vmul.f32 %v1406, 1.442695
        %v1435 = vpow.pop %v1434
        %v1436 = vmul.f32 %v1407, 1.442695
        %v1437 = vpow.pop %v1436
        %v1438 = vmul.f32 %v1408, 1.442695
        %v1439 = vpow.pop %v1438
        %v1440 = vmul.f32 %v1409, 1.442695
        %v1441 = vpow.pop %v1440
        %1442 = vadd.xlane.f32.xlu0 %v1411
        %v1443 = vpop.xlane.xlu0 %1442
        %1444 = vadd.xlane.f32.xlu0 %v1413
        %v1445 = vpop.xlane.xlu0 %1444
        %1446 = vadd.xlane.f32.xlu0 %v1415
        %v1447 = vpop.xlane.xlu0 %1446
        %1448 = vadd.xlane.f32.xlu0 %v1417
        %v1449 = vpop.xlane.xlu0 %1448
        %1450 = vadd.xlane.f32.xlu0 %v1419
        %v1451 = vpop.xlane.xlu0 %1450
        %1452 = vadd.xlane.f32.xlu0 %v1421
        %v1453 = vpop.xlane.xlu0 %1452
        %1454 = vadd.xlane.f32.xlu0 %v1423
        %v1455 = vpop.xlane.xlu0 %1454
        %1456 = vadd.xlane.f32.xlu0 %v1425
        %v1457 = vpop.xlane.xlu0 %1456
        %1458 = vadd.xlane.f32.xlu0 %v1427
        %v1459 = vpop.xlane.xlu0 %1458
        %1460 = vadd.xlane.f32.xlu0 %v1429
        %v1461 = vpop.xlane.xlu0 %1460
        %1462 = vadd.xlane.f32.xlu0 %v1431
        %v1463 = vpop.xlane.xlu0 %1462
        %1464 = vadd.xlane.f32.xlu0 %v1433
        %v1465 = vpop.xlane.xlu0 %1464
        %1466 = vadd.xlane.f32.xlu0 %v1435
        %v1467 = vpop.xlane.xlu0 %1466
        %1468 = vadd.xlane.f32.xlu0 %v1437
        %v1469 = vpop.xlane.xlu0 %1468
        %1470 = vadd.xlane.f32.xlu0 %v1439
        %v1471 = vpop.xlane.xlu0 %1470
        %1472 = vadd.xlane.f32.xlu0 %v1441
        %v1473 = vpop.xlane.xlu0 %1472
        %v1474 = vpack.c.bf16 %v1413, %v1411
        %v1475 = vpack.c.bf16 %v1417, %v1415
        %v1476 = vpack.c.bf16 %v1421, %v1419
        %v1477 = vpack.c.bf16 %v1425, %v1423
        %v1478 = vpack.c.bf16 %v1429, %v1427
        %v1479 = vpack.c.bf16 %v1433, %v1431
        %v1480 = vpack.c.bf16 %v1437, %v1435
        %v1481 = vpack.c.bf16 %v1441, %v1439
        %1482 = vrot.lane.b32.xlu0 %v1024, 64
        %v1483 = vpop.permute.xlu0 %1482
        %1484 = vrot.lane.b32.xlu0 %v1025, 64
        %v1485 = vpop.permute.xlu0 %1484
        %1486 = vrot.lane.b32.xlu0 %v1026, 64
        %v1487 = vpop.permute.xlu0 %1486
        %1488 = vrot.lane.b32.xlu0 %v1027, 64
        %v1489 = vpop.permute.xlu0 %1488
        %1490 = vrot.lane.b32.xlu0 %v1028, 64
        %v1491 = vpop.permute.xlu0 %1490
        %1492 = vrot.lane.b32.xlu0 %v1029, 64
        %v1493 = vpop.permute.xlu0 %1492
        %1494 = vrot.lane.b32.xlu0 %v1030, 64
        %v1495 = vpop.permute.xlu0 %1494
        %1496 = vrot.lane.b32.xlu0 %v1031, 64
        %v1497 = vpop.permute.xlu0 %1496
        %1506 = vmatprep.subr.bf16.mxu0 0
        %1507 = vmatpush1.bf16.msra.mxu0 %v1483
        %1508 = vmatprep.subr.bf16.mxu0 0
        %1509 = vmatpush1.bf16.msra.mxu0 %v1485
        %1510 = vmatprep.subr.bf16.mxu0 0
        %1511 = vmatpush1.bf16.msra.mxu0 %v1487
        %1512 = vmatprep.subr.bf16.mxu0 0
        %1513 = vmatpush1.bf16.msra.mxu0 %v1489
        %1514 = vmatprep.subr.bf16.mxu0 0
        %1515 = vmatpush1.bf16.msra.mxu0 %v1491
        %1516 = vmatprep.subr.bf16.mxu0 0
        %1517 = vmatpush1.bf16.msra.mxu0 %v1493
        %1518 = vmatprep.subr.bf16.mxu0 0
        %1519 = vmatpush1.bf16.msra.mxu0 %v1495
        %1520 = vmatprep.subr.bf16.mxu0 0
        %1521 = vmatpush1.bf16.msra.mxu0 %v1497
        %1522 = vmatprep.subr.bf16.mxu0 0
        %1523 = vmatpush1.bf16.msra.mxu0 0
        %1524 = vmatprep.subr.bf16.mxu0 0
        %1525 = vmatpush1.bf16.msra.mxu0 0
        %1526 = vmatprep.subr.bf16.mxu0 0
        %1527 = vmatpush1.bf16.msra.mxu0 0
        %1528 = vmatprep.subr.bf16.mxu0 0
        %1529 = vmatpush1.bf16.msra.mxu0 0
        %1530 = vmatprep.subr.bf16.mxu0 0
        %1531 = vmatpush1.bf16.msra.mxu0 0
        %1532 = vmatprep.subr.bf16.mxu0 0
        %1533 = vmatpush1.bf16.msra.mxu0 0
        %1534 = vmatprep.subr.bf16.mxu0 0
        %1535 = vmatpush1.bf16.msra.mxu0 0
        %1536 = vmatprep.subr.bf16.mxu0 0
        %1537 = vmatpush1.bf16.msra.mxu0 0
        %1538 = vmatprep.mubr.bf16.mxu0 0
        %1539 = vmatmul.mubr.bf16.gmra.mrb[0].mxu0 %v1474
        %v1540 = vpop.f32.mrb[0].mxu0
        %v1541 = vadd.f32 0.0, %v1540
        %v1542 = vpop.f32.mrb[0].mxu0
        %v1543 = vpop.f32.mrb[0].mxu0
        %v1544 = vadd.f32 0.0, %v1543
        %v1545 = vpop.f32.mrb[0].mxu0
        %1546 = vmatprep.mubr.bf16.mxu0 0
        %1547 = vmatmul.mubr.bf16.gmra.mrb[0].mxu0 %v1475
        %v1548 = vpop.f32.mrb[0].mxu0
        %v1549 = vadd.f32 0.0, %v1548
        %v1550 = vpop.f32.mrb[0].mxu0
        %v1551 = vpop.f32.mrb[0].mxu0
        %v1552 = vadd.f32 0.0, %v1551
        %v1553 = vpop.f32.mrb[0].mxu0
        %1554 = vmatprep.mubr.bf16.mxu0 0
        %1555 = vmatmul.mubr.bf16.gmra.mrb[0].mxu0 %v1476
        %v1556 = vpop.f32.mrb[0].mxu0
        %v1557 = vadd.f32 0.0, %v1556
        %v1558 = vpop.f32.mrb[0].mxu0
        %v1559 = vpop.f32.mrb[0].mxu0
        %v1560 = vadd.f32 0.0, %v1559
        %v1561 = vpop.f32.mrb[0].mxu0
        %1562 = vmatprep.mubr.bf16.mxu0 0
        %1563 = vmatmul.mubr.bf16.gmra.mrb[0].mxu0 %v1477
        %v1564 = vpop.f32.mrb[0].mxu0
        %v1565 = vadd.f32 0.0, %v1564
        %v1566 = vpop.f32.mrb[0].mxu0
        %v1567 = vpop.f32.mrb[0].mxu0
        %v1568 = vadd.f32 0.0, %v1567
        %v1569 = vpop.f32.mrb[0].mxu0
        %1570 = vmatprep.mubr.bf16.mxu0 0
        %1571 = vmatmul.mubr.bf16.gmra.mrb[0].mxu0 %v1478
        %v1572 = vpop.f32.mrb[0].mxu0
        %v1573 = vadd.f32 0.0, %v1572
        %v1574 = vpop.f32.mrb[0].mxu0
        %v1575 = vpop.f32.mrb[0].mxu0
        %v1576 = vadd.f32 0.0, %v1575
        %v1577 = vpop.f32.mrb[0].mxu0
        %1578 = vmatprep.mubr.bf16.mxu0 0
        %1579 = vmatmul.mubr.bf16.gmra.mrb[0].mxu0 %v1479
        %v1580 = vpop.f32.mrb[0].mxu0
        %v1581 = vadd.f32 0.0, %v1580
        %v1582 = vpop.f32.mrb[0].mxu0
        %v1583 = vpop.f32.mrb[0].mxu0
        %v1584 = vadd.f32 0.0, %v1583
        %v1585 = vpop.f32.mrb[0].mxu0
        %1586 = vmatprep.mubr.bf16.mxu0 0
        %1587 = vmatmul.mubr.bf16.gmra.mrb[0].mxu0 %v1480
        %v1588 = vpop.f32.mrb[0].mxu0
        %v1589 = vadd.f32 0.0, %v1588
        %v1590 = vpop.f32.mrb[0].mxu0
        %v1591 = vpop.f32.mrb[0].mxu0
        %v1592 = vadd.f32 0.0, %v1591
        %v1593 = vpop.f32.mrb[0].mxu0
        %1594 = vmatprep.mubr.bf16.mxu0 0
        %1595 = vmatmul.mubr.bf16.gmra.mrb[0].mxu0 %v1481
        %v1596 = vpop.f32.mrb[0].mxu0
        %v1597 = vadd.f32 0.0, %v1596
        %v1598 = vpop.f32.mrb[0].mxu0
        %v1599 = vpop.f32.mrb[0].mxu0
        %v1600 = vadd.f32 0.0, %v1599
        %v1601 = vpop.f32.mrb[0].mxu0
        %1602 = vdwg.mxu0
        %v1603 = vrcp.pop %v1443
        %v1604 = vrcp.pop %v1445
        %v1605 = vrcp.pop %v1447
        %v1606 = vrcp.pop %v1449
        %v1607 = vrcp.pop %v1451
        %v1608 = vrcp.pop %v1453
        %v1609 = vrcp.pop %v1455
        %v1610 = vrcp.pop %v1457
        %v1611 = vrcp.pop %v1459
        %v1612 = vrcp.pop %v1461
        %v1613 = vrcp.pop %v1463
        %v1614 = vrcp.pop %v1465
        %v1615 = vrcp.pop %v1467
        %v1616 = vrcp.pop %v1469
        %v1617 = vrcp.pop %v1471
        %v1618 = vrcp.pop %v1473
        %v1619 = vmul.f32 %v1541, %v1603
        %v1620 = vmul.f32 %v1544, %v1604
        %v1621 = vmul.f32 %v1549, %v1605
        %v1622 = vmul.f32 %v1552, %v1606
        %v1623 = vmul.f32 %v1557, %v1607
        %v1624 = vmul.f32 %v1560, %v1608
        %v1625 = vmul.f32 %v1565, %v1609
        %v1626 = vmul.f32 %v1568, %v1610
        %v1627 = vmul.f32 %v1573, %v1611
        %v1628 = vmul.f32 %v1576, %v1612
        %v1629 = vmul.f32 %v1581, %v1613
        %v1630 = vmul.f32 %v1584, %v1614
        %v1631 = vmul.f32 %v1589, %v1615
        %v1632 = vmul.f32 %v1592, %v1616
        %v1633 = vmul.f32 %v1597, %v1617
        %v1634 = vmul.f32 %v1600, %v1618
        %1651 = vrot.lane.b32.xlu0 %v1619, 64
        %v1652 = vpop.permute.xlu0 %1651
        %1653 = vrot.lane.b32.xlu0 %v1620, 64
        %v1654 = vpop.permute.xlu0 %1653
        %1655 = vrot.lane.b32.xlu0 %v1621, 64
        %v1656 = vpop.permute.xlu0 %1655
        %1657 = vrot.lane.b32.xlu0 %v1622, 64
        %v1658 = vpop.permute.xlu0 %1657
        %1659 = vrot.lane.b32.xlu0 %v1623, 64
        %v1660 = vpop.permute.xlu0 %1659
        %1661 = vrot.lane.b32.xlu0 %v1624, 64
        %v1662 = vpop.permute.xlu0 %1661
        %1663 = vrot.lane.b32.xlu0 %v1625, 64
        %v1664 = vpop.permute.xlu0 %1663
        %1665 = vrot.lane.b32.xlu0 %v1626, 64
        %v1666 = vpop.permute.xlu0 %1665
        %1667 = vrot.lane.b32.xlu0 %v1627, 64
        %v1668 = vpop.permute.xlu0 %1667
        %1669 = vrot.lane.b32.xlu0 %v1628, 64
        %v1670 = vpop.permute.xlu0 %1669
        %1671 = vrot.lane.b32.xlu0 %v1629, 64
        %v1672 = vpop.permute.xlu0 %1671
        %1673 = vrot.lane.b32.xlu0 %v1630, 64
        %v1674 = vpop.permute.xlu0 %1673
        %1675 = vrot.lane.b32.xlu0 %v1631, 64
        %v1676 = vpop.permute.xlu0 %1675
        %1677 = vrot.lane.b32.xlu0 %v1632, 64
        %v1678 = vpop.permute.xlu0 %1677
        %1679 = vrot.lane.b32.xlu0 %v1633, 64
        %v1680 = vpop.permute.xlu0 %1679
        %1681 = vrot.lane.b32.xlu0 %v1634, 64
        %v1682 = vpop.permute.xlu0 %1681
        %v1699 = vsel %vm710, %v1153, %v1652
        %v1700 = vsel %vm710, %v1154, %v1654
        %v1701 = vsel %vm710, %v1155, %v1656
        %v1702 = vsel %vm710, %v1156, %v1658
        %v1703 = vsel %vm710, %v1157, %v1660
        %v1704 = vsel %vm710, %v1158, %v1662
        %v1705 = vsel %vm710, %v1159, %v1664
        %v1706 = vsel %vm710, %v1160, %v1666
        %v1707 = vsel %vm710, %v1161, %v1668
        %v1708 = vsel %vm710, %v1162, %v1670
        %v1709 = vsel %vm710, %v1163, %v1672
        %v1710 = vsel %vm710, %v1164, %v1674
        %v1711 = vsel %vm710, %v1165, %v1676
        %v1712 = vsel %vm710, %v1166, %v1678
        %v1713 = vsel %vm710, %v1167, %v1680
        %v1714 = vsel %vm710, %v1168, %v1682
        %v1715 = vpack.c.bf16 %v1700, %v1699
        %v1716 = vpack.c.bf16 %v1702, %v1701
        %v1717 = vpack.c.bf16 %v1704, %v1703
        %v1718 = vpack.c.bf16 %v1706, %v1705
        %v1719 = vpack.c.bf16 %v1708, %v1707
        %v1720 = vpack.c.bf16 %v1710, %v1709
        %v1721 = vpack.c.bf16 %v1712, %v1711
        %v1722 = vpack.c.bf16 %v1714, %v1713
        %v1731 = vunpack.c.l.b16 %v1715
        %v1732 = vunpack.c.h.b16 %v1715
        %v1733 = vunpack.c.l.b16 %v1716
        %v1734 = vunpack.c.h.b16 %v1716
        %v1735 = vunpack.c.l.b16 %v1717
        %v1736 = vunpack.c.h.b16 %v1717
        %v1737 = vunpack.c.l.b16 %v1718
        %v1738 = vunpack.c.h.b16 %v1718
        %v1739 = vunpack.c.l.b16 %v1719
        %v1740 = vunpack.c.h.b16 %v1719
        %v1741 = vunpack.c.l.b16 %v1720
        %v1742 = vunpack.c.h.b16 %v1720
        %v1743 = vunpack.c.l.b16 %v1721
        %v1744 = vunpack.c.h.b16 %v1721
        %v1745 = vunpack.c.l.b16 %v1722
        %v1746 = vunpack.c.h.b16 %v1722
        %v1747 = vpack.c.b16 %v1731, %v1731
        %v1748 = vpack.c.b16 %v1732, %v1732
        %v1749 = vpack.c.b16 %v1733, %v1733
        %v1750 = vpack.c.b16 %v1734, %v1734
        %v1751 = vpack.c.b16 %v1735, %v1735
        %v1752 = vpack.c.b16 %v1736, %v1736
        %v1753 = vpack.c.b16 %v1737, %v1737
        %v1754 = vpack.c.b16 %v1738, %v1738
        %v1755 = vpack.c.b16 %v1739, %v1739
        %v1756 = vpack.c.b16 %v1740, %v1740
        %v1757 = vpack.c.b16 %v1741, %v1741
        %v1758 = vpack.c.b16 %v1742, %v1742
        %v1759 = vpack.c.b16 %v1743, %v1743
        %v1760 = vpack.c.b16 %v1744, %v1744
        %v1761 = vpack.c.b16 %v1745, %v1745
        %v1762 = vpack.c.b16 %v1746, %v1746
        %1779 = vst [vmem:[%s576] sm:$0xf] %v1747
        %1780 = vst [vmem:[%s576 + $0x4] sm:$0xf] %v1748
        %1781 = vst [vmem:[%s576 + $0x8] sm:$0xf] %v1749
        %1782 = vst [vmem:[%s576 + $0xc] sm:$0xf] %v1750
        %1783 = vst [vmem:[%s576 + $0x10] sm:$0xf] %v1751
        %1784 = vst [vmem:[%s576 + $0x14] sm:$0xf] %v1752
        %1785 = vst [vmem:[%s576 + $0x18] sm:$0xf] %v1753
        %1786 = vst [vmem:[%s576 + $0x1c] sm:$0xf] %v1754
        %1787 = vst [vmem:[%s576 + $0x20] sm:$0xf] %v1755
        %1788 = vst [vmem:[%s576 + $0x24] sm:$0xf] %v1756
        %1789 = vst [vmem:[%s576 + $0x28] sm:$0xf] %v1757
        %1790 = vst [vmem:[%s576 + $0x2c] sm:$0xf] %v1758
        %1791 = vst [vmem:[%s576 + $0x30] sm:$0xf] %v1759
        %1792 = vst [vmem:[%s576 + $0x34] sm:$0xf] %v1760
        %1793 = vst [vmem:[%s576 + $0x38] sm:$0xf] %v1761
        %1794 = vst [vmem:[%s576 + $0x3c] sm:$0xf] %v1762
        %s1795 = smul.u32 16, %s21
        %p1796 = scmp.lt.s32.totalorder %s19, 1
        %s1797 = scalar_select %p1796, %s19, 1
        %p1798 = scmp.lt.s32.totalorder %s1795, 15
        %s1799 = scalar_select %p1798, %s1795, 15
        %p1800 = scmp.lt.s32.totalorder %s20, 0
        %s1801 = scalar_select %p1800, %s20, 0
        %s1802 = sadd.s32 %s1801, %s1799
        %s1803 = smul.addr %s1797, 16
        %s1804 = sadd.s32 %s1802, %s1803
        %s1805 = smul.addr %s1804, 4
        %s1806 = scalar_lea.vmem %s3, %s1805
        // Predicated region
        $region156: #{whisper_audio_tower_forward.10} parent=142 // pred_check
          %p1807 = pneg %p145
        $region157: #{whisper_audio_tower_forward.10} parent=142 // pred_check_branch
          %1809 = sbr.rel (%p1807) target = $region159
        $region158: #{whisper_audio_tower_forward.10} parent=142 // pred_region
          %s1810 = smul.u32 16, %s21
        $region159: #{whisper_audio_tower_forward.10} parent=142 // pred_fallthru
          _
      $region143: #{whisper_audio_tower_forward.10} parent=5 // pred_fallthru
        _
      %p1811 = scmp.le.s32.totalorder 2, %s9
      // Predicated region
      $region160: #{whisper_audio_tower_forward.10} parent=5 // pred_check
        %p1812 = pneg %p1811
      $region161: #{whisper_audio_tower_forward.10} parent=5 // pred_check_branch
        %1814 = sbr.rel (%p1812) target = $region163
      $region162: #{whisper_audio_tower_forward.10} parent=5 // pred_region
        %s1815 = ssub.s32 %s9, 2
        // Predicated region
        $region164: #{whisper_audio_tower_forward.10} parent=162 // pred_check
          %p1816 = pneg %p151
        $region165: #{whisper_audio_tower_forward.10} parent=162 // pred_check_branch
          %1818 = sbr.rel (%p1816) target = $region167
        $region166: #{whisper_audio_tower_forward.10} parent=162 // pred_region
          %s1819 = smul.u32 16, %s24
          %p1820 = scmp.lt.s32.totalorder %s22, 1
          %s1821 = scalar_select %p1820, %s22, 1
          %p1822 = scmp.lt.s32.totalorder %s1819, 15
          %s1823 = scalar_select %p1822, %s1819, 15
          %p1824 = scmp.lt.s32.totalorder %s23, 0
          %s1825 = scalar_select %p1824, %s23, 0
          %s1826 = sadd.s32 %s1825, %s1823
          %s1827 = smul.addr %s1821, 16
          %s1828 = sadd.s32 %s1826, %s1827
          %s1829 = smul.addr %s1828, 4
          %s1830 = scalar_lea.vmem %s3, %s1829
        $region167: #{whisper_audio_tower_forward.10} parent=162 // pred_fallthru
          _
      $region163: #{whisper_audio_tower_forward.10} parent=5 // pred_fallthru
        _
    $region6: #{whisper_audio_tower_forward.10} parent=1 // loop_footer
      %s13 = sadd.s32 1, %s9
    $region7: #{whisper_audio_tower_forward.10} parent=1 // loop_footer_branch
      %8 = sbr.rel target = $region3
    $region8: #{whisper_audio_tower_forward.10} parent=1 // loop_exit
      _

// kernel: whisper_audio_tower_forward.11
$region0: #{whisper_audio_tower_forward.11}
  #allocation0 [shape = 'u32[]', space=smem, size = 0x4, offset = 0x4, fixed_abs, tag = 'smem constant byte address 0x4 - core index']
  #allocation1 [shape = 'u32[144,128]{1,0:T(1,128)}', space=vmem, size = 0x12000, scoped, tag = 'internal scratch']
  #allocation2 [shape = 'f32[256,128]{1,0:T(8,128)}', space=vmem, size = 0x20000, scoped, tag = 'scratch operand']
  %s0 = inlined_call_operand.vmem [shape: bf16[256,128], index: 0, kind: input, shape index: {}]
  %s1 = inlined_call_operand.vmem [shape: bf16[128,128], index: 1, kind: input, shape index: {}]
  %s2 = inlined_call_operand.vmem [shape: bf16[1,128], index: 2, kind: input, shape index: {}]
  %s3 = inlined_call_operand.vmem [shape: bf16[256,128], index: 3, kind: input, shape index: {}]
  %s4 = inlined_call_operand.vmem [shape: bf16[256,128], index: 4, kind: output, shape index: {}]
  %s5 = sld [smem:[#allocation0]]
  $region34: #{whisper_audio_tower_forward.11} parent=0
    _
  %s7 = ssub.s32 1, %s5
  %s8 = scalar_select 0, %s7, %s5
  // Predicated region
  $region2: #{whisper_audio_tower_forward.11} parent=0 // pred_check
    _
  $region3: #{whisper_audio_tower_forward.11} parent=0 // pred_check_branch
    %10 = sbr.rel (0) target = $region5
  $region4: #{whisper_audio_tower_forward.11} parent=0 // pred_region
    _
  $region5: #{whisper_audio_tower_forward.11} parent=0 // pred_fallthru
    _
  // Predicated region
  $region6: #{whisper_audio_tower_forward.11} parent=0 // pred_check
    _
  $region7: #{whisper_audio_tower_forward.11} parent=0 // pred_check_branch
    %12 = sbr.rel (0) target = $region9
  $region8: #{whisper_audio_tower_forward.11} parent=0 // pred_region
    _
  $region9: #{whisper_audio_tower_forward.11} parent=0 // pred_fallthru
    _
  // Predicated region
  $region10: #{whisper_audio_tower_forward.11} parent=0 // pred_check
    _
  $region11: #{whisper_audio_tower_forward.11} parent=0 // pred_check_branch
    %14 = sbr.rel (0) target = $region13
  $region12: #{whisper_audio_tower_forward.11} parent=0 // pred_region
    _
  $region13: #{whisper_audio_tower_forward.11} parent=0 // pred_fallthru
    _
  // Predicated region
  $region14: #{whisper_audio_tower_forward.11} parent=0 // pred_check
    _
  $region15: #{whisper_audio_tower_forward.11} parent=0 // pred_check_branch
    %16 = sbr.rel (0) target = $region17
  $region16: #{whisper_audio_tower_forward.11} parent=0 // pred_region
    _
  $region17: #{whisper_audio_tower_forward.11} parent=0 // pred_fallthru
    _
  %p18 = scmp.eq.s32.totalorder 0, 0
  // Predicated region
  $region18: #{whisper_audio_tower_forward.11} parent=0 // pred_check
    %p19 = pneg %p18
  $region19: #{whisper_audio_tower_forward.11} parent=0 // pred_check_branch
    %21 = sbr.rel (%p19) target = $region21
  $region20: #{whisper_audio_tower_forward.11} parent=0 // pred_region
    %22 = vst [vmem:[#allocation2] sm:$0xff] 0.0
    %23 = vst [vmem:[#allocation2 + $0x8] sm:$0xff] 0.0
    %24 = vst [vmem:[#allocation2 + $0x10] sm:$0xff] 0.0
    %25 = vst [vmem:[#allocation2 + $0x18] sm:$0xff] 0.0
    %26 = vst [vmem:[#allocation2 + $0x20] sm:$0xff] 0.0
    %27 = vst [vmem:[#allocation2 + $0x28] sm:$0xff] 0.0
    %28 = vst [vmem:[#allocation2 + $0x30] sm:$0xff] 0.0
    %29 = vst [vmem:[#allocation2 + $0x38] sm:$0xff] 0.0
    %30 = vst [vmem:[#allocation2 + $0x40] sm:$0xff] 0.0
    %31 = vst [vmem:[#allocation2 + $0x48] sm:$0xff] 0.0
    %32 = vst [vmem:[#allocation2 + $0x50] sm:$0xff] 0.0
    %33 = vst [vmem:[#allocation2 + $0x58] sm:$0xff] 0.0
    %34 = vst [vmem:[#allocation2 + $0x60] sm:$0xff] 0.0
    %35 = vst [vmem:[#allocation2 + $0x68] sm:$0xff] 0.0
    %36 = vst [vmem:[#allocation2 + $0x70] sm:$0xff] 0.0
    %37 = vst [vmem:[#allocation2 + $0x78] sm:$0xff] 0.0
    %38 = vst [vmem:[#allocation2 + $0x80] sm:$0xff] 0.0
    %39 = vst [vmem:[#allocation2 + $0x88] sm:$0xff] 0.0
    %40 = vst [vmem:[#allocation2 + $0x90] sm:$0xff] 0.0
    %41 = vst [vmem:[#allocation2 + $0x98] sm:$0xff] 0.0
    %42 = vst [vmem:[#allocation2 + $0xa0] sm:$0xff] 0.0
    %43 = vst [vmem:[#allocation2 + $0xa8] sm:$0xff] 0.0
    %44 = vst [vmem:[#allocation2 + $0xb0] sm:$0xff] 0.0
    %45 = vst [vmem:[#allocation2 + $0xb8] sm:$0xff] 0.0
    %46 = vst [vmem:[#allocation2 + $0xc0] sm:$0xff] 0.0
    %47 = vst [vmem:[#allocation2 + $0xc8] sm:$0xff] 0.0
    %48 = vst [vmem:[#allocation2 + $0xd0] sm:$0xff] 0.0
    %49 = vst [vmem:[#allocation2 + $0xd8] sm:$0xff] 0.0
    %50 = vst [vmem:[#allocation2 + $0xe0] sm:$0xff] 0.0
    %51 = vst [vmem:[#allocation2 + $0xe8] sm:$0xff] 0.0
    %52 = vst [vmem:[#allocation2 + $0xf0] sm:$0xff] 0.0
    %53 = vst [vmem:[#allocation2 + $0xf8] sm:$0xff] 0.0
  $region21: #{whisper_audio_tower_forward.11} parent=0 // pred_fallthru
    _
  %v54 = vld [vmem:[#allocation2] sm:$0xff]
  %v55 = vld [vmem:[#allocation2 + $0x8] sm:$0xff]
  %v56 = vld [vmem:[#allocation2 + $0x10] sm:$0xff]
  %v57 = vld [vmem:[#allocation2 + $0x18] sm:$0xff]
  %v58 = vld [vmem:[#allocation2 + $0x20] sm:$0xff]
  %v59 = vld [vmem:[#allocation2 + $0x28] sm:$0xff]
  %v60 = vld [vmem:[#allocation2 + $0x30] sm:$0xff]
  %v61 = vld [vmem:[#allocation2 + $0x38] sm:$0xff]
  %v62 = vld [vmem:[#allocation2 + $0x40] sm:$0xff]
  %v63 = vld [vmem:[#allocation2 + $0x48] sm:$0xff]
  %v64 = vld [vmem:[#allocation2 + $0x50] sm:$0xff]
  %v65 = vld [vmem:[#allocation2 + $0x58] sm:$0xff]
  %v66 = vld [vmem:[#allocation2 + $0x60] sm:$0xff]
  %v67 = vld [vmem:[#allocation2 + $0x68] sm:$0xff]
  %v68 = vld [vmem:[#allocation2 + $0x70] sm:$0xff]
  %v69 = vld [vmem:[#allocation2 + $0x78] sm:$0xff]
  %v70 = vld [vmem:[#allocation2 + $0x80] sm:$0xff]
  %v71 = vld [vmem:[#allocation2 + $0x88] sm:$0xff]
  %v72 = vld [vmem:[#allocation2 + $0x90] sm:$0xff]
  %v73 = vld [vmem:[#allocation2 + $0x98] sm:$0xff]
  %v74 = vld [vmem:[#allocation2 + $0xa0] sm:$0xff]
  %v75 = vld [vmem:[#allocation2 + $0xa8] sm:$0xff]
  %v76 = vld [vmem:[#allocation2 + $0xb0] sm:$0xff]
  %v77 = vld [vmem:[#allocation2 + $0xb8] sm:$0xff]
  %v78 = vld [vmem:[#allocation2 + $0xc0] sm:$0xff]
  %v79 = vld [vmem:[#allocation2 + $0xc8] sm:$0xff]
  %v80 = vld [vmem:[#allocation2 + $0xd0] sm:$0xff]
  %v81 = vld [vmem:[#allocation2 + $0xd8] sm:$0xff]
  %v82 = vld [vmem:[#allocation2 + $0xe0] sm:$0xff]
  %v83 = vld [vmem:[#allocation2 + $0xe8] sm:$0xff]
  %v84 = vld [vmem:[#allocation2 + $0xf0] sm:$0xff]
  %v85 = vld [vmem:[#allocation2 + $0xf8] sm:$0xff]
  %v86 = vld [vmem:[%s0] sm:$0xf]
  %v87 = vld [vmem:[%s0 + $0x4] sm:$0xf]
  %v88 = vld [vmem:[%s0 + $0x8] sm:$0xf]
  %v89 = vld [vmem:[%s0 + $0xc] sm:$0xf]
  %v90 = vld [vmem:[%s0 + $0x10] sm:$0xf]
  %v91 = vld [vmem:[%s0 + $0x14] sm:$0xf]
  %v92 = vld [vmem:[%s0 + $0x18] sm:$0xf]
  %v93 = vld [vmem:[%s0 + $0x1c] sm:$0xf]
  %v94 = vld [vmem:[%s0 + $0x20] sm:$0xf]
  %v95 = vld [vmem:[%s0 + $0x24] sm:$0xf]
  %v96 = vld [vmem:[%s0 + $0x28] sm:$0xf]
  %v97 = vld [vmem:[%s0 + $0x2c] sm:$0xf]
  %v98 = vld [vmem:[%s0 + $0x30] sm:$0xf]
  %v99 = vld [vmem:[%s0 + $0x34] sm:$0xf]
  %v100 = vld [vmem:[%s0 + $0x38] sm:$0xf]
  %v101 = vld [vmem:[%s0 + $0x3c] sm:$0xf]
  %v102 = vld [vmem:[%s0 + $0x40] sm:$0xf]
  %v103 = vld [vmem:[%s0 + $0x44] sm:$0xf]
  %v104 = vld [vmem:[%s0 + $0x48] sm:$0xf]
  %v105 = vld [vmem:[%s0 + $0x4c] sm:$0xf]
  %v106 = vld [vmem:[%s0 + $0x50] sm:$0xf]
  %v107 = vld [vmem:[%s0 + $0x54] sm:$0xf]
  %v108 = vld [vmem:[%s0 + $0x58] sm:$0xf]
  %v109 = vld [vmem:[%s0 + $0x5c] sm:$0xf]
  %v110 = vld [vmem:[%s0 + $0x60] sm:$0xf]
  %v111 = vld [vmem:[%s0 + $0x64] sm:$0xf]
  %v112 = vld [vmem:[%s0 + $0x68] sm:$0xf]
  %v113 = vld [vmem:[%s0 + $0x6c] sm:$0xf]
  %v114 = vld [vmem:[%s0 + $0x70] sm:$0xf]
  %v115 = vld [vmem:[%s0 + $0x74] sm:$0xf]
  %v116 = vld [vmem:[%s0 + $0x78] sm:$0xf]
  %v117 = vld [vmem:[%s0 + $0x7c] sm:$0xf]
  %v118 = vld [vmem:[%s1] sm:$0xf]
  %v119 = vld [vmem:[%s1 + $0x4] sm:$0xf]
  %v120 = vld [vmem:[%s1 + $0x8] sm:$0xf]
  %v121 = vld [vmem:[%s1 + $0xc] sm:$0xf]
  %v122 = vld [vmem:[%s1 + $0x10] sm:$0xf]
  %v123 = vld [vmem:[%s1 + $0x14] sm:$0xf]
  %v124 = vld [vmem:[%s1 + $0x18] sm:$0xf]
  %v125 = vld [vmem:[%s1 + $0x1c] sm:$0xf]
  %v126 = vld [vmem:[%s1 + $0x20] sm:$0xf]
  %v127 = vld [vmem:[%s1 + $0x24] sm:$0xf]
  %v128 = vld [vmem:[%s1 + $0x28] sm:$0xf]
  %v129 = vld [vmem:[%s1 + $0x2c] sm:$0xf]
  %v130 = vld [vmem:[%s1 + $0x30] sm:$0xf]
  %v131 = vld [vmem:[%s1 + $0x34] sm:$0xf]
  %v132 = vld [vmem:[%s1 + $0x38] sm:$0xf]
  %v133 = vld [vmem:[%s1 + $0x3c] sm:$0xf]
  %v166 = vunpack.c.l.b16 %v86
  %v167 = vunpack.c.l.b16 %v87
  %v168 = vunpack.c.l.b16 %v88
  %v169 = vunpack.c.l.b16 %v89
  %v170 = vunpack.c.l.b16 %v90
  %v171 = vunpack.c.l.b16 %v91
  %v172 = vunpack.c.l.b16 %v92
  %v173 = vunpack.c.l.b16 %v93
  %v174 = vunpack.c.l.b16 %v94
  %v175 = vunpack.c.l.b16 %v95
  %v176 = vunpack.c.l.b16 %v96
  %v177 = vunpack.c.l.b16 %v97
  %v178 = vunpack.c.l.b16 %v98
  %v179 = vunpack.c.l.b16 %v99
  %v180 = vunpack.c.l.b16 %v100
  %v181 = vunpack.c.l.b16 %v101
  %v182 = vunpack.c.l.b16 %v102
  %v183 = vunpack.c.l.b16 %v103
  %v184 = vunpack.c.l.b16 %v104
  %v185 = vunpack.c.l.b16 %v105
  %v186 = vunpack.c.l.b16 %v106
  %v187 = vunpack.c.l.b16 %v107
  %v188 = vunpack.c.l.b16 %v108
  %v189 = vunpack.c.l.b16 %v109
  %v190 = vunpack.c.l.b16 %v110
  %v191 = vunpack.c.l.b16 %v111
  %v192 = vunpack.c.l.b16 %v112
  %v193 = vunpack.c.l.b16 %v113
  %v194 = vunpack.c.l.b16 %v114
  %v195 = vunpack.c.l.b16 %v115
  %v196 = vunpack.c.l.b16 %v116
  %v197 = vunpack.c.l.b16 %v117
  %v198 = vpack.c.b16 %v167, %v166
  %v199 = vpack.c.b16 %v169, %v168
  %v200 = vpack.c.b16 %v171, %v170
  %v201 = vpack.c.b16 %v173, %v172
  %v202 = vpack.c.b16 %v175, %v174
  %v203 = vpack.c.b16 %v177, %v176
  %v204 = vpack.c.b16 %v179, %v178
  %v205 = vpack.c.b16 %v181, %v180
  %v206 = vpack.c.b16 %v183, %v182
  %v207 = vpack.c.b16 %v185, %v184
  %v208 = vpack.c.b16 %v187, %v186
  %v209 = vpack.c.b16 %v189, %v188
  %v210 = vpack.c.b16 %v191, %v190
  %v211 = vpack.c.b16 %v193, %v192
  %v212 = vpack.c.b16 %v195, %v194
  %v213 = vpack.c.b16 %v197, %v196
  %v246 = vunpack.c.l.b16 %v118
  %v247 = vunpack.c.l.b16 %v119
  %v248 = vunpack.c.l.b16 %v120
  %v249 = vunpack.c.l.b16 %v121
  %v250 = vunpack.c.l.b16 %v122
  %v251 = vunpack.c.l.b16 %v123
  %v252 = vunpack.c.l.b16 %v124
  %v253 = vunpack.c.l.b16 %v125
  %v254 = vunpack.c.l.b16 %v126
  %v255 = vunpack.c.l.b16 %v127
  %v256 = vunpack.c.l.b16 %v128
  %v257 = vunpack.c.l.b16 %v129
  %v258 = vunpack.c.l.b16 %v130
  %v259 = vunpack.c.l.b16 %v131
  %v260 = vunpack.c.l.b16 %v132
  %v261 = vunpack.c.l.b16 %v133
  %v262 = vpack.c.b16 %v247, %v246
  %v263 = vpack.c.b16 %v249, %v248
  %v264 = vpack.c.b16 %v251, %v250
  %v265 = vpack.c.b16 %v253, %v252
  %v266 = vpack.c.b16 %v255, %v254
  %v267 = vpack.c.b16 %v257, %v256
  %v268 = vpack.c.b16 %v259, %v258
  %v269 = vpack.c.b16 %v261, %v260
  %278 = vmatprep.subr.bf16.mxu0 0
  %279 = vmatpush1.bf16.msra.mxu0 %v262
  %280 = vmatprep.subr.bf16.mxu0 0
  %281 = vmatpush1.bf16.msra.mxu0 %v263
  %282 = vmatprep.subr.bf16.mxu0 0
  %283 = vmatpush1.bf16.msra.mxu0 %v264
  %284 = vmatprep.subr.bf16.mxu0 0
  %285 = vmatpush1.bf16.msra.mxu0 %v265
  %286 = vmatprep.subr.bf16.mxu0 0
  %287 = vmatpush1.bf16.msra.mxu0 %v266
  %288 = vmatprep.subr.bf16.mxu0 0
  %289 = vmatpush1.bf16.msra.mxu0 %v267
  %290 = vmatprep.subr.bf16.mxu0 0
  %291 = vmatpush1.bf16.msra.mxu0 %v268
  %292 = vmatprep.subr.bf16.mxu0 0
  %293 = vmatpush1.bf16.msra.mxu0 %v269
  %294 = vmatprep.subr.bf16.mxu0 0
  %295 = vmatpush1.bf16.msra.mxu0 0
  %296 = vmatprep.subr.bf16.mxu0 0
  %297 = vmatpush1.bf16.msra.mxu0 0
  %298 = vmatprep.subr.bf16.mxu0 0
  %299 = vmatpush1.bf16.msra.mxu0 0
  %300 = vmatprep.subr.bf16.mxu0 0
  %301 = vmatpush1.bf16.msra.mxu0 0
  %302 = vmatprep.subr.bf16.mxu0 0
  %303 = vmatpush1.bf16.msra.mxu0 0
  %304 = vmatprep.subr.bf16.mxu0 0
  %305 = vmatpush1.bf16.msra.mxu0 0
  %306 = vmatprep.subr.bf16.mxu0 0
  %307 = vmatpush1.bf16.msra.mxu0 0
  %308 = vmatprep.subr.bf16.mxu0 0
  %309 = vmatpush1.bf16.msra.mxu0 0
  %310 = vmatprep.mubr.bf16.mxu0 0
  %311 = vmatmul.mubr.bf16.gmra.mrb[0].mxu0 %v198
  %v312 = vpop.f32.mrb[0].mxu0
  %v313 = vadd.f32 0.0, %v312
  %v314 = vpop.f32.mrb[0].mxu0
  %v315 = vpop.f32.mrb[0].mxu0
  %v316 = vadd.f32 0.0, %v315
  %v317 = vpop.f32.mrb[0].mxu0
  %318 = vmatprep.mubr.bf16.mxu0 0
  %319 = vmatmul.mubr.bf16.gmra.mrb[0].mxu0 %v199
  %v320 = vpop.f32.mrb[0].mxu0
  %v321 = vadd.f32 0.0, %v320
  %v322 = vpop.f32.mrb[0].mxu0
  %v323 = vpop.f32.mrb[0].mxu0
  %v324 = vadd.f32 0.0, %v323
  %v325 = vpop.f32.mrb[0].mxu0
  %326 = vmatprep.mubr.bf16.mxu0 0
  %327 = vmatmul.mubr.bf16.gmra.mrb[0].mxu0 %v200
  %v328 = vpop.f32.mrb[0].mxu0
  %v329 = vadd.f32 0.0, %v328
  %v330 = vpop.f32.mrb[0].mxu0
  %v331 = vpop.f32.mrb[0].mxu0
  %v332 = vadd.f32 0.0, %v331
  %v333 = vpop.f32.mrb[0].mxu0
  %334 = vmatprep.mubr.bf16.mxu0 0
  %335 = vmatmul.mubr.bf16.gmra.mrb[0].mxu0 %v201
  %v336 = vpop.f32.mrb[0].mxu0
  %v337 = vadd.f32 0.0, %v336
  %v338 = vpop.f32.mrb[0].mxu0
  %v339 = vpop.f32.mrb[0].mxu0
  %v340 = vadd.f32 0.0, %v339
  %v341 = vpop.f32.mrb[0].mxu0
  %342 = vmatprep.mubr.bf16.mxu0 0
  %343 = vmatmul.mubr.bf16.gmra.mrb[0].mxu0 %v202
  %v344 = vpop.f32.mrb[0].mxu0
  %v345 = vadd.f32 0.0, %v344
  %v346 = vpop.f32.mrb[0].mxu0
  %v347 = vpop.f32.mrb[0].mxu0
  %v348 = vadd.f32 0.0, %v347
  %v349 = vpop.f32.mrb[0].mxu0
  %350 = vmatprep.mubr.bf16.mxu0 0
  %351 = vmatmul.mubr.bf16.gmra.mrb[0].mxu0 %v203
  %v352 = vpop.f32.mrb[0].mxu0
  %v353 = vadd.f32 0.0, %v352
  %v354 = vpop.f32.mrb[0].mxu0
  %v355 = vpop.f32.mrb[0].mxu0
  %v356 = vadd.f32 0.0, %v355
  %v357 = vpop.f32.mrb[0].mxu0
  %358 = vmatprep.mubr.bf16.mxu0 0
  %359 = vmatmul.mubr.bf16.gmra.mrb[0].mxu0 %v204
  %v360 = vpop.f32.mrb[0].mxu0
  %v361 = vadd.f32 0.0, %v360
  %v362 = vpop.f32.mrb[0].mxu0
  %v363 = vpop.f32.mrb[0].mxu0
  %v364 = vadd.f32 0.0, %v363
  %v365 = vpop.f32.mrb[0].mxu0
  %366 = vmatprep.mubr.bf16.mxu0 0
  %367 = vmatmul.mubr.bf16.gmra.mrb[0].mxu0 %v205
  %v368 = vpop.f32.mrb[0].mxu0
  %v369 = vadd.f32 0.0, %v368
  %v370 = vpop.f32.mrb[0].mxu0
  %v371 = vpop.f32.mrb[0].mxu0
  %v372 = vadd.f32 0.0, %v371
  %v373 = vpop.f32.mrb[0].mxu0
  %374 = vmatprep.mubr.bf16.mxu0 0
  %375 = vmatmul.mubr.bf16.gmra.mrb[0].mxu0 %v206
  %v376 = vpop.f32.mrb[0].mxu0
  %v377 = vadd.f32 0.0, %v376
  %v378 = vpop.f32.mrb[0].mxu0
  %v379 = vpop.f32.mrb[0].mxu0
  %v380 = vadd.f32 0.0, %v379
  %v381 = vpop.f32.mrb[0].mxu0
  %382 = vmatprep.mubr.bf16.mxu0 0
  %383 = vmatmul.mubr.bf16.gmra.mrb[0].mxu0 %v207
  %v384 = vpop.f32.mrb[0].mxu0
  %v385 = vadd.f32 0.0, %v384
  %v386 = vpop.f32.mrb[0].mxu0
  %v387 = vpop.f32.mrb[0].mxu0
  %v388 = vadd.f32 0.0, %v387
  %v389 = vpop.f32.mrb[0].mxu0
  %390 = vmatprep.mubr.bf16.mxu0 0
  %391 = vmatmul.mubr.bf16.gmra.mrb[0].mxu0 %v208
  %v392 = vpop.f32.mrb[0].mxu0
  %v393 = vadd.f32 0.0, %v392
  %v394 = vpop.f32.mrb[0].mxu0
  %v395 = vpop.f32.mrb[0].mxu0
  %v396 = vadd.f32 0.0, %v395
  %v397 = vpop.f32.mrb[0].mxu0
  %398 = vmatprep.mubr.bf16.mxu0 0
  %399 = vmatmul.mubr.bf16.gmra.mrb[0].mxu0 %v209
  %v400 = vpop.f32.mrb[0].mxu0
  %v401 = vadd.f32 0.0, %v400
  %v402 = vpop.f32.mrb[0].mxu0
  %v403 = vpop.f32.mrb[0].mxu0
  %v404 = vadd.f32 0.0, %v403
  %v405 = vpop.f32.mrb[0].mxu0
  %406 = vmatprep.mubr.bf16.mxu0 0
  %407 = vmatmul.mubr.bf16.gmra.mrb[0].mxu0 %v210
  %v408 = vpop.f32.mrb[0].mxu0
  %v409 = vadd.f32 0.0, %v408
  %v410 = vpop.f32.mrb[0].mxu0
  %v411 = vpop.f32.mrb[0].mxu0
  %v412 = vadd.f32 0.0, %v411
  %v413 = vpop.f32.mrb[0].mxu0
  %414 = vmatprep.mubr.bf16.mxu0 0
  %415 = vmatmul.mubr.bf16.gmra.mrb[0].mxu0 %v211
  %v416 = vpop.f32.mrb[0].mxu0
  %v417 = vadd.f32 0.0, %v416
  %v418 = vpop.f32.mrb[0].mxu0
  %v419 = vpop.f32.mrb[0].mxu0
  %v420 = vadd.f32 0.0, %v419
  %v421 = vpop.f32.mrb[0].mxu0
  %422 = vmatprep.mubr.bf16.mxu0 0
  %423 = vmatmul.mubr.bf16.gmra.mrb[0].mxu0 %v212
  %v424 = vpop.f32.mrb[0].mxu0
  %v425 = vadd.f32 0.0, %v424
  %v426 = vpop.f32.mrb[0].mxu0
  %v427 = vpop.f32.mrb[0].mxu0
  %v428 = vadd.f32 0.0, %v427
  %v429 = vpop.f32.mrb[0].mxu0
  %430 = vmatprep.mubr.bf16.mxu0 0
  %431 = vmatmul.mubr.bf16.gmra.mrb[0].mxu0 %v213
  %v432 = vpop.f32.mrb[0].mxu0
  %v433 = vadd.f32 0.0, %v432
  %v434 = vpop.f32.mrb[0].mxu0
  %v435 = vpop.f32.mrb[0].mxu0
  %v436 = vadd.f32 0.0, %v435
  %v437 = vpop.f32.mrb[0].mxu0
  %438 = vdwg.mxu0
  %v439 = vadd.f32 %v54, %v313
  %v440 = vadd.f32 %v55, %v316
  %v441 = vadd.f32 %v56, %v321
  %v442 = vadd.f32 %v57, %v324
  %v443 = vadd.f32 %v58, %v329
  %v444 = vadd.f32 %v59, %v332
  %v445 = vadd.f32 %v60, %v337
  %v446 = vadd.f32 %v61, %v340
  %v447 = vadd.f32 %v62, %v345
  %v448 = vadd.f32 %v63, %v348
  %v449 = vadd.f32 %v64, %v353
  %v450 = vadd.f32 %v65, %v356
  %v451 = vadd.f32 %v66, %v361
  %v452 = vadd.f32 %v67, %v364
  %v453 = vadd.f32 %v68, %v369
  %v454 = vadd.f32 %v69, %v372
  %v455 = vadd.f32 %v70, %v377
  %v456 = vadd.f32 %v71, %v380
  %v457 = vadd.f32 %v72, %v385
  %v458 = vadd.f32 %v73, %v388
  %v459 = vadd.f32 %v74, %v393
  %v460 = vadd.f32 %v75, %v396
  %v461 = vadd.f32 %v76, %v401
  %v462 = vadd.f32 %v77, %v404
  %v463 = vadd.f32 %v78, %v409
  %v464 = vadd.f32 %v79, %v412
  %v465 = vadd.f32 %v80, %v417
  %v466 = vadd.f32 %v81, %v420
  %v467 = vadd.f32 %v82, %v425
  %v468 = vadd.f32 %v83, %v428
  %v469 = vadd.f32 %v84, %v433
  %v470 = vadd.f32 %v85, %v436
  %471 = vst [vmem:[#allocation2] sm:$0xff] %v439
  %472 = vst [vmem:[#allocation2 + $0x8] sm:$0xff] %v440
  %473 = vst [vmem:[#allocation2 + $0x10] sm:$0xff] %v441
  %474 = vst [vmem:[#allocation2 + $0x18] sm:$0xff] %v442
  %475 = vst [vmem:[#allocation2 + $0x20] sm:$0xff] %v443
  %476 = vst [vmem:[#allocation2 + $0x28] sm:$0xff] %v444
  %477 = vst [vmem:[#allocation2 + $0x30] sm:$0xff] %v445
  %478 = vst [vmem:[#allocation2 + $0x38] sm:$0xff] %v446
  %479 = vst [vmem:[#allocation2 + $0x40] sm:$0xff] %v447
  %480 = vst [vmem:[#allocation2 + $0x48] sm:$0xff] %v448
  %481 = vst [vmem:[#allocation2 + $0x50] sm:$0xff] %v449
  %482 = vst [vmem:[#allocation2 + $0x58] sm:$0xff] %v450
  %483 = vst [vmem:[#allocation2 + $0x60] sm:$0xff] %v451
  %484 = vst [vmem:[#allocation2 + $0x68] sm:$0xff] %v452
  %485 = vst [vmem:[#allocation2 + $0x70] sm:$0xff] %v453
  %486 = vst [vmem:[#allocation2 + $0x78] sm:$0xff] %v454
  %487 = vst [vmem:[#allocation2 + $0x80] sm:$0xff] %v455
  %488 = vst [vmem:[#allocation2 + $0x88] sm:$0xff] %v456
  %489 = vst [vmem:[#allocation2 + $0x90] sm:$0xff] %v457
  %490 = vst [vmem:[#allocation2 + $0x98] sm:$0xff] %v458
  %491 = vst [vmem:[#allocation2 + $0xa0] sm:$0xff] %v459
  %492 = vst [vmem:[#allocation2 + $0xa8] sm:$0xff] %v460
  %493 = vst [vmem:[#allocation2 + $0xb0] sm:$0xff] %v461
  %494 = vst [vmem:[#allocation2 + $0xb8] sm:$0xff] %v462
  %495 = vst [vmem:[#allocation2 + $0xc0] sm:$0xff] %v463
  %496 = vst [vmem:[#allocation2 + $0xc8] sm:$0xff] %v464
  %497 = vst [vmem:[#allocation2 + $0xd0] sm:$0xff] %v465
  %498 = vst [vmem:[#allocation2 + $0xd8] sm:$0xff] %v466
  %499 = vst [vmem:[#allocation2 + $0xe0] sm:$0xff] %v467
  %500 = vst [vmem:[#allocation2 + $0xe8] sm:$0xff] %v468
  %501 = vst [vmem:[#allocation2 + $0xf0] sm:$0xff] %v469
  %502 = vst [vmem:[#allocation2 + $0xf8] sm:$0xff] %v470
  // Predicated region
  $region22: #{whisper_audio_tower_forward.11} parent=0 // pred_check
    %p503 = pneg %p18
  $region23: #{whisper_audio_tower_forward.11} parent=0 // pred_check_branch
    %505 = sbr.rel (%p503) target = $region25
  $region24: #{whisper_audio_tower_forward.11} parent=0 // pred_region
    %v506 = vld [vmem:[#allocation2] sm:$0xff]
    %v507 = vld [vmem:[#allocation2 + $0x8] sm:$0xff]
    %v508 = vld [vmem:[#allocation2 + $0x10] sm:$0xff]
    %v509 = vld [vmem:[#allocation2 + $0x18] sm:$0xff]
    %v510 = vld [vmem:[#allocation2 + $0x20] sm:$0xff]
    %v511 = vld [vmem:[#allocation2 + $0x28] sm:$0xff]
    %v512 = vld [vmem:[#allocation2 + $0x30] sm:$0xff]
    %v513 = vld [vmem:[#allocation2 + $0x38] sm:$0xff]
    %v514 = vld [vmem:[#allocation2 + $0x40] sm:$0xff]
    %v515 = vld [vmem:[#allocation2 + $0x48] sm:$0xff]
    %v516 = vld [vmem:[#allocation2 + $0x50] sm:$0xff]
    %v517 = vld [vmem:[#allocation2 + $0x58] sm:$0xff]
    %v518 = vld [vmem:[#allocation2 + $0x60] sm:$0xff]
    %v519 = vld [vmem:[#allocation2 + $0x68] sm:$0xff]
    %v520 = vld [vmem:[#allocation2 + $0x70] sm:$0xff]
    %v521 = vld [vmem:[#allocation2 + $0x78] sm:$0xff]
    %v522 = vld [vmem:[#allocation2 + $0x80] sm:$0xff]
    %v523 = vld [vmem:[#allocation2 + $0x88] sm:$0xff]
    %v524 = vld [vmem:[#allocation2 + $0x90] sm:$0xff]
    %v525 = vld [vmem:[#allocation2 + $0x98] sm:$0xff]
    %v526 = vld [vmem:[#allocation2 + $0xa0] sm:$0xff]
    %v527 = vld [vmem:[#allocation2 + $0xa8] sm:$0xff]
    %v528 = vld [vmem:[#allocation2 + $0xb0] sm:$0xff]
    %v529 = vld [vmem:[#allocation2 + $0xb8] sm:$0xff]
    %v530 = vld [vmem:[#allocation2 + $0xc0] sm:$0xff]
    %v531 = vld [vmem:[#allocation2 + $0xc8] sm:$0xff]
    %v532 = vld [vmem:[#allocation2 + $0xd0] sm:$0xff]
    %v533 = vld [vmem:[#allocation2 + $0xd8] sm:$0xff]
    %v534 = vld [vmem:[#allocation2 + $0xe0] sm:$0xff]
    %v535 = vld [vmem:[#allocation2 + $0xe8] sm:$0xff]
    %v536 = vld [vmem:[#allocation2 + $0xf0] sm:$0xff]
    %v537 = vld [vmem:[#allocation2 + $0xf8] sm:$0xff]
    %v538 = vld [vmem:[%s2] sm:$0x1]
    %v539 = vunpack.c.l.bf16 %v538
    %v540 = vlaneseq
    %v541 = vshrl.u32 %v540, 7
    %v542 = vsub.s32 0, %v541
    %v543 = vrot.slane %v539, %v542
    %v544 = vadd.f32 %v506, %v543
    %v545 = vadd.f32 %v507, %v543
    %v546 = vadd.f32 %v508, %v543
    %v547 = vadd.f32 %v509, %v543
    %v548 = vadd.f32 %v510, %v543
    %v549 = vadd.f32 %v511, %v543
    %v550 = vadd.f32 %v512, %v543
    %v551 = vadd.f32 %v513, %v543
    %v552 = vadd.f32 %v514, %v543
    %v553 = vadd.f32 %v515, %v543
    %v554 = vadd.f32 %v516, %v543
    %v555 = vadd.f32 %v517, %v543
    %v556 = vadd.f32 %v518, %v543
    %v557 = vadd.f32 %v519, %v543
    %v558 = vadd.f32 %v520, %v543
    %v559 = vadd.f32 %v521, %v543
    %v560 = vadd.f32 %v522, %v543
    %v561 = vadd.f32 %v523, %v543
    %v562 = vadd.f32 %v524, %v543
    %v563 = vadd.f32 %v525, %v543
    %v564 = vadd.f32 %v526, %v543
    %v565 = vadd.f32 %v527, %v543
    %v566 = vadd.f32 %v528, %v543
    %v567 = vadd.f32 %v529, %v543
    %v568 = vadd.f32 %v530, %v543
    %v569 = vadd.f32 %v531, %v543
    %v570 = vadd.f32 %v532, %v543
    %v571 = vadd.f32 %v533, %v543
    %v572 = vadd.f32 %v534, %v543
    %v573 = vadd.f32 %v535, %v543
    %v574 = vadd.f32 %v536, %v543
    %v575 = vadd.f32 %v537, %v543
    %v576 = vld [vmem:[%s3] sm:$0xf]
    %v577 = vld [vmem:[%s3 + $0x4] sm:$0xf]
    %v578 = vld [vmem:[%s3 + $0x8] sm:$0xf]
    %v579 = vld [vmem:[%s3 + $0xc] sm:$0xf]
    %v580 = vld [vmem:[%s3 + $0x10] sm:$0xf]
    %v581 = vld [vmem:[%s3 + $0x14] sm:$0xf]
    %v582 = vld [vmem:[%s3 + $0x18] sm:$0xf]
    %v583 = vld [vmem:[%s3 + $0x1c] sm:$0xf]
    %v584 = vld [vmem:[%s3 + $0x20] sm:$0xf]
    %v585 = vld [vmem:[%s3 + $0x24] sm:$0xf]
    %v586 = vld [vmem:[%s3 + $0x28] sm:$0xf]
    %v587 = vld [vmem:[%s3 + $0x2c] sm:$0xf]
    %v588 = vld [vmem:[%s3 + $0x30] sm:$0xf]
    %v589 = vld [vmem:[%s3 + $0x34] sm:$0xf]
    %v590 = vld [vmem:[%s3 + $0x38] sm:$0xf]
    %v591 = vld [vmem:[%s3 + $0x3c] sm:$0xf]
    %v592 = vld [vmem:[%s3 + $0x40] sm:$0xf]
    %v593 = vld [vmem:[%s3 + $0x44] sm:$0xf]
    %v594 = vld [vmem:[%s3 + $0x48] sm:$0xf]
    %v595 = vld [vmem:[%s3 + $0x4c] sm:$0xf]
    %v596 = vld [vmem:[%s3 + $0x50] sm:$0xf]
    %v597 = vld [vmem:[%s3 + $0x54] sm:$0xf]
    %v598 = vld [vmem:[%s3 + $0x58] sm:$0xf]
    %v599 = vld [vmem:[%s3 + $0x5c] sm:$0xf]
    %v600 = vld [vmem:[%s3 + $0x60] sm:$0xf]
    %v601 = vld [vmem:[%s3 + $0x64] sm:$0xf]
    %v602 = vld [vmem:[%s3 + $0x68] sm:$0xf]
    %v603 = vld [vmem:[%s3 + $0x6c] sm:$0xf]
    %v604 = vld [vmem:[%s3 + $0x70] sm:$0xf]
    %v605 = vld [vmem:[%s3 + $0x74] sm:$0xf]
    %v606 = vld [vmem:[%s3 + $0x78] sm:$0xf]
    %v607 = vld [vmem:[%s3 + $0x7c] sm:$0xf]
    %v608 = vunpack.c.l.bf16 %v576
    %v609 = vunpack.c.l.bf16 %v577
    %v610 = vunpack.c.l.bf16 %v578
    %v611 = vunpack.c.l.bf16 %v579
    %v612 = vunpack.c.l.bf16 %v580
    %v613 = vunpack.c.l.bf16 %v581
    %v614 = vunpack.c.l.bf16 %v582
    %v615 = vunpack.c.l.bf16 %v583
    %v616 = vunpack.c.l.bf16 %v584
    %v617 = vunpack.c.l.bf16 %v585
    %v618 = vunpack.c.l.bf16 %v586
    %v619 = vunpack.c.l.bf16 %v587
    %v620 = vunpack.c.l.bf16 %v588
    %v621 = vunpack.c.l.bf16 %v589
    %v622 = vunpack.c.l.bf16 %v590
    %v623 = vunpack.c.l.bf16 %v591
    %v624 = vunpack.c.l.bf16 %v592
    %v625 = vunpack.c.l.bf16 %v593
    %v626 = vunpack.c.l.bf16 %v594
    %v627 = vunpack.c.l.bf16 %v595
    %v628 = vunpack.c.l.bf16 %v596
    %v629 = vunpack.c.l.bf16 %v597
    %v630 = vunpack.c.l.bf16 %v598
    %v631 = vunpack.c.l.bf16 %v599
    %v632 = vunpack.c.l.bf16 %v600
    %v633 = vunpack.c.l.bf16 %v601
    %v634 = vunpack.c.l.bf16 %v602
    %v635 = vunpack.c.l.bf16 %v603
    %v636 = vunpack.c.l.bf16 %v604
    %v637 = vunpack.c.l.bf16 %v605
    %v638 = vunpack.c.l.bf16 %v606
    %v639 = vunpack.c.l.bf16 %v607
    %v640 = vadd.f32 %v544, %v608
    %v641 = vadd.f32 %v545, %v609
    %v642 = vadd.f32 %v546, %v610
    %v643 = vadd.f32 %v547, %v611
    %v644 = vadd.f32 %v548, %v612
    %v645 = vadd.f32 %v549, %v613
    %v646 = vadd.f32 %v550, %v614
    %v647 = vadd.f32 %v551, %v615
    %v648 = vadd.f32 %v552, %v616
    %v649 = vadd.f32 %v553, %v617
    %v650 = vadd.f32 %v554, %v618
    %v651 = vadd.f32 %v555, %v619
    %v652 = vadd.f32 %v556, %v620
    %v653 = vadd.f32 %v557, %v621
    %v654 = vadd.f32 %v558, %v622
    %v655 = vadd.f32 %v559, %v623
    %v656 = vadd.f32 %v560, %v624
    %v657 = vadd.f32 %v561, %v625
    %v658 = vadd.f32 %v562, %v626
    %v659 = vadd.f32 %v563, %v627
    %v660 = vadd.f32 %v564, %v628
    %v661 = vadd.f32 %v565, %v629
    %v662 = vadd.f32 %v566, %v630
    %v663 = vadd.f32 %v567, %v631
    %v664 = vadd.f32 %v568, %v632
    %v665 = vadd.f32 %v569, %v633
    %v666 = vadd.f32 %v570, %v634
    %v667 = vadd.f32 %v571, %v635
    %v668 = vadd.f32 %v572, %v636
    %v669 = vadd.f32 %v573, %v637
    %v670 = vadd.f32 %v574, %v638
    %v671 = vadd.f32 %v575, %v639
    %v672 = vpack.c.bf16 %v641, %v640
    %v673 = vpack.c.bf16 %v643, %v642
    %v674 = vpack.c.bf16 %v645, %v644
    %v675 = vpack.c.bf16 %v647, %v646
    %v676 = vpack.c.bf16 %v649, %v648
    %v677 = vpack.c.bf16 %v651, %v650
    %v678 = vpack.c.bf16 %v653, %v652
    %v679 = vpack.c.bf16 %v655, %v654
    %v680 = vpack.c.bf16 %v657, %v656
    %v681 = vpack.c.bf16 %v659, %v658
    %v682 = vpack.c.bf16 %v661, %v660
    %v683 = vpack.c.bf16 %v663, %v662
    %v684 = vpack.c.bf16 %v665, %v664
    %v685 = vpack.c.bf16 %v667, %v666
    %v686 = vpack.c.bf16 %v669, %v668
    %v687 = vpack.c.bf16 %v671, %v670
    %v704 = vunpack.c.l.b16 %v672
    %v705 = vunpack.c.h.b16 %v672
    %v706 = vunpack.c.l.b16 %v673
    %v707 = vunpack.c.h.b16 %v673
    %v708 = vunpack.c.l.b16 %v674
    %v709 = vunpack.c.h.b16 %v674
    %v710 = vunpack.c.l.b16 %v675
    %v711 = vunpack.c.h.b16 %v675
    %v712 = vunpack.c.l.b16 %v676
    %v713 = vunpack.c.h.b16 %v676
    %v714 = vunpack.c.l.b16 %v677
    %v715 = vunpack.c.h.b16 %v677
    %v716 = vunpack.c.l.b16 %v678
    %v717 = vunpack.c.h.b16 %v678
    %v718 = vunpack.c.l.b16 %v679
    %v719 = vunpack.c.h.b16 %v679
    %v720 = vunpack.c.l.b16 %v680
    %v721 = vunpack.c.h.b16 %v680
    %v722 = vunpack.c.l.b16 %v681
    %v723 = vunpack.c.h.b16 %v681
    %v724 = vunpack.c.l.b16 %v682
    %v725 = vunpack.c.h.b16 %v682
    %v726 = vunpack.c.l.b16 %v683
    %v727 = vunpack.c.h.b16 %v683
    %v728 = vunpack.c.l.b16 %v684
    %v729 = vunpack.c.h.b16 %v684
    %v730 = vunpack.c.l.b16 %v685
    %v731 = vunpack.c.h.b16 %v685
    %v732 = vunpack.c.l.b16 %v686
    %v733 = vunpack.c.h.b16 %v686
    %v734 = vunpack.c.l.b16 %v687
    %v735 = vunpack.c.h.b16 %v687
    %v736 = vpack.c.b16 %v704, %v704
    %v737 = vpack.c.b16 %v705, %v705
    %v738 = vpack.c.b16 %v706, %v706
    %v739 = vpack.c.b16 %v707, %v707
    %v740 = vpack.c.b16 %v708, %v708
    %v741 = vpack.c.b16 %v709, %v709
    %v742 = vpack.c.b16 %v710, %v710
    %v743 = vpack.c.b16 %v711, %v711
    %v744 = vpack.c.b16 %v712, %v712
    %v745 = vpack.c.b16 %v713, %v713
    %v746 = vpack.c.b16 %v714, %v714
    %v747 = vpack.c.b16 %v715, %v715
    %v748 = vpack.c.b16 %v716, %v716
    %v749 = vpack.c.b16 %v717, %v717
    %v750 = vpack.c.b16 %v718, %v718
    %v751 = vpack.c.b16 %v719, %v719
    %v752 = vpack.c.b16 %v720, %v720
    %v753 = vpack.c.b16 %v721, %v721
    %v754 = vpack.c.b16 %v722, %v722
    %v755 = vpack.c.b16 %v723, %v723
    %v756 = vpack.c.b16 %v724, %v724
    %v757 = vpack.c.b16 %v725, %v725
    %v758 = vpack.c.b16 %v726, %v726
    %v759 = vpack.c.b16 %v727, %v727
    %v760 = vpack.c.b16 %v728, %v728
    %v761 = vpack.c.b16 %v729, %v729
    %v762 = vpack.c.b16 %v730, %v730
    %v763 = vpack.c.b16 %v731, %v731
    %v764 = vpack.c.b16 %v732, %v732
    %v765 = vpack.c.b16 %v733, %v733
    %v766 = vpack.c.b16 %v734, %v734
    %v767 = vpack.c.b16 %v735, %v735
    %800 = vst [vmem:[%s4] sm:$0xf] %v736
    %801 = vst [vmem:[%s4 + $0x4] sm:$0xf] %v737
    %802 = vst [vmem:[%s4 + $0x8] sm:$0xf] %v738
    %803 = vst [vmem:[%s4 + $0xc] sm:$0xf] %v739
    %804 = vst [vmem:[%s4 + $0x10] sm:$0xf] %v740
    %805 = vst [vmem:[%s4 + $0x14] sm:$0xf] %v741
    %806 = vst [vmem:[%s4 + $0x18] sm:$0xf] %v742
    %807 = vst [vmem:[%s4 + $0x1c] sm:$0xf] %v743
    %808 = vst [vmem:[%s4 + $0x20] sm:$0xf] %v744
    %809 = vst [vmem:[%s4 + $0x24] sm:$0xf] %v745
    %810 = vst [vmem:[%s4 + $0x28] sm:$0xf] %v746
    %811 = vst [vmem:[%s4 + $0x2c] sm:$0xf] %v747
    %812 = vst [vmem:[%s4 + $0x30] sm:$0xf] %v748
    %813 = vst [vmem:[%s4 + $0x34] sm:$0xf] %v749
    %814 = vst [vmem:[%s4 + $0x38] sm:$0xf] %v750
    %815 = vst [vmem:[%s4 + $0x3c] sm:$0xf] %v751
    %816 = vst [vmem:[%s4 + $0x40] sm:$0xf] %v752
    %817 = vst [vmem:[%s4 + $0x44] sm:$0xf] %v753
    %818 = vst [vmem:[%s4 + $0x48] sm:$0xf] %v754
    %819 = vst [vmem:[%s4 + $0x4c] sm:$0xf] %v755
    %820 = vst [vmem:[%s4 + $0x50] sm:$0xf] %v756
    %821 = vst [vmem:[%s4 + $0x54] sm:$0xf] %v757
    %822 = vst [vmem:[%s4 + $0x58] sm:$0xf] %v758
    %823 = vst [vmem:[%s4 + $0x5c] sm:$0xf] %v759
    %824 = vst [vmem:[%s4 + $0x60] sm:$0xf] %v760
    %825 = vst [vmem:[%s4 + $0x64] sm:$0xf] %v761
    %826 = vst [vmem:[%s4 + $0x68] sm:$0xf] %v762
    %827 = vst [vmem:[%s4 + $0x6c] sm:$0xf] %v763
    %828 = vst [vmem:[%s4 + $0x70] sm:$0xf] %v764
    %829 = vst [vmem:[%s4 + $0x74] sm:$0xf] %v765
    %830 = vst [vmem:[%s4 + $0x78] sm:$0xf] %v766
    %831 = vst [vmem:[%s4 + $0x7c] sm:$0xf] %v767
  $region25: #{whisper_audio_tower_forward.11} parent=0 // pred_fallthru
    _
  // Predicated region
  $region26: #{whisper_audio_tower_forward.11} parent=0 // pred_check
    _
  $region27: #{whisper_audio_tower_forward.11} parent=0 // pred_check_branch
    %833 = sbr.rel (0) target = $region29
  $region28: #{whisper_audio_tower_forward.11} parent=0 // pred_region
    _
  $region29: #{whisper_audio_tower_forward.11} parent=0 // pred_fallthru
    _
  // Predicated region
  $region30: #{whisper_audio_tower_forward.11} parent=0 // pred_check
    _
  $region31: #{whisper_audio_tower_forward.11} parent=0 // pred_check_branch
    %835 = sbr.rel (0) target = $region33
  $region32: #{whisper_audio_tower_forward.11} parent=0 // pred_region
    _
  $region33: #{whisper_audio_tower_forward.11} parent=0 // pred_fallthru
    _

// kernel: whisper_audio_tower_forward.13
$region0: #{whisper_audio_tower_forward.13}
  #allocation0 [shape = 'u32[]', space=smem, size = 0x4, offset = 0x4, fixed_abs, tag = 'smem constant byte address 0x4 - core index']
  #allocation1 [shape = 'u32[144,128]{1,0:T(1,128)}', space=vmem, size = 0x12000, scoped, tag = 'internal scratch']
  #allocation2 [shape = 'f32[256,128]{1,0:T(8,128)}', space=vmem, size = 0x20000, scoped, tag = 'scratch operand']
  %s0 = inlined_call_operand.vmem [shape: bf16[256,256], index: 0, kind: input, shape index: {}]
  %s1 = inlined_call_operand.vmem [shape: bf16[256,128], index: 1, kind: input, shape index: {}]
  %s2 = inlined_call_operand.vmem [shape: bf16[1,128], index: 2, kind: input, shape index: {}]
  %s3 = inlined_call_operand.vmem [shape: bf16[256,128], index: 3, kind: input, shape index: {}]
  %s4 = inlined_call_operand.vmem [shape: bf16[256,128], index: 4, kind: output, shape index: {}]
  %s5 = sld [smem:[#allocation0]]
  $region34: #{whisper_audio_tower_forward.13} parent=0
    _
  %s7 = ssub.s32 1, %s5
  %s8 = scalar_select 0, %s7, %s5
  // Predicated region
  $region2: #{whisper_audio_tower_forward.13} parent=0 // pred_check
    _
  $region3: #{whisper_audio_tower_forward.13} parent=0 // pred_check_branch
    %10 = sbr.rel (0) target = $region5
  $region4: #{whisper_audio_tower_forward.13} parent=0 // pred_region
    _
  $region5: #{whisper_audio_tower_forward.13} parent=0 // pred_fallthru
    _
  // Predicated region
  $region6: #{whisper_audio_tower_forward.13} parent=0 // pred_check
    _
  $region7: #{whisper_audio_tower_forward.13} parent=0 // pred_check_branch
    %12 = sbr.rel (0) target = $region9
  $region8: #{whisper_audio_tower_forward.13} parent=0 // pred_region
    _
  $region9: #{whisper_audio_tower_forward.13} parent=0 // pred_fallthru
    _
  // Predicated region
  $region10: #{whisper_audio_tower_forward.13} parent=0 // pred_check
    _
  $region11: #{whisper_audio_tower_forward.13} parent=0 // pred_check_branch
    %14 = sbr.rel (0) target = $region13
  $region12: #{whisper_audio_tower_forward.13} parent=0 // pred_region
    _
  $region13: #{whisper_audio_tower_forward.13} parent=0 // pred_fallthru
    _
  // Predicated region
  $region14: #{whisper_audio_tower_forward.13} parent=0 // pred_check
    _
  $region15: #{whisper_audio_tower_forward.13} parent=0 // pred_check_branch
    %16 = sbr.rel (0) target = $region17
  $region16: #{whisper_audio_tower_forward.13} parent=0 // pred_region
    _
  $region17: #{whisper_audio_tower_forward.13} parent=0 // pred_fallthru
    _
  %p18 = scmp.eq.s32.totalorder 0, 0
  // Predicated region
  $region18: #{whisper_audio_tower_forward.13} parent=0 // pred_check
    %p19 = pneg %p18
  $region19: #{whisper_audio_tower_forward.13} parent=0 // pred_check_branch
    %21 = sbr.rel (%p19) target = $region21
  $region20: #{whisper_audio_tower_forward.13} parent=0 // pred_region
    %22 = vst [vmem:[#allocation2] sm:$0xff] 0.0
    %23 = vst [vmem:[#allocation2 + $0x8] sm:$0xff] 0.0
    %24 = vst [vmem:[#allocation2 + $0x10] sm:$0xff] 0.0
    %25 = vst [vmem:[#allocation2 + $0x18] sm:$0xff] 0.0
    %26 = vst [vmem:[#allocation2 + $0x20] sm:$0xff] 0.0
    %27 = vst [vmem:[#allocation2 + $0x28] sm:$0xff] 0.0
    %28 = vst [vmem:[#allocation2 + $0x30] sm:$0xff] 0.0
    %29 = vst [vmem:[#allocation2 + $0x38] sm:$0xff] 0.0
    %30 = vst [vmem:[#allocation2 + $0x40] sm:$0xff] 0.0
    %31 = vst [vmem:[#allocation2 + $0x48] sm:$0xff] 0.0
    %32 = vst [vmem:[#allocation2 + $0x50] sm:$0xff] 0.0
    %33 = vst [vmem:[#allocation2 + $0x58] sm:$0xff] 0.0
    %34 = vst [vmem:[#allocation2 + $0x60] sm:$0xff] 0.0
    %35 = vst [vmem:[#allocation2 + $0x68] sm:$0xff] 0.0
    %36 = vst [vmem:[#allocation2 + $0x70] sm:$0xff] 0.0
    %37 = vst [vmem:[#allocation2 + $0x78] sm:$0xff] 0.0
    %38 = vst [vmem:[#allocation2 + $0x80] sm:$0xff] 0.0
    %39 = vst [vmem:[#allocation2 + $0x88] sm:$0xff] 0.0
    %40 = vst [vmem:[#allocation2 + $0x90] sm:$0xff] 0.0
    %41 = vst [vmem:[#allocation2 + $0x98] sm:$0xff] 0.0
    %42 = vst [vmem:[#allocation2 + $0xa0] sm:$0xff] 0.0
    %43 = vst [vmem:[#allocation2 + $0xa8] sm:$0xff] 0.0
    %44 = vst [vmem:[#allocation2 + $0xb0] sm:$0xff] 0.0
    %45 = vst [vmem:[#allocation2 + $0xb8] sm:$0xff] 0.0
    %46 = vst [vmem:[#allocation2 + $0xc0] sm:$0xff] 0.0
    %47 = vst [vmem:[#allocation2 + $0xc8] sm:$0xff] 0.0
    %48 = vst [vmem:[#allocation2 + $0xd0] sm:$0xff] 0.0
    %49 = vst [vmem:[#allocation2 + $0xd8] sm:$0xff] 0.0
    %50 = vst [vmem:[#allocation2 + $0xe0] sm:$0xff] 0.0
    %51 = vst [vmem:[#allocation2 + $0xe8] sm:$0xff] 0.0
    %52 = vst [vmem:[#allocation2 + $0xf0] sm:$0xff] 0.0
    %53 = vst [vmem:[#allocation2 + $0xf8] sm:$0xff] 0.0
  $region21: #{whisper_audio_tower_forward.13} parent=0 // pred_fallthru
    _
  %v54 = vld [vmem:[#allocation2] sm:$0xff]
  %v55 = vld [vmem:[#allocation2 + $0x8] sm:$0xff]
  %v56 = vld [vmem:[#allocation2 + $0x10] sm:$0xff]
  %v57 = vld [vmem:[#allocation2 + $0x18] sm:$0xff]
  %v58 = vld [vmem:[#allocation2 + $0x20] sm:$0xff]
  %v59 = vld [vmem:[#allocation2 + $0x28] sm:$0xff]
  %v60 = vld [vmem:[#allocation2 + $0x30] sm:$0xff]
  %v61 = vld [vmem:[#allocation2 + $0x38] sm:$0xff]
  %v62 = vld [vmem:[#allocation2 + $0x40] sm:$0xff]
  %v63 = vld [vmem:[#allocation2 + $0x48] sm:$0xff]
  %v64 = vld [vmem:[#allocation2 + $0x50] sm:$0xff]
  %v65 = vld [vmem:[#allocation2 + $0x58] sm:$0xff]
  %v66 = vld [vmem:[#allocation2 + $0x60] sm:$0xff]
  %v67 = vld [vmem:[#allocation2 + $0x68] sm:$0xff]
  %v68 = vld [vmem:[#allocation2 + $0x70] sm:$0xff]
  %v69 = vld [vmem:[#allocation2 + $0x78] sm:$0xff]
  %v70 = vld [vmem:[#allocation2 + $0x80] sm:$0xff]
  %v71 = vld [vmem:[#allocation2 + $0x88] sm:$0xff]
  %v72 = vld [vmem:[#allocation2 + $0x90] sm:$0xff]
  %v73 = vld [vmem:[#allocation2 + $0x98] sm:$0xff]
  %v74 = vld [vmem:[#allocation2 + $0xa0] sm:$0xff]
  %v75 = vld [vmem:[#allocation2 + $0xa8] sm:$0xff]
  %v76 = vld [vmem:[#allocation2 + $0xb0] sm:$0xff]
  %v77 = vld [vmem:[#allocation2 + $0xb8] sm:$0xff]
  %v78 = vld [vmem:[#allocation2 + $0xc0] sm:$0xff]
  %v79 = vld [vmem:[#allocation2 + $0xc8] sm:$0xff]
  %v80 = vld [vmem:[#allocation2 + $0xd0] sm:$0xff]
  %v81 = vld [vmem:[#allocation2 + $0xd8] sm:$0xff]
  %v82 = vld [vmem:[#allocation2 + $0xe0] sm:$0xff]
  %v83 = vld [vmem:[#allocation2 + $0xe8] sm:$0xff]
  %v84 = vld [vmem:[#allocation2 + $0xf0] sm:$0xff]
  %v85 = vld [vmem:[#allocation2 + $0xf8] sm:$0xff]
  %v86 = vld [vmem:[%s0] sm:$0xff]
  %v87 = vld [vmem:[%s0 + $0x8] sm:$0xff]
  %v88 = vld [vmem:[%s0 + $0x10] sm:$0xff]
  %v89 = vld [vmem:[%s0 + $0x18] sm:$0xff]
  %v90 = vld [vmem:[%s0 + $0x20] sm:$0xff]
  %v91 = vld [vmem:[%s0 + $0x28] sm:$0xff]
  %v92 = vld [vmem:[%s0 + $0x30] sm:$0xff]
  %v93 = vld [vmem:[%s0 + $0x38] sm:$0xff]
  %v94 = vld [vmem:[%s0 + $0x40] sm:$0xff]
  %v95 = vld [vmem:[%s0 + $0x48] sm:$0xff]
  %v96 = vld [vmem:[%s0 + $0x50] sm:$0xff]
  %v97 = vld [vmem:[%s0 + $0x58] sm:$0xff]
  %v98 = vld [vmem:[%s0 + $0x60] sm:$0xff]
  %v99 = vld [vmem:[%s0 + $0x68] sm:$0xff]
  %v100 = vld [vmem:[%s0 + $0x70] sm:$0xff]
  %v101 = vld [vmem:[%s0 + $0x78] sm:$0xff]
  %v102 = vld [vmem:[%s0 + $0x80] sm:$0xff]
  %v103 = vld [vmem:[%s0 + $0x88] sm:$0xff]
  %v104 = vld [vmem:[%s0 + $0x90] sm:$0xff]
  %v105 = vld [vmem:[%s0 + $0x98] sm:$0xff]
  %v106 = vld [vmem:[%s0 + $0xa0] sm:$0xff]
  %v107 = vld [vmem:[%s0 + $0xa8] sm:$0xff]
  %v108 = vld [vmem:[%s0 + $0xb0] sm:$0xff]
  %v109 = vld [vmem:[%s0 + $0xb8] sm:$0xff]
  %v110 = vld [vmem:[%s0 + $0xc0] sm:$0xff]
  %v111 = vld [vmem:[%s0 + $0xc8] sm:$0xff]
  %v112 = vld [vmem:[%s0 + $0xd0] sm:$0xff]
  %v113 = vld [vmem:[%s0 + $0xd8] sm:$0xff]
  %v114 = vld [vmem:[%s0 + $0xe0] sm:$0xff]
  %v115 = vld [vmem:[%s0 + $0xe8] sm:$0xff]
  %v116 = vld [vmem:[%s0 + $0xf0] sm:$0xff]
  %v117 = vld [vmem:[%s0 + $0xf8] sm:$0xff]
  %v118 = vld [vmem:[%s1] sm:$0xf]
  %v119 = vld [vmem:[%s1 + $0x4] sm:$0xf]
  %v120 = vld [vmem:[%s1 + $0x8] sm:$0xf]
  %v121 = vld [vmem:[%s1 + $0xc] sm:$0xf]
  %v122 = vld [vmem:[%s1 + $0x10] sm:$0xf]
  %v123 = vld [vmem:[%s1 + $0x14] sm:$0xf]
  %v124 = vld [vmem:[%s1 + $0x18] sm:$0xf]
  %v125 = vld [vmem:[%s1 + $0x1c] sm:$0xf]
  %v126 = vld [vmem:[%s1 + $0x20] sm:$0xf]
  %v127 = vld [vmem:[%s1 + $0x24] sm:$0xf]
  %v128 = vld [vmem:[%s1 + $0x28] sm:$0xf]
  %v129 = vld [vmem:[%s1 + $0x2c] sm:$0xf]
  %v130 = vld [vmem:[%s1 + $0x30] sm:$0xf]
  %v131 = vld [vmem:[%s1 + $0x34] sm:$0xf]
  %v132 = vld [vmem:[%s1 + $0x38] sm:$0xf]
  %v133 = vld [vmem:[%s1 + $0x3c] sm:$0xf]
  %v134 = vld [vmem:[%s1 + $0x40] sm:$0xf]
  %v135 = vld [vmem:[%s1 + $0x44] sm:$0xf]
  %v136 = vld [vmem:[%s1 + $0x48] sm:$0xf]
  %v137 = vld [vmem:[%s1 + $0x4c] sm:$0xf]
  %v138 = vld [vmem:[%s1 + $0x50] sm:$0xf]
  %v139 = vld [vmem:[%s1 + $0x54] sm:$0xf]
  %v140 = vld [vmem:[%s1 + $0x58] sm:$0xf]
  %v141 = vld [vmem:[%s1 + $0x5c] sm:$0xf]
  %v142 = vld [vmem:[%s1 + $0x60] sm:$0xf]
  %v143 = vld [vmem:[%s1 + $0x64] sm:$0xf]
  %v144 = vld [vmem:[%s1 + $0x68] sm:$0xf]
  %v145 = vld [vmem:[%s1 + $0x6c] sm:$0xf]
  %v146 = vld [vmem:[%s1 + $0x70] sm:$0xf]
  %v147 = vld [vmem:[%s1 + $0x74] sm:$0xf]
  %v148 = vld [vmem:[%s1 + $0x78] sm:$0xf]
  %v149 = vld [vmem:[%s1 + $0x7c] sm:$0xf]
  %v182 = vunpack.c.l.b16 %v86
  %v183 = vunpack.c.h.b16 %v86
  %v184 = vunpack.c.l.b16 %v87
  %v185 = vunpack.c.h.b16 %v87
  %v186 = vunpack.c.l.b16 %v88
  %v187 = vunpack.c.h.b16 %v88
  %v188 = vunpack.c.l.b16 %v89
  %v189 = vunpack.c.h.b16 %v89
  %v190 = vunpack.c.l.b16 %v90
  %v191 = vunpack.c.h.b16 %v90
  %v192 = vunpack.c.l.b16 %v91
  %v193 = vunpack.c.h.b16 %v91
  %v194 = vunpack.c.l.b16 %v92
  %v195 = vunpack.c.h.b16 %v92
  %v196 = vunpack.c.l.b16 %v93
  %v197 = vunpack.c.h.b16 %v93
  %v198 = vunpack.c.l.b16 %v94
  %v199 = vunpack.c.h.b16 %v94
  %v200 = vunpack.c.l.b16 %v95
  %v201 = vunpack.c.h.b16 %v95
  %v202 = vunpack.c.l.b16 %v96
  %v203 = vunpack.c.h.b16 %v96
  %v204 = vunpack.c.l.b16 %v97
  %v205 = vunpack.c.h.b16 %v97
  %v206 = vunpack.c.l.b16 %v98
  %v207 = vunpack.c.h.b16 %v98
  %v208 = vunpack.c.l.b16 %v99
  %v209 = vunpack.c.h.b16 %v99
  %v210 = vunpack.c.l.b16 %v100
  %v211 = vunpack.c.h.b16 %v100
  %v212 = vunpack.c.l.b16 %v101
  %v213 = vunpack.c.h.b16 %v101
  %v214 = vunpack.c.l.b16 %v102
  %v215 = vunpack.c.h.b16 %v102
  %v216 = vunpack.c.l.b16 %v103
  %v217 = vunpack.c.h.b16 %v103
  %v218 = vunpack.c.l.b16 %v104
  %v219 = vunpack.c.h.b16 %v104
  %v220 = vunpack.c.l.b16 %v105
  %v221 = vunpack.c.h.b16 %v105
  %v222 = vunpack.c.l.b16 %v106
  %v223 = vunpack.c.h.b16 %v106
  %v224 = vunpack.c.l.b16 %v107
  %v225 = vunpack.c.h.b16 %v107
  %v226 = vunpack.c.l.b16 %v108
  %v227 = vunpack.c.h.b16 %v108
  %v228 = vunpack.c.l.b16 %v109
  %v229 = vunpack.c.h.b16 %v109
  %v230 = vunpack.c.l.b16 %v110
  %v231 = vunpack.c.h.b16 %v110
  %v232 = vunpack.c.l.b16 %v111
  %v233 = vunpack.c.h.b16 %v111
  %v234 = vunpack.c.l.b16 %v112
  %v235 = vunpack.c.h.b16 %v112
  %v236 = vunpack.c.l.b16 %v113
  %v237 = vunpack.c.h.b16 %v113
  %v238 = vunpack.c.l.b16 %v114
  %v239 = vunpack.c.h.b16 %v114
  %v240 = vunpack.c.l.b16 %v115
  %v241 = vunpack.c.h.b16 %v115
  %v242 = vunpack.c.l.b16 %v116
  %v243 = vunpack.c.h.b16 %v116
  %v244 = vunpack.c.l.b16 %v117
  %v245 = vunpack.c.h.b16 %v117
  %v246 = vpack.c.b16 %v184, %v182
  %v247 = vpack.c.b16 %v185, %v183
  %v248 = vpack.c.b16 %v188, %v186
  %v249 = vpack.c.b16 %v189, %v187
  %v250 = vpack.c.b16 %v192, %v190
  %v251 = vpack.c.b16 %v193, %v191
  %v252 = vpack.c.b16 %v196, %v194
  %v253 = vpack.c.b16 %v197, %v195
  %v254 = vpack.c.b16 %v200, %v198
  %v255 = vpack.c.b16 %v201, %v199
  %v256 = vpack.c.b16 %v204, %v202
  %v257 = vpack.c.b16 %v205, %v203
  %v258 = vpack.c.b16 %v208, %v206
  %v259 = vpack.c.b16 %v209, %v207
  %v260 = vpack.c.b16 %v212, %v210
  %v261 = vpack.c.b16 %v213, %v211
  %v262 = vpack.c.b16 %v216, %v214
  %v263 = vpack.c.b16 %v217, %v215
  %v264 = vpack.c.b16 %v220, %v218
  %v265 = vpack.c.b16 %v221, %v219
  %v266 = vpack.c.b16 %v224, %v222
  %v267 = vpack.c.b16 %v225, %v223
  %v268 = vpack.c.b16 %v228, %v226
  %v269 = vpack.c.b16 %v229, %v227
  %v270 = vpack.c.b16 %v232, %v230
  %v271 = vpack.c.b16 %v233, %v231
  %v272 = vpack.c.b16 %v236, %v234
  %v273 = vpack.c.b16 %v237, %v235
  %v274 = vpack.c.b16 %v240, %v238
  %v275 = vpack.c.b16 %v241, %v239
  %v276 = vpack.c.b16 %v244, %v242
  %v277 = vpack.c.b16 %v245, %v243
  %v342 = vunpack.c.l.b16 %v118
  %v343 = vunpack.c.l.b16 %v119
  %v344 = vunpack.c.l.b16 %v120
  %v345 = vunpack.c.l.b16 %v121
  %v346 = vunpack.c.l.b16 %v122
  %v347 = vunpack.c.l.b16 %v123
  %v348 = vunpack.c.l.b16 %v124
  %v349 = vunpack.c.l.b16 %v125
  %v350 = vunpack.c.l.b16 %v126
  %v351 = vunpack.c.l.b16 %v127
  %v352 = vunpack.c.l.b16 %v128
  %v353 = vunpack.c.l.b16 %v129
  %v354 = vunpack.c.l.b16 %v130
  %v355 = vunpack.c.l.b16 %v131
  %v356 = vunpack.c.l.b16 %v132
  %v357 = vunpack.c.l.b16 %v133
  %v358 = vunpack.c.l.b16 %v134
  %v359 = vunpack.c.l.b16 %v135
  %v360 = vunpack.c.l.b16 %v136
  %v361 = vunpack.c.l.b16 %v137
  %v362 = vunpack.c.l.b16 %v138
  %v363 = vunpack.c.l.b16 %v139
  %v364 = vunpack.c.l.b16 %v140
  %v365 = vunpack.c.l.b16 %v141
  %v366 = vunpack.c.l.b16 %v142
  %v367 = vunpack.c.l.b16 %v143
  %v368 = vunpack.c.l.b16 %v144
  %v369 = vunpack.c.l.b16 %v145
  %v370 = vunpack.c.l.b16 %v146
  %v371 = vunpack.c.l.b16 %v147
  %v372 = vunpack.c.l.b16 %v148
  %v373 = vunpack.c.l.b16 %v149
  %v374 = vpack.c.b16 %v343, %v342
  %v375 = vpack.c.b16 %v345, %v344
  %v376 = vpack.c.b16 %v347, %v346
  %v377 = vpack.c.b16 %v349, %v348
  %v378 = vpack.c.b16 %v351, %v350
  %v379 = vpack.c.b16 %v353, %v352
  %v380 = vpack.c.b16 %v355, %v354
  %v381 = vpack.c.b16 %v357, %v356
  %v382 = vpack.c.b16 %v359, %v358
  %v383 = vpack.c.b16 %v361, %v360
  %v384 = vpack.c.b16 %v363, %v362
  %v385 = vpack.c.b16 %v365, %v364
  %v386 = vpack.c.b16 %v367, %v366
  %v387 = vpack.c.b16 %v369, %v368
  %v388 = vpack.c.b16 %v371, %v370
  %v389 = vpack.c.b16 %v373, %v372
  %406 = vmatprep.subr.bf16.mxu0 0
  %407 = vmatpush1.bf16.msra.mxu0 %v374
  %408 = vmatprep.subr.bf16.mxu0 0
  %409 = vmatpush1.bf16.msra.mxu0 %v375
  %410 = vmatprep.subr.bf16.mxu0 0
  %411 = vmatpush1.bf16.msra.mxu0 %v376
  %412 = vmatprep.subr.bf16.mxu0 0
  %413 = vmatpush1.bf16.msra.mxu0 %v377
  %414 = vmatprep.subr.bf16.mxu0 0
  %415 = vmatpush1.bf16.msra.mxu0 %v378
  %416 = vmatprep.subr.bf16.mxu0 0
  %417 = vmatpush1.bf16.msra.mxu0 %v379
  %418 = vmatprep.subr.bf16.mxu0 0
  %419 = vmatpush1.bf16.msra.mxu0 %v380
  %420 = vmatprep.subr.bf16.mxu0 0
  %421 = vmatpush1.bf16.msra.mxu0 %v381
  %422 = vmatprep.subr.bf16.mxu0 0
  %423 = vmatpush1.bf16.msra.mxu0 %v382
  %424 = vmatprep.subr.bf16.mxu0 0
  %425 = vmatpush1.bf16.msra.mxu0 %v383
  %426 = vmatprep.subr.bf16.mxu0 0
  %427 = vmatpush1.bf16.msra.mxu0 %v384
  %428 = vmatprep.subr.bf16.mxu0 0
  %429 = vmatpush1.bf16.msra.mxu0 %v385
  %430 = vmatprep.subr.bf16.mxu0 0
  %431 = vmatpush1.bf16.msra.mxu0 %v386
  %432 = vmatprep.subr.bf16.mxu0 0
  %433 = vmatpush1.bf16.msra.mxu0 %v387
  %434 = vmatprep.subr.bf16.mxu0 0
  %435 = vmatpush1.bf16.msra.mxu0 %v388
  %436 = vmatprep.subr.bf16.mxu0 0
  %437 = vmatpush1.bf16.msra.mxu0 %v389
  %438 = vmatprep.mubr.bf16.mxu0 %v247
  %439 = vmatmul.mubr.bf16.gmra.mrb[0].mxu0 %v246
  %v440 = vpop.f32.mrb[0].mxu0
  %v441 = vadd.f32 0.0, %v440
  %v442 = vpop.f32.mrb[0].mxu0
  %v443 = vpop.f32.mrb[0].mxu0
  %v444 = vadd.f32 0.0, %v443
  %v445 = vpop.f32.mrb[0].mxu0
  %446 = vmatprep.mubr.bf16.mxu0 %v249
  %447 = vmatmul.mubr.bf16.gmra.mrb[0].mxu0 %v248
  %v448 = vpop.f32.mrb[0].mxu0
  %v449 = vadd.f32 0.0, %v448
  %v450 = vpop.f32.mrb[0].mxu0
  %v451 = vpop.f32.mrb[0].mxu0
  %v452 = vadd.f32 0.0, %v451
  %v453 = vpop.f32.mrb[0].mxu0
  %454 = vmatprep.mubr.bf16.mxu0 %v251
  %455 = vmatmul.mubr.bf16.gmra.mrb[0].mxu0 %v250
  %v456 = vpop.f32.mrb[0].mxu0
  %v457 = vadd.f32 0.0, %v456
  %v458 = vpop.f32.mrb[0].mxu0
  %v459 = vpop.f32.mrb[0].mxu0
  %v460 = vadd.f32 0.0, %v459
  %v461 = vpop.f32.mrb[0].mxu0
  %462 = vmatprep.mubr.bf16.mxu0 %v253
  %463 = vmatmul.mubr.bf16.gmra.mrb[0].mxu0 %v252
  %v464 = vpop.f32.mrb[0].mxu0
  %v465 = vadd.f32 0.0, %v464
  %v466 = vpop.f32.mrb[0].mxu0
  %v467 = vpop.f32.mrb[0].mxu0
  %v468 = vadd.f32 0.0, %v467
  %v469 = vpop.f32.mrb[0].mxu0
  %470 = vmatprep.mubr.bf16.mxu0 %v255
  %471 = vmatmul.mubr.bf16.gmra.mrb[0].mxu0 %v254
  %v472 = vpop.f32.mrb[0].mxu0
  %v473 = vadd.f32 0.0, %v472
  %v474 = vpop.f32.mrb[0].mxu0
  %v475 = vpop.f32.mrb[0].mxu0
  %v476 = vadd.f32 0.0, %v475
  %v477 = vpop.f32.mrb[0].mxu0
  %478 = vmatprep.mubr.bf16.mxu0 %v257
  %479 = vmatmul.mubr.bf16.gmra.mrb[0].mxu0 %v256
  %v480 = vpop.f32.mrb[0].mxu0
  %v481 = vadd.f32 0.0, %v480
  %v482 = vpop.f32.mrb[0].mxu0
  %v483 = vpop.f32.mrb[0].mxu0
  %v484 = vadd.f32 0.0, %v483
  %v485 = vpop.f32.mrb[0].mxu0
  %486 = vmatprep.mubr.bf16.mxu0 %v259
  %487 = vmatmul.mubr.bf16.gmra.mrb[0].mxu0 %v258
  %v488 = vpop.f32.mrb[0].mxu0
  %v489 = vadd.f32 0.0, %v488
  %v490 = vpop.f32.mrb[0].mxu0
  %v491 = vpop.f32.mrb[0].mxu0
  %v492 = vadd.f32 0.0, %v491
  %v493 = vpop.f32.mrb[0].mxu0
  %494 = vmatprep.mubr.bf16.mxu0 %v261
  %495 = vmatmul.mubr.bf16.gmra.mrb[0].mxu0 %v260
  %v496 = vpop.f32.mrb[0].mxu0
  %v497 = vadd.f32 0.0, %v496
  %v498 = vpop.f32.mrb[0].mxu0
  %v499 = vpop.f32.mrb[0].mxu0
  %v500 = vadd.f32 0.0, %v499
  %v501 = vpop.f32.mrb[0].mxu0
  %502 = vmatprep.mubr.bf16.mxu0 %v263
  %503 = vmatmul.mubr.bf16.gmra.mrb[0].mxu0 %v262
  %v504 = vpop.f32.mrb[0].mxu0
  %v505 = vadd.f32 0.0, %v504
  %v506 = vpop.f32.mrb[0].mxu0
  %v507 = vpop.f32.mrb[0].mxu0
  %v508 = vadd.f32 0.0, %v507
  %v509 = vpop.f32.mrb[0].mxu0
  %510 = vmatprep.mubr.bf16.mxu0 %v265
  %511 = vmatmul.mubr.bf16.gmra.mrb[0].mxu0 %v264
  %v512 = vpop.f32.mrb[0].mxu0
  %v513 = vadd.f32 0.0, %v512
  %v514 = vpop.f32.mrb[0].mxu0
  %v515 = vpop.f32.mrb[0].mxu0
  %v516 = vadd.f32 0.0, %v515
  %v517 = vpop.f32.mrb[0].mxu0
  %518 = vmatprep.mubr.bf16.mxu0 %v267
  %519 = vmatmul.mubr.bf16.gmra.mrb[0].mxu0 %v266
  %v520 = vpop.f32.mrb[0].mxu0
  %v521 = vadd.f32 0.0, %v520
  %v522 = vpop.f32.mrb[0].mxu0
  %v523 = vpop.f32.mrb[0].mxu0
  %v524 = vadd.f32 0.0, %v523
  %v525 = vpop.f32.mrb[0].mxu0
  %526 = vmatprep.mubr.bf16.mxu0 %v269
  %527 = vmatmul.mubr.bf16.gmra.mrb[0].mxu0 %v268
  %v528 = vpop.f32.mrb[0].mxu0
  %v529 = vadd.f32 0.0, %v528
  %v530 = vpop.f32.mrb[0].mxu0
  %v531 = vpop.f32.mrb[0].mxu0
  %v532 = vadd.f32 0.0, %v531
  %v533 = vpop.f32.mrb[0].mxu0
  %534 = vmatprep.mubr.bf16.mxu0 %v271
  %535 = vmatmul.mubr.bf16.gmra.mrb[0].mxu0 %v270
  %v536 = vpop.f32.mrb[0].mxu0
  %v537 = vadd.f32 0.0, %v536
  %v538 = vpop.f32.mrb[0].mxu0
  %v539 = vpop.f32.mrb[0].mxu0
  %v540 = vadd.f32 0.0, %v539
  %v541 = vpop.f32.mrb[0].mxu0
  %542 = vmatprep.mubr.bf16.mxu0 %v273
  %543 = vmatmul.mubr.bf16.gmra.mrb[0].mxu0 %v272
  %v544 = vpop.f32.mrb[0].mxu0
  %v545 = vadd.f32 0.0, %v544
  %v546 = vpop.f32.mrb[0].mxu0
  %v547 = vpop.f32.mrb[0].mxu0
  %v548 = vadd.f32 0.0, %v547
  %v549 = vpop.f32.mrb[0].mxu0
  %550 = vmatprep.mubr.bf16.mxu0 %v275
  %551 = vmatmul.mubr.bf16.gmra.mrb[0].mxu0 %v274
  %v552 = vpop.f32.mrb[0].mxu0
  %v553 = vadd.f32 0.0, %v552
  %v554 = vpop.f32.mrb[0].mxu0
  %v555 = vpop.f32.mrb[0].mxu0
  %v556 = vadd.f32 0.0, %v555
  %v557 = vpop.f32.mrb[0].mxu0
  %558 = vmatprep.mubr.bf16.mxu0 %v277
  %559 = vmatmul.mubr.bf16.gmra.mrb[0].mxu0 %v276
  %v560 = vpop.f32.mrb[0].mxu0
  %v561 = vadd.f32 0.0, %v560
  %v562 = vpop.f32.mrb[0].mxu0
  %v563 = vpop.f32.mrb[0].mxu0
  %v564 = vadd.f32 0.0, %v563
  %v565 = vpop.f32.mrb[0].mxu0
  %566 = vdwg.mxu0
  %v567 = vadd.f32 %v54, %v441
  %v568 = vadd.f32 %v55, %v444
  %v569 = vadd.f32 %v56, %v449
  %v570 = vadd.f32 %v57, %v452
  %v571 = vadd.f32 %v58, %v457
  %v572 = vadd.f32 %v59, %v460
  %v573 = vadd.f32 %v60, %v465
  %v574 = vadd.f32 %v61, %v468
  %v575 = vadd.f32 %v62, %v473
  %v576 = vadd.f32 %v63, %v476
  %v577 = vadd.f32 %v64, %v481
  %v578 = vadd.f32 %v65, %v484
  %v579 = vadd.f32 %v66, %v489
  %v580 = vadd.f32 %v67, %v492
  %v581 = vadd.f32 %v68, %v497
  %v582 = vadd.f32 %v69, %v500
  %v583 = vadd.f32 %v70, %v505
  %v584 = vadd.f32 %v71, %v508
  %v585 = vadd.f32 %v72, %v513
  %v586 = vadd.f32 %v73, %v516
  %v587 = vadd.f32 %v74, %v521
  %v588 = vadd.f32 %v75, %v524
  %v589 = vadd.f32 %v76, %v529
  %v590 = vadd.f32 %v77, %v532
  %v591 = vadd.f32 %v78, %v537
  %v592 = vadd.f32 %v79, %v540
  %v593 = vadd.f32 %v80, %v545
  %v594 = vadd.f32 %v81, %v548
  %v595 = vadd.f32 %v82, %v553
  %v596 = vadd.f32 %v83, %v556
  %v597 = vadd.f32 %v84, %v561
  %v598 = vadd.f32 %v85, %v564
  %599 = vst [vmem:[#allocation2] sm:$0xff] %v567
  %600 = vst [vmem:[#allocation2 + $0x8] sm:$0xff] %v568
  %601 = vst [vmem:[#allocation2 + $0x10] sm:$0xff] %v569
  %602 = vst [vmem:[#allocation2 + $0x18] sm:$0xff] %v570
  %603 = vst [vmem:[#allocation2 + $0x20] sm:$0xff] %v571
  %604 = vst [vmem:[#allocation2 + $0x28] sm:$0xff] %v572
  %605 = vst [vmem:[#allocation2 + $0x30] sm:$0xff] %v573
  %606 = vst [vmem:[#allocation2 + $0x38] sm:$0xff] %v574
  %607 = vst [vmem:[#allocation2 + $0x40] sm:$0xff] %v575
  %608 = vst [vmem:[#allocation2 + $0x48] sm:$0xff] %v576
  %609 = vst [vmem:[#allocation2 + $0x50] sm:$0xff] %v577
  %610 = vst [vmem:[#allocation2 + $0x58] sm:$0xff] %v578
  %611 = vst [vmem:[#allocation2 + $0x60] sm:$0xff] %v579
  %612 = vst [vmem:[#allocation2 + $0x68] sm:$0xff] %v580
  %613 = vst [vmem:[#allocation2 + $0x70] sm:$0xff] %v581
  %614 = vst [vmem:[#allocation2 + $0x78] sm:$0xff] %v582
  %615 = vst [vmem:[#allocation2 + $0x80] sm:$0xff] %v583
  %616 = vst [vmem:[#allocation2 + $0x88] sm:$0xff] %v584
  %617 = vst [vmem:[#allocation2 + $0x90] sm:$0xff] %v585
  %618 = vst [vmem:[#allocation2 + $0x98] sm:$0xff] %v586
  %619 = vst [vmem:[#allocation2 + $0xa0] sm:$0xff] %v587
  %620 = vst [vmem:[#allocation2 + $0xa8] sm:$0xff] %v588
  %621 = vst [vmem:[#allocation2 + $0xb0] sm:$0xff] %v589
  %622 = vst [vmem:[#allocation2 + $0xb8] sm:$0xff] %v590
  %623 = vst [vmem:[#allocation2 + $0xc0] sm:$0xff] %v591
  %624 = vst [vmem:[#allocation2 + $0xc8] sm:$0xff] %v592
  %625 = vst [vmem:[#allocation2 + $0xd0] sm:$0xff] %v593
  %626 = vst [vmem:[#allocation2 + $0xd8] sm:$0xff] %v594
  %627 = vst [vmem:[#allocation2 + $0xe0] sm:$0xff] %v595
  %628 = vst [vmem:[#allocation2 + $0xe8] sm:$0xff] %v596
  %629 = vst [vmem:[#allocation2 + $0xf0] sm:$0xff] %v597
  %630 = vst [vmem:[#allocation2 + $0xf8] sm:$0xff] %v598
  // Predicated region
  $region22: #{whisper_audio_tower_forward.13} parent=0 // pred_check
    %p631 = pneg %p18
  $region23: #{whisper_audio_tower_forward.13} parent=0 // pred_check_branch
    %633 = sbr.rel (%p631) target = $region25
  $region24: #{whisper_audio_tower_forward.13} parent=0 // pred_region
    %v634 = vld [vmem:[#allocation2] sm:$0xff]
    %v635 = vld [vmem:[#allocation2 + $0x8] sm:$0xff]
    %v636 = vld [vmem:[#allocation2 + $0x10] sm:$0xff]
    %v637 = vld [vmem:[#allocation2 + $0x18] sm:$0xff]
    %v638 = vld [vmem:[#allocation2 + $0x20] sm:$0xff]
    %v639 = vld [vmem:[#allocation2 + $0x28] sm:$0xff]
    %v640 = vld [vmem:[#allocation2 + $0x30] sm:$0xff]
    %v641 = vld [vmem:[#allocation2 + $0x38] sm:$0xff]
    %v642 = vld [vmem:[#allocation2 + $0x40] sm:$0xff]
    %v643 = vld [vmem:[#allocation2 + $0x48] sm:$0xff]
    %v644 = vld [vmem:[#allocation2 + $0x50] sm:$0xff]
    %v645 = vld [vmem:[#allocation2 + $0x58] sm:$0xff]
    %v646 = vld [vmem:[#allocation2 + $0x60] sm:$0xff]
    %v647 = vld [vmem:[#allocation2 + $0x68] sm:$0xff]
    %v648 = vld [vmem:[#allocation2 + $0x70] sm:$0xff]
    %v649 = vld [vmem:[#allocation2 + $0x78] sm:$0xff]
    %v650 = vld [vmem:[#allocation2 + $0x80] sm:$0xff]
    %v651 = vld [vmem:[#allocation2 + $0x88] sm:$0xff]
    %v652 = vld [vmem:[#allocation2 + $0x90] sm:$0xff]
    %v653 = vld [vmem:[#allocation2 + $0x98] sm:$0xff]
    %v654 = vld [vmem:[#allocation2 + $0xa0] sm:$0xff]
    %v655 = vld [vmem:[#allocation2 + $0xa8] sm:$0xff]
    %v656 = vld [vmem:[#allocation2 + $0xb0] sm:$0xff]
    %v657 = vld [vmem:[#allocation2 + $0xb8] sm:$0xff]
    %v658 = vld [vmem:[#allocation2 + $0xc0] sm:$0xff]
    %v659 = vld [vmem:[#allocation2 + $0xc8] sm:$0xff]
    %v660 = vld [vmem:[#allocation2 + $0xd0] sm:$0xff]
    %v661 = vld [vmem:[#allocation2 + $0xd8] sm:$0xff]
    %v662 = vld [vmem:[#allocation2 + $0xe0] sm:$0xff]
    %v663 = vld [vmem:[#allocation2 + $0xe8] sm:$0xff]
    %v664 = vld [vmem:[#allocation2 + $0xf0] sm:$0xff]
    %v665 = vld [vmem:[#allocation2 + $0xf8] sm:$0xff]
    %v666 = vld [vmem:[%s2] sm:$0x1]
    %v667 = vunpack.c.l.bf16 %v666
    %v668 = vlaneseq
    %v669 = vshrl.u32 %v668, 7
    %v670 = vsub.s32 0, %v669
    %v671 = vrot.slane %v667, %v670
    %v672 = vadd.f32 %v634, %v671
    %v673 = vadd.f32 %v635, %v671
    %v674 = vadd.f32 %v636, %v671
    %v675 = vadd.f32 %v637, %v671
    %v676 = vadd.f32 %v638, %v671
    %v677 = vadd.f32 %v639, %v671
    %v678 = vadd.f32 %v640, %v671
    %v679 = vadd.f32 %v641, %v671
    %v680 = vadd.f32 %v642, %v671
    %v681 = vadd.f32 %v643, %v671
    %v682 = vadd.f32 %v644, %v671
    %v683 = vadd.f32 %v645, %v671
    %v684 = vadd.f32 %v646, %v671
    %v685 = vadd.f32 %v647, %v671
    %v686 = vadd.f32 %v648, %v671
    %v687 = vadd.f32 %v649, %v671
    %v688 = vadd.f32 %v650, %v671
    %v689 = vadd.f32 %v651, %v671
    %v690 = vadd.f32 %v652, %v671
    %v691 = vadd.f32 %v653, %v671
    %v692 = vadd.f32 %v654, %v671
    %v693 = vadd.f32 %v655, %v671
    %v694 = vadd.f32 %v656, %v671
    %v695 = vadd.f32 %v657, %v671
    %v696 = vadd.f32 %v658, %v671
    %v697 = vadd.f32 %v659, %v671
    %v698 = vadd.f32 %v660, %v671
    %v699 = vadd.f32 %v661, %v671
    %v700 = vadd.f32 %v662, %v671
    %v701 = vadd.f32 %v663, %v671
    %v702 = vadd.f32 %v664, %v671
    %v703 = vadd.f32 %v665, %v671
    %v704 = vld [vmem:[%s3] sm:$0xf]
    %v705 = vld [vmem:[%s3 + $0x4] sm:$0xf]
    %v706 = vld [vmem:[%s3 + $0x8] sm:$0xf]
    %v707 = vld [vmem:[%s3 + $0xc] sm:$0xf]
    %v708 = vld [vmem:[%s3 + $0x10] sm:$0xf]
    %v709 = vld [vmem:[%s3 + $0x14] sm:$0xf]
    %v710 = vld [vmem:[%s3 + $0x18] sm:$0xf]
    %v711 = vld [vmem:[%s3 + $0x1c] sm:$0xf]
    %v712 = vld [vmem:[%s3 + $0x20] sm:$0xf]
    %v713 = vld [vmem:[%s3 + $0x24] sm:$0xf]
    %v714 = vld [vmem:[%s3 + $0x28] sm:$0xf]
    %v715 = vld [vmem:[%s3 + $0x2c] sm:$0xf]
    %v716 = vld [vmem:[%s3 + $0x30] sm:$0xf]
    %v717 = vld [vmem:[%s3 + $0x34] sm:$0xf]
    %v718 = vld [vmem:[%s3 + $0x38] sm:$0xf]
    %v719 = vld [vmem:[%s3 + $0x3c] sm:$0xf]
    %v720 = vld [vmem:[%s3 + $0x40] sm:$0xf]
    %v721 = vld [vmem:[%s3 + $0x44] sm:$0xf]
    %v722 = vld [vmem:[%s3 + $0x48] sm:$0xf]
    %v723 = vld [vmem:[%s3 + $0x4c] sm:$0xf]
    %v724 = vld [vmem:[%s3 + $0x50] sm:$0xf]
    %v725 = vld [vmem:[%s3 + $0x54] sm:$0xf]
    %v726 = vld [vmem:[%s3 + $0x58] sm:$0xf]
    %v727 = vld [vmem:[%s3 + $0x5c] sm:$0xf]
    %v728 = vld [vmem:[%s3 + $0x60] sm:$0xf]
    %v729 = vld [vmem:[%s3 + $0x64] sm:$0xf]
    %v730 = vld [vmem:[%s3 + $0x68] sm:$0xf]
    %v731 = vld [vmem:[%s3 + $0x6c] sm:$0xf]
    %v732 = vld [vmem:[%s3 + $0x70] sm:$0xf]
    %v733 = vld [vmem:[%s3 + $0x74] sm:$0xf]
    %v734 = vld [vmem:[%s3 + $0x78] sm:$0xf]
    %v735 = vld [vmem:[%s3 + $0x7c] sm:$0xf]
    %v736 = vunpack.c.l.bf16 %v704
    %v737 = vunpack.c.l.bf16 %v705
    %v738 = vunpack.c.l.bf16 %v706
    %v739 = vunpack.c.l.bf16 %v707
    %v740 = vunpack.c.l.bf16 %v708
    %v741 = vunpack.c.l.bf16 %v709
    %v742 = vunpack.c.l.bf16 %v710
    %v743 = vunpack.c.l.bf16 %v711
    %v744 = vunpack.c.l.bf16 %v712
    %v745 = vunpack.c.l.bf16 %v713
    %v746 = vunpack.c.l.bf16 %v714
    %v747 = vunpack.c.l.bf16 %v715
    %v748 = vunpack.c.l.bf16 %v716
    %v749 = vunpack.c.l.bf16 %v717
    %v750 = vunpack.c.l.bf16 %v718
    %v751 = vunpack.c.l.bf16 %v719
    %v752 = vunpack.c.l.bf16 %v720
    %v753 = vunpack.c.l.bf16 %v721
    %v754 = vunpack.c.l.bf16 %v722
    %v755 = vunpack.c.l.bf16 %v723
    %v756 = vunpack.c.l.bf16 %v724
    %v757 = vunpack.c.l.bf16 %v725
    %v758 = vunpack.c.l.bf16 %v726
    %v759 = vunpack.c.l.bf16 %v727
    %v760 = vunpack.c.l.bf16 %v728
    %v761 = vunpack.c.l.bf16 %v729
    %v762 = vunpack.c.l.bf16 %v730
    %v763 = vunpack.c.l.bf16 %v731
    %v764 = vunpack.c.l.bf16 %v732
    %v765 = vunpack.c.l.bf16 %v733
    %v766 = vunpack.c.l.bf16 %v734
    %v767 = vunpack.c.l.bf16 %v735
    %v768 = vadd.f32 %v672, %v736
    %v769 = vadd.f32 %v673, %v737
    %v770 = vadd.f32 %v674, %v738
    %v771 = vadd.f32 %v675, %v739
    %v772 = vadd.f32 %v676, %v740
    %v773 = vadd.f32 %v677, %v741
    %v774 = vadd.f32 %v678, %v742
    %v775 = vadd.f32 %v679, %v743
    %v776 = vadd.f32 %v680, %v744
    %v777 = vadd.f32 %v681, %v745
    %v778 = vadd.f32 %v682, %v746
    %v779 = vadd.f32 %v683, %v747
    %v780 = vadd.f32 %v684, %v748
    %v781 = vadd.f32 %v685, %v749
    %v782 = vadd.f32 %v686, %v750
    %v783 = vadd.f32 %v687, %v751
    %v784 = vadd.f32 %v688, %v752
    %v785 = vadd.f32 %v689, %v753
    %v786 = vadd.f32 %v690, %v754
    %v787 = vadd.f32 %v691, %v755
    %v788 = vadd.f32 %v692, %v756
    %v789 = vadd.f32 %v693, %v757
    %v790 = vadd.f32 %v694, %v758
    %v791 = vadd.f32 %v695, %v759
    %v792 = vadd.f32 %v696, %v760
    %v793 = vadd.f32 %v697, %v761
    %v794 = vadd.f32 %v698, %v762
    %v795 = vadd.f32 %v699, %v763
    %v796 = vadd.f32 %v700, %v764
    %v797 = vadd.f32 %v701, %v765
    %v798 = vadd.f32 %v702, %v766
    %v799 = vadd.f32 %v703, %v767
    %v800 = vpack.c.bf16 %v769, %v768
    %v801 = vpack.c.bf16 %v771, %v770
    %v802 = vpack.c.bf16 %v773, %v772
    %v803 = vpack.c.bf16 %v775, %v774
    %v804 = vpack.c.bf16 %v777, %v776
    %v805 = vpack.c.bf16 %v779, %v778
    %v806 = vpack.c.bf16 %v781, %v780
    %v807 = vpack.c.bf16 %v783, %v782
    %v808 = vpack.c.bf16 %v785, %v784
    %v809 = vpack.c.bf16 %v787, %v786
    %v810 = vpack.c.bf16 %v789, %v788
    %v811 = vpack.c.bf16 %v791, %v790
    %v812 = vpack.c.bf16 %v793, %v792
    %v813 = vpack.c.bf16 %v795, %v794
    %v814 = vpack.c.bf16 %v797, %v796
    %v815 = vpack.c.bf16 %v799, %v798
    %v832 = vunpack.c.l.b16 %v800
    %v833 = vunpack.c.h.b16 %v800
    %v834 = vunpack.c.l.b16 %v801
    %v835 = vunpack.c.h.b16 %v801
    %v836 = vunpack.c.l.b16 %v802
    %v837 = vunpack.c.h.b16 %v802
    %v838 = vunpack.c.l.b16 %v803
    %v839 = vunpack.c.h.b16 %v803
    %v840 = vunpack.c.l.b16 %v804
    %v841 = vunpack.c.h.b16 %v804
    %v842 = vunpack.c.l.b16 %v805
    %v843 = vunpack.c.h.b16 %v805
    %v844 = vunpack.c.l.b16 %v806
    %v845 = vunpack.c.h.b16 %v806
    %v846 = vunpack.c.l.b16 %v807
    %v847 = vunpack.c.h.b16 %v807
    %v848 = vunpack.c.l.b16 %v808
    %v849 = vunpack.c.h.b16 %v808
    %v850 = vunpack.c.l.b16 %v809
    %v851 = vunpack.c.h.b16 %v809
    %v852 = vunpack.c.l.b16 %v810
    %v853 = vunpack.c.h.b16 %v810
    %v854 = vunpack.c.l.b16 %v811
    %v855 = vunpack.c.h.b16 %v811
    %v856 = vunpack.c.l.b16 %v812
    %v857 = vunpack.c.h.b16 %v812
    %v858 = vunpack.c.l.b16 %v813
    %v859 = vunpack.c.h.b16 %v813
    %v860 = vunpack.c.l.b16 %v814
    %v861 = vunpack.c.h.b16 %v814
    %v862 = vunpack.c.l.b16 %v815
    %v863 = vunpack.c.h.b16 %v815
    %v864 = vpack.c.b16 %v832, %v832
    %v865 = vpack.c.b16 %v833, %v833
    %v866 = vpack.c.b16 %v834, %v834
    %v867 = vpack.c.b16 %v835, %v835
    %v868 = vpack.c.b16 %v836, %v836
    %v869 = vpack.c.b16 %v837, %v837
    %v870 = vpack.c.b16 %v838, %v838
    %v871 = vpack.c.b16 %v839, %v839
    %v872 = vpack.c.b16 %v840, %v840
    %v873 = vpack.c.b16 %v841, %v841
    %v874 = vpack.c.b16 %v842, %v842
    %v875 = vpack.c.b16 %v843, %v843
    %v876 = vpack.c.b16 %v844, %v844
    %v877 = vpack.c.b16 %v845, %v845
    %v878 = vpack.c.b16 %v846, %v846
    %v879 = vpack.c.b16 %v847, %v847
    %v880 = vpack.c.b16 %v848, %v848
    %v881 = vpack.c.b16 %v849, %v849
    %v882 = vpack.c.b16 %v850, %v850
    %v883 = vpack.c.b16 %v851, %v851
    %v884 = vpack.c.b16 %v852, %v852
    %v885 = vpack.c.b16 %v853, %v853
    %v886 = vpack.c.b16 %v854, %v854
    %v887 = vpack.c.b16 %v855, %v855
    %v888 = vpack.c.b16 %v856, %v856
    %v889 = vpack.c.b16 %v857, %v857
    %v890 = vpack.c.b16 %v858, %v858
    %v891 = vpack.c.b16 %v859, %v859
    %v892 = vpack.c.b16 %v860, %v860
    %v893 = vpack.c.b16 %v861, %v861
    %v894 = vpack.c.b16 %v862, %v862
    %v895 = vpack.c.b16 %v863, %v863
    %928 = vst [vmem:[%s4] sm:$0xf] %v864
    %929 = vst [vmem:[%s4 + $0x4] sm:$0xf] %v865
    %930 = vst [vmem:[%s4 + $0x8] sm:$0xf] %v866
    %931 = vst [vmem:[%s4 + $0xc] sm:$0xf] %v867
    %932 = vst [vmem:[%s4 + $0x10] sm:$0xf] %v868
    %933 = vst [vmem:[%s4 + $0x14] sm:$0xf] %v869
    %934 = vst [vmem:[%s4 + $0x18] sm:$0xf] %v870
    %935 = vst [vmem:[%s4 + $0x1c] sm:$0xf] %v871
    %936 = vst [vmem:[%s4 + $0x20] sm:$0xf] %v872
    %937 = vst [vmem:[%s4 + $0x24] sm:$0xf] %v873
    %938 = vst [vmem:[%s4 + $0x28] sm:$0xf] %v874
    %939 = vst [vmem:[%s4 + $0x2c] sm:$0xf] %v875
    %940 = vst [vmem:[%s4 + $0x30] sm:$0xf] %v876
    %941 = vst [vmem:[%s4 + $0x34] sm:$0xf] %v877
    %942 = vst [vmem:[%s4 + $0x38] sm:$0xf] %v878
    %943 = vst [vmem:[%s4 + $0x3c] sm:$0xf] %v879
    %944 = vst [vmem:[%s4 + $0x40] sm:$0xf] %v880
    %945 = vst [vmem:[%s4 + $0x44] sm:$0xf] %v881
    %946 = vst [vmem:[%s4 + $0x48] sm:$0xf] %v882
    %947 = vst [vmem:[%s4 + $0x4c] sm:$0xf] %v883
    %948 = vst [vmem:[%s4 + $0x50] sm:$0xf] %v884
    %949 = vst [vmem:[%s4 + $0x54] sm:$0xf] %v885
    %950 = vst [vmem:[%s4 + $0x58] sm:$0xf] %v886
    %951 = vst [vmem:[%s4 + $0x5c] sm:$0xf] %v887
    %952 = vst [vmem:[%s4 + $0x60] sm:$0xf] %v888
    %953 = vst [vmem:[%s4 + $0x64] sm:$0xf] %v889
    %954 = vst [vmem:[%s4 + $0x68] sm:$0xf] %v890
    %955 = vst [vmem:[%s4 + $0x6c] sm:$0xf] %v891
    %956 = vst [vmem:[%s4 + $0x70] sm:$0xf] %v892
    %957 = vst [vmem:[%s4 + $0x74] sm:$0xf] %v893
    %958 = vst [vmem:[%s4 + $0x78] sm:$0xf] %v894
    %959 = vst [vmem:[%s4 + $0x7c] sm:$0xf] %v895
  $region25: #{whisper_audio_tower_forward.13} parent=0 // pred_fallthru
    _
  // Predicated region
  $region26: #{whisper_audio_tower_forward.13} parent=0 // pred_check
    _
  $region27: #{whisper_audio_tower_forward.13} parent=0 // pred_check_branch
    %961 = sbr.rel (0) target = $region29
  $region28: #{whisper_audio_tower_forward.13} parent=0 // pred_region
    _
  $region29: #{whisper_audio_tower_forward.13} parent=0 // pred_fallthru
    _
  // Predicated region
  $region30: #{whisper_audio_tower_forward.13} parent=0 // pred_check
    _
  $region31: #{whisper_audio_tower_forward.13} parent=0 // pred_check_branch
    %963 = sbr.rel (0) target = $region33
  $region32: #{whisper_audio_tower_forward.13} parent=0 // pred_region
    _
  $region33: #{whisper_audio_tower_forward.13} parent=0 // pred_fallthru
    _

// kernel: whisper_audio_tower_forward.12
$region0: #{whisper_audio_tower_forward.12}
  #allocation0 [shape = 'u32[]', space=smem, size = 0x4, offset = 0x4, fixed_abs, tag = 'smem constant byte address 0x4 - core index']
  #allocation1 [shape = 'u32[144,128]{1,0:T(1,128)}', space=vmem, size = 0x12000, scoped, tag = 'internal scratch']
  #allocation2 [shape = 'bf16[256,128]{1,0:T(16,128)(2,1)}', space=vmem, size = 0x10000, scoped, tag = 'scratch operand']
  %s0 = inlined_call_operand.vmem [shape: bf16[256,128], index: 0, kind: input, shape index: {}]
  %s1 = inlined_call_operand.vmem [shape: bf16[1,128], index: 1, kind: input, shape index: {}]
  %s2 = inlined_call_operand.vmem [shape: bf16[1,128], index: 2, kind: input, shape index: {}]
  %s3 = inlined_call_operand.vmem [shape: bf16[128,256], index: 3, kind: input, shape index: {}]
  %s4 = inlined_call_operand.vmem [shape: bf16[1,256], index: 4, kind: input, shape index: {}]
  %s5 = inlined_call_operand.vmem [shape: bf16[256,256], index: 5, kind: output, shape index: {}]
  %s6 = sld [smem:[#allocation0]]
  $region34: #{whisper_audio_tower_forward.12} parent=0
    _
  %s8 = ssub.s32 1, %s6
  %s9 = scalar_select 0, %s8, %s6
  // Predicated region
  $region2: #{whisper_audio_tower_forward.12} parent=0 // pred_check
    _
  $region3: #{whisper_audio_tower_forward.12} parent=0 // pred_check_branch
    %11 = sbr.rel (0) target = $region5
  $region4: #{whisper_audio_tower_forward.12} parent=0 // pred_region
    _
  $region5: #{whisper_audio_tower_forward.12} parent=0 // pred_fallthru
    _
  // Predicated region
  $region6: #{whisper_audio_tower_forward.12} parent=0 // pred_check
    _
  $region7: #{whisper_audio_tower_forward.12} parent=0 // pred_check_branch
    %13 = sbr.rel (0) target = $region9
  $region8: #{whisper_audio_tower_forward.12} parent=0 // pred_region
    _
  $region9: #{whisper_audio_tower_forward.12} parent=0 // pred_fallthru
    _
  // Predicated region
  $region10: #{whisper_audio_tower_forward.12} parent=0 // pred_check
    _
  $region11: #{whisper_audio_tower_forward.12} parent=0 // pred_check_branch
    %15 = sbr.rel (0) target = $region13
  $region12: #{whisper_audio_tower_forward.12} parent=0 // pred_region
    _
  $region13: #{whisper_audio_tower_forward.12} parent=0 // pred_fallthru
    _
  // Predicated region
  $region14: #{whisper_audio_tower_forward.12} parent=0 // pred_check
    _
  $region15: #{whisper_audio_tower_forward.12} parent=0 // pred_check_branch
    %17 = sbr.rel (0) target = $region17
  $region16: #{whisper_audio_tower_forward.12} parent=0 // pred_region
    _
  $region17: #{whisper_audio_tower_forward.12} parent=0 // pred_fallthru
    _
  // Predicated region
  $region18: #{whisper_audio_tower_forward.12} parent=0 // pred_check
    _
  $region19: #{whisper_audio_tower_forward.12} parent=0 // pred_check_branch
    %19 = sbr.rel (0) target = $region21
  $region20: #{whisper_audio_tower_forward.12} parent=0 // pred_region
    _
  $region21: #{whisper_audio_tower_forward.12} parent=0 // pred_fallthru
    _
  %p21 = scmp.eq.s32.totalorder 0, 0
  // Predicated region
  $region22: #{whisper_audio_tower_forward.12} parent=0 // pred_check
    %p22 = pneg %p21
  $region23: #{whisper_audio_tower_forward.12} parent=0 // pred_check_branch
    %24 = sbr.rel (%p22) target = $region25
  $region24: #{whisper_audio_tower_forward.12} parent=0 // pred_region
    %v25 = vld [vmem:[%s0] sm:$0xf]
    %v26 = vld [vmem:[%s0 + $0x4] sm:$0xf]
    %v27 = vld [vmem:[%s0 + $0x8] sm:$0xf]
    %v28 = vld [vmem:[%s0 + $0xc] sm:$0xf]
    %v29 = vld [vmem:[%s0 + $0x10] sm:$0xf]
    %v30 = vld [vmem:[%s0 + $0x14] sm:$0xf]
    %v31 = vld [vmem:[%s0 + $0x18] sm:$0xf]
    %v32 = vld [vmem:[%s0 + $0x1c] sm:$0xf]
    %v33 = vld [vmem:[%s0 + $0x20] sm:$0xf]
    %v34 = vld [vmem:[%s0 + $0x24] sm:$0xf]
    %v35 = vld [vmem:[%s0 + $0x28] sm:$0xf]
    %v36 = vld [vmem:[%s0 + $0x2c] sm:$0xf]
    %v37 = vld [vmem:[%s0 + $0x30] sm:$0xf]
    %v38 = vld [vmem:[%s0 + $0x34] sm:$0xf]
    %v39 = vld [vmem:[%s0 + $0x38] sm:$0xf]
    %v40 = vld [vmem:[%s0 + $0x3c] sm:$0xf]
    %v41 = vld [vmem:[%s0 + $0x40] sm:$0xf]
    %v42 = vld [vmem:[%s0 + $0x44] sm:$0xf]
    %v43 = vld [vmem:[%s0 + $0x48] sm:$0xf]
    %v44 = vld [vmem:[%s0 + $0x4c] sm:$0xf]
    %v45 = vld [vmem:[%s0 + $0x50] sm:$0xf]
    %v46 = vld [vmem:[%s0 + $0x54] sm:$0xf]
    %v47 = vld [vmem:[%s0 + $0x58] sm:$0xf]
    %v48 = vld [vmem:[%s0 + $0x5c] sm:$0xf]
    %v49 = vld [vmem:[%s0 + $0x60] sm:$0xf]
    %v50 = vld [vmem:[%s0 + $0x64] sm:$0xf]
    %v51 = vld [vmem:[%s0 + $0x68] sm:$0xf]
    %v52 = vld [vmem:[%s0 + $0x6c] sm:$0xf]
    %v53 = vld [vmem:[%s0 + $0x70] sm:$0xf]
    %v54 = vld [vmem:[%s0 + $0x74] sm:$0xf]
    %v55 = vld [vmem:[%s0 + $0x78] sm:$0xf]
    %v56 = vld [vmem:[%s0 + $0x7c] sm:$0xf]
    %v57 = vunpack.c.l.bf16 %v25
    %v58 = vunpack.c.l.bf16 %v26
    %v59 = vunpack.c.l.bf16 %v27
    %v60 = vunpack.c.l.bf16 %v28
    %v61 = vunpack.c.l.bf16 %v29
    %v62 = vunpack.c.l.bf16 %v30
    %v63 = vunpack.c.l.bf16 %v31
    %v64 = vunpack.c.l.bf16 %v32
    %v65 = vunpack.c.l.bf16 %v33
    %v66 = vunpack.c.l.bf16 %v34
    %v67 = vunpack.c.l.bf16 %v35
    %v68 = vunpack.c.l.bf16 %v36
    %v69 = vunpack.c.l.bf16 %v37
    %v70 = vunpack.c.l.bf16 %v38
    %v71 = vunpack.c.l.bf16 %v39
    %v72 = vunpack.c.l.bf16 %v40
    %v73 = vunpack.c.l.bf16 %v41
    %v74 = vunpack.c.l.bf16 %v42
    %v75 = vunpack.c.l.bf16 %v43
    %v76 = vunpack.c.l.bf16 %v44
    %v77 = vunpack.c.l.bf16 %v45
    %v78 = vunpack.c.l.bf16 %v46
    %v79 = vunpack.c.l.bf16 %v47
    %v80 = vunpack.c.l.bf16 %v48
    %v81 = vunpack.c.l.bf16 %v49
    %v82 = vunpack.c.l.bf16 %v50
    %v83 = vunpack.c.l.bf16 %v51
    %v84 = vunpack.c.l.bf16 %v52
    %v85 = vunpack.c.l.bf16 %v53
    %v86 = vunpack.c.l.bf16 %v54
    %v87 = vunpack.c.l.bf16 %v55
    %v88 = vunpack.c.l.bf16 %v56
    %89 = vadd.xlane.f32.xlu0 %v57
    %v90 = vpop.xlane.xlu0 %89
    %91 = vadd.xlane.f32.xlu0 %v58
    %v92 = vpop.xlane.xlu0 %91
    %93 = vadd.xlane.f32.xlu0 %v59
    %v94 = vpop.xlane.xlu0 %93
    %95 = vadd.xlane.f32.xlu0 %v60
    %v96 = vpop.xlane.xlu0 %95
    %97 = vadd.xlane.f32.xlu0 %v61
    %v98 = vpop.xlane.xlu0 %97
    %99 = vadd.xlane.f32.xlu0 %v62
    %v100 = vpop.xlane.xlu0 %99
    %101 = vadd.xlane.f32.xlu0 %v63
    %v102 = vpop.xlane.xlu0 %101
    %103 = vadd.xlane.f32.xlu0 %v64
    %v104 = vpop.xlane.xlu0 %103
    %105 = vadd.xlane.f32.xlu0 %v65
    %v106 = vpop.xlane.xlu0 %105
    %107 = vadd.xlane.f32.xlu0 %v66
    %v108 = vpop.xlane.xlu0 %107
    %109 = vadd.xlane.f32.xlu0 %v67
    %v110 = vpop.xlane.xlu0 %109
    %111 = vadd.xlane.f32.xlu0 %v68
    %v112 = vpop.xlane.xlu0 %111
    %113 = vadd.xlane.f32.xlu0 %v69
    %v114 = vpop.xlane.xlu0 %113
    %115 = vadd.xlane.f32.xlu0 %v70
    %v116 = vpop.xlane.xlu0 %115
    %117 = vadd.xlane.f32.xlu0 %v71
    %v118 = vpop.xlane.xlu0 %117
    %119 = vadd.xlane.f32.xlu0 %v72
    %v120 = vpop.xlane.xlu0 %119
    %121 = vadd.xlane.f32.xlu0 %v73
    %v122 = vpop.xlane.xlu0 %121
    %123 = vadd.xlane.f32.xlu0 %v74
    %v124 = vpop.xlane.xlu0 %123
    %125 = vadd.xlane.f32.xlu0 %v75
    %v126 = vpop.xlane.xlu0 %125
    %127 = vadd.xlane.f32.xlu0 %v76
    %v128 = vpop.xlane.xlu0 %127
    %129 = vadd.xlane.f32.xlu0 %v77
    %v130 = vpop.xlane.xlu0 %129
    %131 = vadd.xlane.f32.xlu0 %v78
    %v132 = vpop.xlane.xlu0 %131
    %133 = vadd.xlane.f32.xlu0 %v79
    %v134 = vpop.xlane.xlu0 %133
    %135 = vadd.xlane.f32.xlu0 %v80
    %v136 = vpop.xlane.xlu0 %135
    %137 = vadd.xlane.f32.xlu0 %v81
    %v138 = vpop.xlane.xlu0 %137
    %139 = vadd.xlane.f32.xlu0 %v82
    %v140 = vpop.xlane.xlu0 %139
    %141 = vadd.xlane.f32.xlu0 %v83
    %v142 = vpop.xlane.xlu0 %141
    %143 = vadd.xlane.f32.xlu0 %v84
    %v144 = vpop.xlane.xlu0 %143
    %145 = vadd.xlane.f32.xlu0 %v85
    %v146 = vpop.xlane.xlu0 %145
    %147 = vadd.xlane.f32.xlu0 %v86
    %v148 = vpop.xlane.xlu0 %147
    %149 = vadd.xlane.f32.xlu0 %v87
    %v150 = vpop.xlane.xlu0 %149
    %151 = vadd.xlane.f32.xlu0 %v88
    %v152 = vpop.xlane.xlu0 %151
    %v153 = vrcp.pop 128.0
    %v154 = vmul.f32 %v90, %v153
    %v155 = vmul.f32 %v92, %v153
    %v156 = vmul.f32 %v94, %v153
    %v157 = vmul.f32 %v96, %v153
    %v158 = vmul.f32 %v98, %v153
    %v159 = vmul.f32 %v100, %v153
    %v160 = vmul.f32 %v102, %v153
    %v161 = vmul.f32 %v104, %v153
    %v162 = vmul.f32 %v106, %v153
    %v163 = vmul.f32 %v108, %v153
    %v164 = vmul.f32 %v110, %v153
    %v165 = vmul.f32 %v112, %v153
    %v166 = vmul.f32 %v114, %v153
    %v167 = vmul.f32 %v116, %v153
    %v168 = vmul.f32 %v118, %v153
    %v169 = vmul.f32 %v120, %v153
    %v170 = vmul.f32 %v122, %v153
    %v171 = vmul.f32 %v124, %v153
    %v172 = vmul.f32 %v126, %v153
    %v173 = vmul.f32 %v128, %v153
    %v174 = vmul.f32 %v130, %v153
    %v175 = vmul.f32 %v132, %v153
    %v176 = vmul.f32 %v134, %v153
    %v177 = vmul.f32 %v136, %v153
    %v178 = vmul.f32 %v138, %v153
    %v179 = vmul.f32 %v140, %v153
    %v180 = vmul.f32 %v142, %v153
    %v181 = vmul.f32 %v144, %v153
    %v182 = vmul.f32 %v146, %v153
    %v183 = vmul.f32 %v148, %v153
    %v184 = vmul.f32 %v150, %v153
    %v185 = vmul.f32 %v152, %v153
    %v186 = vsub.f32 %v57, %v154
    %v187 = vsub.f32 %v58, %v155
    %v188 = vsub.f32 %v59, %v156
    %v189 = vsub.f32 %v60, %v157
    %v190 = vsub.f32 %v61, %v158
    %v191 = vsub.f32 %v62, %v159
    %v192 = vsub.f32 %v63, %v160
    %v193 = vsub.f32 %v64, %v161
    %v194 = vsub.f32 %v65, %v162
    %v195 = vsub.f32 %v66, %v163
    %v196 = vsub.f32 %v67, %v164
    %v197 = vsub.f32 %v68, %v165
    %v198 = vsub.f32 %v69, %v166
    %v199 = vsub.f32 %v70, %v167
    %v200 = vsub.f32 %v71, %v168
    %v201 = vsub.f32 %v72, %v169
    %v202 = vsub.f32 %v73, %v170
    %v203 = vsub.f32 %v74, %v171
    %v204 = vsub.f32 %v75, %v172
    %v205 = vsub.f32 %v76, %v173
    %v206 = vsub.f32 %v77, %v174
    %v207 = vsub.f32 %v78, %v175
    %v208 = vsub.f32 %v79, %v176
    %v209 = vsub.f32 %v80, %v177
    %v210 = vsub.f32 %v81, %v178
    %v211 = vsub.f32 %v82, %v179
    %v212 = vsub.f32 %v83, %v180
    %v213 = vsub.f32 %v84, %v181
    %v214 = vsub.f32 %v85, %v182
    %v215 = vsub.f32 %v86, %v183
    %v216 = vsub.f32 %v87, %v184
    %v217 = vsub.f32 %v88, %v185
    %v218 = vmul.f32 %v186, %v186
    %v219 = vmul.f32 %v187, %v187
    %v220 = vmul.f32 %v188, %v188
    %v221 = vmul.f32 %v189, %v189
    %v222 = vmul.f32 %v190, %v190
    %v223 = vmul.f32 %v191, %v191
    %v224 = vmul.f32 %v192, %v192
    %v225 = vmul.f32 %v193, %v193
    %v226 = vmul.f32 %v194, %v194
    %v227 = vmul.f32 %v195, %v195
    %v228 = vmul.f32 %v196, %v196
    %v229 = vmul.f32 %v197, %v197
    %v230 = vmul.f32 %v198, %v198
    %v231 = vmul.f32 %v199, %v199
    %v232 = vmul.f32 %v200, %v200
    %v233 = vmul.f32 %v201, %v201
    %v234 = vmul.f32 %v202, %v202
    %v235 = vmul.f32 %v203, %v203
    %v236 = vmul.f32 %v204, %v204
    %v237 = vmul.f32 %v205, %v205
    %v238 = vmul.f32 %v206, %v206
    %v239 = vmul.f32 %v207, %v207
    %v240 = vmul.f32 %v208, %v208
    %v241 = vmul.f32 %v209, %v209
    %v242 = vmul.f32 %v210, %v210
    %v243 = vmul.f32 %v211, %v211
    %v244 = vmul.f32 %v212, %v212
    %v245 = vmul.f32 %v213, %v213
    %v246 = vmul.f32 %v214, %v214
    %v247 = vmul.f32 %v215, %v215
    %v248 = vmul.f32 %v216, %v216
    %v249 = vmul.f32 %v217, %v217
    %250 = vadd.xlane.f32.xlu0 %v218
    %v251 = vpop.xlane.xlu0 %250
    %252 = vadd.xlane.f32.xlu0 %v219
    %v253 = vpop.xlane.xlu0 %252
    %254 = vadd.xlane.f32.xlu0 %v220
    %v255 = vpop.xlane.xlu0 %254
    %256 = vadd.xlane.f32.xlu0 %v221
    %v257 = vpop.xlane.xlu0 %256
    %258 = vadd.xlane.f32.xlu0 %v222
    %v259 = vpop.xlane.xlu0 %258
    %260 = vadd.xlane.f32.xlu0 %v223
    %v261 = vpop.xlane.xlu0 %260
    %262 = vadd.xlane.f32.xlu0 %v224
    %v263 = vpop.xlane.xlu0 %262
    %264 = vadd.xlane.f32.xlu0 %v225
    %v265 = vpop.xlane.xlu0 %264
    %266 = vadd.xlane.f32.xlu0 %v226
    %v267 = vpop.xlane.xlu0 %266
    %268 = vadd.xlane.f32.xlu0 %v227
    %v269 = vpop.xlane.xlu0 %268
    %270 = vadd.xlane.f32.xlu0 %v228
    %v271 = vpop.xlane.xlu0 %270
    %272 = vadd.xlane.f32.xlu0 %v229
    %v273 = vpop.xlane.xlu0 %272
    %274 = vadd.xlane.f32.xlu0 %v230
    %v275 = vpop.xlane.xlu0 %274
    %276 = vadd.xlane.f32.xlu0 %v231
    %v277 = vpop.xlane.xlu0 %276
    %278 = vadd.xlane.f32.xlu0 %v232
    %v279 = vpop.xlane.xlu0 %278
    %280 = vadd.xlane.f32.xlu0 %v233
    %v281 = vpop.xlane.xlu0 %280
    %282 = vadd.xlane.f32.xlu0 %v234
    %v283 = vpop.xlane.xlu0 %282
    %284 = vadd.xlane.f32.xlu0 %v235
    %v285 = vpop.xlane.xlu0 %284
    %286 = vadd.xlane.f32.xlu0 %v236
    %v287 = vpop.xlane.xlu0 %286
    %288 = vadd.xlane.f32.xlu0 %v237
    %v289 = vpop.xlane.xlu0 %288
    %290 = vadd.xlane.f32.xlu0 %v238
    %v291 = vpop.xlane.xlu0 %290
    %292 = vadd.xlane.f32.xlu0 %v239
    %v293 = vpop.xlane.xlu0 %292
    %294 = vadd.xlane.f32.xlu0 %v240
    %v295 = vpop.xlane.xlu0 %294
    %296 = vadd.xlane.f32.xlu0 %v241
    %v297 = vpop.xlane.xlu0 %296
    %298 = vadd.xlane.f32.xlu0 %v242
    %v299 = vpop.xlane.xlu0 %298
    %300 = vadd.xlane.f32.xlu0 %v243
    %v301 = vpop.xlane.xlu0 %300
    %302 = vadd.xlane.f32.xlu0 %v244
    %v303 = vpop.xlane.xlu0 %302
    %304 = vadd.xlane.f32.xlu0 %v245
    %v305 = vpop.xlane.xlu0 %304
    %306 = vadd.xlane.f32.xlu0 %v246
    %v307 = vpop.xlane.xlu0 %306
    %308 = vadd.xlane.f32.xlu0 %v247
    %v309 = vpop.xlane.xlu0 %308
    %310 = vadd.xlane.f32.xlu0 %v248
    %v311 = vpop.xlane.xlu0 %310
    %312 = vadd.xlane.f32.xlu0 %v249
    %v313 = vpop.xlane.xlu0 %312
    %v314 = vmul.f32 %v251, %v153
    %v315 = vmul.f32 %v253, %v153
    %v316 = vmul.f32 %v255, %v153
    %v317 = vmul.f32 %v257, %v153
    %v318 = vmul.f32 %v259, %v153
    %v319 = vmul.f32 %v261, %v153
    %v320 = vmul.f32 %v263, %v153
    %v321 = vmul.f32 %v265, %v153
    %v322 = vmul.f32 %v267, %v153
    %v323 = vmul.f32 %v269, %v153
    %v324 = vmul.f32 %v271, %v153
    %v325 = vmul.f32 %v273, %v153
    %v326 = vmul.f32 %v275, %v153
    %v327 = vmul.f32 %v277, %v153
    %v328 = vmul.f32 %v279, %v153
    %v329 = vmul.f32 %v281, %v153
    %v330 = vmul.f32 %v283, %v153
    %v331 = vmul.f32 %v285, %v153
    %v332 = vmul.f32 %v287, %v153
    %v333 = vmul.f32 %v289, %v153
    %v334 = vmul.f32 %v291, %v153
    %v335 = vmul.f32 %v293, %v153
    %v336 = vmul.f32 %v295, %v153
    %v337 = vmul.f32 %v297, %v153
    %v338 = vmul.f32 %v299, %v153
    %v339 = vmul.f32 %v301, %v153
    %v340 = vmul.f32 %v303, %v153
    %v341 = vmul.f32 %v305, %v153
    %v342 = vmul.f32 %v307, %v153
    %v343 = vmul.f32 %v309, %v153
    %v344 = vmul.f32 %v311, %v153
    %v345 = vmul.f32 %v313, %v153
    %v346 = vadd.f32 %v314, 1e-05
    %v347 = vadd.f32 %v315, 1e-05
    %v348 = vadd.f32 %v316, 1e-05
    %v349 = vadd.f32 %v317, 1e-05
    %v350 = vadd.f32 %v318, 1e-05
    %v351 = vadd.f32 %v319, 1e-05
    %v352 = vadd.f32 %v320, 1e-05
    %v353 = vadd.f32 %v321, 1e-05
    %v354 = vadd.f32 %v322, 1e-05
    %v355 = vadd.f32 %v323, 1e-05
    %v356 = vadd.f32 %v324, 1e-05
    %v357 = vadd.f32 %v325, 1e-05
    %v358 = vadd.f32 %v326, 1e-05
    %v359 = vadd.f32 %v327, 1e-05
    %v360 = vadd.f32 %v328, 1e-05
    %v361 = vadd.f32 %v329, 1e-05
    %v362 = vadd.f32 %v330, 1e-05
    %v363 = vadd.f32 %v331, 1e-05
    %v364 = vadd.f32 %v332, 1e-05
    %v365 = vadd.f32 %v333, 1e-05
    %v366 = vadd.f32 %v334, 1e-05
    %v367 = vadd.f32 %v335, 1e-05
    %v368 = vadd.f32 %v336, 1e-05
    %v369 = vadd.f32 %v337, 1e-05
    %v370 = vadd.f32 %v338, 1e-05
    %v371 = vadd.f32 %v339, 1e-05
    %v372 = vadd.f32 %v340, 1e-05
    %v373 = vadd.f32 %v341, 1e-05
    %v374 = vadd.f32 %v342, 1e-05
    %v375 = vadd.f32 %v343, 1e-05
    %v376 = vadd.f32 %v344, 1e-05
    %v377 = vadd.f32 %v345, 1e-05
    %v378 = vrsqrt.pop %v346
    %v379 = vrsqrt.pop %v347
    %v380 = vrsqrt.pop %v348
    %v381 = vrsqrt.pop %v349
    %v382 = vrsqrt.pop %v350
    %v383 = vrsqrt.pop %v351
    %v384 = vrsqrt.pop %v352
    %v385 = vrsqrt.pop %v353
    %v386 = vrsqrt.pop %v354
    %v387 = vrsqrt.pop %v355
    %v388 = vrsqrt.pop %v356
    %v389 = vrsqrt.pop %v357
    %v390 = vrsqrt.pop %v358
    %v391 = vrsqrt.pop %v359
    %v392 = vrsqrt.pop %v360
    %v393 = vrsqrt.pop %v361
    %v394 = vrsqrt.pop %v362
    %v395 = vrsqrt.pop %v363
    %v396 = vrsqrt.pop %v364
    %v397 = vrsqrt.pop %v365
    %v398 = vrsqrt.pop %v366
    %v399 = vrsqrt.pop %v367
    %v400 = vrsqrt.pop %v368
    %v401 = vrsqrt.pop %v369
    %v402 = vrsqrt.pop %v370
    %v403 = vrsqrt.pop %v371
    %v404 = vrsqrt.pop %v372
    %v405 = vrsqrt.pop %v373
    %v406 = vrsqrt.pop %v374
    %v407 = vrsqrt.pop %v375
    %v408 = vrsqrt.pop %v376
    %v409 = vrsqrt.pop %v377
    %v410 = vmul.f32 %v186, %v378
    %v411 = vmul.f32 %v187, %v379
    %v412 = vmul.f32 %v188, %v380
    %v413 = vmul.f32 %v189, %v381
    %v414 = vmul.f32 %v190, %v382
    %v415 = vmul.f32 %v191, %v383
    %v416 = vmul.f32 %v192, %v384
    %v417 = vmul.f32 %v193, %v385
    %v418 = vmul.f32 %v194, %v386
    %v419 = vmul.f32 %v195, %v387
    %v420 = vmul.f32 %v196, %v388
    %v421 = vmul.f32 %v197, %v389
    %v422 = vmul.f32 %v198, %v390
    %v423 = vmul.f32 %v199, %v391
    %v424 = vmul.f32 %v200, %v392
    %v425 = vmul.f32 %v201, %v393
    %v426 = vmul.f32 %v202, %v394
    %v427 = vmul.f32 %v203, %v395
    %v428 = vmul.f32 %v204, %v396
    %v429 = vmul.f32 %v205, %v397
    %v430 = vmul.f32 %v206, %v398
    %v431 = vmul.f32 %v207, %v399
    %v432 = vmul.f32 %v208, %v400
    %v433 = vmul.f32 %v209, %v401
    %v434 = vmul.f32 %v210, %v402
    %v435 = vmul.f32 %v211, %v403
    %v436 = vmul.f32 %v212, %v404
    %v437 = vmul.f32 %v213, %v405
    %v438 = vmul.f32 %v214, %v406
    %v439 = vmul.f32 %v215, %v407
    %v440 = vmul.f32 %v216, %v408
    %v441 = vmul.f32 %v217, %v409
    %v442 = vld [vmem:[%s1] sm:$0x1]
    %v443 = vunpack.c.l.bf16 %v442
    %v444 = vlaneseq
    %v445 = vshrl.u32 %v444, 7
    %v446 = vsub.s32 0, %v445
    %v447 = vrot.slane %v443, %v446
    %v448 = vmul.f32 %v410, %v447
    %v449 = vmul.f32 %v411, %v447
    %v450 = vmul.f32 %v412, %v447
    %v451 = vmul.f32 %v413, %v447
    %v452 = vmul.f32 %v414, %v447
    %v453 = vmul.f32 %v415, %v447
    %v454 = vmul.f32 %v416, %v447
    %v455 = vmul.f32 %v417, %v447
    %v456 = vmul.f32 %v418, %v447
    %v457 = vmul.f32 %v419, %v447
    %v458 = vmul.f32 %v420, %v447
    %v459 = vmul.f32 %v421, %v447
    %v460 = vmul.f32 %v422, %v447
    %v461 = vmul.f32 %v423, %v447
    %v462 = vmul.f32 %v424, %v447
    %v463 = vmul.f32 %v425, %v447
    %v464 = vmul.f32 %v426, %v447
    %v465 = vmul.f32 %v427, %v447
    %v466 = vmul.f32 %v428, %v447
    %v467 = vmul.f32 %v429, %v447
    %v468 = vmul.f32 %v430, %v447
    %v469 = vmul.f32 %v431, %v447
    %v470 = vmul.f32 %v432, %v447
    %v471 = vmul.f32 %v433, %v447
    %v472 = vmul.f32 %v434, %v447
    %v473 = vmul.f32 %v435, %v447
    %v474 = vmul.f32 %v436, %v447
    %v475 = vmul.f32 %v437, %v447
    %v476 = vmul.f32 %v438, %v447
    %v477 = vmul.f32 %v439, %v447
    %v478 = vmul.f32 %v440, %v447
    %v479 = vmul.f32 %v441, %v447
    %v480 = vld [vmem:[%s2] sm:$0x1]
    %v481 = vunpack.c.l.bf16 %v480
    %v482 = vlaneseq
    %v483 = vshrl.u32 %v482, 7
    %v484 = vsub.s32 0, %v483
    %v485 = vrot.slane %v481, %v484
    %v486 = vadd.f32 %v448, %v485
    %v487 = vadd.f32 %v449, %v485
    %v488 = vadd.f32 %v450, %v485
    %v489 = vadd.f32 %v451, %v485
    %v490 = vadd.f32 %v452, %v485
    %v491 = vadd.f32 %v453, %v485
    %v492 = vadd.f32 %v454, %v485
    %v493 = vadd.f32 %v455, %v485
    %v494 = vadd.f32 %v456, %v485
    %v495 = vadd.f32 %v457, %v485
    %v496 = vadd.f32 %v458, %v485
    %v497 = vadd.f32 %v459, %v485
    %v498 = vadd.f32 %v460, %v485
    %v499 = vadd.f32 %v461, %v485
    %v500 = vadd.f32 %v462, %v485
    %v501 = vadd.f32 %v463, %v485
    %v502 = vadd.f32 %v464, %v485
    %v503 = vadd.f32 %v465, %v485
    %v504 = vadd.f32 %v466, %v485
    %v505 = vadd.f32 %v467, %v485
    %v506 = vadd.f32 %v468, %v485
    %v507 = vadd.f32 %v469, %v485
    %v508 = vadd.f32 %v470, %v485
    %v509 = vadd.f32 %v471, %v485
    %v510 = vadd.f32 %v472, %v485
    %v511 = vadd.f32 %v473, %v485
    %v512 = vadd.f32 %v474, %v485
    %v513 = vadd.f32 %v475, %v485
    %v514 = vadd.f32 %v476, %v485
    %v515 = vadd.f32 %v477, %v485
    %v516 = vadd.f32 %v478, %v485
    %v517 = vadd.f32 %v479, %v485
    %v518 = vpack.c.bf16 %v487, %v486
    %v519 = vpack.c.bf16 %v489, %v488
    %v520 = vpack.c.bf16 %v491, %v490
    %v521 = vpack.c.bf16 %v493, %v492
    %v522 = vpack.c.bf16 %v495, %v494
    %v523 = vpack.c.bf16 %v497, %v496
    %v524 = vpack.c.bf16 %v499, %v498
    %v525 = vpack.c.bf16 %v501, %v500
    %v526 = vpack.c.bf16 %v503, %v502
    %v527 = vpack.c.bf16 %v505, %v504
    %v528 = vpack.c.bf16 %v507, %v506
    %v529 = vpack.c.bf16 %v509, %v508
    %v530 = vpack.c.bf16 %v511, %v510
    %v531 = vpack.c.bf16 %v513, %v512
    %v532 = vpack.c.bf16 %v515, %v514
    %v533 = vpack.c.bf16 %v517, %v516
    %534 = vst [vmem:[#allocation2] sm:$0xff] %v518
    %535 = vst [vmem:[#allocation2 + $0x8] sm:$0xff] %v519
    %536 = vst [vmem:[#allocation2 + $0x10] sm:$0xff] %v520
    %537 = vst [vmem:[#allocation2 + $0x18] sm:$0xff] %v521
    %538 = vst [vmem:[#allocation2 + $0x20] sm:$0xff] %v522
    %539 = vst [vmem:[#allocation2 + $0x28] sm:$0xff] %v523
    %540 = vst [vmem:[#allocation2 + $0x30] sm:$0xff] %v524
    %541 = vst [vmem:[#allocation2 + $0x38] sm:$0xff] %v525
    %542 = vst [vmem:[#allocation2 + $0x40] sm:$0xff] %v526
    %543 = vst [vmem:[#allocation2 + $0x48] sm:$0xff] %v527
    %544 = vst [vmem:[#allocation2 + $0x50] sm:$0xff] %v528
    %545 = vst [vmem:[#allocation2 + $0x58] sm:$0xff] %v529
    %546 = vst [vmem:[#allocation2 + $0x60] sm:$0xff] %v530
    %547 = vst [vmem:[#allocation2 + $0x68] sm:$0xff] %v531
    %548 = vst [vmem:[#allocation2 + $0x70] sm:$0xff] %v532
    %549 = vst [vmem:[#allocation2 + $0x78] sm:$0xff] %v533
  $region25: #{whisper_audio_tower_forward.12} parent=0 // pred_fallthru
    _
  %v550 = vld [vmem:[#allocation2] sm:$0xff]
  %v551 = vld [vmem:[#allocation2 + $0x8] sm:$0xff]
  %v552 = vld [vmem:[#allocation2 + $0x10] sm:$0xff]
  %v553 = vld [vmem:[#allocation2 + $0x18] sm:$0xff]
  %v554 = vld [vmem:[#allocation2 + $0x20] sm:$0xff]
  %v555 = vld [vmem:[#allocation2 + $0x28] sm:$0xff]
  %v556 = vld [vmem:[#allocation2 + $0x30] sm:$0xff]
  %v557 = vld [vmem:[#allocation2 + $0x38] sm:$0xff]
  %v558 = vld [vmem:[#allocation2 + $0x40] sm:$0xff]
  %v559 = vld [vmem:[#allocation2 + $0x48] sm:$0xff]
  %v560 = vld [vmem:[#allocation2 + $0x50] sm:$0xff]
  %v561 = vld [vmem:[#allocation2 + $0x58] sm:$0xff]
  %v562 = vld [vmem:[#allocation2 + $0x60] sm:$0xff]
  %v563 = vld [vmem:[#allocation2 + $0x68] sm:$0xff]
  %v564 = vld [vmem:[#allocation2 + $0x70] sm:$0xff]
  %v565 = vld [vmem:[#allocation2 + $0x78] sm:$0xff]
  %v566 = vld [vmem:[%s3] sm:$0xff]
  %v567 = vld [vmem:[%s3 + $0x8] sm:$0xff]
  %v568 = vld [vmem:[%s3 + $0x10] sm:$0xff]
  %v569 = vld [vmem:[%s3 + $0x18] sm:$0xff]
  %v570 = vld [vmem:[%s3 + $0x20] sm:$0xff]
  %v571 = vld [vmem:[%s3 + $0x28] sm:$0xff]
  %v572 = vld [vmem:[%s3 + $0x30] sm:$0xff]
  %v573 = vld [vmem:[%s3 + $0x38] sm:$0xff]
  %v574 = vld [vmem:[%s3 + $0x40] sm:$0xff]
  %v575 = vld [vmem:[%s3 + $0x48] sm:$0xff]
  %v576 = vld [vmem:[%s3 + $0x50] sm:$0xff]
  %v577 = vld [vmem:[%s3 + $0x58] sm:$0xff]
  %v578 = vld [vmem:[%s3 + $0x60] sm:$0xff]
  %v579 = vld [vmem:[%s3 + $0x68] sm:$0xff]
  %v580 = vld [vmem:[%s3 + $0x70] sm:$0xff]
  %v581 = vld [vmem:[%s3 + $0x78] sm:$0xff]
  %v582 = vld [vmem:[%s4] sm:$0x3]
  %v583 = vunpack.c.l.bf16 %v582
  %v585 = vlaneseq
  %v586 = vshrl.u32 %v585, 7
  %v587 = vsub.s32 0, %v586
  %v588 = vrot.slane %v583, %v587
  %v589 = vlaneseq
  %v590 = vshrl.u32 %v589, 7
  %v591 = vsub.s32 2, %v590
  %v592 = vrot.slane %v583, %v591
  %v595 = vlaneseq
  %v596 = vshrl.u32 %v595, 7
  %v597 = vsub.s32 0, %v596
  %v598 = vrot.slane %v588, %v597
  %v599 = vlaneseq
  %v600 = vshrl.u32 %v599, 7
  %v601 = vsub.s32 0, %v600
  %v602 = vrot.slane %v592, %v601
  %v619 = vunpack.c.l.b16 %v566
  %v620 = vunpack.c.h.b16 %v566
  %v621 = vunpack.c.l.b16 %v567
  %v622 = vunpack.c.h.b16 %v567
  %v623 = vunpack.c.l.b16 %v568
  %v624 = vunpack.c.h.b16 %v568
  %v625 = vunpack.c.l.b16 %v569
  %v626 = vunpack.c.h.b16 %v569
  %v627 = vunpack.c.l.b16 %v570
  %v628 = vunpack.c.h.b16 %v570
  %v629 = vunpack.c.l.b16 %v571
  %v630 = vunpack.c.h.b16 %v571
  %v631 = vunpack.c.l.b16 %v572
  %v632 = vunpack.c.h.b16 %v572
  %v633 = vunpack.c.l.b16 %v573
  %v634 = vunpack.c.h.b16 %v573
  %v635 = vunpack.c.l.b16 %v574
  %v636 = vunpack.c.h.b16 %v574
  %v637 = vunpack.c.l.b16 %v575
  %v638 = vunpack.c.h.b16 %v575
  %v639 = vunpack.c.l.b16 %v576
  %v640 = vunpack.c.h.b16 %v576
  %v641 = vunpack.c.l.b16 %v577
  %v642 = vunpack.c.h.b16 %v577
  %v643 = vunpack.c.l.b16 %v578
  %v644 = vunpack.c.h.b16 %v578
  %v645 = vunpack.c.l.b16 %v579
  %v646 = vunpack.c.h.b16 %v579
  %v647 = vunpack.c.l.b16 %v580
  %v648 = vunpack.c.h.b16 %v580
  %v649 = vunpack.c.l.b16 %v581
  %v650 = vunpack.c.h.b16 %v581
  %v651 = vpack.c.b16 %v621, %v619
  %v652 = vpack.c.b16 %v622, %v620
  %v653 = vpack.c.b16 %v625, %v623
  %v654 = vpack.c.b16 %v626, %v624
  %v655 = vpack.c.b16 %v629, %v627
  %v656 = vpack.c.b16 %v630, %v628
  %v657 = vpack.c.b16 %v633, %v631
  %v658 = vpack.c.b16 %v634, %v632
  %v659 = vpack.c.b16 %v637, %v635
  %v660 = vpack.c.b16 %v638, %v636
  %v661 = vpack.c.b16 %v641, %v639
  %v662 = vpack.c.b16 %v642, %v640
  %v663 = vpack.c.b16 %v645, %v643
  %v664 = vpack.c.b16 %v646, %v644
  %v665 = vpack.c.b16 %v649, %v647
  %v666 = vpack.c.b16 %v650, %v648
  %683 = vmatprep.subr.bf16.mxu0 %v652
  %684 = vmatpush1.bf16.msra.mxu0 %v651
  %685 = vmatprep.subr.bf16.mxu0 %v654
  %686 = vmatpush1.bf16.msra.mxu0 %v653
  %687 = vmatprep.subr.bf16.mxu0 %v656
  %688 = vmatpush1.bf16.msra.mxu0 %v655
  %689 = vmatprep.subr.bf16.mxu0 %v658
  %690 = vmatpush1.bf16.msra.mxu0 %v657
  %691 = vmatprep.subr.bf16.mxu0 %v660
  %692 = vmatpush1.bf16.msra.mxu0 %v659
  %693 = vmatprep.subr.bf16.mxu0 %v662
  %694 = vmatpush1.bf16.msra.mxu0 %v661
  %695 = vmatprep.subr.bf16.mxu0 %v664
  %696 = vmatpush1.bf16.msra.mxu0 %v663
  %697 = vmatprep.subr.bf16.mxu0 %v666
  %698 = vmatpush1.bf16.msra.mxu0 %v665
  %699 = vmatprep.subr.bf16.mxu0 0
  %700 = vmatpush1.bf16.msra.mxu0 0
  %701 = vmatprep.subr.bf16.mxu0 0
  %702 = vmatpush1.bf16.msra.mxu0 0
  %703 = vmatprep.subr.bf16.mxu0 0
  %704 = vmatpush1.bf16.msra.mxu0 0
  %705 = vmatprep.subr.bf16.mxu0 0
  %706 = vmatpush1.bf16.msra.mxu0 0
  %707 = vmatprep.subr.bf16.mxu0 0
  %708 = vmatpush1.bf16.msra.mxu0 0
  %709 = vmatprep.subr.bf16.mxu0 0
  %710 = vmatpush1.bf16.msra.mxu0 0
  %711 = vmatprep.subr.bf16.mxu0 0
  %712 = vmatpush1.bf16.msra.mxu0 0
  %713 = vmatprep.subr.bf16.mxu0 0
  %714 = vmatpush1.bf16.msra.mxu0 0
  %715 = vmatprep.mubr.bf16.mxu0 0
  %716 = vmatmul.mubr.bf16.gmra.mrb[0].mxu0 %v550
  %v717 = vpop.f32.mrb[0].mxu0
  %v718 = vadd.f32 %v598, %v717
  %v719 = vpop.f32.mrb[0].mxu0
  %v720 = vadd.f32 %v602, %v719
  %v721 = vpop.f32.mrb[0].mxu0
  %v722 = vadd.f32 %v598, %v721
  %v723 = vpop.f32.mrb[0].mxu0
  %v724 = vadd.f32 %v602, %v723
  %725 = vmatprep.mubr.bf16.mxu0 0
  %726 = vmatmul.mubr.bf16.gmra.mrb[0].mxu0 %v551
  %v727 = vpop.f32.mrb[0].mxu0
  %v728 = vadd.f32 %v598, %v727
  %v729 = vpop.f32.mrb[0].mxu0
  %v730 = vadd.f32 %v602, %v729
  %v731 = vpop.f32.mrb[0].mxu0
  %v732 = vadd.f32 %v598, %v731
  %v733 = vpop.f32.mrb[0].mxu0
  %v734 = vadd.f32 %v602, %v733
  %735 = vmatprep.mubr.bf16.mxu0 0
  %736 = vmatmul.mubr.bf16.gmra.mrb[0].mxu0 %v552
  %v737 = vpop.f32.mrb[0].mxu0
  %v738 = vadd.f32 %v598, %v737
  %v739 = vpop.f32.mrb[0].mxu0
  %v740 = vadd.f32 %v602, %v739
  %v741 = vpop.f32.mrb[0].mxu0
  %v742 = vadd.f32 %v598, %v741
  %v743 = vpop.f32.mrb[0].mxu0
  %v744 = vadd.f32 %v602, %v743
  %745 = vmatprep.mubr.bf16.mxu0 0
  %746 = vmatmul.mubr.bf16.gmra.mrb[0].mxu0 %v553
  %v747 = vpop.f32.mrb[0].mxu0
  %v748 = vadd.f32 %v598, %v747
  %v749 = vpop.f32.mrb[0].mxu0
  %v750 = vadd.f32 %v602, %v749
  %v751 = vpop.f32.mrb[0].mxu0
  %v752 = vadd.f32 %v598, %v751
  %v753 = vpop.f32.mrb[0].mxu0
  %v754 = vadd.f32 %v602, %v753
  %755 = vmatprep.mubr.bf16.mxu0 0
  %756 = vmatmul.mubr.bf16.gmra.mrb[0].mxu0 %v554
  %v757 = vpop.f32.mrb[0].mxu0
  %v758 = vadd.f32 %v598, %v757
  %v759 = vpop.f32.mrb[0].mxu0
  %v760 = vadd.f32 %v602, %v759
  %v761 = vpop.f32.mrb[0].mxu0
  %v762 = vadd.f32 %v598, %v761
  %v763 = vpop.f32.mrb[0].mxu0
  %v764 = vadd.f32 %v602, %v763
  %765 = vmatprep.mubr.bf16.mxu0 0
  %766 = vmatmul.mubr.bf16.gmra.mrb[0].mxu0 %v555
  %v767 = vpop.f32.mrb[0].mxu0
  %v768 = vadd.f32 %v598, %v767
  %v769 = vpop.f32.mrb[0].mxu0
  %v770 = vadd.f32 %v602, %v769
  %v771 = vpop.f32.mrb[0].mxu0
  %v772 = vadd.f32 %v598, %v771
  %v773 = vpop.f32.mrb[0].mxu0
  %v774 = vadd.f32 %v602, %v773
  %775 = vmatprep.mubr.bf16.mxu0 0
  %776 = vmatmul.mubr.bf16.gmra.mrb[0].mxu0 %v556
  %v777 = vpop.f32.mrb[0].mxu0
  %v778 = vadd.f32 %v598, %v777
  %v779 = vpop.f32.mrb[0].mxu0
  %v780 = vadd.f32 %v602, %v779
  %v781 = vpop.f32.mrb[0].mxu0
  %v782 = vadd.f32 %v598, %v781
  %v783 = vpop.f32.mrb[0].mxu0
  %v784 = vadd.f32 %v602, %v783
  %785 = vmatprep.mubr.bf16.mxu0 0
  %786 = vmatmul.mubr.bf16.gmra.mrb[0].mxu0 %v557
  %v787 = vpop.f32.mrb[0].mxu0
  %v788 = vadd.f32 %v598, %v787
  %v789 = vpop.f32.mrb[0].mxu0
  %v790 = vadd.f32 %v602, %v789
  %v791 = vpop.f32.mrb[0].mxu0
  %v792 = vadd.f32 %v598, %v791
  %v793 = vpop.f32.mrb[0].mxu0
  %v794 = vadd.f32 %v602, %v793
  %795 = vmatprep.mubr.bf16.mxu0 0
  %796 = vmatmul.mubr.bf16.gmra.mrb[0].mxu0 %v558
  %v797 = vpop.f32.mrb[0].mxu0
  %v798 = vadd.f32 %v598, %v797
  %v799 = vpop.f32.mrb[0].mxu0
  %v800 = vadd.f32 %v602, %v799
  %v801 = vpop.f32.mrb[0].mxu0
  %v802 = vadd.f32 %v598, %v801
  %v803 = vpop.f32.mrb[0].mxu0
  %v804 = vadd.f32 %v602, %v803
  %805 = vmatprep.mubr.bf16.mxu0 0
  %806 = vmatmul.mubr.bf16.gmra.mrb[0].mxu0 %v559
  %v807 = vpop.f32.mrb[0].mxu0
  %v808 = vadd.f32 %v598, %v807
  %v809 = vpop.f32.mrb[0].mxu0
  %v810 = vadd.f32 %v602, %v809
  %v811 = vpop.f32.mrb[0].mxu0
  %v812 = vadd.f32 %v598, %v811
  %v813 = vpop.f32.mrb[0].mxu0
  %v814 = vadd.f32 %v602, %v813
  %815 = vmatprep.mubr.bf16.mxu0 0
  %816 = vmatmul.mubr.bf16.gmra.mrb[0].mxu0 %v560
  %v817 = vpop.f32.mrb[0].mxu0
  %v818 = vadd.f32 %v598, %v817
  %v819 = vpop.f32.mrb[0].mxu0
  %v820 = vadd.f32 %v602, %v819
  %v821 = vpop.f32.mrb[0].mxu0
  %v822 = vadd.f32 %v598, %v821
  %v823 = vpop.f32.mrb[0].mxu0
  %v824 = vadd.f32 %v602, %v823
  %825 = vmatprep.mubr.bf16.mxu0 0
  %826 = vmatmul.mubr.bf16.gmra.mrb[0].mxu0 %v561
  %v827 = vpop.f32.mrb[0].mxu0
  %v828 = vadd.f32 %v598, %v827
  %v829 = vpop.f32.mrb[0].mxu0
  %v830 = vadd.f32 %v602, %v829
  %v831 = vpop.f32.mrb[0].mxu0
  %v832 = vadd.f32 %v598, %v831
  %v833 = vpop.f32.mrb[0].mxu0
  %v834 = vadd.f32 %v602, %v833
  %835 = vmatprep.mubr.bf16.mxu0 0
  %836 = vmatmul.mubr.bf16.gmra.mrb[0].mxu0 %v562
  %v837 = vpop.f32.mrb[0].mxu0
  %v838 = vadd.f32 %v598, %v837
  %v839 = vpop.f32.mrb[0].mxu0
  %v840 = vadd.f32 %v602, %v839
  %v841 = vpop.f32.mrb[0].mxu0
  %v842 = vadd.f32 %v598, %v841
  %v843 = vpop.f32.mrb[0].mxu0
  %v844 = vadd.f32 %v602, %v843
  %845 = vmatprep.mubr.bf16.mxu0 0
  %846 = vmatmul.mubr.bf16.gmra.mrb[0].mxu0 %v563
  %v847 = vpop.f32.mrb[0].mxu0
  %v848 = vadd.f32 %v598, %v847
  %v849 = vpop.f32.mrb[0].mxu0
  %v850 = vadd.f32 %v602, %v849
  %v851 = vpop.f32.mrb[0].mxu0
  %v852 = vadd.f32 %v598, %v851
  %v853 = vpop.f32.mrb[0].mxu0
  %v854 = vadd.f32 %v602, %v853
  %855 = vmatprep.mubr.bf16.mxu0 0
  %856 = vmatmul.mubr.bf16.gmra.mrb[0].mxu0 %v564
  %v857 = vpop.f32.mrb[0].mxu0
  %v858 = vadd.f32 %v598, %v857
  %v859 = vpop.f32.mrb[0].mxu0
  %v860 = vadd.f32 %v602, %v859
  %v861 = vpop.f32.mrb[0].mxu0
  %v862 = vadd.f32 %v598, %v861
  %v863 = vpop.f32.mrb[0].mxu0
  %v864 = vadd.f32 %v602, %v863
  %865 = vmatprep.mubr.bf16.mxu0 0
  %866 = vmatmul.mubr.bf16.gmra.mrb[0].mxu0 %v565
  %v867 = vpop.f32.mrb[0].mxu0
  %v868 = vadd.f32 %v598, %v867
  %v869 = vpop.f32.mrb[0].mxu0
  %v870 = vadd.f32 %v602, %v869
  %v871 = vpop.f32.mrb[0].mxu0
  %v872 = vadd.f32 %v598, %v871
  %v873 = vpop.f32.mrb[0].mxu0
  %v874 = vadd.f32 %v602, %v873
  %875 = vdwg.mxu0
  %v876 = vmul.f32 %v718, 0.5
  %v877 = vmul.f32 %v720, 0.5
  %v878 = vmul.f32 %v722, 0.5
  %v879 = vmul.f32 %v724, 0.5
  %v880 = vmul.f32 %v728, 0.5
  %v881 = vmul.f32 %v730, 0.5
  %v882 = vmul.f32 %v732, 0.5
  %v883 = vmul.f32 %v734, 0.5
  %v884 = vmul.f32 %v738, 0.5
  %v885 = vmul.f32 %v740, 0.5
  %v886 = vmul.f32 %v742, 0.5
  %v887 = vmul.f32 %v744, 0.5
  %v888 = vmul.f32 %v748, 0.5
  %v889 = vmul.f32 %v750, 0.5
  %v890 = vmul.f32 %v752, 0.5
  %v891 = vmul.f32 %v754, 0.5
  %v892 = vmul.f32 %v758, 0.5
  %v893 = vmul.f32 %v760, 0.5
  %v894 = vmul.f32 %v762, 0.5
  %v895 = vmul.f32 %v764, 0.5
  %v896 = vmul.f32 %v768, 0.5
  %v897 = vmul.f32 %v770, 0.5
  %v898 = vmul.f32 %v772, 0.5
  %v899 = vmul.f32 %v774, 0.5
  %v900 = vmul.f32 %v778, 0.5
  %v901 = vmul.f32 %v780, 0.5
  %v902 = vmul.f32 %v782, 0.5
  %v903 = vmul.f32 %v784, 0.5
  %v904 = vmul.f32 %v788, 0.5
  %v905 = vmul.f32 %v790, 0.5
  %v906 = vmul.f32 %v792, 0.5
  %v907 = vmul.f32 %v794, 0.5
  %v908 = vmul.f32 %v798, 0.5
  %v909 = vmul.f32 %v800, 0.5
  %v910 = vmul.f32 %v802, 0.5
  %v911 = vmul.f32 %v804, 0.5
  %v912 = vmul.f32 %v808, 0.5
  %v913 = vmul.f32 %v810, 0.5
  %v914 = vmul.f32 %v812, 0.5
  %v915 = vmul.f32 %v814, 0.5
  %v916 = vmul.f32 %v818, 0.5
  %v917 = vmul.f32 %v820, 0.5
  %v918 = vmul.f32 %v822, 0.5
  %v919 = vmul.f32 %v824, 0.5
  %v920 = vmul.f32 %v828, 0.5
  %v921 = vmul.f32 %v830, 0.5
  %v922 = vmul.f32 %v832, 0.5
  %v923 = vmul.f32 %v834, 0.5
  %v924 = vmul.f32 %v838, 0.5
  %v925 = vmul.f32 %v840, 0.5
  %v926 = vmul.f32 %v842, 0.5
  %v927 = vmul.f32 %v844, 0.5
  %v928 = vmul.f32 %v848, 0.5
  %v929 = vmul.f32 %v850, 0.5
  %v930 = vmul.f32 %v852, 0.5
  %v931 = vmul.f32 %v854, 0.5
  %v932 = vmul.f32 %v858, 0.5
  %v933 = vmul.f32 %v860, 0.5
  %v934 = vmul.f32 %v862, 0.5
  %v935 = vmul.f32 %v864, 0.5
  %v936 = vmul.f32 %v868, 0.5
  %v937 = vmul.f32 %v870, 0.5
  %v938 = vmul.f32 %v872, 0.5
  %v939 = vmul.f32 %v874, 0.5
  %v940 = vmul.f32 %v718, 0.044715
  %v941 = vmul.f32 %v720, 0.044715
  %v942 = vmul.f32 %v722, 0.044715
  %v943 = vmul.f32 %v724, 0.044715
  %v944 = vmul.f32 %v728, 0.044715
  %v945 = vmul.f32 %v730, 0.044715
  %v946 = vmul.f32 %v732, 0.044715
  %v947 = vmul.f32 %v734, 0.044715
  %v948 = vmul.f32 %v738, 0.044715
  %v949 = vmul.f32 %v740, 0.044715
  %v950 = vmul.f32 %v742, 0.044715
  %v951 = vmul.f32 %v744, 0.044715
  %v952 = vmul.f32 %v748, 0.044715
  %v953 = vmul.f32 %v750, 0.044715
  %v954 = vmul.f32 %v752, 0.044715
  %v955 = vmul.f32 %v754, 0.044715
  %v956 = vmul.f32 %v758, 0.044715
  %v957 = vmul.f32 %v760, 0.044715
  %v958 = vmul.f32 %v762, 0.044715
  %v959 = vmul.f32 %v764, 0.044715
  %v960 = vmul.f32 %v768, 0.044715
  %v961 = vmul.f32 %v770, 0.044715
  %v962 = vmul.f32 %v772, 0.044715
  %v963 = vmul.f32 %v774, 0.044715
  %v964 = vmul.f32 %v778, 0.044715
  %v965 = vmul.f32 %v780, 0.044715
  %v966 = vmul.f32 %v782, 0.044715
  %v967 = vmul.f32 %v784, 0.044715
  %v968 = vmul.f32 %v788, 0.044715
  %v969 = vmul.f32 %v790, 0.044715
  %v970 = vmul.f32 %v792, 0.044715
  %v971 = vmul.f32 %v794, 0.044715
  %v972 = vmul.f32 %v798, 0.044715
  %v973 = vmul.f32 %v800, 0.044715
  %v974 = vmul.f32 %v802, 0.044715
  %v975 = vmul.f32 %v804, 0.044715
  %v976 = vmul.f32 %v808, 0.044715
  %v977 = vmul.f32 %v810, 0.044715
  %v978 = vmul.f32 %v812, 0.044715
  %v979 = vmul.f32 %v814, 0.044715
  %v980 = vmul.f32 %v818, 0.044715
  %v981 = vmul.f32 %v820, 0.044715
  %v982 = vmul.f32 %v822, 0.044715
  %v983 = vmul.f32 %v824, 0.044715
  %v984 = vmul.f32 %v828, 0.044715
  %v985 = vmul.f32 %v830, 0.044715
  %v986 = vmul.f32 %v832, 0.044715
  %v987 = vmul.f32 %v834, 0.044715
  %v988 = vmul.f32 %v838, 0.044715
  %v989 = vmul.f32 %v840, 0.044715
  %v990 = vmul.f32 %v842, 0.044715
  %v991 = vmul.f32 %v844, 0.044715
  %v992 = vmul.f32 %v848, 0.044715
  %v993 = vmul.f32 %v850, 0.044715
  %v994 = vmul.f32 %v852, 0.044715
  %v995 = vmul.f32 %v854, 0.044715
  %v996 = vmul.f32 %v858, 0.044715
  %v997 = vmul.f32 %v860, 0.044715
  %v998 = vmul.f32 %v862, 0.044715
  %v999 = vmul.f32 %v864, 0.044715
  %v1000 = vmul.f32 %v868, 0.044715
  %v1001 = vmul.f32 %v870, 0.044715
  %v1002 = vmul.f32 %v872, 0.044715
  %v1003 = vmul.f32 %v874, 0.044715
  %v1004 = vmul.f32 %v940, %v718
  %v1005 = vmul.f32 %v941, %v720
  %v1006 = vmul.f32 %v942, %v722
  %v1007 = vmul.f32 %v943, %v724
  %v1008 = vmul.f32 %v944, %v728
  %v1009 = vmul.f32 %v945, %v730
  %v1010 = vmul.f32 %v946, %v732
  %v1011 = vmul.f32 %v947, %v734
  %v1012 = vmul.f32 %v948, %v738
  %v1013 = vmul.f32 %v949, %v740
  %v1014 = vmul.f32 %v950, %v742
  %v1015 = vmul.f32 %v951, %v744
  %v1016 = vmul.f32 %v952, %v748
  %v1017 = vmul.f32 %v953, %v750
  %v1018 = vmul.f32 %v954, %v752
  %v1019 = vmul.f32 %v955, %v754
  %v1020 = vmul.f32 %v956, %v758
  %v1021 = vmul.f32 %v957, %v760
  %v1022 = vmul.f32 %v958, %v762
  %v1023 = vmul.f32 %v959, %v764
  %v1024 = vmul.f32 %v960, %v768
  %v1025 = vmul.f32 %v961, %v770
  %v1026 = vmul.f32 %v962, %v772
  %v1027 = vmul.f32 %v963, %v774
  %v1028 = vmul.f32 %v964, %v778
  %v1029 = vmul.f32 %v965, %v780
  %v1030 = vmul.f32 %v966, %v782
  %v1031 = vmul.f32 %v967, %v784
  %v1032 = vmul.f32 %v968, %v788
  %v1033 = vmul.f32 %v969, %v790
  %v1034 = vmul.f32 %v970, %v792
  %v1035 = vmul.f32 %v971, %v794
  %v1036 = vmul.f32 %v972, %v798
  %v1037 = vmul.f32 %v973, %v800
  %v1038 = vmul.f32 %v974, %v802
  %v1039 = vmul.f32 %v975, %v804
  %v1040 = vmul.f32 %v976, %v808
  %v1041 = vmul.f32 %v977, %v810
  %v1042 = vmul.f32 %v978, %v812
  %v1043 = vmul.f32 %v979, %v814
  %v1044 = vmul.f32 %v980, %v818
  %v1045 = vmul.f32 %v981, %v820
  %v1046 = vmul.f32 %v982, %v822
  %v1047 = vmul.f32 %v983, %v824
  %v1048 = vmul.f32 %v984, %v828
  %v1049 = vmul.f32 %v985, %v830
  %v1050 = vmul.f32 %v986, %v832
  %v1051 = vmul.f32 %v987, %v834
  %v1052 = vmul.f32 %v988, %v838
  %v1053 = vmul.f32 %v989, %v840
  %v1054 = vmul.f32 %v990, %v842
  %v1055 = vmul.f32 %v991, %v844
  %v1056 = vmul.f32 %v992, %v848
  %v1057 = vmul.f32 %v993, %v850
  %v1058 = vmul.f32 %v994, %v852
  %v1059 = vmul.f32 %v995, %v854
  %v1060 = vmul.f32 %v996, %v858
  %v1061 = vmul.f32 %v997, %v860
  %v1062 = vmul.f32 %v998, %v862
  %v1063 = vmul.f32 %v999, %v864
  %v1064 = vmul.f32 %v1000, %v868
  %v1065 = vmul.f32 %v1001, %v870
  %v1066 = vmul.f32 %v1002, %v872
  %v1067 = vmul.f32 %v1003, %v874
  %v1068 = vmul.f32 %v1004, %v718
  %v1069 = vmul.f32 %v1005, %v720
  %v1070 = vmul.f32 %v1006, %v722
  %v1071 = vmul.f32 %v1007, %v724
  %v1072 = vmul.f32 %v1008, %v728
  %v1073 = vmul.f32 %v1009, %v730
  %v1074 = vmul.f32 %v1010, %v732
  %v1075 = vmul.f32 %v1011, %v734
  %v1076 = vmul.f32 %v1012, %v738
  %v1077 = vmul.f32 %v1013, %v740
  %v1078 = vmul.f32 %v1014, %v742
  %v1079 = vmul.f32 %v1015, %v744
  %v1080 = vmul.f32 %v1016, %v748
  %v1081 = vmul.f32 %v1017, %v750
  %v1082 = vmul.f32 %v1018, %v752
  %v1083 = vmul.f32 %v1019, %v754
  %v1084 = vmul.f32 %v1020, %v758
  %v1085 = vmul.f32 %v1021, %v760
  %v1086 = vmul.f32 %v1022, %v762
  %v1087 = vmul.f32 %v1023, %v764
  %v1088 = vmul.f32 %v1024, %v768
  %v1089 = vmul.f32 %v1025, %v770
  %v1090 = vmul.f32 %v1026, %v772
  %v1091 = vmul.f32 %v1027, %v774
  %v1092 = vmul.f32 %v1028, %v778
  %v1093 = vmul.f32 %v1029, %v780
  %v1094 = vmul.f32 %v1030, %v782
  %v1095 = vmul.f32 %v1031, %v784
  %v1096 = vmul.f32 %v1032, %v788
  %v1097 = vmul.f32 %v1033, %v790
  %v1098 = vmul.f32 %v1034, %v792
  %v1099 = vmul.f32 %v1035, %v794
  %v1100 = vmul.f32 %v1036, %v798
  %v1101 = vmul.f32 %v1037, %v800
  %v1102 = vmul.f32 %v1038, %v802
  %v1103 = vmul.f32 %v1039, %v804
  %v1104 = vmul.f32 %v1040, %v808
  %v1105 = vmul.f32 %v1041, %v810
  %v1106 = vmul.f32 %v1042, %v812
  %v1107 = vmul.f32 %v1043, %v814
  %v1108 = vmul.f32 %v1044, %v818
  %v1109 = vmul.f32 %v1045, %v820
  %v1110 = vmul.f32 %v1046, %v822
  %v1111 = vmul.f32 %v1047, %v824
  %v1112 = vmul.f32 %v1048, %v828
  %v1113 = vmul.f32 %v1049, %v830
  %v1114 = vmul.f32 %v1050, %v832
  %v1115 = vmul.f32 %v1051, %v834
  %v1116 = vmul.f32 %v1052, %v838
  %v1117 = vmul.f32 %v1053, %v840
  %v1118 = vmul.f32 %v1054, %v842
  %v1119 = vmul.f32 %v1055, %v844
  %v1120 = vmul.f32 %v1056, %v848
  %v1121 = vmul.f32 %v1057, %v850
  %v1122 = vmul.f32 %v1058, %v852
  %v1123 = vmul.f32 %v1059, %v854
  %v1124 = vmul.f32 %v1060, %v858
  %v1125 = vmul.f32 %v1061, %v860
  %v1126 = vmul.f32 %v1062, %v862
  %v1127 = vmul.f32 %v1063, %v864
  %v1128 = vmul.f32 %v1064, %v868
  %v1129 = vmul.f32 %v1065, %v870
  %v1130 = vmul.f32 %v1066, %v872
  %v1131 = vmul.f32 %v1067, %v874
  %v1132 = vadd.f32 %v718, %v1068
  %v1133 = vadd.f32 %v720, %v1069
  %v1134 = vadd.f32 %v722, %v1070
  %v1135 = vadd.f32 %v724, %v1071
  %v1136 = vadd.f32 %v728, %v1072
  %v1137 = vadd.f32 %v730, %v1073
  %v1138 = vadd.f32 %v732, %v1074
  %v1139 = vadd.f32 %v734, %v1075
  %v1140 = vadd.f32 %v738, %v1076
  %v1141 = vadd.f32 %v740, %v1077
  %v1142 = vadd.f32 %v742, %v1078
  %v1143 = vadd.f32 %v744, %v1079
  %v1144 = vadd.f32 %v748, %v1080
  %v1145 = vadd.f32 %v750, %v1081
  %v1146 = vadd.f32 %v752, %v1082
  %v1147 = vadd.f32 %v754, %v1083
  %v1148 = vadd.f32 %v758, %v1084
  %v1149 = vadd.f32 %v760, %v1085
  %v1150 = vadd.f32 %v762, %v1086
  %v1151 = vadd.f32 %v764, %v1087
  %v1152 = vadd.f32 %v768, %v1088
  %v1153 = vadd.f32 %v770, %v1089
  %v1154 = vadd.f32 %v772, %v1090
  %v1155 = vadd.f32 %v774, %v1091
  %v1156 = vadd.f32 %v778, %v1092
  %v1157 = vadd.f32 %v780, %v1093
  %v1158 = vadd.f32 %v782, %v1094
  %v1159 = vadd.f32 %v784, %v1095
  %v1160 = vadd.f32 %v788, %v1096
  %v1161 = vadd.f32 %v790, %v1097
  %v1162 = vadd.f32 %v792, %v1098
  %v1163 = vadd.f32 %v794, %v1099
  %v1164 = vadd.f32 %v798, %v1100
  %v1165 = vadd.f32 %v800, %v1101
  %v1166 = vadd.f32 %v802, %v1102
  %v1167 = vadd.f32 %v804, %v1103
  %v1168 = vadd.f32 %v808, %v1104
  %v1169 = vadd.f32 %v810, %v1105
  %v1170 = vadd.f32 %v812, %v1106
  %v1171 = vadd.f32 %v814, %v1107
  %v1172 = vadd.f32 %v818, %v1108
  %v1173 = vadd.f32 %v820, %v1109
  %v1174 = vadd.f32 %v822, %v1110
  %v1175 = vadd.f32 %v824, %v1111
  %v1176 = vadd.f32 %v828, %v1112
  %v1177 = vadd.f32 %v830, %v1113
  %v1178 = vadd.f32 %v832, %v1114
  %v1179 = vadd.f32 %v834, %v1115
  %v1180 = vadd.f32 %v838, %v1116
  %v1181 = vadd.f32 %v840, %v1117
  %v1182 = vadd.f32 %v842, %v1118
  %v1183 = vadd.f32 %v844, %v1119
  %v1184 = vadd.f32 %v848, %v1120
  %v1185 = vadd.f32 %v850, %v1121
  %v1186 = vadd.f32 %v852, %v1122
  %v1187 = vadd.f32 %v854, %v1123
  %v1188 = vadd.f32 %v858, %v1124
  %v1189 = vadd.f32 %v860, %v1125
  %v1190 = vadd.f32 %v862, %v1126
  %v1191 = vadd.f32 %v864, %v1127
  %v1192 = vadd.f32 %v868, %v1128
  %v1193 = vadd.f32 %v870, %v1129
  %v1194 = vadd.f32 %v872, %v1130
  %v1195 = vadd.f32 %v874, %v1131
  %v1196 = vmul.f32 %v1132, 0.7978846
  %v1197 = vmul.f32 %v1133, 0.7978846
  %v1198 = vmul.f32 %v1134, 0.7978846
  %v1199 = vmul.f32 %v1135, 0.7978846
  %v1200 = vmul.f32 %v1136, 0.7978846
  %v1201 = vmul.f32 %v1137, 0.7978846
  %v1202 = vmul.f32 %v1138, 0.7978846
  %v1203 = vmul.f32 %v1139, 0.7978846
  %v1204 = vmul.f32 %v1140, 0.7978846
  %v1205 = vmul.f32 %v1141, 0.7978846
  %v1206 = vmul.f32 %v1142, 0.7978846
  %v1207 = vmul.f32 %v1143, 0.7978846
  %v1208 = vmul.f32 %v1144, 0.7978846
  %v1209 = vmul.f32 %v1145, 0.7978846
  %v1210 = vmul.f32 %v1146, 0.7978846
  %v1211 = vmul.f32 %v1147, 0.7978846
  %v1212 = vmul.f32 %v1148, 0.7978846
  %v1213 = vmul.f32 %v1149, 0.7978846
  %v1214 = vmul.f32 %v1150, 0.7978846
  %v1215 = vmul.f32 %v1151, 0.7978846
  %v1216 = vmul.f32 %v1152, 0.7978846
  %v1217 = vmul.f32 %v1153, 0.7978846
  %v1218 = vmul.f32 %v1154, 0.7978846
  %v1219 = vmul.f32 %v1155, 0.7978846
  %v1220 = vmul.f32 %v1156, 0.7978846
  %v1221 = vmul.f32 %v1157, 0.7978846
  %v1222 = vmul.f32 %v1158, 0.7978846
  %v1223 = vmul.f32 %v1159, 0.7978846
  %v1224 = vmul.f32 %v1160, 0.7978846
  %v1225 = vmul.f32 %v1161, 0.7978846
  %v1226 = vmul.f32 %v1162, 0.7978846
  %v1227 = vmul.f32 %v1163, 0.7978846
  %v1228 = vmul.f32 %v1164, 0.7978846
  %v1229 = vmul.f32 %v1165, 0.7978846
  %v1230 = vmul.f32 %v1166, 0.7978846
  %v1231 = vmul.f32 %v1167, 0.7978846
  %v1232 = vmul.f32 %v1168, 0.7978846
  %v1233 = vmul.f32 %v1169, 0.7978846
  %v1234 = vmul.f32 %v1170, 0.7978846
  %v1235 = vmul.f32 %v1171, 0.7978846
  %v1236 = vmul.f32 %v1172, 0.7978846
  %v1237 = vmul.f32 %v1173, 0.7978846
  %v1238 = vmul.f32 %v1174, 0.7978846
  %v1239 = vmul.f32 %v1175, 0.7978846
  %v1240 = vmul.f32 %v1176, 0.7978846
  %v1241 = vmul.f32 %v1177, 0.7978846
  %v1242 = vmul.f32 %v1178, 0.7978846
  %v1243 = vmul.f32 %v1179, 0.7978846
  %v1244 = vmul.f32 %v1180, 0.7978846
  %v1245 = vmul.f32 %v1181, 0.7978846
  %v1246 = vmul.f32 %v1182, 0.7978846
  %v1247 = vmul.f32 %v1183, 0.7978846
  %v1248 = vmul.f32 %v1184, 0.7978846
  %v1249 = vmul.f32 %v1185, 0.7978846
  %v1250 = vmul.f32 %v1186, 0.7978846
  %v1251 = vmul.f32 %v1187, 0.7978846
  %v1252 = vmul.f32 %v1188, 0.7978846
  %v1253 = vmul.f32 %v1189, 0.7978846
  %v1254 = vmul.f32 %v1190, 0.7978846
  %v1255 = vmul.f32 %v1191, 0.7978846
  %v1256 = vmul.f32 %v1192, 0.7978846
  %v1257 = vmul.f32 %v1193, 0.7978846
  %v1258 = vmul.f32 %v1194, 0.7978846
  %v1259 = vmul.f32 %v1195, 0.7978846
  %v1260 = vtanh.pop %v1196
  %v1261 = vtanh.pop %v1197
  %v1262 = vtanh.pop %v1198
  %v1263 = vtanh.pop %v1199
  %v1264 = vtanh.pop %v1200
  %v1265 = vtanh.pop %v1201
  %v1266 = vtanh.pop %v1202
  %v1267 = vtanh.pop %v1203
  %v1268 = vtanh.pop %v1204
  %v1269 = vtanh.pop %v1205
  %v1270 = vtanh.pop %v1206
  %v1271 = vtanh.pop %v1207
  %v1272 = vtanh.pop %v1208
  %v1273 = vtanh.pop %v1209
  %v1274 = vtanh.pop %v1210
  %v1275 = vtanh.pop %v1211
  %v1276 = vtanh.pop %v1212
  %v1277 = vtanh.pop %v1213
  %v1278 = vtanh.pop %v1214
  %v1279 = vtanh.pop %v1215
  %v1280 = vtanh.pop %v1216
  %v1281 = vtanh.pop %v1217
  %v1282 = vtanh.pop %v1218
  %v1283 = vtanh.pop %v1219
  %v1284 = vtanh.pop %v1220
  %v1285 = vtanh.pop %v1221
  %v1286 = vtanh.pop %v1222
  %v1287 = vtanh.pop %v1223
  %v1288 = vtanh.pop %v1224
  %v1289 = vtanh.pop %v1225
  %v1290 = vtanh.pop %v1226
  %v1291 = vtanh.pop %v1227
  %v1292 = vtanh.pop %v1228
  %v1293 = vtanh.pop %v1229
  %v1294 = vtanh.pop %v1230
  %v1295 = vtanh.pop %v1231
  %v1296 = vtanh.pop %v1232
  %v1297 = vtanh.pop %v1233
  %v1298 = vtanh.pop %v1234
  %v1299 = vtanh.pop %v1235
  %v1300 = vtanh.pop %v1236
  %v1301 = vtanh.pop %v1237
  %v1302 = vtanh.pop %v1238
  %v1303 = vtanh.pop %v1239
  %v1304 = vtanh.pop %v1240
  %v1305 = vtanh.pop %v1241
  %v1306 = vtanh.pop %v1242
  %v1307 = vtanh.pop %v1243
  %v1308 = vtanh.pop %v1244
  %v1309 = vtanh.pop %v1245
  %v1310 = vtanh.pop %v1246
  %v1311 = vtanh.pop %v1247
  %v1312 = vtanh.pop %v1248
  %v1313 = vtanh.pop %v1249
  %v1314 = vtanh.pop %v1250
  %v1315 = vtanh.pop %v1251
  %v1316 = vtanh.pop %v1252
  %v1317 = vtanh.pop %v1253
  %v1318 = vtanh.pop %v1254
  %v1319 = vtanh.pop %v1255
  %v1320 = vtanh.pop %v1256
  %v1321 = vtanh.pop %v1257
  %v1322 = vtanh.pop %v1258
  %v1323 = vtanh.pop %v1259
  %v1324 = vadd.f32 %v1260, 1.0
  %v1325 = vadd.f32 %v1261, 1.0
  %v1326 = vadd.f32 %v1262, 1.0
  %v1327 = vadd.f32 %v1263, 1.0
  %v1328 = vadd.f32 %v1264, 1.0
  %v1329 = vadd.f32 %v1265, 1.0
  %v1330 = vadd.f32 %v1266, 1.0
  %v1331 = vadd.f32 %v1267, 1.0
  %v1332 = vadd.f32 %v1268, 1.0
  %v1333 = vadd.f32 %v1269, 1.0
  %v1334 = vadd.f32 %v1270, 1.0
  %v1335 = vadd.f32 %v1271, 1.0
  %v1336 = vadd.f32 %v1272, 1.0
  %v1337 = vadd.f32 %v1273, 1.0
  %v1338 = vadd.f32 %v1274, 1.0
  %v1339 = vadd.f32 %v1275, 1.0
  %v1340 = vadd.f32 %v1276, 1.0
  %v1341 = vadd.f32 %v1277, 1.0
  %v1342 = vadd.f32 %v1278, 1.0
  %v1343 = vadd.f32 %v1279, 1.0
  %v1344 = vadd.f32 %v1280, 1.0
  %v1345 = vadd.f32 %v1281, 1.0
  %v1346 = vadd.f32 %v1282, 1.0
  %v1347 = vadd.f32 %v1283, 1.0
  %v1348 = vadd.f32 %v1284, 1.0
  %v1349 = vadd.f32 %v1285, 1.0
  %v1350 = vadd.f32 %v1286, 1.0
  %v1351 = vadd.f32 %v1287, 1.0
  %v1352 = vadd.f32 %v1288, 1.0
  %v1353 = vadd.f32 %v1289, 1.0
  %v1354 = vadd.f32 %v1290, 1.0
  %v1355 = vadd.f32 %v1291, 1.0
  %v1356 = vadd.f32 %v1292, 1.0
  %v1357 = vadd.f32 %v1293, 1.0
  %v1358 = vadd.f32 %v1294, 1.0
  %v1359 = vadd.f32 %v1295, 1.0
  %v1360 = vadd.f32 %v1296, 1.0
  %v1361 = vadd.f32 %v1297, 1.0
  %v1362 = vadd.f32 %v1298, 1.0
  %v1363 = vadd.f32 %v1299, 1.0
  %v1364 = vadd.f32 %v1300, 1.0
  %v1365 = vadd.f32 %v1301, 1.0
  %v1366 = vadd.f32 %v1302, 1.0
  %v1367 = vadd.f32 %v1303, 1.0
  %v1368 = vadd.f32 %v1304, 1.0
  %v1369 = vadd.f32 %v1305, 1.0
  %v1370 = vadd.f32 %v1306, 1.0
  %v1371 = vadd.f32 %v1307, 1.0
  %v1372 = vadd.f32 %v1308, 1.0
  %v1373 = vadd.f32 %v1309, 1.0
  %v1374 = vadd.f32 %v1310, 1.0
  %v1375 = vadd.f32 %v1311, 1.0
  %v1376 = vadd.f32 %v1312, 1.0
  %v1377 = vadd.f32 %v1313, 1.0
  %v1378 = vadd.f32 %v1314, 1.0
  %v1379 = vadd.f32 %v1315, 1.0
  %v1380 = vadd.f32 %v1316, 1.0
  %v1381 = vadd.f32 %v1317, 1.0
  %v1382 = vadd.f32 %v1318, 1.0
  %v1383 = vadd.f32 %v1319, 1.0
  %v1384 = vadd.f32 %v1320, 1.0
  %v1385 = vadd.f32 %v1321, 1.0
  %v1386 = vadd.f32 %v1322, 1.0
  %v1387 = vadd.f32 %v1323, 1.0
  %v1388 = vmul.f32 %v876, %v1324
  %v1389 = vmul.f32 %v877, %v1325
  %v1390 = vmul.f32 %v878, %v1326
  %v1391 = vmul.f32 %v879, %v1327
  %v1392 = vmul.f32 %v880, %v1328
  %v1393 = vmul.f32 %v881, %v1329
  %v1394 = vmul.f32 %v882, %v1330
  %v1395 = vmul.f32 %v883, %v1331
  %v1396 = vmul.f32 %v884, %v1332
  %v1397 = vmul.f32 %v885, %v1333
  %v1398 = vmul.f32 %v886, %v1334
  %v1399 = vmul.f32 %v887, %v1335
  %v1400 = vmul.f32 %v888, %v1336
  %v1401 = vmul.f32 %v889, %v1337
  %v1402 = vmul.f32 %v890, %v1338
  %v1403 = vmul.f32 %v891, %v1339
  %v1404 = vmul.f32 %v892, %v1340
  %v1405 = vmul.f32 %v893, %v1341
  %v1406 = vmul.f32 %v894, %v1342
  %v1407 = vmul.f32 %v895, %v1343
  %v1408 = vmul.f32 %v896, %v1344
  %v1409 = vmul.f32 %v897, %v1345
  %v1410 = vmul.f32 %v898, %v1346
  %v1411 = vmul.f32 %v899, %v1347
  %v1412 = vmul.f32 %v900, %v1348
  %v1413 = vmul.f32 %v901, %v1349
  %v1414 = vmul.f32 %v902, %v1350
  %v1415 = vmul.f32 %v903, %v1351
  %v1416 = vmul.f32 %v904, %v1352
  %v1417 = vmul.f32 %v905, %v1353
  %v1418 = vmul.f32 %v906, %v1354
  %v1419 = vmul.f32 %v907, %v1355
  %v1420 = vmul.f32 %v908, %v1356
  %v1421 = vmul.f32 %v909, %v1357
  %v1422 = vmul.f32 %v910, %v1358
  %v1423 = vmul.f32 %v911, %v1359
  %v1424 = vmul.f32 %v912, %v1360
  %v1425 = vmul.f32 %v913, %v1361
  %v1426 = vmul.f32 %v914, %v1362
  %v1427 = vmul.f32 %v915, %v1363
  %v1428 = vmul.f32 %v916, %v1364
  %v1429 = vmul.f32 %v917, %v1365
  %v1430 = vmul.f32 %v918, %v1366
  %v1431 = vmul.f32 %v919, %v1367
  %v1432 = vmul.f32 %v920, %v1368
  %v1433 = vmul.f32 %v921, %v1369
  %v1434 = vmul.f32 %v922, %v1370
  %v1435 = vmul.f32 %v923, %v1371
  %v1436 = vmul.f32 %v924, %v1372
  %v1437 = vmul.f32 %v925, %v1373
  %v1438 = vmul.f32 %v926, %v1374
  %v1439 = vmul.f32 %v927, %v1375
  %v1440 = vmul.f32 %v928, %v1376
  %v1441 = vmul.f32 %v929, %v1377
  %v1442 = vmul.f32 %v930, %v1378
  %v1443 = vmul.f32 %v931, %v1379
  %v1444 = vmul.f32 %v932, %v1380
  %v1445 = vmul.f32 %v933, %v1381
  %v1446 = vmul.f32 %v934, %v1382
  %v1447 = vmul.f32 %v935, %v1383
  %v1448 = vmul.f32 %v936, %v1384
  %v1449 = vmul.f32 %v937, %v1385
  %v1450 = vmul.f32 %v938, %v1386
  %v1451 = vmul.f32 %v939, %v1387
  %v1452 = vpack.c.bf16 %v1390, %v1388
  %v1453 = vpack.c.bf16 %v1391, %v1389
  %v1454 = vpack.c.bf16 %v1394, %v1392
  %v1455 = vpack.c.bf16 %v1395, %v1393
  %v1456 = vpack.c.bf16 %v1398, %v1396
  %v1457 = vpack.c.bf16 %v1399, %v1397
  %v1458 = vpack.c.bf16 %v1402, %v1400
  %v1459 = vpack.c.bf16 %v1403, %v1401
  %v1460 = vpack.c.bf16 %v1406, %v1404
  %v1461 = vpack.c.bf16 %v1407, %v1405
  %v1462 = vpack.c.bf16 %v1410, %v1408
  %v1463 = vpack.c.bf16 %v1411, %v1409
  %v1464 = vpack.c.bf16 %v1414, %v1412
  %v1465 = vpack.c.bf16 %v1415, %v1413
  %v1466 = vpack.c.bf16 %v1418, %v1416
  %v1467 = vpack.c.bf16 %v1419, %v1417
  %v1468 = vpack.c.bf16 %v1422, %v1420
  %v1469 = vpack.c.bf16 %v1423, %v1421
  %v1470 = vpack.c.bf16 %v1426, %v1424
  %v1471 = vpack.c.bf16 %v1427, %v1425
  %v1472 = vpack.c.bf16 %v1430, %v1428
  %v1473 = vpack.c.bf16 %v1431, %v1429
  %v1474 = vpack.c.bf16 %v1434, %v1432
  %v1475 = vpack.c.bf16 %v1435, %v1433
  %v1476 = vpack.c.bf16 %v1438, %v1436
  %v1477 = vpack.c.bf16 %v1439, %v1437
  %v1478 = vpack.c.bf16 %v1442, %v1440
  %v1479 = vpack.c.bf16 %v1443, %v1441
  %v1480 = vpack.c.bf16 %v1446, %v1444
  %v1481 = vpack.c.bf16 %v1447, %v1445
  %v1482 = vpack.c.bf16 %v1450, %v1448
  %v1483 = vpack.c.bf16 %v1451, %v1449
  %v1516 = vunpack.c.l.b16 %v1452
  %v1517 = vunpack.c.l.b16 %v1453
  %v1518 = vunpack.c.h.b16 %v1452
  %v1519 = vunpack.c.h.b16 %v1453
  %v1520 = vunpack.c.l.b16 %v1454
  %v1521 = vunpack.c.l.b16 %v1455
  %v1522 = vunpack.c.h.b16 %v1454
  %v1523 = vunpack.c.h.b16 %v1455
  %v1524 = vunpack.c.l.b16 %v1456
  %v1525 = vunpack.c.l.b16 %v1457
  %v1526 = vunpack.c.h.b16 %v1456
  %v1527 = vunpack.c.h.b16 %v1457
  %v1528 = vunpack.c.l.b16 %v1458
  %v1529 = vunpack.c.l.b16 %v1459
  %v1530 = vunpack.c.h.b16 %v1458
  %v1531 = vunpack.c.h.b16 %v1459
  %v1532 = vunpack.c.l.b16 %v1460
  %v1533 = vunpack.c.l.b16 %v1461
  %v1534 = vunpack.c.h.b16 %v1460
  %v1535 = vunpack.c.h.b16 %v1461
  %v1536 = vunpack.c.l.b16 %v1462
  %v1537 = vunpack.c.l.b16 %v1463
  %v1538 = vunpack.c.h.b16 %v1462
  %v1539 = vunpack.c.h.b16 %v1463
  %v1540 = vunpack.c.l.b16 %v1464
  %v1541 = vunpack.c.l.b16 %v1465
  %v1542 = vunpack.c.h.b16 %v1464
  %v1543 = vunpack.c.h.b16 %v1465
  %v1544 = vunpack.c.l.b16 %v1466
  %v1545 = vunpack.c.l.b16 %v1467
  %v1546 = vunpack.c.h.b16 %v1466
  %v1547 = vunpack.c.h.b16 %v1467
  %v1548 = vunpack.c.l.b16 %v1468
  %v1549 = vunpack.c.l.b16 %v1469
  %v1550 = vunpack.c.h.b16 %v1468
  %v1551 = vunpack.c.h.b16 %v1469
  %v1552 = vunpack.c.l.b16 %v1470
  %v1553 = vunpack.c.l.b16 %v1471
  %v1554 = vunpack.c.h.b16 %v1470
  %v1555 = vunpack.c.h.b16 %v1471
  %v1556 = vunpack.c.l.b16 %v1472
  %v1557 = vunpack.c.l.b16 %v1473
  %v1558 = vunpack.c.h.b16 %v1472
  %v1559 = vunpack.c.h.b16 %v1473
  %v1560 = vunpack.c.l.b16 %v1474
  %v1561 = vunpack.c.l.b16 %v1475
  %v1562 = vunpack.c.h.b16 %v1474
  %v1563 = vunpack.c.h.b16 %v1475
  %v1564 = vunpack.c.l.b16 %v1476
  %v1565 = vunpack.c.l.b16 %v1477
  %v1566 = vunpack.c.h.b16 %v1476
  %v1567 = vunpack.c.h.b16 %v1477
  %v1568 = vunpack.c.l.b16 %v1478
  %v1569 = vunpack.c.l.b16 %v1479
  %v1570 = vunpack.c.h.b16 %v1478
  %v1571 = vunpack.c.h.b16 %v1479
  %v1572 = vunpack.c.l.b16 %v1480
  %v1573 = vunpack.c.l.b16 %v1481
  %v1574 = vunpack.c.h.b16 %v1480
  %v1575 = vunpack.c.h.b16 %v1481
  %v1576 = vunpack.c.l.b16 %v1482
  %v1577 = vunpack.c.l.b16 %v1483
  %v1578 = vunpack.c.h.b16 %v1482
  %v1579 = vunpack.c.h.b16 %v1483
  %v1580 = vpack.c.b16 %v1517, %v1516
  %v1581 = vpack.c.b16 %v1519, %v1518
  %v1582 = vpack.c.b16 %v1521, %v1520
  %v1583 = vpack.c.b16 %v1523, %v1522
  %v1584 = vpack.c.b16 %v1525, %v1524
  %v1585 = vpack.c.b16 %v1527, %v1526
  %v1586 = vpack.c.b16 %v1529, %v1528
  %v1587 = vpack.c.b16 %v1531, %v1530
  %v1588 = vpack.c.b16 %v1533, %v1532
  %v1589 = vpack.c.b16 %v1535, %v1534
  %v1590 = vpack.c.b16 %v1537, %v1536
  %v1591 = vpack.c.b16 %v1539, %v1538
  %v1592 = vpack.c.b16 %v1541, %v1540
  %v1593 = vpack.c.b16 %v1543, %v1542
  %v1594 = vpack.c.b16 %v1545, %v1544
  %v1595 = vpack.c.b16 %v1547, %v1546
  %v1596 = vpack.c.b16 %v1549, %v1548
  %v1597 = vpack.c.b16 %v1551, %v1550
  %v1598 = vpack.c.b16 %v1553, %v1552
  %v1599 = vpack.c.b16 %v1555, %v1554
  %v1600 = vpack.c.b16 %v1557, %v1556
  %v1601 = vpack.c.b16 %v1559, %v1558
  %v1602 = vpack.c.b16 %v1561, %v1560
  %v1603 = vpack.c.b16 %v1563, %v1562
  %v1604 = vpack.c.b16 %v1565, %v1564
  %v1605 = vpack.c.b16 %v1567, %v1566
  %v1606 = vpack.c.b16 %v1569, %v1568
  %v1607 = vpack.c.b16 %v1571, %v1570
  %v1608 = vpack.c.b16 %v1573, %v1572
  %v1609 = vpack.c.b16 %v1575, %v1574
  %v1610 = vpack.c.b16 %v1577, %v1576
  %v1611 = vpack.c.b16 %v1579, %v1578
  %1644 = vst [vmem:[%s5] sm:$0xff] %v1580
  %1645 = vst [vmem:[%s5 + $0x8] sm:$0xff] %v1581
  %1646 = vst [vmem:[%s5 + $0x10] sm:$0xff] %v1582
  %1647 = vst [vmem:[%s5 + $0x18] sm:$0xff] %v1583
  %1648 = vst [vmem:[%s5 + $0x20] sm:$0xff] %v1584
  %1649 = vst [vmem:[%s5 + $0x28] sm:$0xff] %v1585
  %1650 = vst [vmem:[%s5 + $0x30] sm:$0xff] %v1586
  %1651 = vst [vmem:[%s5 + $0x38] sm:$0xff] %v1587
  %1652 = vst [vmem:[%s5 + $0x40] sm:$0xff] %v1588
  %1653 = vst [vmem:[%s5 + $0x48] sm:$0xff] %v1589
  %1654 = vst [vmem:[%s5 + $0x50] sm:$0xff] %v1590
  %1655 = vst [vmem:[%s5 + $0x58] sm:$0xff] %v1591
  %1656 = vst [vmem:[%s5 + $0x60] sm:$0xff] %v1592
  %1657 = vst [vmem:[%s5 + $0x68] sm:$0xff] %v1593
  %1658 = vst [vmem:[%s5 + $0x70] sm:$0xff] %v1594
  %1659 = vst [vmem:[%s5 + $0x78] sm:$0xff] %v1595
  %1660 = vst [vmem:[%s5 + $0x80] sm:$0xff] %v1596
  %1661 = vst [vmem:[%s5 + $0x88] sm:$0xff] %v1597
  %1662 = vst [vmem:[%s5 + $0x90] sm:$0xff] %v1598
  %1663 = vst [vmem:[%s5 + $0x98] sm:$0xff] %v1599
  %1664 = vst [vmem:[%s5 + $0xa0] sm:$0xff] %v1600
  %1665 = vst [vmem:[%s5 + $0xa8] sm:$0xff] %v1601
  %1666 = vst [vmem:[%s5 + $0xb0] sm:$0xff] %v1602
  %1667 = vst [vmem:[%s5 + $0xb8] sm:$0xff] %v1603
  %1668 = vst [vmem:[%s5 + $0xc0] sm:$0xff] %v1604
  %1669 = vst [vmem:[%s5 + $0xc8] sm:$0xff] %v1605
  %1670 = vst [vmem:[%s5 + $0xd0] sm:$0xff] %v1606
  %1671 = vst [vmem:[%s5 + $0xd8] sm:$0xff] %v1607
  %1672 = vst [vmem:[%s5 + $0xe0] sm:$0xff] %v1608
  %1673 = vst [vmem:[%s5 + $0xe8] sm:$0xff] %v1609
  %1674 = vst [vmem:[%s5 + $0xf0] sm:$0xff] %v1610
  %1675 = vst [vmem:[%s5 + $0xf8] sm:$0xff] %v1611
  // Predicated region
  $region26: #{whisper_audio_tower_forward.12} parent=0 // pred_check
    _
  $region27: #{whisper_audio_tower_forward.12} parent=0 // pred_check_branch
    %1677 = sbr.rel (0) target = $region29
  $region28: #{whisper_audio_tower_forward.12} parent=0 // pred_region
    _
  $region29: #{whisper_audio_tower_forward.12} parent=0 // pred_fallthru
    _
  // Predicated region
  $region30: #{whisper_audio_tower_forward.12} parent=0 // pred_check
    _
  $region31: #{whisper_audio_tower_forward.12} parent=0 // pred_check_branch
    %1679 = sbr.rel (0) target = $region33
  $region32: #{whisper_audio_tower_forward.12} parent=0 // pred_region
    _
  $region33: #{whisper_audio_tower_forward.12} parent=0 // pred_fallthru
    _

</llo_original>
